<compile_context>
chip_gen: v7x
topology: tpu7x:2x2x1
jax: 0.10.0
libtpu: 0.0.40
codegen_flags: <defaults>
</compile_context>

<pallas_src>
import functools
import numpy as np
import jax
import jax.numpy as jnp
from jax.experimental import pallas as pl
from jax.experimental.pallas import tpu as pltpu

_LANE_TILE_CAP = 512


def _lane_tile(P):
    """Pick a lane tile that divides P exactly (full block for small P)."""
    if P <= _LANE_TILE_CAP:
        return P
    for t in (_LANE_TILE_CAP, 256, 128):
        if P % t == 0:
            return t
    # TODO(synk): pad ragged large P to a 128 multiple instead of one big block.
    return P


# ---------------------------------------------------------------------------
# Kernel 1: Y = W @ X + b     (1x1 convs / fused block-diagonal heads)
#   W: (Cout, Cin)   X: (Cin, P)   b: (Cout, 1)   Y: (Cout, P)
# ---------------------------------------------------------------------------
def _wxb_kernel(w_ref, x_ref, b_ref, o_ref):
    o_ref[...] = (
        jnp.dot(w_ref[...], x_ref[...], preferred_element_type=jnp.float32)
        + b_ref[...]
    ).astype(o_ref.dtype)


def conv1x1_cp(x_cp, w2d, b):
    Cin, P = x_cp.shape
    Cout = w2d.shape[0]
    tp = _lane_tile(P)
    return pl.pallas_call(
        _wxb_kernel,
        out_shape=jax.ShapeDtypeStruct((Cout, P), jnp.float32),
        grid=(P // tp,),
        in_specs=[
            pl.BlockSpec((Cout, Cin), lambda j: (0, 0)),
            pl.BlockSpec((Cin, tp), lambda j: (0, j)),
            pl.BlockSpec((Cout, 1), lambda j: (0, 0)),
        ],
        out_specs=pl.BlockSpec((Cout, tp), lambda j: (0, j)),
        compiler_params=pltpu.CompilerParams(dimension_semantics=("parallel",)),
    )(w2d, x_cp, b.reshape(Cout, 1))


# ---------------------------------------------------------------------------
# Kernel 2: Y = X @ Op (+ base)   (bilinear resize as a pixel-space operator,
#   optionally fused with the top-down residual add)
#   X: (C, Pin)   Op: (Pin, Pout)   base: (C, Pout)
# ---------------------------------------------------------------------------
def _xop_kernel(x_ref, op_ref, o_ref):
    o_ref[...] = jnp.dot(
        x_ref[...], op_ref[...], preferred_element_type=jnp.float32
    ).astype(o_ref.dtype)


def _xop_add_kernel(x_ref, op_ref, base_ref, o_ref):
    o_ref[...] = (
        base_ref[...]
        + jnp.dot(x_ref[...], op_ref[...], preferred_element_type=jnp.float32)
    ).astype(o_ref.dtype)


def apply_pixel_op(x_cp, op, base=None):
    C, Pin = x_cp.shape
    Pout = op.shape[1]
    tp = _lane_tile(Pout)
    grid = (Pout // tp,)
    cp = pltpu.CompilerParams(dimension_semantics=("parallel",))
    if base is None:
        return pl.pallas_call(
            _xop_kernel,
            out_shape=jax.ShapeDtypeStruct((C, Pout), jnp.float32),
            grid=grid,
            in_specs=[
                pl.BlockSpec((C, Pin), lambda j: (0, 0)),
                pl.BlockSpec((Pin, tp), lambda j: (0, j)),
            ],
            out_specs=pl.BlockSpec((C, tp), lambda j: (0, j)),
            compiler_params=cp,
        )(x_cp, op)
    return pl.pallas_call(
        _xop_add_kernel,
        out_shape=jax.ShapeDtypeStruct((C, Pout), jnp.float32),
        grid=grid,
        in_specs=[
            pl.BlockSpec((C, Pin), lambda j: (0, 0)),
            pl.BlockSpec((Pin, tp), lambda j: (0, j)),
            pl.BlockSpec((C, tp), lambda j: (0, j)),
        ],
        out_specs=pl.BlockSpec((C, tp), lambda j: (0, j)),
        compiler_params=cp,
    )(x_cp, op, base)


# ---------------------------------------------------------------------------
# Kernel 3: fused PPM — per scale s:  out_s = W_s @ (X4 @ M_s) + b_s
#   M_s = kron(I_N, (R_s @ P_s)^T) combines adaptive-avg-pool and the bilinear
#   resize back to (H4, W4).  Grid axis = scale index; each step writes its own
#   16-row block of the channel-stacked output.
# ---------------------------------------------------------------------------
def _ppm_kernel(x_ref, s_ref, w_ref, b_ref, o_ref):
    z = jnp.dot(x_ref[...], s_ref[0], preferred_element_type=jnp.float32)
    o_ref[...] = (
        jnp.dot(w_ref[0], z, preferred_element_type=jnp.float32) + b_ref[0]
    ).astype(o_ref.dtype)


def ppm_fused(x4_cp, spatial_ops, w_stack, b_stack):
    Cin4, P4 = x4_cp.shape
    S, Cc, _ = w_stack.shape
    return pl.pallas_call(
        _ppm_kernel,
        out_shape=jax.ShapeDtypeStruct((S * Cc, P4), jnp.float32),
        grid=(S,),
        in_specs=[
            pl.BlockSpec((Cin4, P4), lambda s: (0, 0)),
            pl.BlockSpec((1, P4, P4), lambda s: (s, 0, 0)),
            pl.BlockSpec((1, Cc, Cin4), lambda s: (s, 0, 0)),
            pl.BlockSpec((1, Cc, 1), lambda s: (s, 0, 0)),
        ],
        out_specs=pl.BlockSpec((Cc, P4), lambda s: (s, 0)),
        compiler_params=pltpu.CompilerParams(dimension_semantics=("parallel",)),
    )(x4_cp, spatial_ops, w_stack, b_stack)


# ---------------------------------------------------------------------------
# Kernel 4: 3x3 conv (stride 1, pad 1) with the 9-tap reduction done in-kernel.
#   Input is spatially zero-padded once and flattened; each tap is a static
#   lane-offset slice of the padded flat array, matmul'ed against that tap's
#   (Cout, Cin) weight slice and accumulated in f32.
# ---------------------------------------------------------------------------
def _conv3x3_kernel(x_ref, w_ref, b_ref, o_ref, *, offsets, guard, pp):
    acc = jnp.zeros(o_ref.shape, jnp.float32)
    for t, off in enumerate(offsets):
        xs = x_ref[:, pl.ds(guard + off, pp)]  # (Cin, Pp), static lane offset
        acc = acc + jnp.dot(w_ref[t], xs, preferred_element_type=jnp.float32)
    o_ref[...] = (acc + b_ref[...]).astype(o_ref.dtype)


def conv3x3_cp(x_cp, w, b, N, H, W):
    Cin, _ = x_cp.shape
    Cout = w.shape[0]
    Hp, Wp = H + 2, W + 2
    Pp = N * Hp * Wp
    G = Wp + 1  # guard lanes so every tap's shifted read stays in-bounds

    xp = jnp.pad(x_cp.reshape(Cin, N, H, W), ((0, 0), (0, 0), (1, 1), (1, 1)))
    xflat = jnp.pad(xp.reshape(Cin, Pp), ((0, 0), (G, G)))  # (Cin, Pp + 2G)
    w_taps = jnp.transpose(w.reshape(Cout, Cin, 9), (2, 0, 1))  # (9, Cout, Cin)
    offsets = tuple((ky - 1) * Wp + (kx - 1) for ky in range(3) for kx in range(3))

    kernel = functools.partial(_conv3x3_kernel, offsets=offsets, guard=G, pp=Pp)
    yp = pl.pallas_call(
        kernel,
        out_shape=jax.ShapeDtypeStruct((Cout, Pp), jnp.float32),
        grid=(1,),
        in_specs=[
            pl.BlockSpec((Cin, Pp + 2 * G), lambda j: (0, 0)),
            pl.BlockSpec((9, Cout, Cin), lambda j: (0, 0, 0)),
            pl.BlockSpec((Cout, 1), lambda j: (0, 0)),
        ],
        out_specs=pl.BlockSpec((Cout, Pp), lambda j: (0, 0)),
        compiler_params=pltpu.CompilerParams(dimension_semantics=("arbitrary",)),
    )(xflat, w_taps, b.reshape(Cout, 1))

    # drop the spatial padding positions (cheap XLA reshape/slice of a small output)
    return yp.reshape(Cout, N, Hp, Wp)[:, :, 1 : H + 1, 1 : W + 1].reshape(
        Cout, N * H * W
    )


# ---------------------------------------------------------------------------
# Separable 1-D matrices (numpy, trace-time constants) and their kron-combined
# pixel-space operators.
# ---------------------------------------------------------------------------
def bilinear_matrix(out_size, in_size):
    """Matches F.interpolate(mode='bilinear', align_corners=False)."""
    m = np.zeros((out_size, in_size), np.float32)
    scale = in_size / out_size
    for i in range(out_size):
        src = max((i + 0.5) * scale - 0.5, 0.0)
        i0 = min(int(np.floor(src)), in_size - 1)
        i1 = min(i0 + 1, in_size - 1)
        f = src - np.floor(src)
        m[i, i0] += 1.0 - f
        m[i, i1] += f
    return m


def adaptive_pool_matrix(out_size, in_size):
    """Matches nn.AdaptiveAvgPool2d window rule [floor(i*I/O), ceil((i+1)*I/O))."""
    m = np.zeros((out_size, in_size), np.float32)
    for i in range(out_size):
        s = (i * in_size) // out_size
        e = -((-(i + 1) * in_size) // out_size)
        m[i, s:e] = 1.0 / (e - s)
    return m


def resize_op(N, hi, wi, ho, wo):
    """Right-multiplication operator: (C, N*hi*wi) @ op -> (C, N*ho*wo)."""
    K = np.kron(bilinear_matrix(ho, hi), bilinear_matrix(wo, wi))  # (ho*wo, hi*wi)
    return np.kron(np.eye(N, dtype=np.float32), K.T.astype(np.float32))


def ppm_spatial_op(N, h, w, scale):
    """Adaptive-pool(scale) followed by bilinear resize back to (h, w)."""
    Pm = np.kron(adaptive_pool_matrix(scale, h), adaptive_pool_matrix(scale, w))
    Rm = np.kron(bilinear_matrix(h, scale), bilinear_matrix(w, scale))
    A = (Rm @ Pm).astype(np.float32)  # (h*w, h*w)
    return np.kron(np.eye(N, dtype=np.float32), A.T)


# ---------------------------------------------------------------------------
# Parameters (deterministic synthetic init, PyTorch conv weight layout) + fusion
# ---------------------------------------------------------------------------
def init_params(key, in_channels, channels, num_classes, pool_scales):
    keys = iter(jax.random.split(key, 64))

    def conv_p(cout, cin, k):
        w = 0.05 * jax.random.normal(next(keys), (cout, cin, k, k), jnp.float32)
        b = 0.05 * jax.random.normal(next(keys), (cout,), jnp.float32)
        return w, b

    params = {}
    params["lateral"] = [conv_p(channels, c, 1) for c in in_channels[:-1]]
    params["ppm"] = [conv_p(channels, in_channels[-1], 1) for _ in pool_scales]
    params["bottleneck"] = conv_p(
        channels, in_channels[-1] + len(pool_scales) * channels, 3
    )
    params["fpn"] = [conv_p(channels, channels, 3) for _ in in_channels[:-1]]
    params["fpn_bottleneck"] = conv_p(channels, len(in_channels) * channels, 3)
    params["conv_seg"] = conv_p(num_classes, channels, 1)
    params["aux"] = [conv_p(num_classes, channels, 1) for _ in range(4)]
    return params


def fuse_params(params, channels, num_classes):
    """Precompute fused / folded weights (exact linear-algebra rewrites)."""
    fused = dict(params)

    # 4 aux 1x1 heads as one block-diagonal matmul over fpn_cat
    aux_w = jnp.zeros((4 * num_classes, 4 * channels), jnp.float32)
    aux_b = []
    for i, (w, b) in enumerate(params["aux"]):
        aux_w = aux_w.at[
            i * num_classes : (i + 1) * num_classes, i * channels : (i + 1) * channels
        ].set(w.reshape(num_classes, channels))
        aux_b.append(b)
    fused["aux_bd_w"] = aux_w
    fused["aux_bd_b"] = jnp.concatenate(aux_b)

    # fold conv_seg (1x1) into the fpn_bottleneck 3x3 conv (dropout is identity)
    wseg, bseg = params["conv_seg"]
    wfb, bfb = params["fpn_bottleneck"]
    wseg2 = wseg.reshape(num_classes, channels)
    fused["segfb_w"] = jnp.einsum("om,mcyx->ocyx", wseg2, wfb)
    fused["segfb_b"] = wseg2 @ bfb + bseg

    # stacked PPM 1x1 weights/biases for the scale-gridded fused PPM kernel
    fused["ppm_w"] = jnp.stack([w.reshape(w.shape[0], w.shape[1]) for w, _ in params["ppm"]])
    fused["ppm_b"] = jnp.stack([b.reshape(-1, 1) for _, b in params["ppm"]])

    # 2-D lateral conv weights
    fused["lateral2d"] = [
        (w.reshape(w.shape[0], w.shape[1]), b) for (w, b) in params["lateral"]
    ]
    return fused


# ---------------------------------------------------------------------------
# Forward (mirrors M_UPerHead_dsv.forward at inference)
# ---------------------------------------------------------------------------
def uperhead_forward(params, x1, x2, x3, x4, pool_scales=(1, 2, 3, 6)):
    ins = [x1, x2, x3, x4]
    N = ins[0].shape[0]
    hws = [(x.shape[2], x.shape[3]) for x in ins]
    # NCHW -> (C, N*H*W)
    cps = [jnp.transpose(x, (1, 0, 2, 3)).reshape(x.shape[1], -1) for x in ins]

    _op_cache = {}

    def pix_op(src_hw, dst_hw):
        key = (src_hw, dst_hw)
        if key not in _op_cache:
            _op_cache[key] = jnp.asarray(
                resize_op(N, src_hw[0], src_hw[1], dst_hw[0], dst_hw[1])
            )
        return _op_cache[key]

    # lateral 1x1 convs on x1..x3
    laterals = [conv1x1_cp(cps[i], *params["lateral2d"][i]) for i in range(3)]

    # PSP on x4: one fused pallas_call for pool + 1x1 + resize over all scales
    H4, W4 = hws[3]
    spatial_ops = jnp.asarray(
        np.stack([ppm_spatial_op(N, H4, W4, s) for s in pool_scales])
    )
    ppm_out = ppm_fused(cps[3], spatial_ops, params["ppm_w"], params["ppm_b"])
    psp_cat = jnp.concatenate([cps[3], ppm_out], axis=0)
    wb, bb = params["bottleneck"]
    laterals.append(conv3x3_cp(psp_cat, wb, bb, N, H4, W4))

    # top-down pathway (bilinear resize fused with the residual add)
    lat_hw = [hws[0], hws[1], hws[2], hws[3]]
    for i in range(3, 0, -1):
        if lat_hw[i] == lat_hw[i - 1]:  # same-size bilinear resize is exact identity
            laterals[i - 1] = laterals[i - 1] + laterals[i]
        else:
            laterals[i - 1] = apply_pixel_op(
                laterals[i], pix_op(lat_hw[i], lat_hw[i - 1]), base=laterals[i - 1]
            )

    # FPN 3x3 convs
    fpn = []
    for i in range(3):
        w, b = params["fpn"][i]
        fpn.append(conv3x3_cp(laterals[i], w, b, N, lat_hw[i][0], lat_hw[i][1]))
    fpn.append(laterals[3])

    # resize levels 1..3 to the finest resolution; same-size maps share one call
    out_hw = lat_hw[0]
    resized = {0: fpn[0]}
    groups = {}
    for i in range(1, 4):
        groups.setdefault(lat_hw[i], []).append(i)
    for hw, idxs in groups.items():
        if hw == out_hw:
            for i in idxs:
                resized[i] = fpn[i]
            continue
        stacked = (
            jnp.concatenate([fpn[i] for i in idxs], axis=0)
            if len(idxs) > 1
            else fpn[idxs[0]]
        )
        r = apply_pixel_op(stacked, pix_op(hw, out_hw))
        Cc = fpn[idxs[0]].shape[0]
        for k, i in enumerate(idxs):
            resized[i] = r[k * Cc : (k + 1) * Cc]
    fpn_outs = [resized[i] for i in range(4)]

    fpn_cat = jnp.concatenate(fpn_outs, axis=0)  # (4*channels, P0)

    # 4 deep-supervision heads in one block-diagonal matmul
    aux_all = conv1x1_cp(fpn_cat, params["aux_bd_w"], params["aux_bd_b"])
    ncls = params["segfb_w"].shape[0]
    auxs = [aux_all[i * ncls : (i + 1) * ncls] for i in range(4)]

    # fpn_bottleneck 3x3 with conv_seg folded in -> final seg logits
    seg = conv3x3_cp(
        fpn_cat, params["segfb_w"], params["segfb_b"], N, out_hw[0], out_hw[1]
    )

    def to_nchw(t):
        return jnp.transpose(t.reshape(t.shape[0], N, out_hw[0], out_hw[1]), (1, 0, 2, 3))

    return {"seg": to_nchw(seg), "seg_aux": [to_nchw(a) for a in auxs]}


# ---------------------------------------------------------------------------
if __name__ == "__main__":
    key = jax.random.PRNGKey(0)
    kx, kp = jax.random.split(key)

    in_channels = [8, 16, 24, 32]
    channels = 16
    num_classes = 5
    pool_scales = (1, 2, 3, 6)

    k1, k2, k3, k4 = jax.random.split(kx, 4)
    x1 = jax.random.normal(k1, (2, in_channels[0], 16, 16), jnp.float32)
    x2 = jax.random.normal(k2, (2, in_channels[1], 8, 8), jnp.float32)
    x3 = jax.random.normal(k3, (2, in_channels[2], 4, 4), jnp.float32)
    x4 = jax.random.normal(k4, (2, in_channels[3], 4, 4), jnp.float32)

    params = init_params(kp, in_channels, channels, num_classes, pool_scales)
    fused = fuse_params(params, channels, num_classes)

    fwd = jax.jit(uperhead_forward)
    out = fwd(fused, x1, x2, x3, x4)
    jax.block_until_ready(out["seg"])
    for a in out["seg_aux"]:
        jax.block_until_ready(a)

    assert out["seg"].shape == (2, num_classes, 16, 16)
    assert all(a.shape == (2, num_classes, 16, 16) for a in out["seg_aux"])
    print("KERNEL_OK")
</pallas_src>

<mosaic_0001>
module attributes {stable_mosaic.version = 11 : i64} {
  func.func @_wxb_kernel(%arg0: i32, %arg1: memref<16x24xf32, #tpu.memory_space<vmem>>, %arg2: memref<24x32xf32, #tpu.memory_space<vmem>>, %arg3: memref<16x1xf32, #tpu.memory_space<vmem>>, %arg4: memref<16x32xf32, #tpu.memory_space<vmem>>) attributes {dimension_semantics = [#tpu.dimension_semantics<parallel>], iteration_bounds = array<i64: 1>, scalar_prefetch = 0 : i64, scratch_operands = 0 : i64, tpu.core_type = #tpu.core_type<tc>, window_params = [{pipeline_mode = #tpu.pipeline_mode<synchronous>, transform_indices = @transform_0, window_bounds = array<i64: 16, 24>}, {transform_indices = @transform_1, window_bounds = array<i64: 24, 32>}, {pipeline_mode = #tpu.pipeline_mode<synchronous>, transform_indices = @transform_2, window_bounds = array<i64: 16, 1>}, {transform_indices = @transform_3, window_bounds = array<i64: 16, 32>}]} {
    %c0 = arith.constant 0 : index
    %c0_0 = arith.constant 0 : index
    %0 = vector.load %arg1[%c0, %c0_0] : memref<16x24xf32, #tpu.memory_space<vmem>>, vector<16x24xf32>
    %c0_1 = arith.constant 0 : index
    %c0_2 = arith.constant 0 : index
    %1 = vector.load %arg2[%c0_1, %c0_2] : memref<24x32xf32, #tpu.memory_space<vmem>>, vector<24x32xf32>
    %cst = arith.constant dense<0.000000e+00> : vector<16x32xf32>
    %2 = tpu.matmul %0, %1, %cst {dimension_numbers = #tpu.dot_dimension_numbers<[1], [0], [0], [1], [0, 0, 1, 1], [], []>} : vector<16x24xf32>, vector<24x32xf32>, vector<16x32xf32> -> vector<16x32xf32>
    %c0_3 = arith.constant 0 : index
    %c0_4 = arith.constant 0 : index
    %3 = vector.load %arg3[%c0_3, %c0_4] : memref<16x1xf32, #tpu.memory_space<vmem>>, vector<16x1xf32>
    %4 = vector.broadcast %3 : vector<16x1xf32> to vector<16x32xf32>
    %5 = arith.addf %2, %4 : vector<16x32xf32>
    %c0_5 = arith.constant 0 : index
    %c0_6 = arith.constant 0 : index
    %6 = vector.load %arg4[%c0_5, %c0_6] : memref<16x32xf32, #tpu.memory_space<vmem>>, vector<16x32xf32>
    tpu.vector_store %arg4[%c0_5, %c0_6], %5 {strides = array<i32>} : memref<16x32xf32, #tpu.memory_space<vmem>>, vector<16x32xf32>,
    return
  }
  func.func @transform_0(%arg0: i32) -> (i32, i32) {
    %c0_i32 = arith.constant 0 : i32
    %c0_i32_0 = arith.constant 0 : i32
    %c0_i32_1 = arith.constant 0 : i32
    return %c0_i32, %c0_i32_0 : i32, i32
  }
  func.func @transform_1(%arg0: i32) -> (i32, i32) {
    %c0_i32 = arith.constant 0 : i32
    %c0_i32_0 = arith.constant 0 : i32
    return %c0_i32, %arg0 : i32, i32
  }
  func.func @transform_2(%arg0: i32) -> (i32, i32) {
    %c0_i32 = arith.constant 0 : i32
    %c0_i32_0 = arith.constant 0 : i32
    %c0_i32_1 = arith.constant 0 : i32
    return %c0_i32, %c0_i32_0 : i32, i32
  }
  func.func @transform_3(%arg0: i32) -> (i32, i32) {
    %c0_i32 = arith.constant 0 : i32
    %c0_i32_0 = arith.constant 0 : i32
    return %c0_i32, %arg0 : i32, i32
  }
}

module attributes {stable_mosaic.version = 11 : i64} {
  func.func @_wxb_kernel(%arg0: i32, %arg1: memref<16x16xf32, #tpu.memory_space<vmem>>, %arg2: memref<16x128xf32, #tpu.memory_space<vmem>>, %arg3: memref<16x1xf32, #tpu.memory_space<vmem>>, %arg4: memref<16x128xf32, #tpu.memory_space<vmem>>) attributes {dimension_semantics = [#tpu.dimension_semantics<parallel>], iteration_bounds = array<i64: 1>, scalar_prefetch = 0 : i64, scratch_operands = 0 : i64, tpu.core_type = #tpu.core_type<tc>, window_params = [{pipeline_mode = #tpu.pipeline_mode<synchronous>, transform_indices = @transform_0, window_bounds = array<i64: 16, 16>}, {transform_indices = @transform_1, window_bounds = array<i64: 16, 128>}, {pipeline_mode = #tpu.pipeline_mode<synchronous>, transform_indices = @transform_2, window_bounds = array<i64: 16, 1>}, {transform_indices = @transform_3, window_bounds = array<i64: 16, 128>}]} {
    %c0 = arith.constant 0 : index
    %c0_0 = arith.constant 0 : index
    %0 = vector.load %arg1[%c0, %c0_0] : memref<16x16xf32, #tpu.memory_space<vmem>>, vector<16x16xf32>
    %c0_1 = arith.constant 0 : index
    %c0_2 = arith.constant 0 : index
    %1 = vector.load %arg2[%c0_1, %c0_2] : memref<16x128xf32, #tpu.memory_space<vmem>>, vector<16x128xf32>
    %cst = arith.constant dense<0.000000e+00> : vector<16x128xf32>
    %2 = tpu.matmul %0, %1, %cst {dimension_numbers = #tpu.dot_dimension_numbers<[1], [0], [0], [1], [0, 0, 1, 1], [], []>} : vector<16x16xf32>, vector<16x128xf32>, vector<16x128xf32> -> vector<16x128xf32>
    %c0_3 = arith.constant 0 : index
    %c0_4 = arith.constant 0 : index
    %3 = vector.load %arg3[%c0_3, %c0_4] : memref<16x1xf32, #tpu.memory_space<vmem>>, vector<16x1xf32>
    %4 = vector.broadcast %3 : vector<16x1xf32> to vector<16x128xf32>
    %5 = arith.addf %2, %4 : vector<16x128xf32>
    %c0_5 = arith.constant 0 : index
    %c0_6 = arith.constant 0 : index
    %6 = vector.load %arg4[%c0_5, %c0_6] : memref<16x128xf32, #tpu.memory_space<vmem>>, vector<16x128xf32>
    tpu.vector_store %arg4[%c0_5, %c0_6], %5 {strides = array<i32>} : memref<16x128xf32, #tpu.memory_space<vmem>>, vector<16x128xf32>,
    return
  }
  func.func @transform_0(%arg0: i32) -> (i32, i32) {
    %c0_i32 = arith.constant 0 : i32
    %c0_i32_0 = arith.constant 0 : i32
    %c0_i32_1 = arith.constant 0 : i32
    return %c0_i32, %c0_i32_0 : i32, i32
  }
  func.func @transform_1(%arg0: i32) -> (i32, i32) {
    %c0_i32 = arith.constant 0 : i32
    %c0_i32_0 = arith.constant 0 : i32
    return %c0_i32, %arg0 : i32, i32
  }
  func.func @transform_2(%arg0: i32) -> (i32, i32) {
    %c0_i32 = arith.constant 0 : i32
    %c0_i32_0 = arith.constant 0 : i32
    %c0_i32_1 = arith.constant 0 : i32
    return %c0_i32, %c0_i32_0 : i32, i32
  }
  func.func @transform_3(%arg0: i32) -> (i32, i32) {
    %c0_i32 = arith.constant 0 : i32
    %c0_i32_0 = arith.constant 0 : i32
    return %c0_i32, %arg0 : i32, i32
  }
}

module attributes {stable_mosaic.version = 11 : i64} {
  func.func @_ppm_kernel(%arg0: i32, %arg1: memref<32x32xf32, #tpu.memory_space<vmem>>, %arg2: memref<1x32x32xf32, #tpu.memory_space<vmem>>, %arg3: memref<1x16x32xf32, #tpu.memory_space<vmem>>, %arg4: memref<1x16x1xf32, #tpu.memory_space<vmem>>, %arg5: memref<16x32xf32, #tpu.memory_space<vmem>>) attributes {dimension_semantics = [#tpu.dimension_semantics<parallel>], iteration_bounds = array<i64: 4>, scalar_prefetch = 0 : i64, scratch_operands = 0 : i64, tpu.core_type = #tpu.core_type<tc>, window_params = [{pipeline_mode = #tpu.pipeline_mode<synchronous>, transform_indices = @transform_0, window_bounds = array<i64: 32, 32>}, {transform_indices = @transform_1, window_bounds = array<i64: 1, 32, 32>}, {transform_indices = @transform_2, window_bounds = array<i64: 1, 16, 32>}, {transform_indices = @transform_3, window_bounds = array<i64: 1, 16, 1>}, {transform_indices = @transform_4, window_bounds = array<i64: 16, 32>}]} {
    %c0 = arith.constant 0 : index
    %c0_0 = arith.constant 0 : index
    %0 = vector.load %arg1[%c0, %c0_0] : memref<32x32xf32, #tpu.memory_space<vmem>>, vector<32x32xf32>
    %c0_1 = arith.constant 0 : index
    %c0_2 = arith.constant 0 : index
    %c0_3 = arith.constant 0 : index
    %1 = vector.load %arg2[%c0_1, %c0_2, %c0_3] : memref<1x32x32xf32, #tpu.memory_space<vmem>>, vector<1x32x32xf32>
    %2 = vector.shape_cast %1 : vector<1x32x32xf32> to vector<32x32xf32>
    %cst = arith.constant dense<0.000000e+00> : vector<32x32xf32>
    %3 = tpu.matmul %0, %2, %cst {dimension_numbers = #tpu.dot_dimension_numbers<[1], [0], [0], [1], [0, 0, 1, 1], [], []>} : vector<32x32xf32>, vector<32x32xf32>, vector<32x32xf32> -> vector<32x32xf32>
    %c0_4 = arith.constant 0 : index
    %c0_5 = arith.constant 0 : index
    %c0_6 = arith.constant 0 : index
    %4 = vector.load %arg3[%c0_4, %c0_5, %c0_6] : memref<1x16x32xf32, #tpu.memory_space<vmem>>, vector<1x16x32xf32>
    %5 = vector.shape_cast %4 : vector<1x16x32xf32> to vector<16x32xf32>
    %cst_7 = arith.constant dense<0.000000e+00> : vector<16x32xf32>
    %6 = tpu.matmul %5, %3, %cst_7 {dimension_numbers = #tpu.dot_dimension_numbers<[1], [0], [0], [1], [0, 0, 1, 1], [], []>} : vector<16x32xf32>, vector<32x32xf32>, vector<16x32xf32> -> vector<16x32xf32>
    %c0_8 = arith.constant 0 : index
    %c0_9 = arith.constant 0 : index
    %c0_10 = arith.constant 0 : index
    %7 = vector.load %arg4[%c0_8, %c0_9, %c0_10] : memref<1x16x1xf32, #tpu.memory_space<vmem>>, vector<1x16x1xf32>
    %8 = vector.shape_cast %7 : vector<1x16x1xf32> to vector<16x1xf32>
    %9 = vector.broadcast %8 : vector<16x1xf32> to vector<16x32xf32>
    %10 = arith.addf %6, %9 : vector<16x32xf32>
    %c0_11 = arith.constant 0 : index
    %c0_12 = arith.constant 0 : index
    %11 = vector.load %arg5[%c0_11, %c0_12] : memref<16x32xf32, #tpu.memory_space<vmem>>, vector<16x32xf32>
    tpu.vector_store %arg5[%c0_11, %c0_12], %10 {strides = array<i32>} : memref<16x32xf32, #tpu.memory_space<vmem>>, vector<16x32xf32>,
    return
  }
  func.func @transform_0(%arg0: i32) -> (i32, i32) {
    %c0_i32 = arith.constant 0 : i32
    %c0_i32_0 = arith.constant 0 : i32
    %c0_i32_1 = arith.constant 0 : i32
    return %c0_i32, %c0_i32_0 : i32, i32
  }
  func.func @transform_1(%arg0: i32) -> (i32, i32, i32) {
    %c0_i32 = arith.constant 0 : i32
    %c0_i32_0 = arith.constant 0 : i32
    %c0_i32_1 = arith.constant 0 : i32
    return %arg0, %c0_i32, %c0_i32_0 : i32, i32, i32
  }
  func.func @transform_2(%arg0: i32) -> (i32, i32, i32) {
    %c0_i32 = arith.constant 0 : i32
    %c0_i32_0 = arith.constant 0 : i32
    %c0_i32_1 = arith.constant 0 : i32
    return %arg0, %c0_i32, %c0_i32_0 : i32, i32, i32
  }
  func.func @transform_3(%arg0: i32) -> (i32, i32, i32) {
    %c0_i32 = arith.constant 0 : i32
    %c0_i32_0 = arith.constant 0 : i32
    %c0_i32_1 = arith.constant 0 : i32
    return %arg0, %c0_i32, %c0_i32_0 : i32, i32, i32
  }
  func.func @transform_4(%arg0: i32) -> (i32, i32) {
    %c0_i32 = arith.constant 0 : i32
    %c0_i32_0 = arith.constant 0 : i32
    return %arg0, %c0_i32 : i32, i32
  }
}

module attributes {stable_mosaic.version = 11 : i64} {
  func.func @_conv3x3_kernel(%arg0: i32, %arg1: memref<96x86xf32, #tpu.memory_space<vmem>>, %arg2: memref<9x16x96xf32, #tpu.memory_space<vmem>>, %arg3: memref<16x1xf32, #tpu.memory_space<vmem>>, %arg4: memref<16x72xf32, #tpu.memory_space<vmem>>) attributes {dimension_semantics = [#tpu.dimension_semantics<arbitrary>], iteration_bounds = array<i64: 1>, scalar_prefetch = 0 : i64, scratch_operands = 0 : i64, tpu.core_type = #tpu.core_type<tc>, window_params = [{pipeline_mode = #tpu.pipeline_mode<synchronous>, transform_indices = @transform_0, window_bounds = array<i64: 96, 86>}, {pipeline_mode = #tpu.pipeline_mode<synchronous>, transform_indices = @transform_1, window_bounds = array<i64: 9, 16, 96>}, {pipeline_mode = #tpu.pipeline_mode<synchronous>, transform_indices = @transform_2, window_bounds = array<i64: 16, 1>}, {pipeline_mode = #tpu.pipeline_mode<synchronous>, transform_indices = @transform_3, window_bounds = array<i64: 16, 72>}]} {
    %cst = arith.constant 0.000000e+00 : f32
    %0 = vector.broadcast %cst : f32 to vector<16x72xf32>
    %c0 = arith.constant 0 : index
    %c0_0 = arith.constant 0 : index
    %1 = vector.load %arg1[%c0, %c0_0] : memref<96x86xf32, #tpu.memory_space<vmem>>, vector<96x72xf32>
    %c0_1 = arith.constant 0 : index
    %c0_2 = arith.constant 0 : index
    %c0_3 = arith.constant 0 : index
    %2 = vector.load %arg2[%c0_1, %c0_2, %c0_3] : memref<9x16x96xf32, #tpu.memory_space<vmem>>, vector<1x16x96xf32>
    %3 = vector.shape_cast %2 : vector<1x16x96xf32> to vector<16x96xf32>
    %cst_4 = arith.constant dense<0.000000e+00> : vector<16x72xf32>
    %4 = tpu.matmul %3, %1, %cst_4 {dimension_numbers = #tpu.dot_dimension_numbers<[1], [0], [0], [1], [0, 0, 1, 1], [], []>} : vector<16x96xf32>, vector<96x72xf32>, vector<16x72xf32> -> vector<16x72xf32>
    %5 = arith.addf %0, %4 : vector<16x72xf32>
    %c0_5 = arith.constant 0 : index
    %c1 = arith.constant 1 : index
    %6 = vector.load %arg1[%c0_5, %c1] : memref<96x86xf32, #tpu.memory_space<vmem>>, vector<96x72xf32>
    %c1_6 = arith.constant 1 : index
    %c0_7 = arith.constant 0 : index
    %c0_8 = arith.constant 0 : index
    %7 = vector.load %arg2[%c1_6, %c0_7, %c0_8] : memref<9x16x96xf32, #tpu.memory_space<vmem>>, vector<1x16x96xf32>
    %8 = vector.shape_cast %7 : vector<1x16x96xf32> to vector<16x96xf32>
    %cst_9 = arith.constant dense<0.000000e+00> : vector<16x72xf32>
    %9 = tpu.matmul %8, %6, %cst_9 {dimension_numbers = #tpu.dot_dimension_numbers<[1], [0], [0], [1], [0, 0, 1, 1], [], []>} : vector<16x96xf32>, vector<96x72xf32>, vector<16x72xf32> -> vector<16x72xf32>
    %10 = arith.addf %5, %9 : vector<16x72xf32>
    %c0_10 = arith.constant 0 : index
    %c2 = arith.constant 2 : index
    %11 = vector.load %arg1[%c0_10, %c2] : memref<96x86xf32, #tpu.memory_space<vmem>>, vector<96x72xf32>
    %c2_11 = arith.constant 2 : index
    %c0_12 = arith.constant 0 : index
    %c0_13 = arith.constant 0 : index
    %12 = vector.load %arg2[%c2_11, %c0_12, %c0_13] : memref<9x16x96xf32, #tpu.memory_space<vmem>>, vector<1x16x96xf32>
    %13 = vector.shape_cast %12 : vector<1x16x96xf32> to vector<16x96xf32>
    %cst_14 = arith.constant dense<0.000000e+00> : vector<16x72xf32>
    %14 = tpu.matmul %13, %11, %cst_14 {dimension_numbers = #tpu.dot_dimension_numbers<[1], [0], [0], [1], [0, 0, 1, 1], [], []>} : vector<16x96xf32>, vector<96x72xf32>, vector<16x72xf32> -> vector<16x72xf32>
    %15 = arith.addf %10, %14 : vector<16x72xf32>
    %c0_15 = arith.constant 0 : index
    %c6 = arith.constant 6 : index
    %16 = vector.load %arg1[%c0_15, %c6] : memref<96x86xf32, #tpu.memory_space<vmem>>, vector<96x72xf32>
    %c3 = arith.constant 3 : index
    %c0_16 = arith.constant 0 : index
    %c0_17 = arith.constant 0 : index
    %17 = vector.load %arg2[%c3, %c0_16, %c0_17] : memref<9x16x96xf32, #tpu.memory_space<vmem>>, vector<1x16x96xf32>
    %18 = vector.shape_cast %17 : vector<1x16x96xf32> to vector<16x96xf32>
    %cst_18 = arith.constant dense<0.000000e+00> : vector<16x72xf32>
    %19 = tpu.matmul %18, %16, %cst_18 {dimension_numbers = #tpu.dot_dimension_numbers<[1], [0], [0], [1], [0, 0, 1, 1], [], []>} : vector<16x96xf32>, vector<96x72xf32>, vector<16x72xf32> -> vector<16x72xf32>
    %20 = arith.addf %15, %19 : vector<16x72xf32>
    %c0_19 = arith.constant 0 : index
    %c7 = arith.constant 7 : index
    %21 = vector.load %arg1[%c0_19, %c7] : memref<96x86xf32, #tpu.memory_space<vmem>>, vector<96x72xf32>
    %c4 = arith.constant 4 : index
    %c0_20 = arith.constant 0 : index
    %c0_21 = arith.constant 0 : index
    %22 = vector.load %arg2[%c4, %c0_20, %c0_21] : memref<9x16x96xf32, #tpu.memory_space<vmem>>, vector<1x16x96xf32>
    %23 = vector.shape_cast %22 : vector<1x16x96xf32> to vector<16x96xf32>
    %cst_22 = arith.constant dense<0.000000e+00> : vector<16x72xf32>
    %24 = tpu.matmul %23, %21, %cst_22 {dimension_numbers = #tpu.dot_dimension_numbers<[1], [0], [0], [1], [0, 0, 1, 1], [], []>} : vector<16x96xf32>, vector<96x72xf32>, vector<16x72xf32> -> vector<16x72xf32>
    %25 = arith.addf %20, %24 : vector<16x72xf32>
    %c0_23 = arith.constant 0 : index
    %c8 = arith.constant 8 : index
    %26 = vector.load %arg1[%c0_23, %c8] : memref<96x86xf32, #tpu.memory_space<vmem>>, vector<96x72xf32>
    %c5 = arith.constant 5 : index
    %c0_24 = arith.constant 0 : index
    %c0_25 = arith.constant 0 : index
    %27 = vector.load %arg2[%c5, %c0_24, %c0_25] : memref<9x16x96xf32, #tpu.memory_space<vmem>>, vector<1x16x96xf32>
    %28 = vector.shape_cast %27 : vector<1x16x96xf32> to vector<16x96xf32>
    %cst_26 = arith.constant dense<0.000000e+00> : vector<16x72xf32>
    %29 = tpu.matmul %28, %26, %cst_26 {dimension_numbers = #tpu.dot_dimension_numbers<[1], [0], [0], [1], [0, 0, 1, 1], [], []>} : vector<16x96xf32>, vector<96x72xf32>, vector<16x72xf32> -> vector<16x72xf32>
    %30 = arith.addf %25, %29 : vector<16x72xf32>
    %c0_27 = arith.constant 0 : index
    %c12 = arith.constant 12 : index
    %31 = vector.load %arg1[%c0_27, %c12] : memref<96x86xf32, #tpu.memory_space<vmem>>, vector<96x72xf32>
    %c6_28 = arith.constant 6 : index
    %c0_29 = arith.constant 0 : index
    %c0_30 = arith.constant 0 : index
    %32 = vector.load %arg2[%c6_28, %c0_29, %c0_30] : memref<9x16x96xf32, #tpu.memory_space<vmem>>, vector<1x16x96xf32>
    %33 = vector.shape_cast %32 : vector<1x16x96xf32> to vector<16x96xf32>
    %cst_31 = arith.constant dense<0.000000e+00> : vector<16x72xf32>
    %34 = tpu.matmul %33, %31, %cst_31 {dimension_numbers = #tpu.dot_dimension_numbers<[1], [0], [0], [1], [0, 0, 1, 1], [], []>} : vector<16x96xf32>, vector<96x72xf32>, vector<16x72xf32> -> vector<16x72xf32>
    %35 = arith.addf %30, %34 : vector<16x72xf32>
    %c0_32 = arith.constant 0 : index
    %c13 = arith.constant 13 : index
    %36 = vector.load %arg1[%c0_32, %c13] : memref<96x86xf32, #tpu.memory_space<vmem>>, vector<96x72xf32>
    %c7_33 = arith.constant 7 : index
    %c0_34 = arith.constant 0 : index
    %c0_35 = arith.constant 0 : index
    %37 = vector.load %arg2[%c7_33, %c0_34, %c0_35] : memref<9x16x96xf32, #tpu.memory_space<vmem>>, vector<1x16x96xf32>
    %38 = vector.shape_cast %37 : vector<1x16x96xf32> to vector<16x96xf32>
    %cst_36 = arith.constant dense<0.000000e+00> : vector<16x72xf32>
    %39 = tpu.matmul %38, %36, %cst_36 {dimension_numbers = #tpu.dot_dimension_numbers<[1], [0], [0], [1], [0, 0, 1, 1], [], []>} : vector<16x96xf32>, vector<96x72xf32>, vector<16x72xf32> -> vector<16x72xf32>
    %40 = arith.addf %35, %39 : vector<16x72xf32>
    %c0_37 = arith.constant 0 : index
    %c14 = arith.constant 14 : index
    %41 = vector.load %arg1[%c0_37, %c14] : memref<96x86xf32, #tpu.memory_space<vmem>>, vector<96x72xf32>
    %c8_38 = arith.constant 8 : index
    %c0_39 = arith.constant 0 : index
    %c0_40 = arith.constant 0 : index
    %42 = vector.load %arg2[%c8_38, %c0_39, %c0_40] : memref<9x16x96xf32, #tpu.memory_space<vmem>>, vector<1x16x96xf32>
    %43 = vector.shape_cast %42 : vector<1x16x96xf32> to vector<16x96xf32>
    %cst_41 = arith.constant dense<0.000000e+00> : vector<16x72xf32>
    %44 = tpu.matmul %43, %41, %cst_41 {dimension_numbers = #tpu.dot_dimension_numbers<[1], [0], [0], [1], [0, 0, 1, 1], [], []>} : vector<16x96xf32>, vector<96x72xf32>, vector<16x72xf32> -> vector<16x72xf32>
    %45 = arith.addf %40, %44 : vector<16x72xf32>
    %c0_42 = arith.constant 0 : index
    %c0_43 = arith.constant 0 : index
    %46 = vector.load %arg3[%c0_42, %c0_43] : memref<16x1xf32, #tpu.memory_space<vmem>>, vector<16x1xf32>
    %47 = vector.broadcast %46 : vector<16x1xf32> to vector<16x72xf32>
    %48 = arith.addf %45, %47 : vector<16x72xf32>
    %c0_44 = arith.constant 0 : index
    %c0_45 = arith.constant 0 : index
    %49 = vector.load %arg4[%c0_44, %c0_45] : memref<16x72xf32, #tpu.memory_space<vmem>>, vector<16x72xf32>
    tpu.vector_store %arg4[%c0_44, %c0_45], %48 {strides = array<i32>} : memref<16x72xf32, #tpu.memory_space<vmem>>, vector<16x72xf32>,
    return
  }
  func.func @transform_0(%arg0: i32) -> (i32, i32) {
    %c0_i32 = arith.constant 0 : i32
    %c0_i32_0 = arith.constant 0 : i32
    %c0_i32_1 = arith.constant 0 : i32
    return %c0_i32, %c0_i32_0 : i32, i32
  }
  func.func @transform_1(%arg0: i32) -> (i32, i32, i32) {
    %c0_i32 = arith.constant 0 : i32
    %c0_i32_0 = arith.constant 0 : i32
    %c0_i32_1 = arith.constant 0 : i32
    %c0_i32_2 = arith.constant 0 : i32
    return %c0_i32, %c0_i32_0, %c0_i32_1 : i32, i32, i32
  }
  func.func @transform_2(%arg0: i32) -> (i32, i32) {
    %c0_i32 = arith.constant 0 : i32
    %c0_i32_0 = arith.constant 0 : i32
    %c0_i32_1 = arith.constant 0 : i32
    return %c0_i32, %c0_i32_0 : i32, i32
  }
  func.func @transform_3(%arg0: i32) -> (i32, i32) {
    %c0_i32 = arith.constant 0 : i32
    %c0_i32_0 = arith.constant 0 : i32
    %c0_i32_1 = arith.constant 0 : i32
    return %c0_i32, %c0_i32_0 : i32, i32
  }
}

module attributes {stable_mosaic.version = 11 : i64} {
  func.func @_xop_add_kernel(%arg0: i32, %arg1: memref<16x32xf32, #tpu.memory_space<vmem>>, %arg2: memref<32x128xf32, #tpu.memory_space<vmem>>, %arg3: memref<16x128xf32, #tpu.memory_space<vmem>>, %arg4: memref<16x128xf32, #tpu.memory_space<vmem>>) attributes {dimension_semantics = [#tpu.dimension_semantics<parallel>], iteration_bounds = array<i64: 1>, scalar_prefetch = 0 : i64, scratch_operands = 0 : i64, tpu.core_type = #tpu.core_type<tc>, window_params = [{pipeline_mode = #tpu.pipeline_mode<synchronous>, transform_indices = @transform_0, window_bounds = array<i64: 16, 32>}, {transform_indices = @transform_1, window_bounds = array<i64: 32, 128>}, {transform_indices = @transform_2, window_bounds = array<i64: 16, 128>}, {transform_indices = @transform_3, window_bounds = array<i64: 16, 128>}]} {
    %c0 = arith.constant 0 : index
    %c0_0 = arith.constant 0 : index
    %0 = vector.load %arg3[%c0, %c0_0] : memref<16x128xf32, #tpu.memory_space<vmem>>, vector<16x128xf32>
    %c0_1 = arith.constant 0 : index
    %c0_2 = arith.constant 0 : index
    %1 = vector.load %arg1[%c0_1, %c0_2] : memref<16x32xf32, #tpu.memory_space<vmem>>, vector<16x32xf32>
    %c0_3 = arith.constant 0 : index
    %c0_4 = arith.constant 0 : index
    %2 = vector.load %arg2[%c0_3, %c0_4] : memref<32x128xf32, #tpu.memory_space<vmem>>, vector<32x128xf32>
    %cst = arith.constant dense<0.000000e+00> : vector<16x128xf32>
    %3 = tpu.matmul %1, %2, %cst {dimension_numbers = #tpu.dot_dimension_numbers<[1], [0], [0], [1], [0, 0, 1, 1], [], []>} : vector<16x32xf32>, vector<32x128xf32>, vector<16x128xf32> -> vector<16x128xf32>
    %4 = arith.addf %0, %3 : vector<16x128xf32>
    %c0_5 = arith.constant 0 : index
    %c0_6 = arith.constant 0 : index
    %5 = vector.load %arg4[%c0_5, %c0_6] : memref<16x128xf32, #tpu.memory_space<vmem>>, vector<16x128xf32>
    tpu.vector_store %arg4[%c0_5, %c0_6], %4 {strides = array<i32>} : memref<16x128xf32, #tpu.memory_space<vmem>>, vector<16x128xf32>,
    return
  }
  func.func @transform_0(%arg0: i32) -> (i32, i32) {
    %c0_i32 = arith.constant 0 : i32
    %c0_i32_0 = arith.constant 0 : i32
    %c0_i32_1 = arith.constant 0 : i32
    return %c0_i32, %c0_i32_0 : i32, i32
  }
  func.func @transform_1(%arg0: i32) -> (i32, i32) {
    %c0_i32 = arith.constant 0 : i32
    %c0_i32_0 = arith.constant 0 : i32
    return %c0_i32, %arg0 : i32, i32
  }
  func.func @transform_2(%arg0: i32) -> (i32, i32) {
    %c0_i32 = arith.constant 0 : i32
    %c0_i32_0 = arith.constant 0 : i32
    return %c0_i32, %arg0 : i32, i32
  }
  func.func @transform_3(%arg0: i32) -> (i32, i32) {
    %c0_i32 = arith.constant 0 : i32
    %c0_i32_0 = arith.constant 0 : i32
    return %c0_i32, %arg0 : i32, i32
  }
}

module attributes {stable_mosaic.version = 11 : i64} {
  func.func @_conv3x3_kernel(%arg0: i32, %arg1: memref<16x86xf32, #tpu.memory_space<vmem>>, %arg2: memref<9x16x16xf32, #tpu.memory_space<vmem>>, %arg3: memref<16x1xf32, #tpu.memory_space<vmem>>, %arg4: memref<16x72xf32, #tpu.memory_space<vmem>>) attributes {dimension_semantics = [#tpu.dimension_semantics<arbitrary>], iteration_bounds = array<i64: 1>, scalar_prefetch = 0 : i64, scratch_operands = 0 : i64, tpu.core_type = #tpu.core_type<tc>, window_params = [{pipeline_mode = #tpu.pipeline_mode<synchronous>, transform_indices = @transform_0, window_bounds = array<i64: 16, 86>}, {pipeline_mode = #tpu.pipeline_mode<synchronous>, transform_indices = @transform_1, window_bounds = array<i64: 9, 16, 16>}, {pipeline_mode = #tpu.pipeline_mode<synchronous>, transform_indices = @transform_2, window_bounds = array<i64: 16, 1>}, {pipeline_mode = #tpu.pipeline_mode<synchronous>, transform_indices = @transform_3, window_bounds = array<i64: 16, 72>}]} {
    %cst = arith.constant 0.000000e+00 : f32
    %0 = vector.broadcast %cst : f32 to vector<16x72xf32>
    %c0 = arith.constant 0 : index
    %c0_0 = arith.constant 0 : index
    %1 = vector.load %arg1[%c0, %c0_0] : memref<16x86xf32, #tpu.memory_space<vmem>>, vector<16x72xf32>
    %c0_1 = arith.constant 0 : index
    %c0_2 = arith.constant 0 : index
    %c0_3 = arith.constant 0 : index
    %2 = vector.load %arg2[%c0_1, %c0_2, %c0_3] : memref<9x16x16xf32, #tpu.memory_space<vmem>>, vector<1x16x16xf32>
    %3 = vector.shape_cast %2 : vector<1x16x16xf32> to vector<16x16xf32>
    %cst_4 = arith.constant dense<0.000000e+00> : vector<16x72xf32>
    %4 = tpu.matmul %3, %1, %cst_4 {dimension_numbers = #tpu.dot_dimension_numbers<[1], [0], [0], [1], [0, 0, 1, 1], [], []>} : vector<16x16xf32>, vector<16x72xf32>, vector<16x72xf32> -> vector<16x72xf32>
    %5 = arith.addf %0, %4 : vector<16x72xf32>
    %c0_5 = arith.constant 0 : index
    %c1 = arith.constant 1 : index
    %6 = vector.load %arg1[%c0_5, %c1] : memref<16x86xf32, #tpu.memory_space<vmem>>, vector<16x72xf32>
    %c1_6 = arith.constant 1 : index
    %c0_7 = arith.constant 0 : index
    %c0_8 = arith.constant 0 : index
    %7 = vector.load %arg2[%c1_6, %c0_7, %c0_8] : memref<9x16x16xf32, #tpu.memory_space<vmem>>, vector<1x16x16xf32>
    %8 = vector.shape_cast %7 : vector<1x16x16xf32> to vector<16x16xf32>
    %cst_9 = arith.constant dense<0.000000e+00> : vector<16x72xf32>
    %9 = tpu.matmul %8, %6, %cst_9 {dimension_numbers = #tpu.dot_dimension_numbers<[1], [0], [0], [1], [0, 0, 1, 1], [], []>} : vector<16x16xf32>, vector<16x72xf32>, vector<16x72xf32> -> vector<16x72xf32>
    %10 = arith.addf %5, %9 : vector<16x72xf32>
    %c0_10 = arith.constant 0 : index
    %c2 = arith.constant 2 : index
    %11 = vector.load %arg1[%c0_10, %c2] : memref<16x86xf32, #tpu.memory_space<vmem>>, vector<16x72xf32>
    %c2_11 = arith.constant 2 : index
    %c0_12 = arith.constant 0 : index
    %c0_13 = arith.constant 0 : index
    %12 = vector.load %arg2[%c2_11, %c0_12, %c0_13] : memref<9x16x16xf32, #tpu.memory_space<vmem>>, vector<1x16x16xf32>
    %13 = vector.shape_cast %12 : vector<1x16x16xf32> to vector<16x16xf32>
    %cst_14 = arith.constant dense<0.000000e+00> : vector<16x72xf32>
    %14 = tpu.matmul %13, %11, %cst_14 {dimension_numbers = #tpu.dot_dimension_numbers<[1], [0], [0], [1], [0, 0, 1, 1], [], []>} : vector<16x16xf32>, vector<16x72xf32>, vector<16x72xf32> -> vector<16x72xf32>
    %15 = arith.addf %10, %14 : vector<16x72xf32>
    %c0_15 = arith.constant 0 : index
    %c6 = arith.constant 6 : index
    %16 = vector.load %arg1[%c0_15, %c6] : memref<16x86xf32, #tpu.memory_space<vmem>>, vector<16x72xf32>
    %c3 = arith.constant 3 : index
    %c0_16 = arith.constant 0 : index
    %c0_17 = arith.constant 0 : index
    %17 = vector.load %arg2[%c3, %c0_16, %c0_17] : memref<9x16x16xf32, #tpu.memory_space<vmem>>, vector<1x16x16xf32>
    %18 = vector.shape_cast %17 : vector<1x16x16xf32> to vector<16x16xf32>
    %cst_18 = arith.constant dense<0.000000e+00> : vector<16x72xf32>
    %19 = tpu.matmul %18, %16, %cst_18 {dimension_numbers = #tpu.dot_dimension_numbers<[1], [0], [0], [1], [0, 0, 1, 1], [], []>} : vector<16x16xf32>, vector<16x72xf32>, vector<16x72xf32> -> vector<16x72xf32>
    %20 = arith.addf %15, %19 : vector<16x72xf32>
    %c0_19 = arith.constant 0 : index
    %c7 = arith.constant 7 : index
    %21 = vector.load %arg1[%c0_19, %c7] : memref<16x86xf32, #tpu.memory_space<vmem>>, vector<16x72xf32>
    %c4 = arith.constant 4 : index
    %c0_20 = arith.constant 0 : index
    %c0_21 = arith.constant 0 : index
    %22 = vector.load %arg2[%c4, %c0_20, %c0_21] : memref<9x16x16xf32, #tpu.memory_space<vmem>>, vector<1x16x16xf32>
    %23 = vector.shape_cast %22 : vector<1x16x16xf32> to vector<16x16xf32>
    %cst_22 = arith.constant dense<0.000000e+00> : vector<16x72xf32>
    %24 = tpu.matmul %23, %21, %cst_22 {dimension_numbers = #tpu.dot_dimension_numbers<[1], [0], [0], [1], [0, 0, 1, 1], [], []>} : vector<16x16xf32>, vector<16x72xf32>, vector<16x72xf32> -> vector<16x72xf32>
    %25 = arith.addf %20, %24 : vector<16x72xf32>
    %c0_23 = arith.constant 0 : index
    %c8 = arith.constant 8 : index
    %26 = vector.load %arg1[%c0_23, %c8] : memref<16x86xf32, #tpu.memory_space<vmem>>, vector<16x72xf32>
    %c5 = arith.constant 5 : index
    %c0_24 = arith.constant 0 : index
    %c0_25 = arith.constant 0 : index
    %27 = vector.load %arg2[%c5, %c0_24, %c0_25] : memref<9x16x16xf32, #tpu.memory_space<vmem>>, vector<1x16x16xf32>
    %28 = vector.shape_cast %27 : vector<1x16x16xf32> to vector<16x16xf32>
    %cst_26 = arith.constant dense<0.000000e+00> : vector<16x72xf32>
    %29 = tpu.matmul %28, %26, %cst_26 {dimension_numbers = #tpu.dot_dimension_numbers<[1], [0], [0], [1], [0, 0, 1, 1], [], []>} : vector<16x16xf32>, vector<16x72xf32>, vector<16x72xf32> -> vector<16x72xf32>
    %30 = arith.addf %25, %29 : vector<16x72xf32>
    %c0_27 = arith.constant 0 : index
    %c12 = arith.constant 12 : index
    %31 = vector.load %arg1[%c0_27, %c12] : memref<16x86xf32, #tpu.memory_space<vmem>>, vector<16x72xf32>
    %c6_28 = arith.constant 6 : index
    %c0_29 = arith.constant 0 : index
    %c0_30 = arith.constant 0 : index
    %32 = vector.load %arg2[%c6_28, %c0_29, %c0_30] : memref<9x16x16xf32, #tpu.memory_space<vmem>>, vector<1x16x16xf32>
    %33 = vector.shape_cast %32 : vector<1x16x16xf32> to vector<16x16xf32>
    %cst_31 = arith.constant dense<0.000000e+00> : vector<16x72xf32>
    %34 = tpu.matmul %33, %31, %cst_31 {dimension_numbers = #tpu.dot_dimension_numbers<[1], [0], [0], [1], [0, 0, 1, 1], [], []>} : vector<16x16xf32>, vector<16x72xf32>, vector<16x72xf32> -> vector<16x72xf32>
    %35 = arith.addf %30, %34 : vector<16x72xf32>
    %c0_32 = arith.constant 0 : index
    %c13 = arith.constant 13 : index
    %36 = vector.load %arg1[%c0_32, %c13] : memref<16x86xf32, #tpu.memory_space<vmem>>, vector<16x72xf32>
    %c7_33 = arith.constant 7 : index
    %c0_34 = arith.constant 0 : index
    %c0_35 = arith.constant 0 : index
    %37 = vector.load %arg2[%c7_33, %c0_34, %c0_35] : memref<9x16x16xf32, #tpu.memory_space<vmem>>, vector<1x16x16xf32>
    %38 = vector.shape_cast %37 : vector<1x16x16xf32> to vector<16x16xf32>
    %cst_36 = arith.constant dense<0.000000e+00> : vector<16x72xf32>
    %39 = tpu.matmul %38, %36, %cst_36 {dimension_numbers = #tpu.dot_dimension_numbers<[1], [0], [0], [1], [0, 0, 1, 1], [], []>} : vector<16x16xf32>, vector<16x72xf32>, vector<16x72xf32> -> vector<16x72xf32>
    %40 = arith.addf %35, %39 : vector<16x72xf32>
    %c0_37 = arith.constant 0 : index
    %c14 = arith.constant 14 : index
    %41 = vector.load %arg1[%c0_37, %c14] : memref<16x86xf32, #tpu.memory_space<vmem>>, vector<16x72xf32>
    %c8_38 = arith.constant 8 : index
    %c0_39 = arith.constant 0 : index
    %c0_40 = arith.constant 0 : index
    %42 = vector.load %arg2[%c8_38, %c0_39, %c0_40] : memref<9x16x16xf32, #tpu.memory_space<vmem>>, vector<1x16x16xf32>
    %43 = vector.shape_cast %42 : vector<1x16x16xf32> to vector<16x16xf32>
    %cst_41 = arith.constant dense<0.000000e+00> : vector<16x72xf32>
    %44 = tpu.matmul %43, %41, %cst_41 {dimension_numbers = #tpu.dot_dimension_numbers<[1], [0], [0], [1], [0, 0, 1, 1], [], []>} : vector<16x16xf32>, vector<16x72xf32>, vector<16x72xf32> -> vector<16x72xf32>
    %45 = arith.addf %40, %44 : vector<16x72xf32>
    %c0_42 = arith.constant 0 : index
    %c0_43 = arith.constant 0 : index
    %46 = vector.load %arg3[%c0_42, %c0_43] : memref<16x1xf32, #tpu.memory_space<vmem>>, vector<16x1xf32>
    %47 = vector.broadcast %46 : vector<16x1xf32> to vector<16x72xf32>
    %48 = arith.addf %45, %47 : vector<16x72xf32>
    %c0_44 = arith.constant 0 : index
    %c0_45 = arith.constant 0 : index
    %49 = vector.load %arg4[%c0_44, %c0_45] : memref<16x72xf32, #tpu.memory_space<vmem>>, vector<16x72xf32>
    tpu.vector_store %arg4[%c0_44, %c0_45], %48 {strides = array<i32>} : memref<16x72xf32, #tpu.memory_space<vmem>>, vector<16x72xf32>,
    return
  }
  func.func @transform_0(%arg0: i32) -> (i32, i32) {
    %c0_i32 = arith.constant 0 : i32
    %c0_i32_0 = arith.constant 0 : i32
    %c0_i32_1 = arith.constant 0 : i32
    return %c0_i32, %c0_i32_0 : i32, i32
  }
  func.func @transform_1(%arg0: i32) -> (i32, i32, i32) {
    %c0_i32 = arith.constant 0 : i32
    %c0_i32_0 = arith.constant 0 : i32
    %c0_i32_1 = arith.constant 0 : i32
    %c0_i32_2 = arith.constant 0 : i32
    return %c0_i32, %c0_i32_0, %c0_i32_1 : i32, i32, i32
  }
  func.func @transform_2(%arg0: i32) -> (i32, i32) {
    %c0_i32 = arith.constant 0 : i32
    %c0_i32_0 = arith.constant 0 : i32
    %c0_i32_1 = arith.constant 0 : i32
    return %c0_i32, %c0_i32_0 : i32, i32
  }
  func.func @transform_3(%arg0: i32) -> (i32, i32) {
    %c0_i32 = arith.constant 0 : i32
    %c0_i32_0 = arith.constant 0 : i32
    %c0_i32_1 = arith.constant 0 : i32
    return %c0_i32, %c0_i32_0 : i32, i32
  }
}

module attributes {stable_mosaic.version = 11 : i64} {
  func.func @_xop_kernel(%arg0: i32, %arg1: memref<32x32xf32, #tpu.memory_space<vmem>>, %arg2: memref<32x512xf32, #tpu.memory_space<vmem>>, %arg3: memref<32x512xf32, #tpu.memory_space<vmem>>) attributes {dimension_semantics = [#tpu.dimension_semantics<parallel>], iteration_bounds = array<i64: 1>, scalar_prefetch = 0 : i64, scratch_operands = 0 : i64, tpu.core_type = #tpu.core_type<tc>, window_params = [{pipeline_mode = #tpu.pipeline_mode<synchronous>, transform_indices = @transform_0, window_bounds = array<i64: 32, 32>}, {transform_indices = @transform_1, window_bounds = array<i64: 32, 512>}, {transform_indices = @transform_2, window_bounds = array<i64: 32, 512>}]} {
    %c0 = arith.constant 0 : index
    %c0_0 = arith.constant 0 : index
    %0 = vector.load %arg1[%c0, %c0_0] : memref<32x32xf32, #tpu.memory_space<vmem>>, vector<32x32xf32>
    %c0_1 = arith.constant 0 : index
    %c0_2 = arith.constant 0 : index
    %1 = vector.load %arg2[%c0_1, %c0_2] : memref<32x512xf32, #tpu.memory_space<vmem>>, vector<32x512xf32>
    %cst = arith.constant dense<0.000000e+00> : vector<32x512xf32>
    %2 = tpu.matmul %0, %1, %cst {dimension_numbers = #tpu.dot_dimension_numbers<[1], [0], [0], [1], [0, 0, 1, 1], [], []>} : vector<32x32xf32>, vector<32x512xf32>, vector<32x512xf32> -> vector<32x512xf32>
    %c0_3 = arith.constant 0 : index
    %c0_4 = arith.constant 0 : index
    %3 = vector.load %arg3[%c0_3, %c0_4] : memref<32x512xf32, #tpu.memory_space<vmem>>, vector<32x512xf32>
    tpu.vector_store %arg3[%c0_3, %c0_4], %2 {strides = array<i32>} : memref<32x512xf32, #tpu.memory_space<vmem>>, vector<32x512xf32>,
    return
  }
  func.func @transform_0(%arg0: i32) -> (i32, i32) {
    %c0_i32 = arith.constant 0 : i32
    %c0_i32_0 = arith.constant 0 : i32
    %c0_i32_1 = arith.constant 0 : i32
    return %c0_i32, %c0_i32_0 : i32, i32
  }
  func.func @transform_1(%arg0: i32) -> (i32, i32) {
    %c0_i32 = arith.constant 0 : i32
    %c0_i32_0 = arith.constant 0 : i32
    return %c0_i32, %arg0 : i32, i32
  }
  func.func @transform_2(%arg0: i32) -> (i32, i32) {
    %c0_i32 = arith.constant 0 : i32
    %c0_i32_0 = arith.constant 0 : i32
    return %c0_i32, %arg0 : i32, i32
  }
}

module attributes {stable_mosaic.version = 11 : i64} {
  func.func @_conv3x3_kernel(%arg0: i32, %arg1: memref<16x222xf32, #tpu.memory_space<vmem>>, %arg2: memref<9x16x16xf32, #tpu.memory_space<vmem>>, %arg3: memref<16x1xf32, #tpu.memory_space<vmem>>, %arg4: memref<16x200xf32, #tpu.memory_space<vmem>>) attributes {dimension_semantics = [#tpu.dimension_semantics<arbitrary>], iteration_bounds = array<i64: 1>, scalar_prefetch = 0 : i64, scratch_operands = 0 : i64, tpu.core_type = #tpu.core_type<tc>, window_params = [{pipeline_mode = #tpu.pipeline_mode<synchronous>, transform_indices = @transform_0, window_bounds = array<i64: 16, 222>}, {pipeline_mode = #tpu.pipeline_mode<synchronous>, transform_indices = @transform_1, window_bounds = array<i64: 9, 16, 16>}, {pipeline_mode = #tpu.pipeline_mode<synchronous>, transform_indices = @transform_2, window_bounds = array<i64: 16, 1>}, {pipeline_mode = #tpu.pipeline_mode<synchronous>, transform_indices = @transform_3, window_bounds = array<i64: 16, 200>}]} {
    %cst = arith.constant 0.000000e+00 : f32
    %0 = vector.broadcast %cst : f32 to vector<16x200xf32>
    %c0 = arith.constant 0 : index
    %c0_0 = arith.constant 0 : index
    %1 = vector.load %arg1[%c0, %c0_0] : memref<16x222xf32, #tpu.memory_space<vmem>>, vector<16x200xf32>
    %c0_1 = arith.constant 0 : index
    %c0_2 = arith.constant 0 : index
    %c0_3 = arith.constant 0 : index
    %2 = vector.load %arg2[%c0_1, %c0_2, %c0_3] : memref<9x16x16xf32, #tpu.memory_space<vmem>>, vector<1x16x16xf32>
    %3 = vector.shape_cast %2 : vector<1x16x16xf32> to vector<16x16xf32>
    %cst_4 = arith.constant dense<0.000000e+00> : vector<16x200xf32>
    %4 = tpu.matmul %3, %1, %cst_4 {dimension_numbers = #tpu.dot_dimension_numbers<[1], [0], [0], [1], [0, 0, 1, 1], [], []>} : vector<16x16xf32>, vector<16x200xf32>, vector<16x200xf32> -> vector<16x200xf32>
    %5 = arith.addf %0, %4 : vector<16x200xf32>
    %c0_5 = arith.constant 0 : index
    %c1 = arith.constant 1 : index
    %6 = vector.load %arg1[%c0_5, %c1] : memref<16x222xf32, #tpu.memory_space<vmem>>, vector<16x200xf32>
    %c1_6 = arith.constant 1 : index
    %c0_7 = arith.constant 0 : index
    %c0_8 = arith.constant 0 : index
    %7 = vector.load %arg2[%c1_6, %c0_7, %c0_8] : memref<9x16x16xf32, #tpu.memory_space<vmem>>, vector<1x16x16xf32>
    %8 = vector.shape_cast %7 : vector<1x16x16xf32> to vector<16x16xf32>
    %cst_9 = arith.constant dense<0.000000e+00> : vector<16x200xf32>
    %9 = tpu.matmul %8, %6, %cst_9 {dimension_numbers = #tpu.dot_dimension_numbers<[1], [0], [0], [1], [0, 0, 1, 1], [], []>} : vector<16x16xf32>, vector<16x200xf32>, vector<16x200xf32> -> vector<16x200xf32>
    %10 = arith.addf %5, %9 : vector<16x200xf32>
    %c0_10 = arith.constant 0 : index
    %c2 = arith.constant 2 : index
    %11 = vector.load %arg1[%c0_10, %c2] : memref<16x222xf32, #tpu.memory_space<vmem>>, vector<16x200xf32>
    %c2_11 = arith.constant 2 : index
    %c0_12 = arith.constant 0 : index
    %c0_13 = arith.constant 0 : index
    %12 = vector.load %arg2[%c2_11, %c0_12, %c0_13] : memref<9x16x16xf32, #tpu.memory_space<vmem>>, vector<1x16x16xf32>
    %13 = vector.shape_cast %12 : vector<1x16x16xf32> to vector<16x16xf32>
    %cst_14 = arith.constant dense<0.000000e+00> : vector<16x200xf32>
    %14 = tpu.matmul %13, %11, %cst_14 {dimension_numbers = #tpu.dot_dimension_numbers<[1], [0], [0], [1], [0, 0, 1, 1], [], []>} : vector<16x16xf32>, vector<16x200xf32>, vector<16x200xf32> -> vector<16x200xf32>
    %15 = arith.addf %10, %14 : vector<16x200xf32>
    %c0_15 = arith.constant 0 : index
    %c10 = arith.constant 10 : index
    %16 = vector.load %arg1[%c0_15, %c10] : memref<16x222xf32, #tpu.memory_space<vmem>>, vector<16x200xf32>
    %c3 = arith.constant 3 : index
    %c0_16 = arith.constant 0 : index
    %c0_17 = arith.constant 0 : index
    %17 = vector.load %arg2[%c3, %c0_16, %c0_17] : memref<9x16x16xf32, #tpu.memory_space<vmem>>, vector<1x16x16xf32>
    %18 = vector.shape_cast %17 : vector<1x16x16xf32> to vector<16x16xf32>
    %cst_18 = arith.constant dense<0.000000e+00> : vector<16x200xf32>
    %19 = tpu.matmul %18, %16, %cst_18 {dimension_numbers = #tpu.dot_dimension_numbers<[1], [0], [0], [1], [0, 0, 1, 1], [], []>} : vector<16x16xf32>, vector<16x200xf32>, vector<16x200xf32> -> vector<16x200xf32>
    %20 = arith.addf %15, %19 : vector<16x200xf32>
    %c0_19 = arith.constant 0 : index
    %c11 = arith.constant 11 : index
    %21 = vector.load %arg1[%c0_19, %c11] : memref<16x222xf32, #tpu.memory_space<vmem>>, vector<16x200xf32>
    %c4 = arith.constant 4 : index
    %c0_20 = arith.constant 0 : index
    %c0_21 = arith.constant 0 : index
    %22 = vector.load %arg2[%c4, %c0_20, %c0_21] : memref<9x16x16xf32, #tpu.memory_space<vmem>>, vector<1x16x16xf32>
    %23 = vector.shape_cast %22 : vector<1x16x16xf32> to vector<16x16xf32>
    %cst_22 = arith.constant dense<0.000000e+00> : vector<16x200xf32>
    %24 = tpu.matmul %23, %21, %cst_22 {dimension_numbers = #tpu.dot_dimension_numbers<[1], [0], [0], [1], [0, 0, 1, 1], [], []>} : vector<16x16xf32>, vector<16x200xf32>, vector<16x200xf32> -> vector<16x200xf32>
    %25 = arith.addf %20, %24 : vector<16x200xf32>
    %c0_23 = arith.constant 0 : index
    %c12 = arith.constant 12 : index
    %26 = vector.load %arg1[%c0_23, %c12] : memref<16x222xf32, #tpu.memory_space<vmem>>, vector<16x200xf32>
    %c5 = arith.constant 5 : index
    %c0_24 = arith.constant 0 : index
    %c0_25 = arith.constant 0 : index
    %27 = vector.load %arg2[%c5, %c0_24, %c0_25] : memref<9x16x16xf32, #tpu.memory_space<vmem>>, vector<1x16x16xf32>
    %28 = vector.shape_cast %27 : vector<1x16x16xf32> to vector<16x16xf32>
    %cst_26 = arith.constant dense<0.000000e+00> : vector<16x200xf32>
    %29 = tpu.matmul %28, %26, %cst_26 {dimension_numbers = #tpu.dot_dimension_numbers<[1], [0], [0], [1], [0, 0, 1, 1], [], []>} : vector<16x16xf32>, vector<16x200xf32>, vector<16x200xf32> -> vector<16x200xf32>
    %30 = arith.addf %25, %29 : vector<16x200xf32>
    %c0_27 = arith.constant 0 : index
    %c20 = arith.constant 20 : index
    %31 = vector.load %arg1[%c0_27, %c20] : memref<16x222xf32, #tpu.memory_space<vmem>>, vector<16x200xf32>
    %c6 = arith.constant 6 : index
    %c0_28 = arith.constant 0 : index
    %c0_29 = arith.constant 0 : index
    %32 = vector.load %arg2[%c6, %c0_28, %c0_29] : memref<9x16x16xf32, #tpu.memory_space<vmem>>, vector<1x16x16xf32>
    %33 = vector.shape_cast %32 : vector<1x16x16xf32> to vector<16x16xf32>
    %cst_30 = arith.constant dense<0.000000e+00> : vector<16x200xf32>
    %34 = tpu.matmul %33, %31, %cst_30 {dimension_numbers = #tpu.dot_dimension_numbers<[1], [0], [0], [1], [0, 0, 1, 1], [], []>} : vector<16x16xf32>, vector<16x200xf32>, vector<16x200xf32> -> vector<16x200xf32>
    %35 = arith.addf %30, %34 : vector<16x200xf32>
    %c0_31 = arith.constant 0 : index
    %c21 = arith.constant 21 : index
    %36 = vector.load %arg1[%c0_31, %c21] : memref<16x222xf32, #tpu.memory_space<vmem>>, vector<16x200xf32>
    %c7 = arith.constant 7 : index
    %c0_32 = arith.constant 0 : index
    %c0_33 = arith.constant 0 : index
    %37 = vector.load %arg2[%c7, %c0_32, %c0_33] : memref<9x16x16xf32, #tpu.memory_space<vmem>>, vector<1x16x16xf32>
    %38 = vector.shape_cast %37 : vector<1x16x16xf32> to vector<16x16xf32>
    %cst_34 = arith.constant dense<0.000000e+00> : vector<16x200xf32>
    %39 = tpu.matmul %38, %36, %cst_34 {dimension_numbers = #tpu.dot_dimension_numbers<[1], [0], [0], [1], [0, 0, 1, 1], [], []>} : vector<16x16xf32>, vector<16x200xf32>, vector<16x200xf32> -> vector<16x200xf32>
    %40 = arith.addf %35, %39 : vector<16x200xf32>
    %c0_35 = arith.constant 0 : index
    %c22 = arith.constant 22 : index
    %41 = vector.load %arg1[%c0_35, %c22] : memref<16x222xf32, #tpu.memory_space<vmem>>, vector<16x200xf32>
    %c8 = arith.constant 8 : index
    %c0_36 = arith.constant 0 : index
    %c0_37 = arith.constant 0 : index
    %42 = vector.load %arg2[%c8, %c0_36, %c0_37] : memref<9x16x16xf32, #tpu.memory_space<vmem>>, vector<1x16x16xf32>
    %43 = vector.shape_cast %42 : vector<1x16x16xf32> to vector<16x16xf32>
    %cst_38 = arith.constant dense<0.000000e+00> : vector<16x200xf32>
    %44 = tpu.matmul %43, %41, %cst_38 {dimension_numbers = #tpu.dot_dimension_numbers<[1], [0], [0], [1], [0, 0, 1, 1], [], []>} : vector<16x16xf32>, vector<16x200xf32>, vector<16x200xf32> -> vector<16x200xf32>
    %45 = arith.addf %40, %44 : vector<16x200xf32>
    %c0_39 = arith.constant 0 : index
    %c0_40 = arith.constant 0 : index
    %46 = vector.load %arg3[%c0_39, %c0_40] : memref<16x1xf32, #tpu.memory_space<vmem>>, vector<16x1xf32>
    %47 = vector.broadcast %46 : vector<16x1xf32> to vector<16x200xf32>
    %48 = arith.addf %45, %47 : vector<16x200xf32>
    %c0_41 = arith.constant 0 : index
    %c0_42 = arith.constant 0 : index
    %49 = vector.load %arg4[%c0_41, %c0_42] : memref<16x200xf32, #tpu.memory_space<vmem>>, vector<16x200xf32>
    tpu.vector_store %arg4[%c0_41, %c0_42], %48 {strides = array<i32>} : memref<16x200xf32, #tpu.memory_space<vmem>>, vector<16x200xf32>,
    return
  }
  func.func @transform_0(%arg0: i32) -> (i32, i32) {
    %c0_i32 = arith.constant 0 : i32
    %c0_i32_0 = arith.constant 0 : i32
    %c0_i32_1 = arith.constant 0 : i32
    return %c0_i32, %c0_i32_0 : i32, i32
  }
  func.func @transform_1(%arg0: i32) -> (i32, i32, i32) {
    %c0_i32 = arith.constant 0 : i32
    %c0_i32_0 = arith.constant 0 : i32
    %c0_i32_1 = arith.constant 0 : i32
    %c0_i32_2 = arith.constant 0 : i32
    return %c0_i32, %c0_i32_0, %c0_i32_1 : i32, i32, i32
  }
  func.func @transform_2(%arg0: i32) -> (i32, i32) {
    %c0_i32 = arith.constant 0 : i32
    %c0_i32_0 = arith.constant 0 : i32
    %c0_i32_1 = arith.constant 0 : i32
    return %c0_i32, %c0_i32_0 : i32, i32
  }
  func.func @transform_3(%arg0: i32) -> (i32, i32) {
    %c0_i32 = arith.constant 0 : i32
    %c0_i32_0 = arith.constant 0 : i32
    %c0_i32_1 = arith.constant 0 : i32
    return %c0_i32, %c0_i32_0 : i32, i32
  }
}

module attributes {stable_mosaic.version = 11 : i64} {
  func.func @_xop_kernel(%arg0: i32, %arg1: memref<16x128xf32, #tpu.memory_space<vmem>>, %arg2: memref<128x512xf32, #tpu.memory_space<vmem>>, %arg3: memref<16x512xf32, #tpu.memory_space<vmem>>) attributes {dimension_semantics = [#tpu.dimension_semantics<parallel>], iteration_bounds = array<i64: 1>, scalar_prefetch = 0 : i64, scratch_operands = 0 : i64, tpu.core_type = #tpu.core_type<tc>, window_params = [{pipeline_mode = #tpu.pipeline_mode<synchronous>, transform_indices = @transform_0, window_bounds = array<i64: 16, 128>}, {transform_indices = @transform_1, window_bounds = array<i64: 128, 512>}, {transform_indices = @transform_2, window_bounds = array<i64: 16, 512>}]} {
    %c0 = arith.constant 0 : index
    %c0_0 = arith.constant 0 : index
    %0 = vector.load %arg1[%c0, %c0_0] : memref<16x128xf32, #tpu.memory_space<vmem>>, vector<16x128xf32>
    %c0_1 = arith.constant 0 : index
    %c0_2 = arith.constant 0 : index
    %1 = vector.load %arg2[%c0_1, %c0_2] : memref<128x512xf32, #tpu.memory_space<vmem>>, vector<128x512xf32>
    %cst = arith.constant dense<0.000000e+00> : vector<16x512xf32>
    %2 = tpu.matmul %0, %1, %cst {dimension_numbers = #tpu.dot_dimension_numbers<[1], [0], [0], [1], [0, 0, 1, 1], [], []>} : vector<16x128xf32>, vector<128x512xf32>, vector<16x512xf32> -> vector<16x512xf32>
    %c0_3 = arith.constant 0 : index
    %c0_4 = arith.constant 0 : index
    %3 = vector.load %arg3[%c0_3, %c0_4] : memref<16x512xf32, #tpu.memory_space<vmem>>, vector<16x512xf32>
    tpu.vector_store %arg3[%c0_3, %c0_4], %2 {strides = array<i32>} : memref<16x512xf32, #tpu.memory_space<vmem>>, vector<16x512xf32>,
    return
  }
  func.func @transform_0(%arg0: i32) -> (i32, i32) {
    %c0_i32 = arith.constant 0 : i32
    %c0_i32_0 = arith.constant 0 : i32
    %c0_i32_1 = arith.constant 0 : i32
    return %c0_i32, %c0_i32_0 : i32, i32
  }
  func.func @transform_1(%arg0: i32) -> (i32, i32) {
    %c0_i32 = arith.constant 0 : i32
    %c0_i32_0 = arith.constant 0 : i32
    return %c0_i32, %arg0 : i32, i32
  }
  func.func @transform_2(%arg0: i32) -> (i32, i32) {
    %c0_i32 = arith.constant 0 : i32
    %c0_i32_0 = arith.constant 0 : i32
    return %c0_i32, %arg0 : i32, i32
  }
}

module attributes {stable_mosaic.version = 11 : i64} {
  func.func @_wxb_kernel(%arg0: i32, %arg1: memref<16x8xf32, #tpu.memory_space<vmem>>, %arg2: memref<8x512xf32, #tpu.memory_space<vmem>>, %arg3: memref<16x1xf32, #tpu.memory_space<vmem>>, %arg4: memref<16x512xf32, #tpu.memory_space<vmem>>) attributes {dimension_semantics = [#tpu.dimension_semantics<parallel>], iteration_bounds = array<i64: 1>, scalar_prefetch = 0 : i64, scratch_operands = 0 : i64, tpu.core_type = #tpu.core_type<tc>, window_params = [{pipeline_mode = #tpu.pipeline_mode<synchronous>, transform_indices = @transform_0, window_bounds = array<i64: 16, 8>}, {transform_indices = @transform_1, window_bounds = array<i64: 8, 512>}, {pipeline_mode = #tpu.pipeline_mode<synchronous>, transform_indices = @transform_2, window_bounds = array<i64: 16, 1>}, {transform_indices = @transform_3, window_bounds = array<i64: 16, 512>}]} {
    %c0 = arith.constant 0 : index
    %c0_0 = arith.constant 0 : index
    %0 = vector.load %arg1[%c0, %c0_0] : memref<16x8xf32, #tpu.memory_space<vmem>>, vector<16x8xf32>
    %c0_1 = arith.constant 0 : index
    %c0_2 = arith.constant 0 : index
    %1 = vector.load %arg2[%c0_1, %c0_2] : memref<8x512xf32, #tpu.memory_space<vmem>>, vector<8x512xf32>
    %cst = arith.constant dense<0.000000e+00> : vector<16x512xf32>
    %2 = tpu.matmul %0, %1, %cst {dimension_numbers = #tpu.dot_dimension_numbers<[1], [0], [0], [1], [0, 0, 1, 1], [], []>} : vector<16x8xf32>, vector<8x512xf32>, vector<16x512xf32> -> vector<16x512xf32>
    %c0_3 = arith.constant 0 : index
    %c0_4 = arith.constant 0 : index
    %3 = vector.load %arg3[%c0_3, %c0_4] : memref<16x1xf32, #tpu.memory_space<vmem>>, vector<16x1xf32>
    %4 = vector.broadcast %3 : vector<16x1xf32> to vector<16x512xf32>
    %5 = arith.addf %2, %4 : vector<16x512xf32>
    %c0_5 = arith.constant 0 : index
    %c0_6 = arith.constant 0 : index
    %6 = vector.load %arg4[%c0_5, %c0_6] : memref<16x512xf32, #tpu.memory_space<vmem>>, vector<16x512xf32>
    tpu.vector_store %arg4[%c0_5, %c0_6], %5 {strides = array<i32>} : memref<16x512xf32, #tpu.memory_space<vmem>>, vector<16x512xf32>,
    return
  }
  func.func @transform_0(%arg0: i32) -> (i32, i32) {
    %c0_i32 = arith.constant 0 : i32
    %c0_i32_0 = arith.constant 0 : i32
    %c0_i32_1 = arith.constant 0 : i32
    return %c0_i32, %c0_i32_0 : i32, i32
  }
  func.func @transform_1(%arg0: i32) -> (i32, i32) {
    %c0_i32 = arith.constant 0 : i32
    %c0_i32_0 = arith.constant 0 : i32
    return %c0_i32, %arg0 : i32, i32
  }
  func.func @transform_2(%arg0: i32) -> (i32, i32) {
    %c0_i32 = arith.constant 0 : i32
    %c0_i32_0 = arith.constant 0 : i32
    %c0_i32_1 = arith.constant 0 : i32
    return %c0_i32, %c0_i32_0 : i32, i32
  }
  func.func @transform_3(%arg0: i32) -> (i32, i32) {
    %c0_i32 = arith.constant 0 : i32
    %c0_i32_0 = arith.constant 0 : i32
    return %c0_i32, %arg0 : i32, i32
  }
}

module attributes {stable_mosaic.version = 11 : i64} {
  func.func @_xop_add_kernel(%arg0: i32, %arg1: memref<16x128xf32, #tpu.memory_space<vmem>>, %arg2: memref<128x512xf32, #tpu.memory_space<vmem>>, %arg3: memref<16x512xf32, #tpu.memory_space<vmem>>, %arg4: memref<16x512xf32, #tpu.memory_space<vmem>>) attributes {dimension_semantics = [#tpu.dimension_semantics<parallel>], iteration_bounds = array<i64: 1>, scalar_prefetch = 0 : i64, scratch_operands = 0 : i64, tpu.core_type = #tpu.core_type<tc>, window_params = [{pipeline_mode = #tpu.pipeline_mode<synchronous>, transform_indices = @transform_0, window_bounds = array<i64: 16, 128>}, {transform_indices = @transform_1, window_bounds = array<i64: 128, 512>}, {transform_indices = @transform_2, window_bounds = array<i64: 16, 512>}, {transform_indices = @transform_3, window_bounds = array<i64: 16, 512>}]} {
    %c0 = arith.constant 0 : index
    %c0_0 = arith.constant 0 : index
    %0 = vector.load %arg3[%c0, %c0_0] : memref<16x512xf32, #tpu.memory_space<vmem>>, vector<16x512xf32>
    %c0_1 = arith.constant 0 : index
    %c0_2 = arith.constant 0 : index
    %1 = vector.load %arg1[%c0_1, %c0_2] : memref<16x128xf32, #tpu.memory_space<vmem>>, vector<16x128xf32>
    %c0_3 = arith.constant 0 : index
    %c0_4 = arith.constant 0 : index
    %2 = vector.load %arg2[%c0_3, %c0_4] : memref<128x512xf32, #tpu.memory_space<vmem>>, vector<128x512xf32>
    %cst = arith.constant dense<0.000000e+00> : vector<16x512xf32>
    %3 = tpu.matmul %1, %2, %cst {dimension_numbers = #tpu.dot_dimension_numbers<[1], [0], [0], [1], [0, 0, 1, 1], [], []>} : vector<16x128xf32>, vector<128x512xf32>, vector<16x512xf32> -> vector<16x512xf32>
    %4 = arith.addf %0, %3 : vector<16x512xf32>
    %c0_5 = arith.constant 0 : index
    %c0_6 = arith.constant 0 : index
    %5 = vector.load %arg4[%c0_5, %c0_6] : memref<16x512xf32, #tpu.memory_space<vmem>>, vector<16x512xf32>
    tpu.vector_store %arg4[%c0_5, %c0_6], %4 {strides = array<i32>} : memref<16x512xf32, #tpu.memory_space<vmem>>, vector<16x512xf32>,
    return
  }
  func.func @transform_0(%arg0: i32) -> (i32, i32) {
    %c0_i32 = arith.constant 0 : i32
    %c0_i32_0 = arith.constant 0 : i32
    %c0_i32_1 = arith.constant 0 : i32
    return %c0_i32, %c0_i32_0 : i32, i32
  }
  func.func @transform_1(%arg0: i32) -> (i32, i32) {
    %c0_i32 = arith.constant 0 : i32
    %c0_i32_0 = arith.constant 0 : i32
    return %c0_i32, %arg0 : i32, i32
  }
  func.func @transform_2(%arg0: i32) -> (i32, i32) {
    %c0_i32 = arith.constant 0 : i32
    %c0_i32_0 = arith.constant 0 : i32
    return %c0_i32, %arg0 : i32, i32
  }
  func.func @transform_3(%arg0: i32) -> (i32, i32) {
    %c0_i32 = arith.constant 0 : i32
    %c0_i32_0 = arith.constant 0 : i32
    return %c0_i32, %arg0 : i32, i32
  }
}

module attributes {stable_mosaic.version = 11 : i64} {
  func.func @_conv3x3_kernel(%arg0: i32, %arg1: memref<16x686xf32, #tpu.memory_space<vmem>>, %arg2: memref<9x16x16xf32, #tpu.memory_space<vmem>>, %arg3: memref<16x1xf32, #tpu.memory_space<vmem>>, %arg4: memref<16x648xf32, #tpu.memory_space<vmem>>) attributes {dimension_semantics = [#tpu.dimension_semantics<arbitrary>], iteration_bounds = array<i64: 1>, scalar_prefetch = 0 : i64, scratch_operands = 0 : i64, tpu.core_type = #tpu.core_type<tc>, window_params = [{pipeline_mode = #tpu.pipeline_mode<synchronous>, transform_indices = @transform_0, window_bounds = array<i64: 16, 686>}, {pipeline_mode = #tpu.pipeline_mode<synchronous>, transform_indices = @transform_1, window_bounds = array<i64: 9, 16, 16>}, {pipeline_mode = #tpu.pipeline_mode<synchronous>, transform_indices = @transform_2, window_bounds = array<i64: 16, 1>}, {pipeline_mode = #tpu.pipeline_mode<synchronous>, transform_indices = @transform_3, window_bounds = array<i64: 16, 648>}]} {
    %cst = arith.constant 0.000000e+00 : f32
    %0 = vector.broadcast %cst : f32 to vector<16x648xf32>
    %c0 = arith.constant 0 : index
    %c0_0 = arith.constant 0 : index
    %1 = vector.load %arg1[%c0, %c0_0] : memref<16x686xf32, #tpu.memory_space<vmem>>, vector<16x648xf32>
    %c0_1 = arith.constant 0 : index
    %c0_2 = arith.constant 0 : index
    %c0_3 = arith.constant 0 : index
    %2 = vector.load %arg2[%c0_1, %c0_2, %c0_3] : memref<9x16x16xf32, #tpu.memory_space<vmem>>, vector<1x16x16xf32>
    %3 = vector.shape_cast %2 : vector<1x16x16xf32> to vector<16x16xf32>
    %cst_4 = arith.constant dense<0.000000e+00> : vector<16x648xf32>
    %4 = tpu.matmul %3, %1, %cst_4 {dimension_numbers = #tpu.dot_dimension_numbers<[1], [0], [0], [1], [0, 0, 1, 1], [], []>} : vector<16x16xf32>, vector<16x648xf32>, vector<16x648xf32> -> vector<16x648xf32>
    %5 = arith.addf %0, %4 : vector<16x648xf32>
    %c0_5 = arith.constant 0 : index
    %c1 = arith.constant 1 : index
    %6 = vector.load %arg1[%c0_5, %c1] : memref<16x686xf32, #tpu.memory_space<vmem>>, vector<16x648xf32>
    %c1_6 = arith.constant 1 : index
    %c0_7 = arith.constant 0 : index
    %c0_8 = arith.constant 0 : index
    %7 = vector.load %arg2[%c1_6, %c0_7, %c0_8] : memref<9x16x16xf32, #tpu.memory_space<vmem>>, vector<1x16x16xf32>
    %8 = vector.shape_cast %7 : vector<1x16x16xf32> to vector<16x16xf32>
    %cst_9 = arith.constant dense<0.000000e+00> : vector<16x648xf32>
    %9 = tpu.matmul %8, %6, %cst_9 {dimension_numbers = #tpu.dot_dimension_numbers<[1], [0], [0], [1], [0, 0, 1, 1], [], []>} : vector<16x16xf32>, vector<16x648xf32>, vector<16x648xf32> -> vector<16x648xf32>
    %10 = arith.addf %5, %9 : vector<16x648xf32>
    %c0_10 = arith.constant 0 : index
    %c2 = arith.constant 2 : index
    %11 = vector.load %arg1[%c0_10, %c2] : memref<16x686xf32, #tpu.memory_space<vmem>>, vector<16x648xf32>
    %c2_11 = arith.constant 2 : index
    %c0_12 = arith.constant 0 : index
    %c0_13 = arith.constant 0 : index
    %12 = vector.load %arg2[%c2_11, %c0_12, %c0_13] : memref<9x16x16xf32, #tpu.memory_space<vmem>>, vector<1x16x16xf32>
    %13 = vector.shape_cast %12 : vector<1x16x16xf32> to vector<16x16xf32>
    %cst_14 = arith.constant dense<0.000000e+00> : vector<16x648xf32>
    %14 = tpu.matmul %13, %11, %cst_14 {dimension_numbers = #tpu.dot_dimension_numbers<[1], [0], [0], [1], [0, 0, 1, 1], [], []>} : vector<16x16xf32>, vector<16x648xf32>, vector<16x648xf32> -> vector<16x648xf32>
    %15 = arith.addf %10, %14 : vector<16x648xf32>
    %c0_15 = arith.constant 0 : index
    %c18 = arith.constant 18 : index
    %16 = vector.load %arg1[%c0_15, %c18] : memref<16x686xf32, #tpu.memory_space<vmem>>, vector<16x648xf32>
    %c3 = arith.constant 3 : index
    %c0_16 = arith.constant 0 : index
    %c0_17 = arith.constant 0 : index
    %17 = vector.load %arg2[%c3, %c0_16, %c0_17] : memref<9x16x16xf32, #tpu.memory_space<vmem>>, vector<1x16x16xf32>
    %18 = vector.shape_cast %17 : vector<1x16x16xf32> to vector<16x16xf32>
    %cst_18 = arith.constant dense<0.000000e+00> : vector<16x648xf32>
    %19 = tpu.matmul %18, %16, %cst_18 {dimension_numbers = #tpu.dot_dimension_numbers<[1], [0], [0], [1], [0, 0, 1, 1], [], []>} : vector<16x16xf32>, vector<16x648xf32>, vector<16x648xf32> -> vector<16x648xf32>
    %20 = arith.addf %15, %19 : vector<16x648xf32>
    %c0_19 = arith.constant 0 : index
    %c19 = arith.constant 19 : index
    %21 = vector.load %arg1[%c0_19, %c19] : memref<16x686xf32, #tpu.memory_space<vmem>>, vector<16x648xf32>
    %c4 = arith.constant 4 : index
    %c0_20 = arith.constant 0 : index
    %c0_21 = arith.constant 0 : index
    %22 = vector.load %arg2[%c4, %c0_20, %c0_21] : memref<9x16x16xf32, #tpu.memory_space<vmem>>, vector<1x16x16xf32>
    %23 = vector.shape_cast %22 : vector<1x16x16xf32> to vector<16x16xf32>
    %cst_22 = arith.constant dense<0.000000e+00> : vector<16x648xf32>
    %24 = tpu.matmul %23, %21, %cst_22 {dimension_numbers = #tpu.dot_dimension_numbers<[1], [0], [0], [1], [0, 0, 1, 1], [], []>} : vector<16x16xf32>, vector<16x648xf32>, vector<16x648xf32> -> vector<16x648xf32>
    %25 = arith.addf %20, %24 : vector<16x648xf32>
    %c0_23 = arith.constant 0 : index
    %c20 = arith.constant 20 : index
    %26 = vector.load %arg1[%c0_23, %c20] : memref<16x686xf32, #tpu.memory_space<vmem>>, vector<16x648xf32>
    %c5 = arith.constant 5 : index
    %c0_24 = arith.constant 0 : index
    %c0_25 = arith.constant 0 : index
    %27 = vector.load %arg2[%c5, %c0_24, %c0_25] : memref<9x16x16xf32, #tpu.memory_space<vmem>>, vector<1x16x16xf32>
    %28 = vector.shape_cast %27 : vector<1x16x16xf32> to vector<16x16xf32>
    %cst_26 = arith.constant dense<0.000000e+00> : vector<16x648xf32>
    %29 = tpu.matmul %28, %26, %cst_26 {dimension_numbers = #tpu.dot_dimension_numbers<[1], [0], [0], [1], [0, 0, 1, 1], [], []>} : vector<16x16xf32>, vector<16x648xf32>, vector<16x648xf32> -> vector<16x648xf32>
    %30 = arith.addf %25, %29 : vector<16x648xf32>
    %c0_27 = arith.constant 0 : index
    %c36 = arith.constant 36 : index
    %31 = vector.load %arg1[%c0_27, %c36] : memref<16x686xf32, #tpu.memory_space<vmem>>, vector<16x648xf32>
    %c6 = arith.constant 6 : index
    %c0_28 = arith.constant 0 : index
    %c0_29 = arith.constant 0 : index
    %32 = vector.load %arg2[%c6, %c0_28, %c0_29] : memref<9x16x16xf32, #tpu.memory_space<vmem>>, vector<1x16x16xf32>
    %33 = vector.shape_cast %32 : vector<1x16x16xf32> to vector<16x16xf32>
    %cst_30 = arith.constant dense<0.000000e+00> : vector<16x648xf32>
    %34 = tpu.matmul %33, %31, %cst_30 {dimension_numbers = #tpu.dot_dimension_numbers<[1], [0], [0], [1], [0, 0, 1, 1], [], []>} : vector<16x16xf32>, vector<16x648xf32>, vector<16x648xf32> -> vector<16x648xf32>
    %35 = arith.addf %30, %34 : vector<16x648xf32>
    %c0_31 = arith.constant 0 : index
    %c37 = arith.constant 37 : index
    %36 = vector.load %arg1[%c0_31, %c37] : memref<16x686xf32, #tpu.memory_space<vmem>>, vector<16x648xf32>
    %c7 = arith.constant 7 : index
    %c0_32 = arith.constant 0 : index
    %c0_33 = arith.constant 0 : index
    %37 = vector.load %arg2[%c7, %c0_32, %c0_33] : memref<9x16x16xf32, #tpu.memory_space<vmem>>, vector<1x16x16xf32>
    %38 = vector.shape_cast %37 : vector<1x16x16xf32> to vector<16x16xf32>
    %cst_34 = arith.constant dense<0.000000e+00> : vector<16x648xf32>
    %39 = tpu.matmul %38, %36, %cst_34 {dimension_numbers = #tpu.dot_dimension_numbers<[1], [0], [0], [1], [0, 0, 1, 1], [], []>} : vector<16x16xf32>, vector<16x648xf32>, vector<16x648xf32> -> vector<16x648xf32>
    %40 = arith.addf %35, %39 : vector<16x648xf32>
    %c0_35 = arith.constant 0 : index
    %c38 = arith.constant 38 : index
    %41 = vector.load %arg1[%c0_35, %c38] : memref<16x686xf32, #tpu.memory_space<vmem>>, vector<16x648xf32>
    %c8 = arith.constant 8 : index
    %c0_36 = arith.constant 0 : index
    %c0_37 = arith.constant 0 : index
    %42 = vector.load %arg2[%c8, %c0_36, %c0_37] : memref<9x16x16xf32, #tpu.memory_space<vmem>>, vector<1x16x16xf32>
    %43 = vector.shape_cast %42 : vector<1x16x16xf32> to vector<16x16xf32>
    %cst_38 = arith.constant dense<0.000000e+00> : vector<16x648xf32>
    %44 = tpu.matmul %43, %41, %cst_38 {dimension_numbers = #tpu.dot_dimension_numbers<[1], [0], [0], [1], [0, 0, 1, 1], [], []>} : vector<16x16xf32>, vector<16x648xf32>, vector<16x648xf32> -> vector<16x648xf32>
    %45 = arith.addf %40, %44 : vector<16x648xf32>
    %c0_39 = arith.constant 0 : index
    %c0_40 = arith.constant 0 : index
    %46 = vector.load %arg3[%c0_39, %c0_40] : memref<16x1xf32, #tpu.memory_space<vmem>>, vector<16x1xf32>
    %47 = vector.broadcast %46 : vector<16x1xf32> to vector<16x648xf32>
    %48 = arith.addf %45, %47 : vector<16x648xf32>
    %c0_41 = arith.constant 0 : index
    %c0_42 = arith.constant 0 : index
    %49 = vector.load %arg4[%c0_41, %c0_42] : memref<16x648xf32, #tpu.memory_space<vmem>>, vector<16x648xf32>
    tpu.vector_store %arg4[%c0_41, %c0_42], %48 {strides = array<i32>} : memref<16x648xf32, #tpu.memory_space<vmem>>, vector<16x648xf32>,
    return
  }
  func.func @transform_0(%arg0: i32) -> (i32, i32) {
    %c0_i32 = arith.constant 0 : i32
    %c0_i32_0 = arith.constant 0 : i32
    %c0_i32_1 = arith.constant 0 : i32
    return %c0_i32, %c0_i32_0 : i32, i32
  }
  func.func @transform_1(%arg0: i32) -> (i32, i32, i32) {
    %c0_i32 = arith.constant 0 : i32
    %c0_i32_0 = arith.constant 0 : i32
    %c0_i32_1 = arith.constant 0 : i32
    %c0_i32_2 = arith.constant 0 : i32
    return %c0_i32, %c0_i32_0, %c0_i32_1 : i32, i32, i32
  }
  func.func @transform_2(%arg0: i32) -> (i32, i32) {
    %c0_i32 = arith.constant 0 : i32
    %c0_i32_0 = arith.constant 0 : i32
    %c0_i32_1 = arith.constant 0 : i32
    return %c0_i32, %c0_i32_0 : i32, i32
  }
  func.func @transform_3(%arg0: i32) -> (i32, i32) {
    %c0_i32 = arith.constant 0 : i32
    %c0_i32_0 = arith.constant 0 : i32
    %c0_i32_1 = arith.constant 0 : i32
    return %c0_i32, %c0_i32_0 : i32, i32
  }
}

module attributes {stable_mosaic.version = 11 : i64} {
  func.func @_conv3x3_kernel(%arg0: i32, %arg1: memref<64x686xf32, #tpu.memory_space<vmem>>, %arg2: memref<9x5x64xf32, #tpu.memory_space<vmem>>, %arg3: memref<5x1xf32, #tpu.memory_space<vmem>>, %arg4: memref<5x648xf32, #tpu.memory_space<vmem>>) attributes {dimension_semantics = [#tpu.dimension_semantics<arbitrary>], iteration_bounds = array<i64: 1>, scalar_prefetch = 0 : i64, scratch_operands = 0 : i64, tpu.core_type = #tpu.core_type<tc>, window_params = [{pipeline_mode = #tpu.pipeline_mode<synchronous>, transform_indices = @transform_0, window_bounds = array<i64: 64, 686>}, {pipeline_mode = #tpu.pipeline_mode<synchronous>, transform_indices = @transform_1, window_bounds = array<i64: 9, 5, 64>}, {pipeline_mode = #tpu.pipeline_mode<synchronous>, transform_indices = @transform_2, window_bounds = array<i64: 5, 1>}, {pipeline_mode = #tpu.pipeline_mode<synchronous>, transform_indices = @transform_3, window_bounds = array<i64: 5, 648>}]} {
    %cst = arith.constant 0.000000e+00 : f32
    %0 = vector.broadcast %cst : f32 to vector<5x648xf32>
    %c0 = arith.constant 0 : index
    %c0_0 = arith.constant 0 : index
    %1 = vector.load %arg1[%c0, %c0_0] : memref<64x686xf32, #tpu.memory_space<vmem>>, vector<64x648xf32>
    %c0_1 = arith.constant 0 : index
    %c0_2 = arith.constant 0 : index
    %c0_3 = arith.constant 0 : index
    %2 = vector.load %arg2[%c0_1, %c0_2, %c0_3] : memref<9x5x64xf32, #tpu.memory_space<vmem>>, vector<1x5x64xf32>
    %3 = vector.shape_cast %2 : vector<1x5x64xf32> to vector<5x64xf32>
    %cst_4 = arith.constant dense<0.000000e+00> : vector<5x648xf32>
    %4 = tpu.matmul %3, %1, %cst_4 {dimension_numbers = #tpu.dot_dimension_numbers<[1], [0], [0], [1], [0, 0, 1, 1], [], []>} : vector<5x64xf32>, vector<64x648xf32>, vector<5x648xf32> -> vector<5x648xf32>
    %5 = arith.addf %0, %4 : vector<5x648xf32>
    %c0_5 = arith.constant 0 : index
    %c1 = arith.constant 1 : index
    %6 = vector.load %arg1[%c0_5, %c1] : memref<64x686xf32, #tpu.memory_space<vmem>>, vector<64x648xf32>
    %c1_6 = arith.constant 1 : index
    %c0_7 = arith.constant 0 : index
    %c0_8 = arith.constant 0 : index
    %7 = vector.load %arg2[%c1_6, %c0_7, %c0_8] : memref<9x5x64xf32, #tpu.memory_space<vmem>>, vector<1x5x64xf32>
    %8 = vector.shape_cast %7 : vector<1x5x64xf32> to vector<5x64xf32>
    %cst_9 = arith.constant dense<0.000000e+00> : vector<5x648xf32>
    %9 = tpu.matmul %8, %6, %cst_9 {dimension_numbers = #tpu.dot_dimension_numbers<[1], [0], [0], [1], [0, 0, 1, 1], [], []>} : vector<5x64xf32>, vector<64x648xf32>, vector<5x648xf32> -> vector<5x648xf32>
    %10 = arith.addf %5, %9 : vector<5x648xf32>
    %c0_10 = arith.constant 0 : index
    %c2 = arith.constant 2 : index
    %11 = vector.load %arg1[%c0_10, %c2] : memref<64x686xf32, #tpu.memory_space<vmem>>, vector<64x648xf32>
    %c2_11 = arith.constant 2 : index
    %c0_12 = arith.constant 0 : index
    %c0_13 = arith.constant 0 : index
    %12 = vector.load %arg2[%c2_11, %c0_12, %c0_13] : memref<9x5x64xf32, #tpu.memory_space<vmem>>, vector<1x5x64xf32>
    %13 = vector.shape_cast %12 : vector<1x5x64xf32> to vector<5x64xf32>
    %cst_14 = arith.constant dense<0.000000e+00> : vector<5x648xf32>
    %14 = tpu.matmul %13, %11, %cst_14 {dimension_numbers = #tpu.dot_dimension_numbers<[1], [0], [0], [1], [0, 0, 1, 1], [], []>} : vector<5x64xf32>, vector<64x648xf32>, vector<5x648xf32> -> vector<5x648xf32>
    %15 = arith.addf %10, %14 : vector<5x648xf32>
    %c0_15 = arith.constant 0 : index
    %c18 = arith.constant 18 : index
    %16 = vector.load %arg1[%c0_15, %c18] : memref<64x686xf32, #tpu.memory_space<vmem>>, vector<64x648xf32>
    %c3 = arith.constant 3 : index
    %c0_16 = arith.constant 0 : index
    %c0_17 = arith.constant 0 : index
    %17 = vector.load %arg2[%c3, %c0_16, %c0_17] : memref<9x5x64xf32, #tpu.memory_space<vmem>>, vector<1x5x64xf32>
    %18 = vector.shape_cast %17 : vector<1x5x64xf32> to vector<5x64xf32>
    %cst_18 = arith.constant dense<0.000000e+00> : vector<5x648xf32>
    %19 = tpu.matmul %18, %16, %cst_18 {dimension_numbers = #tpu.dot_dimension_numbers<[1], [0], [0], [1], [0, 0, 1, 1], [], []>} : vector<5x64xf32>, vector<64x648xf32>, vector<5x648xf32> -> vector<5x648xf32>
    %20 = arith.addf %15, %19 : vector<5x648xf32>
    %c0_19 = arith.constant 0 : index
    %c19 = arith.constant 19 : index
    %21 = vector.load %arg1[%c0_19, %c19] : memref<64x686xf32, #tpu.memory_space<vmem>>, vector<64x648xf32>
    %c4 = arith.constant 4 : index
    %c0_20 = arith.constant 0 : index
    %c0_21 = arith.constant 0 : index
    %22 = vector.load %arg2[%c4, %c0_20, %c0_21] : memref<9x5x64xf32, #tpu.memory_space<vmem>>, vector<1x5x64xf32>
    %23 = vector.shape_cast %22 : vector<1x5x64xf32> to vector<5x64xf32>
    %cst_22 = arith.constant dense<0.000000e+00> : vector<5x648xf32>
    %24 = tpu.matmul %23, %21, %cst_22 {dimension_numbers = #tpu.dot_dimension_numbers<[1], [0], [0], [1], [0, 0, 1, 1], [], []>} : vector<5x64xf32>, vector<64x648xf32>, vector<5x648xf32> -> vector<5x648xf32>
    %25 = arith.addf %20, %24 : vector<5x648xf32>
    %c0_23 = arith.constant 0 : index
    %c20 = arith.constant 20 : index
    %26 = vector.load %arg1[%c0_23, %c20] : memref<64x686xf32, #tpu.memory_space<vmem>>, vector<64x648xf32>
    %c5 = arith.constant 5 : index
    %c0_24 = arith.constant 0 : index
    %c0_25 = arith.constant 0 : index
    %27 = vector.load %arg2[%c5, %c0_24, %c0_25] : memref<9x5x64xf32, #tpu.memory_space<vmem>>, vector<1x5x64xf32>
    %28 = vector.shape_cast %27 : vector<1x5x64xf32> to vector<5x64xf32>
    %cst_26 = arith.constant dense<0.000000e+00> : vector<5x648xf32>
    %29 = tpu.matmul %28, %26, %cst_26 {dimension_numbers = #tpu.dot_dimension_numbers<[1], [0], [0], [1], [0, 0, 1, 1], [], []>} : vector<5x64xf32>, vector<64x648xf32>, vector<5x648xf32> -> vector<5x648xf32>
    %30 = arith.addf %25, %29 : vector<5x648xf32>
    %c0_27 = arith.constant 0 : index
    %c36 = arith.constant 36 : index
    %31 = vector.load %arg1[%c0_27, %c36] : memref<64x686xf32, #tpu.memory_space<vmem>>, vector<64x648xf32>
    %c6 = arith.constant 6 : index
    %c0_28 = arith.constant 0 : index
    %c0_29 = arith.constant 0 : index
    %32 = vector.load %arg2[%c6, %c0_28, %c0_29] : memref<9x5x64xf32, #tpu.memory_space<vmem>>, vector<1x5x64xf32>
    %33 = vector.shape_cast %32 : vector<1x5x64xf32> to vector<5x64xf32>
    %cst_30 = arith.constant dense<0.000000e+00> : vector<5x648xf32>
    %34 = tpu.matmul %33, %31, %cst_30 {dimension_numbers = #tpu.dot_dimension_numbers<[1], [0], [0], [1], [0, 0, 1, 1], [], []>} : vector<5x64xf32>, vector<64x648xf32>, vector<5x648xf32> -> vector<5x648xf32>
    %35 = arith.addf %30, %34 : vector<5x648xf32>
    %c0_31 = arith.constant 0 : index
    %c37 = arith.constant 37 : index
    %36 = vector.load %arg1[%c0_31, %c37] : memref<64x686xf32, #tpu.memory_space<vmem>>, vector<64x648xf32>
    %c7 = arith.constant 7 : index
    %c0_32 = arith.constant 0 : index
    %c0_33 = arith.constant 0 : index
    %37 = vector.load %arg2[%c7, %c0_32, %c0_33] : memref<9x5x64xf32, #tpu.memory_space<vmem>>, vector<1x5x64xf32>
    %38 = vector.shape_cast %37 : vector<1x5x64xf32> to vector<5x64xf32>
    %cst_34 = arith.constant dense<0.000000e+00> : vector<5x648xf32>
    %39 = tpu.matmul %38, %36, %cst_34 {dimension_numbers = #tpu.dot_dimension_numbers<[1], [0], [0], [1], [0, 0, 1, 1], [], []>} : vector<5x64xf32>, vector<64x648xf32>, vector<5x648xf32> -> vector<5x648xf32>
    %40 = arith.addf %35, %39 : vector<5x648xf32>
    %c0_35 = arith.constant 0 : index
    %c38 = arith.constant 38 : index
    %41 = vector.load %arg1[%c0_35, %c38] : memref<64x686xf32, #tpu.memory_space<vmem>>, vector<64x648xf32>
    %c8 = arith.constant 8 : index
    %c0_36 = arith.constant 0 : index
    %c0_37 = arith.constant 0 : index
    %42 = vector.load %arg2[%c8, %c0_36, %c0_37] : memref<9x5x64xf32, #tpu.memory_space<vmem>>, vector<1x5x64xf32>
    %43 = vector.shape_cast %42 : vector<1x5x64xf32> to vector<5x64xf32>
    %cst_38 = arith.constant dense<0.000000e+00> : vector<5x648xf32>
    %44 = tpu.matmul %43, %41, %cst_38 {dimension_numbers = #tpu.dot_dimension_numbers<[1], [0], [0], [1], [0, 0, 1, 1], [], []>} : vector<5x64xf32>, vector<64x648xf32>, vector<5x648xf32> -> vector<5x648xf32>
    %45 = arith.addf %40, %44 : vector<5x648xf32>
    %c0_39 = arith.constant 0 : index
    %c0_40 = arith.constant 0 : index
    %46 = vector.load %arg3[%c0_39, %c0_40] : memref<5x1xf32, #tpu.memory_space<vmem>>, vector<5x1xf32>
    %47 = vector.broadcast %46 : vector<5x1xf32> to vector<5x648xf32>
    %48 = arith.addf %45, %47 : vector<5x648xf32>
    %c0_41 = arith.constant 0 : index
    %c0_42 = arith.constant 0 : index
    %49 = vector.load %arg4[%c0_41, %c0_42] : memref<5x648xf32, #tpu.memory_space<vmem>>, vector<5x648xf32>
    tpu.vector_store %arg4[%c0_41, %c0_42], %48 {strides = array<i32>} : memref<5x648xf32, #tpu.memory_space<vmem>>, vector<5x648xf32>,
    return
  }
  func.func @transform_0(%arg0: i32) -> (i32, i32) {
    %c0_i32 = arith.constant 0 : i32
    %c0_i32_0 = arith.constant 0 : i32
    %c0_i32_1 = arith.constant 0 : i32
    return %c0_i32, %c0_i32_0 : i32, i32
  }
  func.func @transform_1(%arg0: i32) -> (i32, i32, i32) {
    %c0_i32 = arith.constant 0 : i32
    %c0_i32_0 = arith.constant 0 : i32
    %c0_i32_1 = arith.constant 0 : i32
    %c0_i32_2 = arith.constant 0 : i32
    return %c0_i32, %c0_i32_0, %c0_i32_1 : i32, i32, i32
  }
  func.func @transform_2(%arg0: i32) -> (i32, i32) {
    %c0_i32 = arith.constant 0 : i32
    %c0_i32_0 = arith.constant 0 : i32
    %c0_i32_1 = arith.constant 0 : i32
    return %c0_i32, %c0_i32_0 : i32, i32
  }
  func.func @transform_3(%arg0: i32) -> (i32, i32) {
    %c0_i32 = arith.constant 0 : i32
    %c0_i32_0 = arith.constant 0 : i32
    %c0_i32_1 = arith.constant 0 : i32
    return %c0_i32, %c0_i32_0 : i32, i32
  }
}

module attributes {stable_mosaic.version = 11 : i64} {
  func.func @_wxb_kernel(%arg0: i32, %arg1: memref<20x64xf32, #tpu.memory_space<vmem>>, %arg2: memref<64x512xf32, #tpu.memory_space<vmem>>, %arg3: memref<20x1xf32, #tpu.memory_space<vmem>>, %arg4: memref<20x512xf32, #tpu.memory_space<vmem>>) attributes {dimension_semantics = [#tpu.dimension_semantics<parallel>], iteration_bounds = array<i64: 1>, scalar_prefetch = 0 : i64, scratch_operands = 0 : i64, tpu.core_type = #tpu.core_type<tc>, window_params = [{pipeline_mode = #tpu.pipeline_mode<synchronous>, transform_indices = @transform_0, window_bounds = array<i64: 20, 64>}, {transform_indices = @transform_1, window_bounds = array<i64: 64, 512>}, {pipeline_mode = #tpu.pipeline_mode<synchronous>, transform_indices = @transform_2, window_bounds = array<i64: 20, 1>}, {transform_indices = @transform_3, window_bounds = array<i64: 20, 512>}]} {
    %c0 = arith.constant 0 : index
    %c0_0 = arith.constant 0 : index
    %0 = vector.load %arg1[%c0, %c0_0] : memref<20x64xf32, #tpu.memory_space<vmem>>, vector<20x64xf32>
    %c0_1 = arith.constant 0 : index
    %c0_2 = arith.constant 0 : index
    %1 = vector.load %arg2[%c0_1, %c0_2] : memref<64x512xf32, #tpu.memory_space<vmem>>, vector<64x512xf32>
    %cst = arith.constant dense<0.000000e+00> : vector<20x512xf32>
    %2 = tpu.matmul %0, %1, %cst {dimension_numbers = #tpu.dot_dimension_numbers<[1], [0], [0], [1], [0, 0, 1, 1], [], []>} : vector<20x64xf32>, vector<64x512xf32>, vector<20x512xf32> -> vector<20x512xf32>
    %c0_3 = arith.constant 0 : index
    %c0_4 = arith.constant 0 : index
    %3 = vector.load %arg3[%c0_3, %c0_4] : memref<20x1xf32, #tpu.memory_space<vmem>>, vector<20x1xf32>
    %4 = vector.broadcast %3 : vector<20x1xf32> to vector<20x512xf32>
    %5 = arith.addf %2, %4 : vector<20x512xf32>
    %c0_5 = arith.constant 0 : index
    %c0_6 = arith.constant 0 : index
    %6 = vector.load %arg4[%c0_5, %c0_6] : memref<20x512xf32, #tpu.memory_space<vmem>>, vector<20x512xf32>
    tpu.vector_store %arg4[%c0_5, %c0_6], %5 {strides = array<i32>} : memref<20x512xf32, #tpu.memory_space<vmem>>, vector<20x512xf32>,
    return
  }
  func.func @transform_0(%arg0: i32) -> (i32, i32) {
    %c0_i32 = arith.constant 0 : i32
    %c0_i32_0 = arith.constant 0 : i32
    %c0_i32_1 = arith.constant 0 : i32
    return %c0_i32, %c0_i32_0 : i32, i32
  }
  func.func @transform_1(%arg0: i32) -> (i32, i32) {
    %c0_i32 = arith.constant 0 : i32
    %c0_i32_0 = arith.constant 0 : i32
    return %c0_i32, %arg0 : i32, i32
  }
  func.func @transform_2(%arg0: i32) -> (i32, i32) {
    %c0_i32 = arith.constant 0 : i32
    %c0_i32_0 = arith.constant 0 : i32
    %c0_i32_1 = arith.constant 0 : i32
    return %c0_i32, %c0_i32_0 : i32, i32
  }
  func.func @transform_3(%arg0: i32) -> (i32, i32) {
    %c0_i32 = arith.constant 0 : i32
    %c0_i32_0 = arith.constant 0 : i32
    return %c0_i32, %arg0 : i32, i32
  }
}

</mosaic_0001>

<llo_original>
// kernel: uperhead_forward.15
$region0: #{uperhead_forward.15}
  #allocation0 [shape = 'u32[]', space=smem, size = 0x4, offset = 0x4, fixed_abs, tag = 'smem constant byte address 0x4 - core index']
  #allocation1 [shape = 'u32[144,128]{1,0:T(1,128)}', space=vmem, size = 0x12000, scoped, tag = 'internal scratch']
  %s0 = inlined_call_operand.vmem [shape: f32[16,16], index: 0, kind: input, shape index: {}]
  %s1 = inlined_call_operand.vmem [shape: f32[16,128], index: 1, kind: input, shape index: {}]
  %s2 = inlined_call_operand.vmem [shape: f32[16,1], index: 2, kind: input, shape index: {}]
  %s3 = inlined_call_operand.vmem [shape: f32[16,128], index: 3, kind: output, shape index: {}]
  %s4 = sld [smem:[#allocation0]]
  $region22: #{uperhead_forward.15} parent=0
    _
  %s6 = ssub.s32 1, %s4
  %s7 = scalar_select 0, %s6, %s4
  // Predicated region
  $region2: #{uperhead_forward.15} parent=0 // pred_check
    _
  $region3: #{uperhead_forward.15} parent=0 // pred_check_branch
    %9 = sbr.rel (0) target = $region5
  $region4: #{uperhead_forward.15} parent=0 // pred_region
    _
  $region5: #{uperhead_forward.15} parent=0 // pred_fallthru
    _
  // Predicated region
  $region6: #{uperhead_forward.15} parent=0 // pred_check
    _
  $region7: #{uperhead_forward.15} parent=0 // pred_check_branch
    %11 = sbr.rel (0) target = $region9
  $region8: #{uperhead_forward.15} parent=0 // pred_region
    _
  $region9: #{uperhead_forward.15} parent=0 // pred_fallthru
    _
  // Predicated region
  $region10: #{uperhead_forward.15} parent=0 // pred_check
    _
  $region11: #{uperhead_forward.15} parent=0 // pred_check_branch
    %13 = sbr.rel (0) target = $region13
  $region12: #{uperhead_forward.15} parent=0 // pred_region
    _
  $region13: #{uperhead_forward.15} parent=0 // pred_fallthru
    _
  %v14 = vld [vmem:[%s0] sm:$0xff]
  %v15 = vld [vmem:[%s0 + $0x8] sm:$0xff]
  %v16 = vld [vmem:[%s1] sm:$0xff]
  %v17 = vld [vmem:[%s1 + $0x8] sm:$0xff]
  %v18 = vld [vmem:[%s2] sm:$0xff]
  %v19 = vld [vmem:[%s2 + $0x8] sm:$0xff]
  %21 = vset.pattern.permute.xlu0 0
  %22 = vperm.xlu0 %21, %v18
  %v23 = vpop.permute.xlu0 %22
  %26 = vset.pattern.permute.xlu0 0
  %27 = vperm.xlu0 %26, %v19
  %v28 = vpop.permute.xlu0 %27
  %vm30 = vcmask 130048
  %v32 = vsel %vm30, %v14, 0
  %v35 = vsel %vm30, %v15, 0
  %37 = vmatprep.subr.mxu0 0.0
  %38 = vmatpush1.msra.mxu0 %v16
  %39 = vmatprep.subr.mxu0 0.0
  %40 = vmatpush1.msra.mxu0 %v17
  %41 = vmatprep.subr.mxu0 0.0
  %42 = vmatpush1.msra.mxu0 0.0
  %43 = vmatprep.subr.mxu0 0.0
  %44 = vmatpush1.msra.mxu0 0.0
  %45 = vmatprep.subr.mxu0 0.0
  %46 = vmatpush1.msra.mxu0 0.0
  %47 = vmatprep.subr.mxu0 0.0
  %48 = vmatpush1.msra.mxu0 0.0
  %49 = vmatprep.subr.mxu0 0.0
  %50 = vmatpush1.msra.mxu0 0.0
  %51 = vmatprep.subr.mxu0 0.0
  %52 = vmatpush1.msra.mxu0 0.0
  %53 = vmatprep.subr.mxu0 0.0
  %54 = vmatpush1.msra.mxu0 0.0
  %55 = vmatprep.subr.mxu0 0.0
  %56 = vmatpush1.msra.mxu0 0.0
  %57 = vmatprep.subr.mxu0 0.0
  %58 = vmatpush1.msra.mxu0 0.0
  %59 = vmatprep.subr.mxu0 0.0
  %60 = vmatpush1.msra.mxu0 0.0
  %61 = vmatprep.subr.mxu0 0.0
  %62 = vmatpush1.msra.mxu0 0.0
  %63 = vmatprep.subr.mxu0 0.0
  %64 = vmatpush1.msra.mxu0 0.0
  %65 = vmatprep.subr.mxu0 0.0
  %66 = vmatpush1.msra.mxu0 0.0
  %67 = vmatprep.subr.mxu0 0.0
  %68 = vmatpush1.msra.mxu0 0.0
  %69 = vmatprep.subr.mxu0 0.0
  %70 = vmatpush1.msra.mxu0 0.0
  %71 = vmatprep.subr.mxu0 0.0
  %72 = vmatpush1.msra.mxu0 0.0
  %73 = vmatprep.subr.mxu0 0.0
  %74 = vmatpush1.msra.mxu0 0.0
  %75 = vmatprep.subr.mxu0 0.0
  %76 = vmatpush1.msra.mxu0 0.0
  %77 = vmatprep.subr.mxu0 0.0
  %78 = vmatpush1.msra.mxu0 0.0
  %79 = vmatprep.subr.mxu0 0.0
  %80 = vmatpush1.msra.mxu0 0.0
  %81 = vmatprep.subr.mxu0 0.0
  %82 = vmatpush1.msra.mxu0 0.0
  %83 = vmatprep.subr.mxu0 0.0
  %84 = vmatpush1.msra.mxu0 0.0
  %85 = vmatprep.subr.mxu0 0.0
  %86 = vmatpush1.msra.mxu0 0.0
  %87 = vmatprep.subr.mxu0 0.0
  %88 = vmatpush1.msra.mxu0 0.0
  %89 = vmatprep.subr.mxu0 0.0
  %90 = vmatpush1.msra.mxu0 0.0
  %91 = vmatprep.subr.mxu0 0.0
  %92 = vmatpush1.msra.mxu0 0.0
  %93 = vmatprep.subr.mxu0 0.0
  %94 = vmatpush1.msra.mxu0 0.0
  %95 = vmatprep.subr.mxu0 0.0
  %96 = vmatpush1.msra.mxu0 0.0
  %97 = vmatprep.subr.mxu0 0.0
  %98 = vmatpush1.msra.mxu0 0.0
  %99 = vmatprep.subr.mxu0 0.0
  %100 = vmatpush1.msra.mxu0 0.0
  %101 = vmatprep.mubr.f32.mxu0 0.0
  %102 = vmatmul.mubr.f32.gmra.mrb[0].mxu0 %v32
  %v103 = vpop.f32.mrb[0].mxu0
  %v104 = vadd.f32 %v23, %v103
  %v105 = vpop.f32.mrb[0].mxu0
  %106 = vmatprep.mubr.f32.mxu0 0.0
  %107 = vmatmul.mubr.f32.gmra.mrb[0].mxu0 %v35
  %v108 = vpop.f32.mrb[0].mxu0
  %v109 = vadd.f32 %v28, %v108
  %v110 = vpop.f32.mrb[0].mxu0
  %111 = vdwg.mxu0
  %112 = vst [vmem:[%s3] sm:$0xff] %v104
  %113 = vst [vmem:[%s3 + $0x8] sm:$0xff] %v109
  // Predicated region
  $region14: #{uperhead_forward.15} parent=0 // pred_check
    _
  $region15: #{uperhead_forward.15} parent=0 // pred_check_branch
    %115 = sbr.rel (0) target = $region17
  $region16: #{uperhead_forward.15} parent=0 // pred_region
    _
  $region17: #{uperhead_forward.15} parent=0 // pred_fallthru
    _
  // Predicated region
  $region18: #{uperhead_forward.15} parent=0 // pred_check
    _
  $region19: #{uperhead_forward.15} parent=0 // pred_check_branch
    %117 = sbr.rel (0) target = $region21
  $region20: #{uperhead_forward.15} parent=0 // pred_region
    _
  $region21: #{uperhead_forward.15} parent=0 // pred_fallthru
    _

// kernel: uperhead_forward.16
$region0: #{uperhead_forward.16}
  #allocation0 [shape = 'u32[]', space=smem, size = 0x4, offset = 0x4, fixed_abs, tag = 'smem constant byte address 0x4 - core index']
  #allocation1 [shape = 'u32[144,128]{1,0:T(1,128)}', space=vmem, size = 0x12000, scoped, tag = 'internal scratch']
  %s0 = inlined_call_operand.vmem [shape: f32[16,24], index: 0, kind: input, shape index: {}]
  %s1 = inlined_call_operand.vmem [shape: f32[24,32], index: 1, kind: input, shape index: {}]
  %s2 = inlined_call_operand.vmem [shape: f32[16,1], index: 2, kind: input, shape index: {}]
  %s3 = inlined_call_operand.vmem [shape: f32[16,32], index: 3, kind: output, shape index: {}]
  %s4 = sld [smem:[#allocation0]]
  $region22: #{uperhead_forward.16} parent=0
    _
  %s6 = ssub.s32 1, %s4
  %s7 = scalar_select 0, %s6, %s4
  // Predicated region
  $region2: #{uperhead_forward.16} parent=0 // pred_check
    _
  $region3: #{uperhead_forward.16} parent=0 // pred_check_branch
    %9 = sbr.rel (0) target = $region5
  $region4: #{uperhead_forward.16} parent=0 // pred_region
    _
  $region5: #{uperhead_forward.16} parent=0 // pred_fallthru
    _
  // Predicated region
  $region6: #{uperhead_forward.16} parent=0 // pred_check
    _
  $region7: #{uperhead_forward.16} parent=0 // pred_check_branch
    %11 = sbr.rel (0) target = $region9
  $region8: #{uperhead_forward.16} parent=0 // pred_region
    _
  $region9: #{uperhead_forward.16} parent=0 // pred_fallthru
    _
  // Predicated region
  $region10: #{uperhead_forward.16} parent=0 // pred_check
    _
  $region11: #{uperhead_forward.16} parent=0 // pred_check_branch
    %13 = sbr.rel (0) target = $region13
  $region12: #{uperhead_forward.16} parent=0 // pred_region
    _
  $region13: #{uperhead_forward.16} parent=0 // pred_fallthru
    _
  %v14 = vld [vmem:[%s0] sm:$0xff]
  %v15 = vld [vmem:[%s0 + $0x8] sm:$0xff]
  %v16 = vld [vmem:[%s1] sm:$0xff]
  %v17 = vld [vmem:[%s1 + $0x8] sm:$0xff]
  %v18 = vld [vmem:[%s1 + $0x10] sm:$0xff]
  %v19 = vld [vmem:[%s2] sm:$0xff]
  %v20 = vld [vmem:[%s2 + $0x8] sm:$0xff]
  %22 = vset.pattern.permute.xlu0 0
  %23 = vperm.xlu0 %22, %v19
  %v24 = vpop.permute.xlu0 %23
  %27 = vset.pattern.permute.xlu0 0
  %28 = vperm.xlu0 %27, %v20
  %v29 = vpop.permute.xlu0 %28
  %vm31 = vcmask 195584
  %v33 = vsel %vm31, %v14, 0
  %v36 = vsel %vm31, %v15, 0
  %38 = vmatprep.subr.mxu0 0.0
  %39 = vmatpush1.msra.mxu0 %v16
  %40 = vmatprep.subr.mxu0 0.0
  %41 = vmatpush1.msra.mxu0 %v17
  %42 = vmatprep.subr.mxu0 0.0
  %43 = vmatpush1.msra.mxu0 %v18
  %44 = vmatprep.subr.mxu0 0.0
  %45 = vmatpush1.msra.mxu0 0.0
  %46 = vmatprep.subr.mxu0 0.0
  %47 = vmatpush1.msra.mxu0 0.0
  %48 = vmatprep.subr.mxu0 0.0
  %49 = vmatpush1.msra.mxu0 0.0
  %50 = vmatprep.subr.mxu0 0.0
  %51 = vmatpush1.msra.mxu0 0.0
  %52 = vmatprep.subr.mxu0 0.0
  %53 = vmatpush1.msra.mxu0 0.0
  %54 = vmatprep.subr.mxu0 0.0
  %55 = vmatpush1.msra.mxu0 0.0
  %56 = vmatprep.subr.mxu0 0.0
  %57 = vmatpush1.msra.mxu0 0.0
  %58 = vmatprep.subr.mxu0 0.0
  %59 = vmatpush1.msra.mxu0 0.0
  %60 = vmatprep.subr.mxu0 0.0
  %61 = vmatpush1.msra.mxu0 0.0
  %62 = vmatprep.subr.mxu0 0.0
  %63 = vmatpush1.msra.mxu0 0.0
  %64 = vmatprep.subr.mxu0 0.0
  %65 = vmatpush1.msra.mxu0 0.0
  %66 = vmatprep.subr.mxu0 0.0
  %67 = vmatpush1.msra.mxu0 0.0
  %68 = vmatprep.subr.mxu0 0.0
  %69 = vmatpush1.msra.mxu0 0.0
  %70 = vmatprep.subr.mxu0 0.0
  %71 = vmatpush1.msra.mxu0 0.0
  %72 = vmatprep.subr.mxu0 0.0
  %73 = vmatpush1.msra.mxu0 0.0
  %74 = vmatprep.subr.mxu0 0.0
  %75 = vmatpush1.msra.mxu0 0.0
  %76 = vmatprep.subr.mxu0 0.0
  %77 = vmatpush1.msra.mxu0 0.0
  %78 = vmatprep.subr.mxu0 0.0
  %79 = vmatpush1.msra.mxu0 0.0
  %80 = vmatprep.subr.mxu0 0.0
  %81 = vmatpush1.msra.mxu0 0.0
  %82 = vmatprep.subr.mxu0 0.0
  %83 = vmatpush1.msra.mxu0 0.0
  %84 = vmatprep.subr.mxu0 0.0
  %85 = vmatpush1.msra.mxu0 0.0
  %86 = vmatprep.subr.mxu0 0.0
  %87 = vmatpush1.msra.mxu0 0.0
  %88 = vmatprep.subr.mxu0 0.0
  %89 = vmatpush1.msra.mxu0 0.0
  %90 = vmatprep.subr.mxu0 0.0
  %91 = vmatpush1.msra.mxu0 0.0
  %92 = vmatprep.subr.mxu0 0.0
  %93 = vmatpush1.msra.mxu0 0.0
  %94 = vmatprep.subr.mxu0 0.0
  %95 = vmatpush1.msra.mxu0 0.0
  %96 = vmatprep.subr.mxu0 0.0
  %97 = vmatpush1.msra.mxu0 0.0
  %98 = vmatprep.subr.mxu0 0.0
  %99 = vmatpush1.msra.mxu0 0.0
  %100 = vmatprep.subr.mxu0 0.0
  %101 = vmatpush1.msra.mxu0 0.0
  %102 = vmatprep.mubr.f32.mxu0 0.0
  %103 = vmatmul.mubr.f32.gmra.mrb[0].mxu0 %v33
  %v104 = vpop.f32.mrb[0].mxu0
  %v105 = vadd.f32 %v24, %v104
  %v106 = vpop.f32.mrb[0].mxu0
  %107 = vmatprep.mubr.f32.mxu0 0.0
  %108 = vmatmul.mubr.f32.gmra.mrb[0].mxu0 %v36
  %v109 = vpop.f32.mrb[0].mxu0
  %v110 = vadd.f32 %v29, %v109
  %v111 = vpop.f32.mrb[0].mxu0
  %112 = vdwg.mxu0
  %vm113 = vcmask 261120
  %114 = vst.msk [vmem:[%s3] sm:$0xff] %vm113, %v105
  %115 = vst.msk [vmem:[%s3 + $0x8] sm:$0xff] %vm113, %v110
  // Predicated region
  $region14: #{uperhead_forward.16} parent=0 // pred_check
    _
  $region15: #{uperhead_forward.16} parent=0 // pred_check_branch
    %117 = sbr.rel (0) target = $region17
  $region16: #{uperhead_forward.16} parent=0 // pred_region
    _
  $region17: #{uperhead_forward.16} parent=0 // pred_fallthru
    _
  // Predicated region
  $region18: #{uperhead_forward.16} parent=0 // pred_check
    _
  $region19: #{uperhead_forward.16} parent=0 // pred_check_branch
    %119 = sbr.rel (0) target = $region21
  $region20: #{uperhead_forward.16} parent=0 // pred_region
    _
  $region21: #{uperhead_forward.16} parent=0 // pred_fallthru
    _

// kernel: uperhead_forward.17
$region0: #{uperhead_forward.17}
  #allocation0 [shape = 'u32[]', space=smem, size = 0x4, offset = 0x4, fixed_abs, tag = 'smem constant byte address 0x4 - core index']
  #allocation1 [shape = 'u32[144,128]{1,0:T(1,128)}', space=vmem, size = 0x12000, scoped, tag = 'internal scratch']
  %s0 = inlined_call_operand.vmem [shape: f32[32,32], index: 0, kind: input, shape index: {}]
  %s1 = inlined_call_operand.vmem [shape: f32[4,32,32], index: 1, kind: input, shape index: {}]
  %s2 = inlined_call_operand.vmem [shape: f32[4,16,32], index: 2, kind: input, shape index: {}]
  %s3 = inlined_call_operand.vmem [shape: f32[4,16,1], index: 3, kind: input, shape index: {}]
  %s4 = inlined_call_operand.vmem [shape: f32[64,32], index: 4, kind: output, shape index: {}]
  %s5 = sld [smem:[#allocation0]]
  $region49: #{uperhead_forward.17} parent=0
    _
  %s7 = ssub.s32 1, %s5
  %s8 = scalar_select 0, %s7, %s5
  loop: start=0, step=1, limit=6
  $region2: #{uperhead_forward.17} parent=0 // loop_pre_header
    _
  $region3: #{uperhead_forward.17} parent=0 // loop_header
    %s10 = sphi 0, %s14
    %p11 = scmp.ge.s32.totalorder %s10, 6
    %s18 = sphi 0, %s18
    %s20 = sphi 0, %s18
    %s21 = sphi 0, %s20
    %s35 = sphi 0, %s21
    %s41 = sphi 0, %s43
    %s44 = sphi 0, %s41
    %s45 = sphi 0, %s44
    %s61 = sphi 0, %s45
    %s67 = sphi 0, %s69
    %s70 = sphi 0, %s67
    %s71 = sphi 0, %s70
    %s87 = sphi 0, %s71
    %s93 = sphi 0, %s95
    %s96 = sphi 0, %s93
    %s97 = sphi 0, %s96
    %s113 = sphi 0, %s97
    %s119 = sphi 0, %s121
    %s122 = sphi 0, %s119
    %s123 = sphi 0, %s122
    %s139 = sphi 0, %s123
  $region4: #{uperhead_forward.17} parent=0 // loop_header_branch
    %13 = sbr.rel (%p11) target = $region8
  $region5: #{uperhead_forward.17} parent=0 // loop_body
    %s15 = ssub.s32 %s10, 1
    %s16 = ssub.s32 %s10, 2
    %s17 = sadd.s32 %s10, 1
    %s19 = sadd.s32 %s18, 1
    %p22 = scmp.eq.s32.totalorder %s10, 3
    %p23 = scmp.ne.s32.totalorder %s18, %s20
    %p24 = scmp.eq.s32.totalorder %s10, 0
    %p25 = por %p23, %p24
    %p26 = scmp.ne.s32.totalorder %s18, %s20
    %p27 = scmp.eq.s32.totalorder %s15, 3
    %p28 = por %p26, %p27
    %p29 = scmp.ne.s32.totalorder %s20, %s21
    %p30 = scmp.eq.s32.totalorder %s15, 0
    %p31 = por %p29, %p30
    %p32 = scmp.ne.s32.totalorder %s20, %s21
    %p33 = scmp.eq.s32.totalorder %s16, 3
    %p34 = por %p32, %p33
    %p36 = scmp.ne.s32.totalorder %s21, %s35
    %p37 = scmp.eq.s32.totalorder %s16, 0
    %p38 = por %p36, %p37
    %s39 = ssub.s32 %s10, %s17
    %p40 = scmp.eq.s32.totalorder %s39, 0
    %s42 = sadd.s32 %s41, 1
    %s43 = scalar_select %p40, %s41, %s42
    %p46 = pneg %p40
    %p47 = scmp.eq.s32.totalorder %s10, 3
    %p48 = por %p46, %p47
    %p49 = scmp.ne.s32.totalorder %s41, %s44
    %p50 = scmp.eq.s32.totalorder %s10, 0
    %p51 = por %p49, %p50
    %p52 = scmp.ne.s32.totalorder %s41, %s44
    %p53 = scmp.eq.s32.totalorder %s15, 3
    %p54 = por %p52, %p53
    %p55 = scmp.ne.s32.totalorder %s44, %s45
    %p56 = scmp.eq.s32.totalorder %s15, 0
    %p57 = por %p55, %p56
    %p58 = scmp.ne.s32.totalorder %s44, %s45
    %p59 = scmp.eq.s32.totalorder %s16, 3
    %p60 = por %p58, %p59
    %p62 = scmp.ne.s32.totalorder %s45, %s61
    %p63 = scmp.eq.s32.totalorder %s16, 0
    %p64 = por %p62, %p63
    %s65 = ssub.s32 %s10, %s17
    %p66 = scmp.eq.s32.totalorder %s65, 0
    %s68 = sadd.s32 %s67, 1
    %s69 = scalar_select %p66, %s67, %s68
    %p72 = pneg %p66
    %p73 = scmp.eq.s32.totalorder %s10, 3
    %p74 = por %p72, %p73
    %p75 = scmp.ne.s32.totalorder %s67, %s70
    %p76 = scmp.eq.s32.totalorder %s10, 0
    %p77 = por %p75, %p76
    %p78 = scmp.ne.s32.totalorder %s67, %s70
    %p79 = scmp.eq.s32.totalorder %s15, 3
    %p80 = por %p78, %p79
    %p81 = scmp.ne.s32.totalorder %s70, %s71
    %p82 = scmp.eq.s32.totalorder %s15, 0
    %p83 = por %p81, %p82
    %p84 = scmp.ne.s32.totalorder %s70, %s71
    %p85 = scmp.eq.s32.totalorder %s16, 3
    %p86 = por %p84, %p85
    %p88 = scmp.ne.s32.totalorder %s71, %s87
    %p89 = scmp.eq.s32.totalorder %s16, 0
    %p90 = por %p88, %p89
    %s91 = ssub.s32 %s10, %s17
    %p92 = scmp.eq.s32.totalorder %s91, 0
    %s94 = sadd.s32 %s93, 1
    %s95 = scalar_select %p92, %s93, %s94
    %p98 = pneg %p92
    %p99 = scmp.eq.s32.totalorder %s10, 3
    %p100 = por %p98, %p99
    %p101 = scmp.ne.s32.totalorder %s93, %s96
    %p102 = scmp.eq.s32.totalorder %s10, 0
    %p103 = por %p101, %p102
    %p104 = scmp.ne.s32.totalorder %s93, %s96
    %p105 = scmp.eq.s32.totalorder %s15, 3
    %p106 = por %p104, %p105
    %p107 = scmp.ne.s32.totalorder %s96, %s97
    %p108 = scmp.eq.s32.totalorder %s15, 0
    %p109 = por %p107, %p108
    %p110 = scmp.ne.s32.totalorder %s96, %s97
    %p111 = scmp.eq.s32.totalorder %s16, 3
    %p112 = por %p110, %p111
    %p114 = scmp.ne.s32.totalorder %s97, %s113
    %p115 = scmp.eq.s32.totalorder %s16, 0
    %p116 = por %p114, %p115
    %s117 = ssub.s32 %s10, %s17
    %p118 = scmp.eq.s32.totalorder %s117, 0
    %s120 = sadd.s32 %s119, 1
    %s121 = scalar_select %p118, %s119, %s120
    %p124 = pneg %p118
    %p125 = scmp.eq.s32.totalorder %s10, 3
    %p126 = por %p124, %p125
    %p127 = scmp.ne.s32.totalorder %s119, %s122
    %p128 = scmp.eq.s32.totalorder %s10, 0
    %p129 = por %p127, %p128
    %p130 = scmp.ne.s32.totalorder %s119, %s122
    %p131 = scmp.eq.s32.totalorder %s15, 3
    %p132 = por %p130, %p131
    %p133 = scmp.ne.s32.totalorder %s122, %s123
    %p134 = scmp.eq.s32.totalorder %s15, 0
    %p135 = por %p133, %p134
    %p136 = scmp.ne.s32.totalorder %s122, %s123
    %p137 = scmp.eq.s32.totalorder %s16, 3
    %p138 = por %p136, %p137
    %p140 = scmp.ne.s32.totalorder %s123, %s139
    %p141 = scmp.eq.s32.totalorder %s16, 0
    %p142 = por %p140, %p141
    %p143 = scmp.le.s32.totalorder 1, %s10
    %p144 = scmp.lt.s32.totalorder %s10, 5
    %p145 = pnand %p143, %p144
    %p146 = pneg %p145
    // Predicated region
    $region9: #{uperhead_forward.17} parent=5 // pred_check
      _
    $region10: #{uperhead_forward.17} parent=5 // pred_check_branch
      %148 = sbr.rel (%p145) target = $region12
    $region11: #{uperhead_forward.17} parent=5 // pred_region
      %s149 = ssub.s32 %s10, 1
      // Predicated region
      $region13: #{uperhead_forward.17} parent=11 // pred_check
        %p150 = pneg %p31
      $region14: #{uperhead_forward.17} parent=11 // pred_check_branch
        %152 = sbr.rel (%p150) target = $region16
      $region15: #{uperhead_forward.17} parent=11 // pred_region
        _
      $region16: #{uperhead_forward.17} parent=11 // pred_fallthru
        _
    $region12: #{uperhead_forward.17} parent=5 // pred_fallthru
      _
    %p153 = scmp.lt.s32.totalorder %s10, 4
    // Predicated region
    $region17: #{uperhead_forward.17} parent=5 // pred_check
      %p154 = pneg %p153
    $region18: #{uperhead_forward.17} parent=5 // pred_check_branch
      %156 = sbr.rel (%p154) target = $region20
    $region19: #{uperhead_forward.17} parent=5 // pred_region
      // Predicated region
      $region21: #{uperhead_forward.17} parent=19 // pred_check
        %p157 = pneg %p51
      $region22: #{uperhead_forward.17} parent=19 // pred_check_branch
        %159 = sbr.rel (%p157) target = $region24
      $region23: #{uperhead_forward.17} parent=19 // pred_region
        %p160 = scmp.lt.s32.totalorder %s10, 3
        %s161 = scalar_select %p160, %s10, 3
        %s162 = smul.addr %s161, 4
        %s163 = smul.addr %s162, 8
        %s164 = scalar_lea.vmem %s1, %s163
      $region24: #{uperhead_forward.17} parent=19 // pred_fallthru
        _
      // Predicated region
      $region25: #{uperhead_forward.17} parent=19 // pred_check
        %p165 = pneg %p77
      $region26: #{uperhead_forward.17} parent=19 // pred_check_branch
        %167 = sbr.rel (%p165) target = $region28
      $region27: #{uperhead_forward.17} parent=19 // pred_region
        %p168 = scmp.lt.s32.totalorder %s10, 3
        %s169 = scalar_select %p168, %s10, 3
        %s170 = smul.addr %s169, 2
        %s171 = smul.addr %s170, 8
        %s172 = scalar_lea.vmem %s2, %s171
      $region28: #{uperhead_forward.17} parent=19 // pred_fallthru
        _
      // Predicated region
      $region29: #{uperhead_forward.17} parent=19 // pred_check
        %p173 = pneg %p103
      $region30: #{uperhead_forward.17} parent=19 // pred_check_branch
        %175 = sbr.rel (%p173) target = $region32
      $region31: #{uperhead_forward.17} parent=19 // pred_region
        %p176 = scmp.lt.s32.totalorder %s10, 3
        %s177 = scalar_select %p176, %s10, 3
        %s178 = smul.addr %s177, 2
        %s179 = smul.addr %s178, 8
        %s180 = scalar_lea.vmem %s3, %s179
      $region32: #{uperhead_forward.17} parent=19 // pred_fallthru
        _
    $region20: #{uperhead_forward.17} parent=5 // pred_fallthru
      _
    %p181 = scmp.le.s32.totalorder 1, %s10
    %p182 = scmp.lt.s32.totalorder %s10, 5
    %p183 = pnand %p181, %p182
    %p184 = pneg %p183
    // Predicated region
    $region33: #{uperhead_forward.17} parent=5 // pred_check
      _
    $region34: #{uperhead_forward.17} parent=5 // pred_check_branch
      %186 = sbr.rel (%p183) target = $region36
    $region35: #{uperhead_forward.17} parent=5 // pred_region
      %s187 = ssub.s32 %s10, 1
      %p188 = pneg %p31
      %p189 = pneg %p28
      %p190 = scmp.lt.s32.totalorder %s15, 3
      %s191 = scalar_select %p190, %s15, 3
      %s192 = smul.addr %s191, 4
      %s193 = smul.addr %s192, 8
      %s194 = scalar_lea.vmem %s1, %s193
      %p195 = pneg %p57
      %p196 = pneg %p54
      %p197 = scmp.lt.s32.totalorder %s15, 3
      %s198 = scalar_select %p197, %s15, 3
      %s199 = smul.addr %s198, 2
      %s200 = smul.addr %s199, 8
      %s201 = scalar_lea.vmem %s2, %s200
      %p202 = pneg %p83
      %p203 = pneg %p80
      %p204 = scmp.lt.s32.totalorder %s15, 3
      %s205 = scalar_select %p204, %s15, 3
      %s206 = smul.addr %s205, 2
      %s207 = smul.addr %s206, 8
      %s208 = scalar_lea.vmem %s3, %s207
      %p209 = pneg %p109
      %p210 = pneg %p106
      %p211 = pneg %p135
      %p212 = pneg %p132
      %s213 = smul.u32 2, %s15
      %p214 = scmp.lt.s32.totalorder %s213, 7
      %s215 = scalar_select %p214, %s213, 7
      %s216 = smul.addr %s215, 8
      %s217 = scalar_lea.vmem %s4, %s216
      %p218 = scmp.lt.s32.totalorder %s15, 3
      %s219 = scalar_select %p218, %s15, 3
      %s220 = smul.addr %s219, 4
      %s221 = smul.addr %s220, 8
      %s222 = scalar_lea.vmem %s1, %s221
      %p223 = scmp.lt.s32.totalorder %s15, 3
      %s224 = scalar_select %p223, %s15, 3
      %s225 = smul.addr %s224, 2
      %s226 = smul.addr %s225, 8
      %s227 = scalar_lea.vmem %s2, %s226
      %p228 = scmp.lt.s32.totalorder %s15, 3
      %s229 = scalar_select %p228, %s15, 3
      %s230 = smul.addr %s229, 2
      %s231 = smul.addr %s230, 8
      %s232 = scalar_lea.vmem %s3, %s231
      %s233 = smul.u32 2, %s15
      %p234 = scmp.lt.s32.totalorder %s233, 7
      %s235 = scalar_select %p234, %s233, 7
      %s236 = smul.addr %s235, 8
      %s237 = scalar_lea.vmem %s4, %s236
      %s238 = smul.u32 2, %s15
      %v239 = vld [vmem:[%s0] sm:$0xff]
      %v240 = vld [vmem:[%s0 + $0x8] sm:$0xff]
      %v241 = vld [vmem:[%s0 + $0x10] sm:$0xff]
      %v242 = vld [vmem:[%s0 + $0x18] sm:$0xff]
      %v243 = vld [vmem:[%s222] sm:$0xff]
      %v244 = vld [vmem:[%s222 + $0x8] sm:$0xff]
      %v245 = vld [vmem:[%s222 + $0x10] sm:$0xff]
      %v246 = vld [vmem:[%s222 + $0x18] sm:$0xff]
      %vm247 = vcmask 261120
      %v249 = vsel %vm247, %v239, 0
      %v252 = vsel %vm247, %v240, 0
      %v255 = vsel %vm247, %v241, 0
      %v258 = vsel %vm247, %v242, 0
      %260 = vmatprep.subr.mxu0 0.0
      %261 = vmatpush1.msra.mxu0 %v243
      %262 = vmatprep.subr.mxu0 0.0
      %263 = vmatpush1.msra.mxu0 %v244
      %264 = vmatprep.subr.mxu0 0.0
      %265 = vmatpush1.msra.mxu0 %v245
      %266 = vmatprep.subr.mxu0 0.0
      %267 = vmatpush1.msra.mxu0 %v246
      %268 = vmatprep.subr.mxu0 0.0
      %269 = vmatpush1.msra.mxu0 0.0
      %270 = vmatprep.subr.mxu0 0.0
      %271 = vmatpush1.msra.mxu0 0.0
      %272 = vmatprep.subr.mxu0 0.0
      %273 = vmatpush1.msra.mxu0 0.0
      %274 = vmatprep.subr.mxu0 0.0
      %275 = vmatpush1.msra.mxu0 0.0
      %276 = vmatprep.subr.mxu0 0.0
      %277 = vmatpush1.msra.mxu0 0.0
      %278 = vmatprep.subr.mxu0 0.0
      %279 = vmatpush1.msra.mxu0 0.0
      %280 = vmatprep.subr.mxu0 0.0
      %281 = vmatpush1.msra.mxu0 0.0
      %282 = vmatprep.subr.mxu0 0.0
      %283 = vmatpush1.msra.mxu0 0.0
      %284 = vmatprep.subr.mxu0 0.0
      %285 = vmatpush1.msra.mxu0 0.0
      %286 = vmatprep.subr.mxu0 0.0
      %287 = vmatpush1.msra.mxu0 0.0
      %288 = vmatprep.subr.mxu0 0.0
      %289 = vmatpush1.msra.mxu0 0.0
      %290 = vmatprep.subr.mxu0 0.0
      %291 = vmatpush1.msra.mxu0 0.0
      %292 = vmatprep.subr.mxu0 0.0
      %293 = vmatpush1.msra.mxu0 0.0
      %294 = vmatprep.subr.mxu0 0.0
      %295 = vmatpush1.msra.mxu0 0.0
      %296 = vmatprep.subr.mxu0 0.0
      %297 = vmatpush1.msra.mxu0 0.0
      %298 = vmatprep.subr.mxu0 0.0
      %299 = vmatpush1.msra.mxu0 0.0
      %300 = vmatprep.subr.mxu0 0.0
      %301 = vmatpush1.msra.mxu0 0.0
      %302 = vmatprep.subr.mxu0 0.0
      %303 = vmatpush1.msra.mxu0 0.0
      %304 = vmatprep.subr.mxu0 0.0
      %305 = vmatpush1.msra.mxu0 0.0
      %306 = vmatprep.subr.mxu0 0.0
      %307 = vmatpush1.msra.mxu0 0.0
      %308 = vmatprep.subr.mxu0 0.0
      %309 = vmatpush1.msra.mxu0 0.0
      %310 = vmatprep.subr.mxu0 0.0
      %311 = vmatpush1.msra.mxu0 0.0
      %312 = vmatprep.subr.mxu0 0.0
      %313 = vmatpush1.msra.mxu0 0.0
      %314 = vmatprep.subr.mxu0 0.0
      %315 = vmatpush1.msra.mxu0 0.0
      %316 = vmatprep.subr.mxu0 0.0
      %317 = vmatpush1.msra.mxu0 0.0
      %318 = vmatprep.subr.mxu0 0.0
      %319 = vmatpush1.msra.mxu0 0.0
      %320 = vmatprep.subr.mxu0 0.0
      %321 = vmatpush1.msra.mxu0 0.0
      %322 = vmatprep.subr.mxu0 0.0
      %323 = vmatpush1.msra.mxu0 0.0
      %324 = vmatprep.mubr.f32.mxu0 0.0
      %325 = vmatmul.mubr.f32.gmra.mrb[0].mxu0 %v249
      %v326 = vpop.f32.mrb[0].mxu0
      %v327 = vadd.f32 0.0, %v326
      %v328 = vpop.f32.mrb[0].mxu0
      %329 = vmatprep.mubr.f32.mxu0 0.0
      %330 = vmatmul.mubr.f32.gmra.mrb[0].mxu0 %v252
      %v331 = vpop.f32.mrb[0].mxu0
      %v332 = vadd.f32 0.0, %v331
      %v333 = vpop.f32.mrb[0].mxu0
      %334 = vmatprep.mubr.f32.mxu0 0.0
      %335 = vmatmul.mubr.f32.gmra.mrb[0].mxu0 %v255
      %v336 = vpop.f32.mrb[0].mxu0
      %v337 = vadd.f32 0.0, %v336
      %v338 = vpop.f32.mrb[0].mxu0
      %339 = vmatprep.mubr.f32.mxu0 0.0
      %340 = vmatmul.mubr.f32.gmra.mrb[0].mxu0 %v258
      %v341 = vpop.f32.mrb[0].mxu0
      %v342 = vadd.f32 0.0, %v341
      %v343 = vpop.f32.mrb[0].mxu0
      %344 = vdwg.mxu0
      %v345 = vld [vmem:[%s227] sm:$0xff]
      %v346 = vld [vmem:[%s227 + $0x8] sm:$0xff]
      %v347 = vld [vmem:[%s232] sm:$0xff]
      %v348 = vld [vmem:[%s232 + $0x8] sm:$0xff]
      %350 = vset.pattern.permute.xlu0 0
      %351 = vperm.xlu0 %350, %v347
      %v352 = vpop.permute.xlu0 %351
      %355 = vset.pattern.permute.xlu0 0
      %356 = vperm.xlu0 %355, %v348
      %v357 = vpop.permute.xlu0 %356
      %v360 = vsel %vm247, %v345, 0
      %v363 = vsel %vm247, %v346, 0
      %365 = vmatprep.subr.mxu0 0.0
      %366 = vmatpush1.msra.mxu0 %v327
      %367 = vmatprep.subr.mxu0 0.0
      %368 = vmatpush1.msra.mxu0 %v332
      %369 = vmatprep.subr.mxu0 0.0
      %370 = vmatpush1.msra.mxu0 %v337
      %371 = vmatprep.subr.mxu0 0.0
      %372 = vmatpush1.msra.mxu0 %v342
      %373 = vmatprep.subr.mxu0 0.0
      %374 = vmatpush1.msra.mxu0 0.0
      %375 = vmatprep.subr.mxu0 0.0
      %376 = vmatpush1.msra.mxu0 0.0
      %377 = vmatprep.subr.mxu0 0.0
      %378 = vmatpush1.msra.mxu0 0.0
      %379 = vmatprep.subr.mxu0 0.0
      %380 = vmatpush1.msra.mxu0 0.0
      %381 = vmatprep.subr.mxu0 0.0
      %382 = vmatpush1.msra.mxu0 0.0
      %383 = vmatprep.subr.mxu0 0.0
      %384 = vmatpush1.msra.mxu0 0.0
      %385 = vmatprep.subr.mxu0 0.0
      %386 = vmatpush1.msra.mxu0 0.0
      %387 = vmatprep.subr.mxu0 0.0
      %388 = vmatpush1.msra.mxu0 0.0
      %389 = vmatprep.subr.mxu0 0.0
      %390 = vmatpush1.msra.mxu0 0.0
      %391 = vmatprep.subr.mxu0 0.0
      %392 = vmatpush1.msra.mxu0 0.0
      %393 = vmatprep.subr.mxu0 0.0
      %394 = vmatpush1.msra.mxu0 0.0
      %395 = vmatprep.subr.mxu0 0.0
      %396 = vmatpush1.msra.mxu0 0.0
      %397 = vmatprep.subr.mxu0 0.0
      %398 = vmatpush1.msra.mxu0 0.0
      %399 = vmatprep.subr.mxu0 0.0
      %400 = vmatpush1.msra.mxu0 0.0
      %401 = vmatprep.subr.mxu0 0.0
      %402 = vmatpush1.msra.mxu0 0.0
      %403 = vmatprep.subr.mxu0 0.0
      %404 = vmatpush1.msra.mxu0 0.0
      %405 = vmatprep.subr.mxu0 0.0
      %406 = vmatpush1.msra.mxu0 0.0
      %407 = vmatprep.subr.mxu0 0.0
      %408 = vmatpush1.msra.mxu0 0.0
      %409 = vmatprep.subr.mxu0 0.0
      %410 = vmatpush1.msra.mxu0 0.0
      %411 = vmatprep.subr.mxu0 0.0
      %412 = vmatpush1.msra.mxu0 0.0
      %413 = vmatprep.subr.mxu0 0.0
      %414 = vmatpush1.msra.mxu0 0.0
      %415 = vmatprep.subr.mxu0 0.0
      %416 = vmatpush1.msra.mxu0 0.0
      %417 = vmatprep.subr.mxu0 0.0
      %418 = vmatpush1.msra.mxu0 0.0
      %419 = vmatprep.subr.mxu0 0.0
      %420 = vmatpush1.msra.mxu0 0.0
      %421 = vmatprep.subr.mxu0 0.0
      %422 = vmatpush1.msra.mxu0 0.0
      %423 = vmatprep.subr.mxu0 0.0
      %424 = vmatpush1.msra.mxu0 0.0
      %425 = vmatprep.subr.mxu0 0.0
      %426 = vmatpush1.msra.mxu0 0.0
      %427 = vmatprep.subr.mxu0 0.0
      %428 = vmatpush1.msra.mxu0 0.0
      %429 = vmatprep.mubr.f32.mxu0 0.0
      %430 = vmatmul.mubr.f32.gmra.mrb[0].mxu0 %v360
      %v431 = vpop.f32.mrb[0].mxu0
      %v432 = vadd.f32 %v352, %v431
      %v433 = vpop.f32.mrb[0].mxu0
      %434 = vmatprep.mubr.f32.mxu0 0.0
      %435 = vmatmul.mubr.f32.gmra.mrb[0].mxu0 %v363
      %v436 = vpop.f32.mrb[0].mxu0
      %v437 = vadd.f32 %v357, %v436
      %v438 = vpop.f32.mrb[0].mxu0
      %439 = vdwg.mxu0
      %440 = vst.msk [vmem:[%s237] sm:$0xff] %vm247, %v432
      %441 = vst.msk [vmem:[%s237 + $0x8] sm:$0xff] %vm247, %v437
      %s442 = smul.u32 2, %s15
      %p443 = scmp.lt.s32.totalorder %s442, 7
      %s444 = scalar_select %p443, %s442, 7
      %s445 = smul.addr %s444, 8
      %s446 = scalar_lea.vmem %s4, %s445
      // Predicated region
      $region37: #{uperhead_forward.17} parent=35 // pred_check
        %p447 = pneg %p132
      $region38: #{uperhead_forward.17} parent=35 // pred_check_branch
        %449 = sbr.rel (%p447) target = $region40
      $region39: #{uperhead_forward.17} parent=35 // pred_region
        %s450 = smul.u32 2, %s15
      $region40: #{uperhead_forward.17} parent=35 // pred_fallthru
        _
    $region36: #{uperhead_forward.17} parent=5 // pred_fallthru
      _
    %p451 = scmp.le.s32.totalorder 2, %s10
    // Predicated region
    $region41: #{uperhead_forward.17} parent=5 // pred_check
      %p452 = pneg %p451
    $region42: #{uperhead_forward.17} parent=5 // pred_check_branch
      %454 = sbr.rel (%p452) target = $region44
    $region43: #{uperhead_forward.17} parent=5 // pred_region
      %s455 = ssub.s32 %s10, 2
      // Predicated region
      $region45: #{uperhead_forward.17} parent=43 // pred_check
        %p456 = pneg %p138
      $region46: #{uperhead_forward.17} parent=43 // pred_check_branch
        %458 = sbr.rel (%p456) target = $region48
      $region47: #{uperhead_forward.17} parent=43 // pred_region
        %s459 = smul.u32 2, %s16
        %p460 = scmp.lt.s32.totalorder %s459, 7
        %s461 = scalar_select %p460, %s459, 7
        %s462 = smul.addr %s461, 8
        %s463 = scalar_lea.vmem %s4, %s462
      $region48: #{uperhead_forward.17} parent=43 // pred_fallthru
        _
    $region44: #{uperhead_forward.17} parent=5 // pred_fallthru
      _
  $region6: #{uperhead_forward.17} parent=0 // loop_footer
    %s14 = sadd.s32 1, %s10
  $region7: #{uperhead_forward.17} parent=0 // loop_footer_branch
    %9 = sbr.rel target = $region3
  $region8: #{uperhead_forward.17} parent=0 // loop_exit
    _

// kernel: uperhead_forward.19
$region0: #{uperhead_forward.19}
  #allocation0 [shape = 'u32[]', space=smem, size = 0x4, offset = 0x4, fixed_abs, tag = 'smem constant byte address 0x4 - core index']
  #allocation1 [shape = 'u32[144,128]{1,0:T(1,128)}', space=vmem, size = 0x12000, scoped, tag = 'internal scratch']
  %s0 = inlined_call_operand.vmem [shape: f32[16,32], index: 0, kind: input, shape index: {}]
  %s1 = inlined_call_operand.vmem [shape: f32[32,128], index: 1, kind: input, shape index: {}]
  %s2 = inlined_call_operand.vmem [shape: f32[16,128], index: 2, kind: input, shape index: {}]
  %s3 = inlined_call_operand.vmem [shape: f32[16,128], index: 3, kind: output, shape index: {}]
  %s4 = sld [smem:[#allocation0]]
  $region22: #{uperhead_forward.19} parent=0
    _
  %s6 = ssub.s32 1, %s4
  %s7 = scalar_select 0, %s6, %s4
  // Predicated region
  $region2: #{uperhead_forward.19} parent=0 // pred_check
    _
  $region3: #{uperhead_forward.19} parent=0 // pred_check_branch
    %9 = sbr.rel (0) target = $region5
  $region4: #{uperhead_forward.19} parent=0 // pred_region
    _
  $region5: #{uperhead_forward.19} parent=0 // pred_fallthru
    _
  // Predicated region
  $region6: #{uperhead_forward.19} parent=0 // pred_check
    _
  $region7: #{uperhead_forward.19} parent=0 // pred_check_branch
    %11 = sbr.rel (0) target = $region9
  $region8: #{uperhead_forward.19} parent=0 // pred_region
    _
  $region9: #{uperhead_forward.19} parent=0 // pred_fallthru
    _
  // Predicated region
  $region10: #{uperhead_forward.19} parent=0 // pred_check
    _
  $region11: #{uperhead_forward.19} parent=0 // pred_check_branch
    %13 = sbr.rel (0) target = $region13
  $region12: #{uperhead_forward.19} parent=0 // pred_region
    _
  $region13: #{uperhead_forward.19} parent=0 // pred_fallthru
    _
  %v14 = vld [vmem:[%s2] sm:$0xff]
  %v15 = vld [vmem:[%s2 + $0x8] sm:$0xff]
  %v16 = vld [vmem:[%s0] sm:$0xff]
  %v17 = vld [vmem:[%s0 + $0x8] sm:$0xff]
  %v18 = vld [vmem:[%s1] sm:$0xff]
  %v19 = vld [vmem:[%s1 + $0x8] sm:$0xff]
  %v20 = vld [vmem:[%s1 + $0x10] sm:$0xff]
  %v21 = vld [vmem:[%s1 + $0x18] sm:$0xff]
  %vm22 = vcmask 261120
  %v24 = vsel %vm22, %v16, 0
  %v27 = vsel %vm22, %v17, 0
  %29 = vmatprep.subr.mxu0 0.0
  %30 = vmatpush1.msra.mxu0 %v18
  %31 = vmatprep.subr.mxu0 0.0
  %32 = vmatpush1.msra.mxu0 %v19
  %33 = vmatprep.subr.mxu0 0.0
  %34 = vmatpush1.msra.mxu0 %v20
  %35 = vmatprep.subr.mxu0 0.0
  %36 = vmatpush1.msra.mxu0 %v21
  %37 = vmatprep.subr.mxu0 0.0
  %38 = vmatpush1.msra.mxu0 0.0
  %39 = vmatprep.subr.mxu0 0.0
  %40 = vmatpush1.msra.mxu0 0.0
  %41 = vmatprep.subr.mxu0 0.0
  %42 = vmatpush1.msra.mxu0 0.0
  %43 = vmatprep.subr.mxu0 0.0
  %44 = vmatpush1.msra.mxu0 0.0
  %45 = vmatprep.subr.mxu0 0.0
  %46 = vmatpush1.msra.mxu0 0.0
  %47 = vmatprep.subr.mxu0 0.0
  %48 = vmatpush1.msra.mxu0 0.0
  %49 = vmatprep.subr.mxu0 0.0
  %50 = vmatpush1.msra.mxu0 0.0
  %51 = vmatprep.subr.mxu0 0.0
  %52 = vmatpush1.msra.mxu0 0.0
  %53 = vmatprep.subr.mxu0 0.0
  %54 = vmatpush1.msra.mxu0 0.0
  %55 = vmatprep.subr.mxu0 0.0
  %56 = vmatpush1.msra.mxu0 0.0
  %57 = vmatprep.subr.mxu0 0.0
  %58 = vmatpush1.msra.mxu0 0.0
  %59 = vmatprep.subr.mxu0 0.0
  %60 = vmatpush1.msra.mxu0 0.0
  %61 = vmatprep.subr.mxu0 0.0
  %62 = vmatpush1.msra.mxu0 0.0
  %63 = vmatprep.subr.mxu0 0.0
  %64 = vmatpush1.msra.mxu0 0.0
  %65 = vmatprep.subr.mxu0 0.0
  %66 = vmatpush1.msra.mxu0 0.0
  %67 = vmatprep.subr.mxu0 0.0
  %68 = vmatpush1.msra.mxu0 0.0
  %69 = vmatprep.subr.mxu0 0.0
  %70 = vmatpush1.msra.mxu0 0.0
  %71 = vmatprep.subr.mxu0 0.0
  %72 = vmatpush1.msra.mxu0 0.0
  %73 = vmatprep.subr.mxu0 0.0
  %74 = vmatpush1.msra.mxu0 0.0
  %75 = vmatprep.subr.mxu0 0.0
  %76 = vmatpush1.msra.mxu0 0.0
  %77 = vmatprep.subr.mxu0 0.0
  %78 = vmatpush1.msra.mxu0 0.0
  %79 = vmatprep.subr.mxu0 0.0
  %80 = vmatpush1.msra.mxu0 0.0
  %81 = vmatprep.subr.mxu0 0.0
  %82 = vmatpush1.msra.mxu0 0.0
  %83 = vmatprep.subr.mxu0 0.0
  %84 = vmatpush1.msra.mxu0 0.0
  %85 = vmatprep.subr.mxu0 0.0
  %86 = vmatpush1.msra.mxu0 0.0
  %87 = vmatprep.subr.mxu0 0.0
  %88 = vmatpush1.msra.mxu0 0.0
  %89 = vmatprep.subr.mxu0 0.0
  %90 = vmatpush1.msra.mxu0 0.0
  %91 = vmatprep.subr.mxu0 0.0
  %92 = vmatpush1.msra.mxu0 0.0
  %93 = vmatprep.mubr.f32.mxu0 0.0
  %94 = vmatmul.mubr.f32.gmra.mrb[0].mxu0 %v24
  %v95 = vpop.f32.mrb[0].mxu0
  %v96 = vadd.f32 0.0, %v95
  %v97 = vpop.f32.mrb[0].mxu0
  %98 = vmatprep.mubr.f32.mxu0 0.0
  %99 = vmatmul.mubr.f32.gmra.mrb[0].mxu0 %v27
  %v100 = vpop.f32.mrb[0].mxu0
  %v101 = vadd.f32 0.0, %v100
  %v102 = vpop.f32.mrb[0].mxu0
  %103 = vdwg.mxu0
  %v104 = vadd.f32 %v14, %v96
  %v105 = vadd.f32 %v15, %v101
  %106 = vst [vmem:[%s3] sm:$0xff] %v104
  %107 = vst [vmem:[%s3 + $0x8] sm:$0xff] %v105
  // Predicated region
  $region14: #{uperhead_forward.19} parent=0 // pred_check
    _
  $region15: #{uperhead_forward.19} parent=0 // pred_check_branch
    %109 = sbr.rel (0) target = $region17
  $region16: #{uperhead_forward.19} parent=0 // pred_region
    _
  $region17: #{uperhead_forward.19} parent=0 // pred_fallthru
    _
  // Predicated region
  $region18: #{uperhead_forward.19} parent=0 // pred_check
    _
  $region19: #{uperhead_forward.19} parent=0 // pred_check_branch
    %111 = sbr.rel (0) target = $region21
  $region20: #{uperhead_forward.19} parent=0 // pred_region
    _
  $region21: #{uperhead_forward.19} parent=0 // pred_fallthru
    _

// kernel: uperhead_forward.18
$region0: #{uperhead_forward.18}
  #allocation0 [shape = 'u32[]', space=smem, size = 0x4, offset = 0x4, fixed_abs, tag = 'smem constant byte address 0x4 - core index']
  #allocation1 [shape = 'u32[144,128]{1,0:T(1,128)}', space=vmem, size = 0x12000, scoped, tag = 'internal scratch']
  %s0 = inlined_call_operand.vmem [shape: f32[96,86], index: 0, kind: input, shape index: {}]
  %s1 = inlined_call_operand.vmem [shape: f32[9,16,96], index: 1, kind: input, shape index: {}]
  %s2 = inlined_call_operand.vmem [shape: f32[16,1], index: 2, kind: input, shape index: {}]
  %s3 = inlined_call_operand.vmem [shape: f32[16,72], index: 3, kind: output, shape index: {}]
  %s4 = sld [smem:[#allocation0]]
  $region22: #{uperhead_forward.18} parent=0
    _
  %s6 = ssub.s32 1, %s4
  %s7 = scalar_select 0, %s6, %s4
  // Predicated region
  $region2: #{uperhead_forward.18} parent=0 // pred_check
    _
  $region3: #{uperhead_forward.18} parent=0 // pred_check_branch
    %9 = sbr.rel (0) target = $region5
  $region4: #{uperhead_forward.18} parent=0 // pred_region
    _
  $region5: #{uperhead_forward.18} parent=0 // pred_fallthru
    _
  // Predicated region
  $region6: #{uperhead_forward.18} parent=0 // pred_check
    _
  $region7: #{uperhead_forward.18} parent=0 // pred_check_branch
    %11 = sbr.rel (0) target = $region9
  $region8: #{uperhead_forward.18} parent=0 // pred_region
    _
  $region9: #{uperhead_forward.18} parent=0 // pred_fallthru
    _
  // Predicated region
  $region10: #{uperhead_forward.18} parent=0 // pred_check
    _
  $region11: #{uperhead_forward.18} parent=0 // pred_check_branch
    %13 = sbr.rel (0) target = $region13
  $region12: #{uperhead_forward.18} parent=0 // pred_region
    _
  $region13: #{uperhead_forward.18} parent=0 // pred_fallthru
    _
  %v14 = vld [vmem:[%s0] sm:$0xff]
  %v15 = vld [vmem:[%s0 + $0x8] sm:$0xff]
  %v16 = vld [vmem:[%s0 + $0x10] sm:$0xff]
  %v17 = vld [vmem:[%s0 + $0x18] sm:$0xff]
  %v18 = vld [vmem:[%s0 + $0x20] sm:$0xff]
  %v19 = vld [vmem:[%s0 + $0x28] sm:$0xff]
  %v20 = vld [vmem:[%s0 + $0x30] sm:$0xff]
  %v21 = vld [vmem:[%s0 + $0x38] sm:$0xff]
  %v22 = vld [vmem:[%s0 + $0x40] sm:$0xff]
  %v23 = vld [vmem:[%s0 + $0x48] sm:$0xff]
  %v24 = vld [vmem:[%s0 + $0x50] sm:$0xff]
  %v25 = vld [vmem:[%s0 + $0x58] sm:$0xff]
  %v26 = vld [vmem:[%s1] sm:$0xff]
  %v27 = vld [vmem:[%s1 + $0x8] sm:$0xff]
  %s28 = scalar_lea.vmem %s1, 16
  %v29 = vld [vmem:[%s28] sm:$0xff]
  %v30 = vld [vmem:[%s28 + $0x8] sm:$0xff]
  %43 = vrot.lane.b32.xlu0 %v14, 127
  %v44 = vpop.permute.xlu0 %43
  %45 = vrot.lane.b32.xlu0 %v15, 127
  %v46 = vpop.permute.xlu0 %45
  %47 = vrot.lane.b32.xlu0 %v16, 127
  %v48 = vpop.permute.xlu0 %47
  %49 = vrot.lane.b32.xlu0 %v17, 127
  %v50 = vpop.permute.xlu0 %49
  %51 = vrot.lane.b32.xlu0 %v18, 127
  %v52 = vpop.permute.xlu0 %51
  %53 = vrot.lane.b32.xlu0 %v19, 127
  %v54 = vpop.permute.xlu0 %53
  %55 = vrot.lane.b32.xlu0 %v20, 127
  %v56 = vpop.permute.xlu0 %55
  %57 = vrot.lane.b32.xlu0 %v21, 127
  %v58 = vpop.permute.xlu0 %57
  %59 = vrot.lane.b32.xlu0 %v22, 127
  %v60 = vpop.permute.xlu0 %59
  %61 = vrot.lane.b32.xlu0 %v23, 127
  %v62 = vpop.permute.xlu0 %61
  %63 = vrot.lane.b32.xlu0 %v24, 127
  %v64 = vpop.permute.xlu0 %63
  %65 = vrot.lane.b32.xlu0 %v25, 127
  %v66 = vpop.permute.xlu0 %65
  %vm79 = vcmask 785408
  %v81 = vsel %vm79, %v29, 0
  %v84 = vsel %vm79, %v30, 0
  %86 = vmatprep.subr.mxu0 0.0
  %87 = vmatpush1.msra.mxu0 %v44
  %88 = vmatprep.subr.mxu0 0.0
  %89 = vmatpush1.msra.mxu0 %v46
  %90 = vmatprep.subr.mxu0 0.0
  %91 = vmatpush1.msra.mxu0 %v48
  %92 = vmatprep.subr.mxu0 0.0
  %93 = vmatpush1.msra.mxu0 %v50
  %94 = vmatprep.subr.mxu0 0.0
  %95 = vmatpush1.msra.mxu0 %v52
  %96 = vmatprep.subr.mxu0 0.0
  %97 = vmatpush1.msra.mxu0 %v54
  %98 = vmatprep.subr.mxu0 0.0
  %99 = vmatpush1.msra.mxu0 %v56
  %100 = vmatprep.subr.mxu0 0.0
  %101 = vmatpush1.msra.mxu0 %v58
  %102 = vmatprep.subr.mxu0 0.0
  %103 = vmatpush1.msra.mxu0 %v60
  %104 = vmatprep.subr.mxu0 0.0
  %105 = vmatpush1.msra.mxu0 %v62
  %106 = vmatprep.subr.mxu0 0.0
  %107 = vmatpush1.msra.mxu0 %v64
  %108 = vmatprep.subr.mxu0 0.0
  %109 = vmatpush1.msra.mxu0 %v66
  %110 = vmatprep.subr.mxu0 0.0
  %111 = vmatpush1.msra.mxu0 0.0
  %112 = vmatprep.subr.mxu0 0.0
  %113 = vmatpush1.msra.mxu0 0.0
  %114 = vmatprep.subr.mxu0 0.0
  %115 = vmatpush1.msra.mxu0 0.0
  %116 = vmatprep.subr.mxu0 0.0
  %117 = vmatpush1.msra.mxu0 0.0
  %118 = vmatprep.subr.mxu0 0.0
  %119 = vmatpush1.msra.mxu0 0.0
  %120 = vmatprep.subr.mxu0 0.0
  %121 = vmatpush1.msra.mxu0 0.0
  %122 = vmatprep.subr.mxu0 0.0
  %123 = vmatpush1.msra.mxu0 0.0
  %124 = vmatprep.subr.mxu0 0.0
  %125 = vmatpush1.msra.mxu0 0.0
  %126 = vmatprep.subr.mxu0 0.0
  %127 = vmatpush1.msra.mxu0 0.0
  %128 = vmatprep.subr.mxu0 0.0
  %129 = vmatpush1.msra.mxu0 0.0
  %130 = vmatprep.subr.mxu0 0.0
  %131 = vmatpush1.msra.mxu0 0.0
  %132 = vmatprep.subr.mxu0 0.0
  %133 = vmatpush1.msra.mxu0 0.0
  %134 = vmatprep.subr.mxu0 0.0
  %135 = vmatpush1.msra.mxu0 0.0
  %136 = vmatprep.subr.mxu0 0.0
  %137 = vmatpush1.msra.mxu0 0.0
  %138 = vmatprep.subr.mxu0 0.0
  %139 = vmatpush1.msra.mxu0 0.0
  %140 = vmatprep.subr.mxu0 0.0
  %141 = vmatpush1.msra.mxu0 0.0
  %142 = vmatprep.subr.mxu0 0.0
  %143 = vmatpush1.msra.mxu0 0.0
  %144 = vmatprep.subr.mxu0 0.0
  %145 = vmatpush1.msra.mxu0 0.0
  %146 = vmatprep.subr.mxu0 0.0
  %147 = vmatpush1.msra.mxu0 0.0
  %148 = vmatprep.subr.mxu0 0.0
  %149 = vmatpush1.msra.mxu0 0.0
  %150 = vmatprep.mubr.f32.mxu0 0.0
  %151 = vmatmul.mubr.f32.gmra.mrb[0].mxu0 %v81
  %v152 = vpop.f32.mrb[0].mxu0
  %v153 = vadd.f32 0.0, %v152
  %v154 = vpop.f32.mrb[0].mxu0
  %155 = vmatprep.mubr.f32.mxu0 0.0
  %156 = vmatmul.mubr.f32.gmra.mrb[0].mxu0 %v84
  %v157 = vpop.f32.mrb[0].mxu0
  %v158 = vadd.f32 0.0, %v157
  %v159 = vpop.f32.mrb[0].mxu0
  %160 = vdwg.mxu0
  %v162 = vsel %vm79, %v26, 0
  %v165 = vsel %vm79, %v27, 0
  %167 = vmatprep.subr.mxu0 0.0
  %168 = vmatpush1.msra.mxu0 %v14
  %169 = vmatprep.subr.mxu0 0.0
  %170 = vmatpush1.msra.mxu0 %v15
  %171 = vmatprep.subr.mxu0 0.0
  %172 = vmatpush1.msra.mxu0 %v16
  %173 = vmatprep.subr.mxu0 0.0
  %174 = vmatpush1.msra.mxu0 %v17
  %175 = vmatprep.subr.mxu0 0.0
  %176 = vmatpush1.msra.mxu0 %v18
  %177 = vmatprep.subr.mxu0 0.0
  %178 = vmatpush1.msra.mxu0 %v19
  %179 = vmatprep.subr.mxu0 0.0
  %180 = vmatpush1.msra.mxu0 %v20
  %181 = vmatprep.subr.mxu0 0.0
  %182 = vmatpush1.msra.mxu0 %v21
  %183 = vmatprep.subr.mxu0 0.0
  %184 = vmatpush1.msra.mxu0 %v22
  %185 = vmatprep.subr.mxu0 0.0
  %186 = vmatpush1.msra.mxu0 %v23
  %187 = vmatprep.subr.mxu0 0.0
  %188 = vmatpush1.msra.mxu0 %v24
  %189 = vmatprep.subr.mxu0 0.0
  %190 = vmatpush1.msra.mxu0 %v25
  %191 = vmatprep.subr.mxu0 0.0
  %192 = vmatpush1.msra.mxu0 0.0
  %193 = vmatprep.subr.mxu0 0.0
  %194 = vmatpush1.msra.mxu0 0.0
  %195 = vmatprep.subr.mxu0 0.0
  %196 = vmatpush1.msra.mxu0 0.0
  %197 = vmatprep.subr.mxu0 0.0
  %198 = vmatpush1.msra.mxu0 0.0
  %199 = vmatprep.subr.mxu0 0.0
  %200 = vmatpush1.msra.mxu0 0.0
  %201 = vmatprep.subr.mxu0 0.0
  %202 = vmatpush1.msra.mxu0 0.0
  %203 = vmatprep.subr.mxu0 0.0
  %204 = vmatpush1.msra.mxu0 0.0
  %205 = vmatprep.subr.mxu0 0.0
  %206 = vmatpush1.msra.mxu0 0.0
  %207 = vmatprep.subr.mxu0 0.0
  %208 = vmatpush1.msra.mxu0 0.0
  %209 = vmatprep.subr.mxu0 0.0
  %210 = vmatpush1.msra.mxu0 0.0
  %211 = vmatprep.subr.mxu0 0.0
  %212 = vmatpush1.msra.mxu0 0.0
  %213 = vmatprep.subr.mxu0 0.0
  %214 = vmatpush1.msra.mxu0 0.0
  %215 = vmatprep.subr.mxu0 0.0
  %216 = vmatpush1.msra.mxu0 0.0
  %217 = vmatprep.subr.mxu0 0.0
  %218 = vmatpush1.msra.mxu0 0.0
  %219 = vmatprep.subr.mxu0 0.0
  %220 = vmatpush1.msra.mxu0 0.0
  %221 = vmatprep.subr.mxu0 0.0
  %222 = vmatpush1.msra.mxu0 0.0
  %223 = vmatprep.subr.mxu0 0.0
  %224 = vmatpush1.msra.mxu0 0.0
  %225 = vmatprep.subr.mxu0 0.0
  %226 = vmatpush1.msra.mxu0 0.0
  %227 = vmatprep.subr.mxu0 0.0
  %228 = vmatpush1.msra.mxu0 0.0
  %229 = vmatprep.subr.mxu0 0.0
  %230 = vmatpush1.msra.mxu0 0.0
  %231 = vmatprep.mubr.f32.mxu0 0.0
  %232 = vmatmul.mubr.f32.gmra.mrb[0].mxu0 %v162
  %v233 = vpop.f32.mrb[0].mxu0
  %v234 = vadd.f32 %v153, %v233
  %v235 = vpop.f32.mrb[0].mxu0
  %236 = vmatprep.mubr.f32.mxu0 0.0
  %237 = vmatmul.mubr.f32.gmra.mrb[0].mxu0 %v165
  %v238 = vpop.f32.mrb[0].mxu0
  %v239 = vadd.f32 %v158, %v238
  %v240 = vpop.f32.mrb[0].mxu0
  %241 = vdwg.mxu0
  %s242 = scalar_lea.vmem %s1, 32
  %v243 = vld [vmem:[%s242] sm:$0xff]
  %v244 = vld [vmem:[%s242 + $0x8] sm:$0xff]
  %245 = vrot.lane.b32.xlu0 %v14, 126
  %v246 = vpop.permute.xlu0 %245
  %247 = vrot.lane.b32.xlu0 %v15, 126
  %v248 = vpop.permute.xlu0 %247
  %249 = vrot.lane.b32.xlu0 %v16, 126
  %v250 = vpop.permute.xlu0 %249
  %251 = vrot.lane.b32.xlu0 %v17, 126
  %v252 = vpop.permute.xlu0 %251
  %253 = vrot.lane.b32.xlu0 %v18, 126
  %v254 = vpop.permute.xlu0 %253
  %255 = vrot.lane.b32.xlu0 %v19, 126
  %v256 = vpop.permute.xlu0 %255
  %257 = vrot.lane.b32.xlu0 %v20, 126
  %v258 = vpop.permute.xlu0 %257
  %259 = vrot.lane.b32.xlu0 %v21, 126
  %v260 = vpop.permute.xlu0 %259
  %261 = vrot.lane.b32.xlu0 %v22, 126
  %v262 = vpop.permute.xlu0 %261
  %263 = vrot.lane.b32.xlu0 %v23, 126
  %v264 = vpop.permute.xlu0 %263
  %265 = vrot.lane.b32.xlu0 %v24, 126
  %v266 = vpop.permute.xlu0 %265
  %267 = vrot.lane.b32.xlu0 %v25, 126
  %v268 = vpop.permute.xlu0 %267
  %v282 = vsel %vm79, %v243, 0
  %v285 = vsel %vm79, %v244, 0
  %287 = vmatprep.subr.mxu0 0.0
  %288 = vmatpush1.msra.mxu0 %v246
  %289 = vmatprep.subr.mxu0 0.0
  %290 = vmatpush1.msra.mxu0 %v248
  %291 = vmatprep.subr.mxu0 0.0
  %292 = vmatpush1.msra.mxu0 %v250
  %293 = vmatprep.subr.mxu0 0.0
  %294 = vmatpush1.msra.mxu0 %v252
  %295 = vmatprep.subr.mxu0 0.0
  %296 = vmatpush1.msra.mxu0 %v254
  %297 = vmatprep.subr.mxu0 0.0
  %298 = vmatpush1.msra.mxu0 %v256
  %299 = vmatprep.subr.mxu0 0.0
  %300 = vmatpush1.msra.mxu0 %v258
  %301 = vmatprep.subr.mxu0 0.0
  %302 = vmatpush1.msra.mxu0 %v260
  %303 = vmatprep.subr.mxu0 0.0
  %304 = vmatpush1.msra.mxu0 %v262
  %305 = vmatprep.subr.mxu0 0.0
  %306 = vmatpush1.msra.mxu0 %v264
  %307 = vmatprep.subr.mxu0 0.0
  %308 = vmatpush1.msra.mxu0 %v266
  %309 = vmatprep.subr.mxu0 0.0
  %310 = vmatpush1.msra.mxu0 %v268
  %311 = vmatprep.subr.mxu0 0.0
  %312 = vmatpush1.msra.mxu0 0.0
  %313 = vmatprep.subr.mxu0 0.0
  %314 = vmatpush1.msra.mxu0 0.0
  %315 = vmatprep.subr.mxu0 0.0
  %316 = vmatpush1.msra.mxu0 0.0
  %317 = vmatprep.subr.mxu0 0.0
  %318 = vmatpush1.msra.mxu0 0.0
  %319 = vmatprep.subr.mxu0 0.0
  %320 = vmatpush1.msra.mxu0 0.0
  %321 = vmatprep.subr.mxu0 0.0
  %322 = vmatpush1.msra.mxu0 0.0
  %323 = vmatprep.subr.mxu0 0.0
  %324 = vmatpush1.msra.mxu0 0.0
  %325 = vmatprep.subr.mxu0 0.0
  %326 = vmatpush1.msra.mxu0 0.0
  %327 = vmatprep.subr.mxu0 0.0
  %328 = vmatpush1.msra.mxu0 0.0
  %329 = vmatprep.subr.mxu0 0.0
  %330 = vmatpush1.msra.mxu0 0.0
  %331 = vmatprep.subr.mxu0 0.0
  %332 = vmatpush1.msra.mxu0 0.0
  %333 = vmatprep.subr.mxu0 0.0
  %334 = vmatpush1.msra.mxu0 0.0
  %335 = vmatprep.subr.mxu0 0.0
  %336 = vmatpush1.msra.mxu0 0.0
  %337 = vmatprep.subr.mxu0 0.0
  %338 = vmatpush1.msra.mxu0 0.0
  %339 = vmatprep.subr.mxu0 0.0
  %340 = vmatpush1.msra.mxu0 0.0
  %341 = vmatprep.subr.mxu0 0.0
  %342 = vmatpush1.msra.mxu0 0.0
  %343 = vmatprep.subr.mxu0 0.0
  %344 = vmatpush1.msra.mxu0 0.0
  %345 = vmatprep.subr.mxu0 0.0
  %346 = vmatpush1.msra.mxu0 0.0
  %347 = vmatprep.subr.mxu0 0.0
  %348 = vmatpush1.msra.mxu0 0.0
  %349 = vmatprep.subr.mxu0 0.0
  %350 = vmatpush1.msra.mxu0 0.0
  %351 = vmatprep.mubr.f32.mxu0 0.0
  %352 = vmatmul.mubr.f32.gmra.mrb[0].mxu0 %v282
  %v353 = vpop.f32.mrb[0].mxu0
  %v354 = vadd.f32 0.0, %v353
  %v355 = vpop.f32.mrb[0].mxu0
  %356 = vmatprep.mubr.f32.mxu0 0.0
  %357 = vmatmul.mubr.f32.gmra.mrb[0].mxu0 %v285
  %v358 = vpop.f32.mrb[0].mxu0
  %v359 = vadd.f32 0.0, %v358
  %v360 = vpop.f32.mrb[0].mxu0
  %361 = vdwg.mxu0
  %v362 = vadd.f32 %v234, %v354
  %v363 = vadd.f32 %v239, %v359
  %s364 = scalar_lea.vmem %s1, 48
  %v365 = vld [vmem:[%s364] sm:$0xff]
  %v366 = vld [vmem:[%s364 + $0x8] sm:$0xff]
  %367 = vrot.lane.b32.xlu0 %v14, 122
  %v368 = vpop.permute.xlu0 %367
  %369 = vrot.lane.b32.xlu0 %v15, 122
  %v370 = vpop.permute.xlu0 %369
  %371 = vrot.lane.b32.xlu0 %v16, 122
  %v372 = vpop.permute.xlu0 %371
  %373 = vrot.lane.b32.xlu0 %v17, 122
  %v374 = vpop.permute.xlu0 %373
  %375 = vrot.lane.b32.xlu0 %v18, 122
  %v376 = vpop.permute.xlu0 %375
  %377 = vrot.lane.b32.xlu0 %v19, 122
  %v378 = vpop.permute.xlu0 %377
  %379 = vrot.lane.b32.xlu0 %v20, 122
  %v380 = vpop.permute.xlu0 %379
  %381 = vrot.lane.b32.xlu0 %v21, 122
  %v382 = vpop.permute.xlu0 %381
  %383 = vrot.lane.b32.xlu0 %v22, 122
  %v384 = vpop.permute.xlu0 %383
  %385 = vrot.lane.b32.xlu0 %v23, 122
  %v386 = vpop.permute.xlu0 %385
  %387 = vrot.lane.b32.xlu0 %v24, 122
  %v388 = vpop.permute.xlu0 %387
  %389 = vrot.lane.b32.xlu0 %v25, 122
  %v390 = vpop.permute.xlu0 %389
  %v404 = vsel %vm79, %v365, 0
  %v407 = vsel %vm79, %v366, 0
  %409 = vmatprep.subr.mxu0 0.0
  %410 = vmatpush1.msra.mxu0 %v368
  %411 = vmatprep.subr.mxu0 0.0
  %412 = vmatpush1.msra.mxu0 %v370
  %413 = vmatprep.subr.mxu0 0.0
  %414 = vmatpush1.msra.mxu0 %v372
  %415 = vmatprep.subr.mxu0 0.0
  %416 = vmatpush1.msra.mxu0 %v374
  %417 = vmatprep.subr.mxu0 0.0
  %418 = vmatpush1.msra.mxu0 %v376
  %419 = vmatprep.subr.mxu0 0.0
  %420 = vmatpush1.msra.mxu0 %v378
  %421 = vmatprep.subr.mxu0 0.0
  %422 = vmatpush1.msra.mxu0 %v380
  %423 = vmatprep.subr.mxu0 0.0
  %424 = vmatpush1.msra.mxu0 %v382
  %425 = vmatprep.subr.mxu0 0.0
  %426 = vmatpush1.msra.mxu0 %v384
  %427 = vmatprep.subr.mxu0 0.0
  %428 = vmatpush1.msra.mxu0 %v386
  %429 = vmatprep.subr.mxu0 0.0
  %430 = vmatpush1.msra.mxu0 %v388
  %431 = vmatprep.subr.mxu0 0.0
  %432 = vmatpush1.msra.mxu0 %v390
  %433 = vmatprep.subr.mxu0 0.0
  %434 = vmatpush1.msra.mxu0 0.0
  %435 = vmatprep.subr.mxu0 0.0
  %436 = vmatpush1.msra.mxu0 0.0
  %437 = vmatprep.subr.mxu0 0.0
  %438 = vmatpush1.msra.mxu0 0.0
  %439 = vmatprep.subr.mxu0 0.0
  %440 = vmatpush1.msra.mxu0 0.0
  %441 = vmatprep.subr.mxu0 0.0
  %442 = vmatpush1.msra.mxu0 0.0
  %443 = vmatprep.subr.mxu0 0.0
  %444 = vmatpush1.msra.mxu0 0.0
  %445 = vmatprep.subr.mxu0 0.0
  %446 = vmatpush1.msra.mxu0 0.0
  %447 = vmatprep.subr.mxu0 0.0
  %448 = vmatpush1.msra.mxu0 0.0
  %449 = vmatprep.subr.mxu0 0.0
  %450 = vmatpush1.msra.mxu0 0.0
  %451 = vmatprep.subr.mxu0 0.0
  %452 = vmatpush1.msra.mxu0 0.0
  %453 = vmatprep.subr.mxu0 0.0
  %454 = vmatpush1.msra.mxu0 0.0
  %455 = vmatprep.subr.mxu0 0.0
  %456 = vmatpush1.msra.mxu0 0.0
  %457 = vmatprep.subr.mxu0 0.0
  %458 = vmatpush1.msra.mxu0 0.0
  %459 = vmatprep.subr.mxu0 0.0
  %460 = vmatpush1.msra.mxu0 0.0
  %461 = vmatprep.subr.mxu0 0.0
  %462 = vmatpush1.msra.mxu0 0.0
  %463 = vmatprep.subr.mxu0 0.0
  %464 = vmatpush1.msra.mxu0 0.0
  %465 = vmatprep.subr.mxu0 0.0
  %466 = vmatpush1.msra.mxu0 0.0
  %467 = vmatprep.subr.mxu0 0.0
  %468 = vmatpush1.msra.mxu0 0.0
  %469 = vmatprep.subr.mxu0 0.0
  %470 = vmatpush1.msra.mxu0 0.0
  %471 = vmatprep.subr.mxu0 0.0
  %472 = vmatpush1.msra.mxu0 0.0
  %473 = vmatprep.mubr.f32.mxu0 0.0
  %474 = vmatmul.mubr.f32.gmra.mrb[0].mxu0 %v404
  %v475 = vpop.f32.mrb[0].mxu0
  %v476 = vadd.f32 0.0, %v475
  %v477 = vpop.f32.mrb[0].mxu0
  %478 = vmatprep.mubr.f32.mxu0 0.0
  %479 = vmatmul.mubr.f32.gmra.mrb[0].mxu0 %v407
  %v480 = vpop.f32.mrb[0].mxu0
  %v481 = vadd.f32 0.0, %v480
  %v482 = vpop.f32.mrb[0].mxu0
  %483 = vdwg.mxu0
  %v484 = vadd.f32 %v362, %v476
  %v485 = vadd.f32 %v363, %v481
  %s486 = scalar_lea.vmem %s1, 64
  %v487 = vld [vmem:[%s486] sm:$0xff]
  %v488 = vld [vmem:[%s486 + $0x8] sm:$0xff]
  %489 = vrot.lane.b32.xlu0 %v14, 121
  %v490 = vpop.permute.xlu0 %489
  %491 = vrot.lane.b32.xlu0 %v15, 121
  %v492 = vpop.permute.xlu0 %491
  %493 = vrot.lane.b32.xlu0 %v16, 121
  %v494 = vpop.permute.xlu0 %493
  %495 = vrot.lane.b32.xlu0 %v17, 121
  %v496 = vpop.permute.xlu0 %495
  %497 = vrot.lane.b32.xlu0 %v18, 121
  %v498 = vpop.permute.xlu0 %497
  %499 = vrot.lane.b32.xlu0 %v19, 121
  %v500 = vpop.permute.xlu0 %499
  %501 = vrot.lane.b32.xlu0 %v20, 121
  %v502 = vpop.permute.xlu0 %501
  %503 = vrot.lane.b32.xlu0 %v21, 121
  %v504 = vpop.permute.xlu0 %503
  %505 = vrot.lane.b32.xlu0 %v22, 121
  %v506 = vpop.permute.xlu0 %505
  %507 = vrot.lane.b32.xlu0 %v23, 121
  %v508 = vpop.permute.xlu0 %507
  %509 = vrot.lane.b32.xlu0 %v24, 121
  %v510 = vpop.permute.xlu0 %509
  %511 = vrot.lane.b32.xlu0 %v25, 121
  %v512 = vpop.permute.xlu0 %511
  %v526 = vsel %vm79, %v487, 0
  %v529 = vsel %vm79, %v488, 0
  %531 = vmatprep.subr.mxu0 0.0
  %532 = vmatpush1.msra.mxu0 %v490
  %533 = vmatprep.subr.mxu0 0.0
  %534 = vmatpush1.msra.mxu0 %v492
  %535 = vmatprep.subr.mxu0 0.0
  %536 = vmatpush1.msra.mxu0 %v494
  %537 = vmatprep.subr.mxu0 0.0
  %538 = vmatpush1.msra.mxu0 %v496
  %539 = vmatprep.subr.mxu0 0.0
  %540 = vmatpush1.msra.mxu0 %v498
  %541 = vmatprep.subr.mxu0 0.0
  %542 = vmatpush1.msra.mxu0 %v500
  %543 = vmatprep.subr.mxu0 0.0
  %544 = vmatpush1.msra.mxu0 %v502
  %545 = vmatprep.subr.mxu0 0.0
  %546 = vmatpush1.msra.mxu0 %v504
  %547 = vmatprep.subr.mxu0 0.0
  %548 = vmatpush1.msra.mxu0 %v506
  %549 = vmatprep.subr.mxu0 0.0
  %550 = vmatpush1.msra.mxu0 %v508
  %551 = vmatprep.subr.mxu0 0.0
  %552 = vmatpush1.msra.mxu0 %v510
  %553 = vmatprep.subr.mxu0 0.0
  %554 = vmatpush1.msra.mxu0 %v512
  %555 = vmatprep.subr.mxu0 0.0
  %556 = vmatpush1.msra.mxu0 0.0
  %557 = vmatprep.subr.mxu0 0.0
  %558 = vmatpush1.msra.mxu0 0.0
  %559 = vmatprep.subr.mxu0 0.0
  %560 = vmatpush1.msra.mxu0 0.0
  %561 = vmatprep.subr.mxu0 0.0
  %562 = vmatpush1.msra.mxu0 0.0
  %563 = vmatprep.subr.mxu0 0.0
  %564 = vmatpush1.msra.mxu0 0.0
  %565 = vmatprep.subr.mxu0 0.0
  %566 = vmatpush1.msra.mxu0 0.0
  %567 = vmatprep.subr.mxu0 0.0
  %568 = vmatpush1.msra.mxu0 0.0
  %569 = vmatprep.subr.mxu0 0.0
  %570 = vmatpush1.msra.mxu0 0.0
  %571 = vmatprep.subr.mxu0 0.0
  %572 = vmatpush1.msra.mxu0 0.0
  %573 = vmatprep.subr.mxu0 0.0
  %574 = vmatpush1.msra.mxu0 0.0
  %575 = vmatprep.subr.mxu0 0.0
  %576 = vmatpush1.msra.mxu0 0.0
  %577 = vmatprep.subr.mxu0 0.0
  %578 = vmatpush1.msra.mxu0 0.0
  %579 = vmatprep.subr.mxu0 0.0
  %580 = vmatpush1.msra.mxu0 0.0
  %581 = vmatprep.subr.mxu0 0.0
  %582 = vmatpush1.msra.mxu0 0.0
  %583 = vmatprep.subr.mxu0 0.0
  %584 = vmatpush1.msra.mxu0 0.0
  %585 = vmatprep.subr.mxu0 0.0
  %586 = vmatpush1.msra.mxu0 0.0
  %587 = vmatprep.subr.mxu0 0.0
  %588 = vmatpush1.msra.mxu0 0.0
  %589 = vmatprep.subr.mxu0 0.0
  %590 = vmatpush1.msra.mxu0 0.0
  %591 = vmatprep.subr.mxu0 0.0
  %592 = vmatpush1.msra.mxu0 0.0
  %593 = vmatprep.subr.mxu0 0.0
  %594 = vmatpush1.msra.mxu0 0.0
  %595 = vmatprep.mubr.f32.mxu0 0.0
  %596 = vmatmul.mubr.f32.gmra.mrb[0].mxu0 %v526
  %v597 = vpop.f32.mrb[0].mxu0
  %v598 = vadd.f32 0.0, %v597
  %v599 = vpop.f32.mrb[0].mxu0
  %600 = vmatprep.mubr.f32.mxu0 0.0
  %601 = vmatmul.mubr.f32.gmra.mrb[0].mxu0 %v529
  %v602 = vpop.f32.mrb[0].mxu0
  %v603 = vadd.f32 0.0, %v602
  %v604 = vpop.f32.mrb[0].mxu0
  %605 = vdwg.mxu0
  %v606 = vadd.f32 %v484, %v598
  %v607 = vadd.f32 %v485, %v603
  %s608 = scalar_lea.vmem %s1, 80
  %v609 = vld [vmem:[%s608] sm:$0xff]
  %v610 = vld [vmem:[%s608 + $0x8] sm:$0xff]
  %611 = vrot.lane.b32.xlu0 %v14, 120
  %v612 = vpop.permute.xlu0 %611
  %613 = vrot.lane.b32.xlu0 %v15, 120
  %v614 = vpop.permute.xlu0 %613
  %615 = vrot.lane.b32.xlu0 %v16, 120
  %v616 = vpop.permute.xlu0 %615
  %617 = vrot.lane.b32.xlu0 %v17, 120
  %v618 = vpop.permute.xlu0 %617
  %619 = vrot.lane.b32.xlu0 %v18, 120
  %v620 = vpop.permute.xlu0 %619
  %621 = vrot.lane.b32.xlu0 %v19, 120
  %v622 = vpop.permute.xlu0 %621
  %623 = vrot.lane.b32.xlu0 %v20, 120
  %v624 = vpop.permute.xlu0 %623
  %625 = vrot.lane.b32.xlu0 %v21, 120
  %v626 = vpop.permute.xlu0 %625
  %627 = vrot.lane.b32.xlu0 %v22, 120
  %v628 = vpop.permute.xlu0 %627
  %629 = vrot.lane.b32.xlu0 %v23, 120
  %v630 = vpop.permute.xlu0 %629
  %631 = vrot.lane.b32.xlu0 %v24, 120
  %v632 = vpop.permute.xlu0 %631
  %633 = vrot.lane.b32.xlu0 %v25, 120
  %v634 = vpop.permute.xlu0 %633
  %v648 = vsel %vm79, %v609, 0
  %v651 = vsel %vm79, %v610, 0
  %653 = vmatprep.subr.mxu0 0.0
  %654 = vmatpush1.msra.mxu0 %v612
  %655 = vmatprep.subr.mxu0 0.0
  %656 = vmatpush1.msra.mxu0 %v614
  %657 = vmatprep.subr.mxu0 0.0
  %658 = vmatpush1.msra.mxu0 %v616
  %659 = vmatprep.subr.mxu0 0.0
  %660 = vmatpush1.msra.mxu0 %v618
  %661 = vmatprep.subr.mxu0 0.0
  %662 = vmatpush1.msra.mxu0 %v620
  %663 = vmatprep.subr.mxu0 0.0
  %664 = vmatpush1.msra.mxu0 %v622
  %665 = vmatprep.subr.mxu0 0.0
  %666 = vmatpush1.msra.mxu0 %v624
  %667 = vmatprep.subr.mxu0 0.0
  %668 = vmatpush1.msra.mxu0 %v626
  %669 = vmatprep.subr.mxu0 0.0
  %670 = vmatpush1.msra.mxu0 %v628
  %671 = vmatprep.subr.mxu0 0.0
  %672 = vmatpush1.msra.mxu0 %v630
  %673 = vmatprep.subr.mxu0 0.0
  %674 = vmatpush1.msra.mxu0 %v632
  %675 = vmatprep.subr.mxu0 0.0
  %676 = vmatpush1.msra.mxu0 %v634
  %677 = vmatprep.subr.mxu0 0.0
  %678 = vmatpush1.msra.mxu0 0.0
  %679 = vmatprep.subr.mxu0 0.0
  %680 = vmatpush1.msra.mxu0 0.0
  %681 = vmatprep.subr.mxu0 0.0
  %682 = vmatpush1.msra.mxu0 0.0
  %683 = vmatprep.subr.mxu0 0.0
  %684 = vmatpush1.msra.mxu0 0.0
  %685 = vmatprep.subr.mxu0 0.0
  %686 = vmatpush1.msra.mxu0 0.0
  %687 = vmatprep.subr.mxu0 0.0
  %688 = vmatpush1.msra.mxu0 0.0
  %689 = vmatprep.subr.mxu0 0.0
  %690 = vmatpush1.msra.mxu0 0.0
  %691 = vmatprep.subr.mxu0 0.0
  %692 = vmatpush1.msra.mxu0 0.0
  %693 = vmatprep.subr.mxu0 0.0
  %694 = vmatpush1.msra.mxu0 0.0
  %695 = vmatprep.subr.mxu0 0.0
  %696 = vmatpush1.msra.mxu0 0.0
  %697 = vmatprep.subr.mxu0 0.0
  %698 = vmatpush1.msra.mxu0 0.0
  %699 = vmatprep.subr.mxu0 0.0
  %700 = vmatpush1.msra.mxu0 0.0
  %701 = vmatprep.subr.mxu0 0.0
  %702 = vmatpush1.msra.mxu0 0.0
  %703 = vmatprep.subr.mxu0 0.0
  %704 = vmatpush1.msra.mxu0 0.0
  %705 = vmatprep.subr.mxu0 0.0
  %706 = vmatpush1.msra.mxu0 0.0
  %707 = vmatprep.subr.mxu0 0.0
  %708 = vmatpush1.msra.mxu0 0.0
  %709 = vmatprep.subr.mxu0 0.0
  %710 = vmatpush1.msra.mxu0 0.0
  %711 = vmatprep.subr.mxu0 0.0
  %712 = vmatpush1.msra.mxu0 0.0
  %713 = vmatprep.subr.mxu0 0.0
  %714 = vmatpush1.msra.mxu0 0.0
  %715 = vmatprep.subr.mxu0 0.0
  %716 = vmatpush1.msra.mxu0 0.0
  %717 = vmatprep.mubr.f32.mxu0 0.0
  %718 = vmatmul.mubr.f32.gmra.mrb[0].mxu0 %v648
  %v719 = vpop.f32.mrb[0].mxu0
  %v720 = vadd.f32 0.0, %v719
  %v721 = vpop.f32.mrb[0].mxu0
  %722 = vmatprep.mubr.f32.mxu0 0.0
  %723 = vmatmul.mubr.f32.gmra.mrb[0].mxu0 %v651
  %v724 = vpop.f32.mrb[0].mxu0
  %v725 = vadd.f32 0.0, %v724
  %v726 = vpop.f32.mrb[0].mxu0
  %727 = vdwg.mxu0
  %v728 = vadd.f32 %v606, %v720
  %v729 = vadd.f32 %v607, %v725
  %s730 = scalar_lea.vmem %s1, 96
  %v731 = vld [vmem:[%s730] sm:$0xff]
  %v732 = vld [vmem:[%s730 + $0x8] sm:$0xff]
  %733 = vrot.lane.b32.xlu0 %v14, 116
  %v734 = vpop.permute.xlu0 %733
  %735 = vrot.lane.b32.xlu0 %v15, 116
  %v736 = vpop.permute.xlu0 %735
  %737 = vrot.lane.b32.xlu0 %v16, 116
  %v738 = vpop.permute.xlu0 %737
  %739 = vrot.lane.b32.xlu0 %v17, 116
  %v740 = vpop.permute.xlu0 %739
  %741 = vrot.lane.b32.xlu0 %v18, 116
  %v742 = vpop.permute.xlu0 %741
  %743 = vrot.lane.b32.xlu0 %v19, 116
  %v744 = vpop.permute.xlu0 %743
  %745 = vrot.lane.b32.xlu0 %v20, 116
  %v746 = vpop.permute.xlu0 %745
  %747 = vrot.lane.b32.xlu0 %v21, 116
  %v748 = vpop.permute.xlu0 %747
  %749 = vrot.lane.b32.xlu0 %v22, 116
  %v750 = vpop.permute.xlu0 %749
  %751 = vrot.lane.b32.xlu0 %v23, 116
  %v752 = vpop.permute.xlu0 %751
  %753 = vrot.lane.b32.xlu0 %v24, 116
  %v754 = vpop.permute.xlu0 %753
  %755 = vrot.lane.b32.xlu0 %v25, 116
  %v756 = vpop.permute.xlu0 %755
  %v770 = vsel %vm79, %v731, 0
  %v773 = vsel %vm79, %v732, 0
  %775 = vmatprep.subr.mxu0 0.0
  %776 = vmatpush1.msra.mxu0 %v734
  %777 = vmatprep.subr.mxu0 0.0
  %778 = vmatpush1.msra.mxu0 %v736
  %779 = vmatprep.subr.mxu0 0.0
  %780 = vmatpush1.msra.mxu0 %v738
  %781 = vmatprep.subr.mxu0 0.0
  %782 = vmatpush1.msra.mxu0 %v740
  %783 = vmatprep.subr.mxu0 0.0
  %784 = vmatpush1.msra.mxu0 %v742
  %785 = vmatprep.subr.mxu0 0.0
  %786 = vmatpush1.msra.mxu0 %v744
  %787 = vmatprep.subr.mxu0 0.0
  %788 = vmatpush1.msra.mxu0 %v746
  %789 = vmatprep.subr.mxu0 0.0
  %790 = vmatpush1.msra.mxu0 %v748
  %791 = vmatprep.subr.mxu0 0.0
  %792 = vmatpush1.msra.mxu0 %v750
  %793 = vmatprep.subr.mxu0 0.0
  %794 = vmatpush1.msra.mxu0 %v752
  %795 = vmatprep.subr.mxu0 0.0
  %796 = vmatpush1.msra.mxu0 %v754
  %797 = vmatprep.subr.mxu0 0.0
  %798 = vmatpush1.msra.mxu0 %v756
  %799 = vmatprep.subr.mxu0 0.0
  %800 = vmatpush1.msra.mxu0 0.0
  %801 = vmatprep.subr.mxu0 0.0
  %802 = vmatpush1.msra.mxu0 0.0
  %803 = vmatprep.subr.mxu0 0.0
  %804 = vmatpush1.msra.mxu0 0.0
  %805 = vmatprep.subr.mxu0 0.0
  %806 = vmatpush1.msra.mxu0 0.0
  %807 = vmatprep.subr.mxu0 0.0
  %808 = vmatpush1.msra.mxu0 0.0
  %809 = vmatprep.subr.mxu0 0.0
  %810 = vmatpush1.msra.mxu0 0.0
  %811 = vmatprep.subr.mxu0 0.0
  %812 = vmatpush1.msra.mxu0 0.0
  %813 = vmatprep.subr.mxu0 0.0
  %814 = vmatpush1.msra.mxu0 0.0
  %815 = vmatprep.subr.mxu0 0.0
  %816 = vmatpush1.msra.mxu0 0.0
  %817 = vmatprep.subr.mxu0 0.0
  %818 = vmatpush1.msra.mxu0 0.0
  %819 = vmatprep.subr.mxu0 0.0
  %820 = vmatpush1.msra.mxu0 0.0
  %821 = vmatprep.subr.mxu0 0.0
  %822 = vmatpush1.msra.mxu0 0.0
  %823 = vmatprep.subr.mxu0 0.0
  %824 = vmatpush1.msra.mxu0 0.0
  %825 = vmatprep.subr.mxu0 0.0
  %826 = vmatpush1.msra.mxu0 0.0
  %827 = vmatprep.subr.mxu0 0.0
  %828 = vmatpush1.msra.mxu0 0.0
  %829 = vmatprep.subr.mxu0 0.0
  %830 = vmatpush1.msra.mxu0 0.0
  %831 = vmatprep.subr.mxu0 0.0
  %832 = vmatpush1.msra.mxu0 0.0
  %833 = vmatprep.subr.mxu0 0.0
  %834 = vmatpush1.msra.mxu0 0.0
  %835 = vmatprep.subr.mxu0 0.0
  %836 = vmatpush1.msra.mxu0 0.0
  %837 = vmatprep.subr.mxu0 0.0
  %838 = vmatpush1.msra.mxu0 0.0
  %839 = vmatprep.mubr.f32.mxu0 0.0
  %840 = vmatmul.mubr.f32.gmra.mrb[0].mxu0 %v770
  %v841 = vpop.f32.mrb[0].mxu0
  %v842 = vadd.f32 0.0, %v841
  %v843 = vpop.f32.mrb[0].mxu0
  %844 = vmatprep.mubr.f32.mxu0 0.0
  %845 = vmatmul.mubr.f32.gmra.mrb[0].mxu0 %v773
  %v846 = vpop.f32.mrb[0].mxu0
  %v847 = vadd.f32 0.0, %v846
  %v848 = vpop.f32.mrb[0].mxu0
  %849 = vdwg.mxu0
  %v850 = vadd.f32 %v728, %v842
  %v851 = vadd.f32 %v729, %v847
  %s852 = scalar_lea.vmem %s1, 112
  %v853 = vld [vmem:[%s852] sm:$0xff]
  %v854 = vld [vmem:[%s852 + $0x8] sm:$0xff]
  %855 = vrot.lane.b32.xlu0 %v14, 115
  %v856 = vpop.permute.xlu0 %855
  %857 = vrot.lane.b32.xlu0 %v15, 115
  %v858 = vpop.permute.xlu0 %857
  %859 = vrot.lane.b32.xlu0 %v16, 115
  %v860 = vpop.permute.xlu0 %859
  %861 = vrot.lane.b32.xlu0 %v17, 115
  %v862 = vpop.permute.xlu0 %861
  %863 = vrot.lane.b32.xlu0 %v18, 115
  %v864 = vpop.permute.xlu0 %863
  %865 = vrot.lane.b32.xlu0 %v19, 115
  %v866 = vpop.permute.xlu0 %865
  %867 = vrot.lane.b32.xlu0 %v20, 115
  %v868 = vpop.permute.xlu0 %867
  %869 = vrot.lane.b32.xlu0 %v21, 115
  %v870 = vpop.permute.xlu0 %869
  %871 = vrot.lane.b32.xlu0 %v22, 115
  %v872 = vpop.permute.xlu0 %871
  %873 = vrot.lane.b32.xlu0 %v23, 115
  %v874 = vpop.permute.xlu0 %873
  %875 = vrot.lane.b32.xlu0 %v24, 115
  %v876 = vpop.permute.xlu0 %875
  %877 = vrot.lane.b32.xlu0 %v25, 115
  %v878 = vpop.permute.xlu0 %877
  %v892 = vsel %vm79, %v853, 0
  %v895 = vsel %vm79, %v854, 0
  %897 = vmatprep.subr.mxu0 0.0
  %898 = vmatpush1.msra.mxu0 %v856
  %899 = vmatprep.subr.mxu0 0.0
  %900 = vmatpush1.msra.mxu0 %v858
  %901 = vmatprep.subr.mxu0 0.0
  %902 = vmatpush1.msra.mxu0 %v860
  %903 = vmatprep.subr.mxu0 0.0
  %904 = vmatpush1.msra.mxu0 %v862
  %905 = vmatprep.subr.mxu0 0.0
  %906 = vmatpush1.msra.mxu0 %v864
  %907 = vmatprep.subr.mxu0 0.0
  %908 = vmatpush1.msra.mxu0 %v866
  %909 = vmatprep.subr.mxu0 0.0
  %910 = vmatpush1.msra.mxu0 %v868
  %911 = vmatprep.subr.mxu0 0.0
  %912 = vmatpush1.msra.mxu0 %v870
  %913 = vmatprep.subr.mxu0 0.0
  %914 = vmatpush1.msra.mxu0 %v872
  %915 = vmatprep.subr.mxu0 0.0
  %916 = vmatpush1.msra.mxu0 %v874
  %917 = vmatprep.subr.mxu0 0.0
  %918 = vmatpush1.msra.mxu0 %v876
  %919 = vmatprep.subr.mxu0 0.0
  %920 = vmatpush1.msra.mxu0 %v878
  %921 = vmatprep.subr.mxu0 0.0
  %922 = vmatpush1.msra.mxu0 0.0
  %923 = vmatprep.subr.mxu0 0.0
  %924 = vmatpush1.msra.mxu0 0.0
  %925 = vmatprep.subr.mxu0 0.0
  %926 = vmatpush1.msra.mxu0 0.0
  %927 = vmatprep.subr.mxu0 0.0
  %928 = vmatpush1.msra.mxu0 0.0
  %929 = vmatprep.subr.mxu0 0.0
  %930 = vmatpush1.msra.mxu0 0.0
  %931 = vmatprep.subr.mxu0 0.0
  %932 = vmatpush1.msra.mxu0 0.0
  %933 = vmatprep.subr.mxu0 0.0
  %934 = vmatpush1.msra.mxu0 0.0
  %935 = vmatprep.subr.mxu0 0.0
  %936 = vmatpush1.msra.mxu0 0.0
  %937 = vmatprep.subr.mxu0 0.0
  %938 = vmatpush1.msra.mxu0 0.0
  %939 = vmatprep.subr.mxu0 0.0
  %940 = vmatpush1.msra.mxu0 0.0
  %941 = vmatprep.subr.mxu0 0.0
  %942 = vmatpush1.msra.mxu0 0.0
  %943 = vmatprep.subr.mxu0 0.0
  %944 = vmatpush1.msra.mxu0 0.0
  %945 = vmatprep.subr.mxu0 0.0
  %946 = vmatpush1.msra.mxu0 0.0
  %947 = vmatprep.subr.mxu0 0.0
  %948 = vmatpush1.msra.mxu0 0.0
  %949 = vmatprep.subr.mxu0 0.0
  %950 = vmatpush1.msra.mxu0 0.0
  %951 = vmatprep.subr.mxu0 0.0
  %952 = vmatpush1.msra.mxu0 0.0
  %953 = vmatprep.subr.mxu0 0.0
  %954 = vmatpush1.msra.mxu0 0.0
  %955 = vmatprep.subr.mxu0 0.0
  %956 = vmatpush1.msra.mxu0 0.0
  %957 = vmatprep.subr.mxu0 0.0
  %958 = vmatpush1.msra.mxu0 0.0
  %959 = vmatprep.subr.mxu0 0.0
  %960 = vmatpush1.msra.mxu0 0.0
  %961 = vmatprep.mubr.f32.mxu0 0.0
  %962 = vmatmul.mubr.f32.gmra.mrb[0].mxu0 %v892
  %v963 = vpop.f32.mrb[0].mxu0
  %v964 = vadd.f32 0.0, %v963
  %v965 = vpop.f32.mrb[0].mxu0
  %966 = vmatprep.mubr.f32.mxu0 0.0
  %967 = vmatmul.mubr.f32.gmra.mrb[0].mxu0 %v895
  %v968 = vpop.f32.mrb[0].mxu0
  %v969 = vadd.f32 0.0, %v968
  %v970 = vpop.f32.mrb[0].mxu0
  %971 = vdwg.mxu0
  %v972 = vadd.f32 %v850, %v964
  %v973 = vadd.f32 %v851, %v969
  %s974 = scalar_lea.vmem %s1, 128
  %v975 = vld [vmem:[%s974] sm:$0xff]
  %v976 = vld [vmem:[%s974 + $0x8] sm:$0xff]
  %977 = vrot.lane.b32.xlu0 %v14, 114
  %v978 = vpop.permute.xlu0 %977
  %979 = vrot.lane.b32.xlu0 %v15, 114
  %v980 = vpop.permute.xlu0 %979
  %981 = vrot.lane.b32.xlu0 %v16, 114
  %v982 = vpop.permute.xlu0 %981
  %983 = vrot.lane.b32.xlu0 %v17, 114
  %v984 = vpop.permute.xlu0 %983
  %985 = vrot.lane.b32.xlu0 %v18, 114
  %v986 = vpop.permute.xlu0 %985
  %987 = vrot.lane.b32.xlu0 %v19, 114
  %v988 = vpop.permute.xlu0 %987
  %989 = vrot.lane.b32.xlu0 %v20, 114
  %v990 = vpop.permute.xlu0 %989
  %991 = vrot.lane.b32.xlu0 %v21, 114
  %v992 = vpop.permute.xlu0 %991
  %993 = vrot.lane.b32.xlu0 %v22, 114
  %v994 = vpop.permute.xlu0 %993
  %995 = vrot.lane.b32.xlu0 %v23, 114
  %v996 = vpop.permute.xlu0 %995
  %997 = vrot.lane.b32.xlu0 %v24, 114
  %v998 = vpop.permute.xlu0 %997
  %999 = vrot.lane.b32.xlu0 %v25, 114
  %v1000 = vpop.permute.xlu0 %999
  %v1014 = vsel %vm79, %v975, 0
  %v1017 = vsel %vm79, %v976, 0
  %1019 = vmatprep.subr.mxu0 0.0
  %1020 = vmatpush1.msra.mxu0 %v978
  %1021 = vmatprep.subr.mxu0 0.0
  %1022 = vmatpush1.msra.mxu0 %v980
  %1023 = vmatprep.subr.mxu0 0.0
  %1024 = vmatpush1.msra.mxu0 %v982
  %1025 = vmatprep.subr.mxu0 0.0
  %1026 = vmatpush1.msra.mxu0 %v984
  %1027 = vmatprep.subr.mxu0 0.0
  %1028 = vmatpush1.msra.mxu0 %v986
  %1029 = vmatprep.subr.mxu0 0.0
  %1030 = vmatpush1.msra.mxu0 %v988
  %1031 = vmatprep.subr.mxu0 0.0
  %1032 = vmatpush1.msra.mxu0 %v990
  %1033 = vmatprep.subr.mxu0 0.0
  %1034 = vmatpush1.msra.mxu0 %v992
  %1035 = vmatprep.subr.mxu0 0.0
  %1036 = vmatpush1.msra.mxu0 %v994
  %1037 = vmatprep.subr.mxu0 0.0
  %1038 = vmatpush1.msra.mxu0 %v996
  %1039 = vmatprep.subr.mxu0 0.0
  %1040 = vmatpush1.msra.mxu0 %v998
  %1041 = vmatprep.subr.mxu0 0.0
  %1042 = vmatpush1.msra.mxu0 %v1000
  %1043 = vmatprep.subr.mxu0 0.0
  %1044 = vmatpush1.msra.mxu0 0.0
  %1045 = vmatprep.subr.mxu0 0.0
  %1046 = vmatpush1.msra.mxu0 0.0
  %1047 = vmatprep.subr.mxu0 0.0
  %1048 = vmatpush1.msra.mxu0 0.0
  %1049 = vmatprep.subr.mxu0 0.0
  %1050 = vmatpush1.msra.mxu0 0.0
  %1051 = vmatprep.subr.mxu0 0.0
  %1052 = vmatpush1.msra.mxu0 0.0
  %1053 = vmatprep.subr.mxu0 0.0
  %1054 = vmatpush1.msra.mxu0 0.0
  %1055 = vmatprep.subr.mxu0 0.0
  %1056 = vmatpush1.msra.mxu0 0.0
  %1057 = vmatprep.subr.mxu0 0.0
  %1058 = vmatpush1.msra.mxu0 0.0
  %1059 = vmatprep.subr.mxu0 0.0
  %1060 = vmatpush1.msra.mxu0 0.0
  %1061 = vmatprep.subr.mxu0 0.0
  %1062 = vmatpush1.msra.mxu0 0.0
  %1063 = vmatprep.subr.mxu0 0.0
  %1064 = vmatpush1.msra.mxu0 0.0
  %1065 = vmatprep.subr.mxu0 0.0
  %1066 = vmatpush1.msra.mxu0 0.0
  %1067 = vmatprep.subr.mxu0 0.0
  %1068 = vmatpush1.msra.mxu0 0.0
  %1069 = vmatprep.subr.mxu0 0.0
  %1070 = vmatpush1.msra.mxu0 0.0
  %1071 = vmatprep.subr.mxu0 0.0
  %1072 = vmatpush1.msra.mxu0 0.0
  %1073 = vmatprep.subr.mxu0 0.0
  %1074 = vmatpush1.msra.mxu0 0.0
  %1075 = vmatprep.subr.mxu0 0.0
  %1076 = vmatpush1.msra.mxu0 0.0
  %1077 = vmatprep.subr.mxu0 0.0
  %1078 = vmatpush1.msra.mxu0 0.0
  %1079 = vmatprep.subr.mxu0 0.0
  %1080 = vmatpush1.msra.mxu0 0.0
  %1081 = vmatprep.subr.mxu0 0.0
  %1082 = vmatpush1.msra.mxu0 0.0
  %1083 = vmatprep.mubr.f32.mxu0 0.0
  %1084 = vmatmul.mubr.f32.gmra.mrb[0].mxu0 %v1014
  %v1085 = vpop.f32.mrb[0].mxu0
  %v1086 = vadd.f32 0.0, %v1085
  %v1087 = vpop.f32.mrb[0].mxu0
  %1088 = vmatprep.mubr.f32.mxu0 0.0
  %1089 = vmatmul.mubr.f32.gmra.mrb[0].mxu0 %v1017
  %v1090 = vpop.f32.mrb[0].mxu0
  %v1091 = vadd.f32 0.0, %v1090
  %v1092 = vpop.f32.mrb[0].mxu0
  %1093 = vdwg.mxu0
  %v1094 = vadd.f32 %v972, %v1086
  %v1095 = vadd.f32 %v973, %v1091
  %v1096 = vld [vmem:[%s2] sm:$0xff]
  %v1097 = vld [vmem:[%s2 + $0x8] sm:$0xff]
  %1099 = vset.pattern.permute.xlu0 0
  %1100 = vperm.xlu0 %1099, %v1096
  %v1101 = vpop.permute.xlu0 %1100
  %1104 = vset.pattern.permute.xlu0 0
  %1105 = vperm.xlu0 %1104, %v1097
  %v1106 = vpop.permute.xlu0 %1105
  %v1108 = vadd.f32 %v1094, %v1101
  %v1109 = vadd.f32 %v1095, %v1106
  %vm1110 = vcmask 588800
  %1111 = vst.msk [vmem:[%s3] sm:$0xff] %vm1110, %v1108
  %1112 = vst.msk [vmem:[%s3 + $0x8] sm:$0xff] %vm1110, %v1109
  // Predicated region
  $region14: #{uperhead_forward.18} parent=0 // pred_check
    _
  $region15: #{uperhead_forward.18} parent=0 // pred_check_branch
    %1114 = sbr.rel (0) target = $region17
  $region16: #{uperhead_forward.18} parent=0 // pred_region
    _
  $region17: #{uperhead_forward.18} parent=0 // pred_fallthru
    _
  // Predicated region
  $region18: #{uperhead_forward.18} parent=0 // pred_check
    _
  $region19: #{uperhead_forward.18} parent=0 // pred_check_branch
    %1116 = sbr.rel (0) target = $region21
  $region20: #{uperhead_forward.18} parent=0 // pred_region
    _
  $region21: #{uperhead_forward.18} parent=0 // pred_fallthru
    _

// kernel: uperhead_forward.23
$region0: #{uperhead_forward.23}
  #allocation0 [shape = 'u32[]', space=smem, size = 0x4, offset = 0x4, fixed_abs, tag = 'smem constant byte address 0x4 - core index']
  #allocation1 [shape = 'u32[144,128]{1,0:T(1,128)}', space=vmem, size = 0x12000, scoped, tag = 'internal scratch']
  %s0 = inlined_call_operand.vmem [shape: f32[16,86], index: 0, kind: input, shape index: {}]
  %s1 = inlined_call_operand.vmem [shape: f32[9,16,16], index: 1, kind: input, shape index: {}]
  %s2 = inlined_call_operand.vmem [shape: f32[16,1], index: 2, kind: input, shape index: {}]
  %s3 = inlined_call_operand.vmem [shape: f32[16,72], index: 3, kind: output, shape index: {}]
  %s4 = sld [smem:[#allocation0]]
  $region22: #{uperhead_forward.23} parent=0
    _
  %s6 = ssub.s32 1, %s4
  %s7 = scalar_select 0, %s6, %s4
  // Predicated region
  $region2: #{uperhead_forward.23} parent=0 // pred_check
    _
  $region3: #{uperhead_forward.23} parent=0 // pred_check_branch
    %9 = sbr.rel (0) target = $region5
  $region4: #{uperhead_forward.23} parent=0 // pred_region
    _
  $region5: #{uperhead_forward.23} parent=0 // pred_fallthru
    _
  // Predicated region
  $region6: #{uperhead_forward.23} parent=0 // pred_check
    _
  $region7: #{uperhead_forward.23} parent=0 // pred_check_branch
    %11 = sbr.rel (0) target = $region9
  $region8: #{uperhead_forward.23} parent=0 // pred_region
    _
  $region9: #{uperhead_forward.23} parent=0 // pred_fallthru
    _
  // Predicated region
  $region10: #{uperhead_forward.23} parent=0 // pred_check
    _
  $region11: #{uperhead_forward.23} parent=0 // pred_check_branch
    %13 = sbr.rel (0) target = $region13
  $region12: #{uperhead_forward.23} parent=0 // pred_region
    _
  $region13: #{uperhead_forward.23} parent=0 // pred_fallthru
    _
  %v14 = vld [vmem:[%s0] sm:$0xff]
  %v15 = vld [vmem:[%s0 + $0x8] sm:$0xff]
  %v16 = vld [vmem:[%s1] sm:$0xff]
  %v17 = vld [vmem:[%s1 + $0x8] sm:$0xff]
  %s18 = scalar_lea.vmem %s1, 16
  %v19 = vld [vmem:[%s18] sm:$0xff]
  %v20 = vld [vmem:[%s18 + $0x8] sm:$0xff]
  %23 = vrot.lane.b32.xlu0 %v14, 127
  %v24 = vpop.permute.xlu0 %23
  %25 = vrot.lane.b32.xlu0 %v15, 127
  %v26 = vpop.permute.xlu0 %25
  %vm29 = vcmask 130048
  %v31 = vsel %vm29, %v19, 0
  %v34 = vsel %vm29, %v20, 0
  %36 = vmatprep.subr.mxu0 0.0
  %37 = vmatpush1.msra.mxu0 %v24
  %38 = vmatprep.subr.mxu0 0.0
  %39 = vmatpush1.msra.mxu0 %v26
  %40 = vmatprep.subr.mxu0 0.0
  %41 = vmatpush1.msra.mxu0 0.0
  %42 = vmatprep.subr.mxu0 0.0
  %43 = vmatpush1.msra.mxu0 0.0
  %44 = vmatprep.subr.mxu0 0.0
  %45 = vmatpush1.msra.mxu0 0.0
  %46 = vmatprep.subr.mxu0 0.0
  %47 = vmatpush1.msra.mxu0 0.0
  %48 = vmatprep.subr.mxu0 0.0
  %49 = vmatpush1.msra.mxu0 0.0
  %50 = vmatprep.subr.mxu0 0.0
  %51 = vmatpush1.msra.mxu0 0.0
  %52 = vmatprep.subr.mxu0 0.0
  %53 = vmatpush1.msra.mxu0 0.0
  %54 = vmatprep.subr.mxu0 0.0
  %55 = vmatpush1.msra.mxu0 0.0
  %56 = vmatprep.subr.mxu0 0.0
  %57 = vmatpush1.msra.mxu0 0.0
  %58 = vmatprep.subr.mxu0 0.0
  %59 = vmatpush1.msra.mxu0 0.0
  %60 = vmatprep.subr.mxu0 0.0
  %61 = vmatpush1.msra.mxu0 0.0
  %62 = vmatprep.subr.mxu0 0.0
  %63 = vmatpush1.msra.mxu0 0.0
  %64 = vmatprep.subr.mxu0 0.0
  %65 = vmatpush1.msra.mxu0 0.0
  %66 = vmatprep.subr.mxu0 0.0
  %67 = vmatpush1.msra.mxu0 0.0
  %68 = vmatprep.subr.mxu0 0.0
  %69 = vmatpush1.msra.mxu0 0.0
  %70 = vmatprep.subr.mxu0 0.0
  %71 = vmatpush1.msra.mxu0 0.0
  %72 = vmatprep.subr.mxu0 0.0
  %73 = vmatpush1.msra.mxu0 0.0
  %74 = vmatprep.subr.mxu0 0.0
  %75 = vmatpush1.msra.mxu0 0.0
  %76 = vmatprep.subr.mxu0 0.0
  %77 = vmatpush1.msra.mxu0 0.0
  %78 = vmatprep.subr.mxu0 0.0
  %79 = vmatpush1.msra.mxu0 0.0
  %80 = vmatprep.subr.mxu0 0.0
  %81 = vmatpush1.msra.mxu0 0.0
  %82 = vmatprep.subr.mxu0 0.0
  %83 = vmatpush1.msra.mxu0 0.0
  %84 = vmatprep.subr.mxu0 0.0
  %85 = vmatpush1.msra.mxu0 0.0
  %86 = vmatprep.subr.mxu0 0.0
  %87 = vmatpush1.msra.mxu0 0.0
  %88 = vmatprep.subr.mxu0 0.0
  %89 = vmatpush1.msra.mxu0 0.0
  %90 = vmatprep.subr.mxu0 0.0
  %91 = vmatpush1.msra.mxu0 0.0
  %92 = vmatprep.subr.mxu0 0.0
  %93 = vmatpush1.msra.mxu0 0.0
  %94 = vmatprep.subr.mxu0 0.0
  %95 = vmatpush1.msra.mxu0 0.0
  %96 = vmatprep.subr.mxu0 0.0
  %97 = vmatpush1.msra.mxu0 0.0
  %98 = vmatprep.subr.mxu0 0.0
  %99 = vmatpush1.msra.mxu0 0.0
  %100 = vmatprep.mubr.f32.mxu0 0.0
  %101 = vmatmul.mubr.f32.gmra.mrb[0].mxu0 %v31
  %v102 = vpop.f32.mrb[0].mxu0
  %v103 = vadd.f32 0.0, %v102
  %v104 = vpop.f32.mrb[0].mxu0
  %105 = vmatprep.mubr.f32.mxu0 0.0
  %106 = vmatmul.mubr.f32.gmra.mrb[0].mxu0 %v34
  %v107 = vpop.f32.mrb[0].mxu0
  %v108 = vadd.f32 0.0, %v107
  %v109 = vpop.f32.mrb[0].mxu0
  %110 = vdwg.mxu0
  %v112 = vsel %vm29, %v16, 0
  %v115 = vsel %vm29, %v17, 0
  %117 = vmatprep.subr.mxu0 0.0
  %118 = vmatpush1.msra.mxu0 %v14
  %119 = vmatprep.subr.mxu0 0.0
  %120 = vmatpush1.msra.mxu0 %v15
  %121 = vmatprep.subr.mxu0 0.0
  %122 = vmatpush1.msra.mxu0 0.0
  %123 = vmatprep.subr.mxu0 0.0
  %124 = vmatpush1.msra.mxu0 0.0
  %125 = vmatprep.subr.mxu0 0.0
  %126 = vmatpush1.msra.mxu0 0.0
  %127 = vmatprep.subr.mxu0 0.0
  %128 = vmatpush1.msra.mxu0 0.0
  %129 = vmatprep.subr.mxu0 0.0
  %130 = vmatpush1.msra.mxu0 0.0
  %131 = vmatprep.subr.mxu0 0.0
  %132 = vmatpush1.msra.mxu0 0.0
  %133 = vmatprep.subr.mxu0 0.0
  %134 = vmatpush1.msra.mxu0 0.0
  %135 = vmatprep.subr.mxu0 0.0
  %136 = vmatpush1.msra.mxu0 0.0
  %137 = vmatprep.subr.mxu0 0.0
  %138 = vmatpush1.msra.mxu0 0.0
  %139 = vmatprep.subr.mxu0 0.0
  %140 = vmatpush1.msra.mxu0 0.0
  %141 = vmatprep.subr.mxu0 0.0
  %142 = vmatpush1.msra.mxu0 0.0
  %143 = vmatprep.subr.mxu0 0.0
  %144 = vmatpush1.msra.mxu0 0.0
  %145 = vmatprep.subr.mxu0 0.0
  %146 = vmatpush1.msra.mxu0 0.0
  %147 = vmatprep.subr.mxu0 0.0
  %148 = vmatpush1.msra.mxu0 0.0
  %149 = vmatprep.subr.mxu0 0.0
  %150 = vmatpush1.msra.mxu0 0.0
  %151 = vmatprep.subr.mxu0 0.0
  %152 = vmatpush1.msra.mxu0 0.0
  %153 = vmatprep.subr.mxu0 0.0
  %154 = vmatpush1.msra.mxu0 0.0
  %155 = vmatprep.subr.mxu0 0.0
  %156 = vmatpush1.msra.mxu0 0.0
  %157 = vmatprep.subr.mxu0 0.0
  %158 = vmatpush1.msra.mxu0 0.0
  %159 = vmatprep.subr.mxu0 0.0
  %160 = vmatpush1.msra.mxu0 0.0
  %161 = vmatprep.subr.mxu0 0.0
  %162 = vmatpush1.msra.mxu0 0.0
  %163 = vmatprep.subr.mxu0 0.0
  %164 = vmatpush1.msra.mxu0 0.0
  %165 = vmatprep.subr.mxu0 0.0
  %166 = vmatpush1.msra.mxu0 0.0
  %167 = vmatprep.subr.mxu0 0.0
  %168 = vmatpush1.msra.mxu0 0.0
  %169 = vmatprep.subr.mxu0 0.0
  %170 = vmatpush1.msra.mxu0 0.0
  %171 = vmatprep.subr.mxu0 0.0
  %172 = vmatpush1.msra.mxu0 0.0
  %173 = vmatprep.subr.mxu0 0.0
  %174 = vmatpush1.msra.mxu0 0.0
  %175 = vmatprep.subr.mxu0 0.0
  %176 = vmatpush1.msra.mxu0 0.0
  %177 = vmatprep.subr.mxu0 0.0
  %178 = vmatpush1.msra.mxu0 0.0
  %179 = vmatprep.subr.mxu0 0.0
  %180 = vmatpush1.msra.mxu0 0.0
  %181 = vmatprep.mubr.f32.mxu0 0.0
  %182 = vmatmul.mubr.f32.gmra.mrb[0].mxu0 %v112
  %v183 = vpop.f32.mrb[0].mxu0
  %v184 = vadd.f32 %v103, %v183
  %v185 = vpop.f32.mrb[0].mxu0
  %186 = vmatprep.mubr.f32.mxu0 0.0
  %187 = vmatmul.mubr.f32.gmra.mrb[0].mxu0 %v115
  %v188 = vpop.f32.mrb[0].mxu0
  %v189 = vadd.f32 %v108, %v188
  %v190 = vpop.f32.mrb[0].mxu0
  %191 = vdwg.mxu0
  %s192 = scalar_lea.vmem %s1, 32
  %v193 = vld [vmem:[%s192] sm:$0xff]
  %v194 = vld [vmem:[%s192 + $0x8] sm:$0xff]
  %195 = vrot.lane.b32.xlu0 %v14, 126
  %v196 = vpop.permute.xlu0 %195
  %197 = vrot.lane.b32.xlu0 %v15, 126
  %v198 = vpop.permute.xlu0 %197
  %v202 = vsel %vm29, %v193, 0
  %v205 = vsel %vm29, %v194, 0
  %207 = vmatprep.subr.mxu0 0.0
  %208 = vmatpush1.msra.mxu0 %v196
  %209 = vmatprep.subr.mxu0 0.0
  %210 = vmatpush1.msra.mxu0 %v198
  %211 = vmatprep.subr.mxu0 0.0
  %212 = vmatpush1.msra.mxu0 0.0
  %213 = vmatprep.subr.mxu0 0.0
  %214 = vmatpush1.msra.mxu0 0.0
  %215 = vmatprep.subr.mxu0 0.0
  %216 = vmatpush1.msra.mxu0 0.0
  %217 = vmatprep.subr.mxu0 0.0
  %218 = vmatpush1.msra.mxu0 0.0
  %219 = vmatprep.subr.mxu0 0.0
  %220 = vmatpush1.msra.mxu0 0.0
  %221 = vmatprep.subr.mxu0 0.0
  %222 = vmatpush1.msra.mxu0 0.0
  %223 = vmatprep.subr.mxu0 0.0
  %224 = vmatpush1.msra.mxu0 0.0
  %225 = vmatprep.subr.mxu0 0.0
  %226 = vmatpush1.msra.mxu0 0.0
  %227 = vmatprep.subr.mxu0 0.0
  %228 = vmatpush1.msra.mxu0 0.0
  %229 = vmatprep.subr.mxu0 0.0
  %230 = vmatpush1.msra.mxu0 0.0
  %231 = vmatprep.subr.mxu0 0.0
  %232 = vmatpush1.msra.mxu0 0.0
  %233 = vmatprep.subr.mxu0 0.0
  %234 = vmatpush1.msra.mxu0 0.0
  %235 = vmatprep.subr.mxu0 0.0
  %236 = vmatpush1.msra.mxu0 0.0
  %237 = vmatprep.subr.mxu0 0.0
  %238 = vmatpush1.msra.mxu0 0.0
  %239 = vmatprep.subr.mxu0 0.0
  %240 = vmatpush1.msra.mxu0 0.0
  %241 = vmatprep.subr.mxu0 0.0
  %242 = vmatpush1.msra.mxu0 0.0
  %243 = vmatprep.subr.mxu0 0.0
  %244 = vmatpush1.msra.mxu0 0.0
  %245 = vmatprep.subr.mxu0 0.0
  %246 = vmatpush1.msra.mxu0 0.0
  %247 = vmatprep.subr.mxu0 0.0
  %248 = vmatpush1.msra.mxu0 0.0
  %249 = vmatprep.subr.mxu0 0.0
  %250 = vmatpush1.msra.mxu0 0.0
  %251 = vmatprep.subr.mxu0 0.0
  %252 = vmatpush1.msra.mxu0 0.0
  %253 = vmatprep.subr.mxu0 0.0
  %254 = vmatpush1.msra.mxu0 0.0
  %255 = vmatprep.subr.mxu0 0.0
  %256 = vmatpush1.msra.mxu0 0.0
  %257 = vmatprep.subr.mxu0 0.0
  %258 = vmatpush1.msra.mxu0 0.0
  %259 = vmatprep.subr.mxu0 0.0
  %260 = vmatpush1.msra.mxu0 0.0
  %261 = vmatprep.subr.mxu0 0.0
  %262 = vmatpush1.msra.mxu0 0.0
  %263 = vmatprep.subr.mxu0 0.0
  %264 = vmatpush1.msra.mxu0 0.0
  %265 = vmatprep.subr.mxu0 0.0
  %266 = vmatpush1.msra.mxu0 0.0
  %267 = vmatprep.subr.mxu0 0.0
  %268 = vmatpush1.msra.mxu0 0.0
  %269 = vmatprep.subr.mxu0 0.0
  %270 = vmatpush1.msra.mxu0 0.0
  %271 = vmatprep.mubr.f32.mxu0 0.0
  %272 = vmatmul.mubr.f32.gmra.mrb[0].mxu0 %v202
  %v273 = vpop.f32.mrb[0].mxu0
  %v274 = vadd.f32 0.0, %v273
  %v275 = vpop.f32.mrb[0].mxu0
  %276 = vmatprep.mubr.f32.mxu0 0.0
  %277 = vmatmul.mubr.f32.gmra.mrb[0].mxu0 %v205
  %v278 = vpop.f32.mrb[0].mxu0
  %v279 = vadd.f32 0.0, %v278
  %v280 = vpop.f32.mrb[0].mxu0
  %281 = vdwg.mxu0
  %v282 = vadd.f32 %v184, %v274
  %v283 = vadd.f32 %v189, %v279
  %s284 = scalar_lea.vmem %s1, 48
  %v285 = vld [vmem:[%s284] sm:$0xff]
  %v286 = vld [vmem:[%s284 + $0x8] sm:$0xff]
  %287 = vrot.lane.b32.xlu0 %v14, 122
  %v288 = vpop.permute.xlu0 %287
  %289 = vrot.lane.b32.xlu0 %v15, 122
  %v290 = vpop.permute.xlu0 %289
  %v294 = vsel %vm29, %v285, 0
  %v297 = vsel %vm29, %v286, 0
  %299 = vmatprep.subr.mxu0 0.0
  %300 = vmatpush1.msra.mxu0 %v288
  %301 = vmatprep.subr.mxu0 0.0
  %302 = vmatpush1.msra.mxu0 %v290
  %303 = vmatprep.subr.mxu0 0.0
  %304 = vmatpush1.msra.mxu0 0.0
  %305 = vmatprep.subr.mxu0 0.0
  %306 = vmatpush1.msra.mxu0 0.0
  %307 = vmatprep.subr.mxu0 0.0
  %308 = vmatpush1.msra.mxu0 0.0
  %309 = vmatprep.subr.mxu0 0.0
  %310 = vmatpush1.msra.mxu0 0.0
  %311 = vmatprep.subr.mxu0 0.0
  %312 = vmatpush1.msra.mxu0 0.0
  %313 = vmatprep.subr.mxu0 0.0
  %314 = vmatpush1.msra.mxu0 0.0
  %315 = vmatprep.subr.mxu0 0.0
  %316 = vmatpush1.msra.mxu0 0.0
  %317 = vmatprep.subr.mxu0 0.0
  %318 = vmatpush1.msra.mxu0 0.0
  %319 = vmatprep.subr.mxu0 0.0
  %320 = vmatpush1.msra.mxu0 0.0
  %321 = vmatprep.subr.mxu0 0.0
  %322 = vmatpush1.msra.mxu0 0.0
  %323 = vmatprep.subr.mxu0 0.0
  %324 = vmatpush1.msra.mxu0 0.0
  %325 = vmatprep.subr.mxu0 0.0
  %326 = vmatpush1.msra.mxu0 0.0
  %327 = vmatprep.subr.mxu0 0.0
  %328 = vmatpush1.msra.mxu0 0.0
  %329 = vmatprep.subr.mxu0 0.0
  %330 = vmatpush1.msra.mxu0 0.0
  %331 = vmatprep.subr.mxu0 0.0
  %332 = vmatpush1.msra.mxu0 0.0
  %333 = vmatprep.subr.mxu0 0.0
  %334 = vmatpush1.msra.mxu0 0.0
  %335 = vmatprep.subr.mxu0 0.0
  %336 = vmatpush1.msra.mxu0 0.0
  %337 = vmatprep.subr.mxu0 0.0
  %338 = vmatpush1.msra.mxu0 0.0
  %339 = vmatprep.subr.mxu0 0.0
  %340 = vmatpush1.msra.mxu0 0.0
  %341 = vmatprep.subr.mxu0 0.0
  %342 = vmatpush1.msra.mxu0 0.0
  %343 = vmatprep.subr.mxu0 0.0
  %344 = vmatpush1.msra.mxu0 0.0
  %345 = vmatprep.subr.mxu0 0.0
  %346 = vmatpush1.msra.mxu0 0.0
  %347 = vmatprep.subr.mxu0 0.0
  %348 = vmatpush1.msra.mxu0 0.0
  %349 = vmatprep.subr.mxu0 0.0
  %350 = vmatpush1.msra.mxu0 0.0
  %351 = vmatprep.subr.mxu0 0.0
  %352 = vmatpush1.msra.mxu0 0.0
  %353 = vmatprep.subr.mxu0 0.0
  %354 = vmatpush1.msra.mxu0 0.0
  %355 = vmatprep.subr.mxu0 0.0
  %356 = vmatpush1.msra.mxu0 0.0
  %357 = vmatprep.subr.mxu0 0.0
  %358 = vmatpush1.msra.mxu0 0.0
  %359 = vmatprep.subr.mxu0 0.0
  %360 = vmatpush1.msra.mxu0 0.0
  %361 = vmatprep.subr.mxu0 0.0
  %362 = vmatpush1.msra.mxu0 0.0
  %363 = vmatprep.mubr.f32.mxu0 0.0
  %364 = vmatmul.mubr.f32.gmra.mrb[0].mxu0 %v294
  %v365 = vpop.f32.mrb[0].mxu0
  %v366 = vadd.f32 0.0, %v365
  %v367 = vpop.f32.mrb[0].mxu0
  %368 = vmatprep.mubr.f32.mxu0 0.0
  %369 = vmatmul.mubr.f32.gmra.mrb[0].mxu0 %v297
  %v370 = vpop.f32.mrb[0].mxu0
  %v371 = vadd.f32 0.0, %v370
  %v372 = vpop.f32.mrb[0].mxu0
  %373 = vdwg.mxu0
  %v374 = vadd.f32 %v282, %v366
  %v375 = vadd.f32 %v283, %v371
  %s376 = scalar_lea.vmem %s1, 64
  %v377 = vld [vmem:[%s376] sm:$0xff]
  %v378 = vld [vmem:[%s376 + $0x8] sm:$0xff]
  %379 = vrot.lane.b32.xlu0 %v14, 121
  %v380 = vpop.permute.xlu0 %379
  %381 = vrot.lane.b32.xlu0 %v15, 121
  %v382 = vpop.permute.xlu0 %381
  %v386 = vsel %vm29, %v377, 0
  %v389 = vsel %vm29, %v378, 0
  %391 = vmatprep.subr.mxu0 0.0
  %392 = vmatpush1.msra.mxu0 %v380
  %393 = vmatprep.subr.mxu0 0.0
  %394 = vmatpush1.msra.mxu0 %v382
  %395 = vmatprep.subr.mxu0 0.0
  %396 = vmatpush1.msra.mxu0 0.0
  %397 = vmatprep.subr.mxu0 0.0
  %398 = vmatpush1.msra.mxu0 0.0
  %399 = vmatprep.subr.mxu0 0.0
  %400 = vmatpush1.msra.mxu0 0.0
  %401 = vmatprep.subr.mxu0 0.0
  %402 = vmatpush1.msra.mxu0 0.0
  %403 = vmatprep.subr.mxu0 0.0
  %404 = vmatpush1.msra.mxu0 0.0
  %405 = vmatprep.subr.mxu0 0.0
  %406 = vmatpush1.msra.mxu0 0.0
  %407 = vmatprep.subr.mxu0 0.0
  %408 = vmatpush1.msra.mxu0 0.0
  %409 = vmatprep.subr.mxu0 0.0
  %410 = vmatpush1.msra.mxu0 0.0
  %411 = vmatprep.subr.mxu0 0.0
  %412 = vmatpush1.msra.mxu0 0.0
  %413 = vmatprep.subr.mxu0 0.0
  %414 = vmatpush1.msra.mxu0 0.0
  %415 = vmatprep.subr.mxu0 0.0
  %416 = vmatpush1.msra.mxu0 0.0
  %417 = vmatprep.subr.mxu0 0.0
  %418 = vmatpush1.msra.mxu0 0.0
  %419 = vmatprep.subr.mxu0 0.0
  %420 = vmatpush1.msra.mxu0 0.0
  %421 = vmatprep.subr.mxu0 0.0
  %422 = vmatpush1.msra.mxu0 0.0
  %423 = vmatprep.subr.mxu0 0.0
  %424 = vmatpush1.msra.mxu0 0.0
  %425 = vmatprep.subr.mxu0 0.0
  %426 = vmatpush1.msra.mxu0 0.0
  %427 = vmatprep.subr.mxu0 0.0
  %428 = vmatpush1.msra.mxu0 0.0
  %429 = vmatprep.subr.mxu0 0.0
  %430 = vmatpush1.msra.mxu0 0.0
  %431 = vmatprep.subr.mxu0 0.0
  %432 = vmatpush1.msra.mxu0 0.0
  %433 = vmatprep.subr.mxu0 0.0
  %434 = vmatpush1.msra.mxu0 0.0
  %435 = vmatprep.subr.mxu0 0.0
  %436 = vmatpush1.msra.mxu0 0.0
  %437 = vmatprep.subr.mxu0 0.0
  %438 = vmatpush1.msra.mxu0 0.0
  %439 = vmatprep.subr.mxu0 0.0
  %440 = vmatpush1.msra.mxu0 0.0
  %441 = vmatprep.subr.mxu0 0.0
  %442 = vmatpush1.msra.mxu0 0.0
  %443 = vmatprep.subr.mxu0 0.0
  %444 = vmatpush1.msra.mxu0 0.0
  %445 = vmatprep.subr.mxu0 0.0
  %446 = vmatpush1.msra.mxu0 0.0
  %447 = vmatprep.subr.mxu0 0.0
  %448 = vmatpush1.msra.mxu0 0.0
  %449 = vmatprep.subr.mxu0 0.0
  %450 = vmatpush1.msra.mxu0 0.0
  %451 = vmatprep.subr.mxu0 0.0
  %452 = vmatpush1.msra.mxu0 0.0
  %453 = vmatprep.subr.mxu0 0.0
  %454 = vmatpush1.msra.mxu0 0.0
  %455 = vmatprep.mubr.f32.mxu0 0.0
  %456 = vmatmul.mubr.f32.gmra.mrb[0].mxu0 %v386
  %v457 = vpop.f32.mrb[0].mxu0
  %v458 = vadd.f32 0.0, %v457
  %v459 = vpop.f32.mrb[0].mxu0
  %460 = vmatprep.mubr.f32.mxu0 0.0
  %461 = vmatmul.mubr.f32.gmra.mrb[0].mxu0 %v389
  %v462 = vpop.f32.mrb[0].mxu0
  %v463 = vadd.f32 0.0, %v462
  %v464 = vpop.f32.mrb[0].mxu0
  %465 = vdwg.mxu0
  %v466 = vadd.f32 %v374, %v458
  %v467 = vadd.f32 %v375, %v463
  %s468 = scalar_lea.vmem %s1, 80
  %v469 = vld [vmem:[%s468] sm:$0xff]
  %v470 = vld [vmem:[%s468 + $0x8] sm:$0xff]
  %471 = vrot.lane.b32.xlu0 %v14, 120
  %v472 = vpop.permute.xlu0 %471
  %473 = vrot.lane.b32.xlu0 %v15, 120
  %v474 = vpop.permute.xlu0 %473
  %v478 = vsel %vm29, %v469, 0
  %v481 = vsel %vm29, %v470, 0
  %483 = vmatprep.subr.mxu0 0.0
  %484 = vmatpush1.msra.mxu0 %v472
  %485 = vmatprep.subr.mxu0 0.0
  %486 = vmatpush1.msra.mxu0 %v474
  %487 = vmatprep.subr.mxu0 0.0
  %488 = vmatpush1.msra.mxu0 0.0
  %489 = vmatprep.subr.mxu0 0.0
  %490 = vmatpush1.msra.mxu0 0.0
  %491 = vmatprep.subr.mxu0 0.0
  %492 = vmatpush1.msra.mxu0 0.0
  %493 = vmatprep.subr.mxu0 0.0
  %494 = vmatpush1.msra.mxu0 0.0
  %495 = vmatprep.subr.mxu0 0.0
  %496 = vmatpush1.msra.mxu0 0.0
  %497 = vmatprep.subr.mxu0 0.0
  %498 = vmatpush1.msra.mxu0 0.0
  %499 = vmatprep.subr.mxu0 0.0
  %500 = vmatpush1.msra.mxu0 0.0
  %501 = vmatprep.subr.mxu0 0.0
  %502 = vmatpush1.msra.mxu0 0.0
  %503 = vmatprep.subr.mxu0 0.0
  %504 = vmatpush1.msra.mxu0 0.0
  %505 = vmatprep.subr.mxu0 0.0
  %506 = vmatpush1.msra.mxu0 0.0
  %507 = vmatprep.subr.mxu0 0.0
  %508 = vmatpush1.msra.mxu0 0.0
  %509 = vmatprep.subr.mxu0 0.0
  %510 = vmatpush1.msra.mxu0 0.0
  %511 = vmatprep.subr.mxu0 0.0
  %512 = vmatpush1.msra.mxu0 0.0
  %513 = vmatprep.subr.mxu0 0.0
  %514 = vmatpush1.msra.mxu0 0.0
  %515 = vmatprep.subr.mxu0 0.0
  %516 = vmatpush1.msra.mxu0 0.0
  %517 = vmatprep.subr.mxu0 0.0
  %518 = vmatpush1.msra.mxu0 0.0
  %519 = vmatprep.subr.mxu0 0.0
  %520 = vmatpush1.msra.mxu0 0.0
  %521 = vmatprep.subr.mxu0 0.0
  %522 = vmatpush1.msra.mxu0 0.0
  %523 = vmatprep.subr.mxu0 0.0
  %524 = vmatpush1.msra.mxu0 0.0
  %525 = vmatprep.subr.mxu0 0.0
  %526 = vmatpush1.msra.mxu0 0.0
  %527 = vmatprep.subr.mxu0 0.0
  %528 = vmatpush1.msra.mxu0 0.0
  %529 = vmatprep.subr.mxu0 0.0
  %530 = vmatpush1.msra.mxu0 0.0
  %531 = vmatprep.subr.mxu0 0.0
  %532 = vmatpush1.msra.mxu0 0.0
  %533 = vmatprep.subr.mxu0 0.0
  %534 = vmatpush1.msra.mxu0 0.0
  %535 = vmatprep.subr.mxu0 0.0
  %536 = vmatpush1.msra.mxu0 0.0
  %537 = vmatprep.subr.mxu0 0.0
  %538 = vmatpush1.msra.mxu0 0.0
  %539 = vmatprep.subr.mxu0 0.0
  %540 = vmatpush1.msra.mxu0 0.0
  %541 = vmatprep.subr.mxu0 0.0
  %542 = vmatpush1.msra.mxu0 0.0
  %543 = vmatprep.subr.mxu0 0.0
  %544 = vmatpush1.msra.mxu0 0.0
  %545 = vmatprep.subr.mxu0 0.0
  %546 = vmatpush1.msra.mxu0 0.0
  %547 = vmatprep.mubr.f32.mxu0 0.0
  %548 = vmatmul.mubr.f32.gmra.mrb[0].mxu0 %v478
  %v549 = vpop.f32.mrb[0].mxu0
  %v550 = vadd.f32 0.0, %v549
  %v551 = vpop.f32.mrb[0].mxu0
  %552 = vmatprep.mubr.f32.mxu0 0.0
  %553 = vmatmul.mubr.f32.gmra.mrb[0].mxu0 %v481
  %v554 = vpop.f32.mrb[0].mxu0
  %v555 = vadd.f32 0.0, %v554
  %v556 = vpop.f32.mrb[0].mxu0
  %557 = vdwg.mxu0
  %v558 = vadd.f32 %v466, %v550
  %v559 = vadd.f32 %v467, %v555
  %s560 = scalar_lea.vmem %s1, 96
  %v561 = vld [vmem:[%s560] sm:$0xff]
  %v562 = vld [vmem:[%s560 + $0x8] sm:$0xff]
  %563 = vrot.lane.b32.xlu0 %v14, 116
  %v564 = vpop.permute.xlu0 %563
  %565 = vrot.lane.b32.xlu0 %v15, 116
  %v566 = vpop.permute.xlu0 %565
  %v570 = vsel %vm29, %v561, 0
  %v573 = vsel %vm29, %v562, 0
  %575 = vmatprep.subr.mxu0 0.0
  %576 = vmatpush1.msra.mxu0 %v564
  %577 = vmatprep.subr.mxu0 0.0
  %578 = vmatpush1.msra.mxu0 %v566
  %579 = vmatprep.subr.mxu0 0.0
  %580 = vmatpush1.msra.mxu0 0.0
  %581 = vmatprep.subr.mxu0 0.0
  %582 = vmatpush1.msra.mxu0 0.0
  %583 = vmatprep.subr.mxu0 0.0
  %584 = vmatpush1.msra.mxu0 0.0
  %585 = vmatprep.subr.mxu0 0.0
  %586 = vmatpush1.msra.mxu0 0.0
  %587 = vmatprep.subr.mxu0 0.0
  %588 = vmatpush1.msra.mxu0 0.0
  %589 = vmatprep.subr.mxu0 0.0
  %590 = vmatpush1.msra.mxu0 0.0
  %591 = vmatprep.subr.mxu0 0.0
  %592 = vmatpush1.msra.mxu0 0.0
  %593 = vmatprep.subr.mxu0 0.0
  %594 = vmatpush1.msra.mxu0 0.0
  %595 = vmatprep.subr.mxu0 0.0
  %596 = vmatpush1.msra.mxu0 0.0
  %597 = vmatprep.subr.mxu0 0.0
  %598 = vmatpush1.msra.mxu0 0.0
  %599 = vmatprep.subr.mxu0 0.0
  %600 = vmatpush1.msra.mxu0 0.0
  %601 = vmatprep.subr.mxu0 0.0
  %602 = vmatpush1.msra.mxu0 0.0
  %603 = vmatprep.subr.mxu0 0.0
  %604 = vmatpush1.msra.mxu0 0.0
  %605 = vmatprep.subr.mxu0 0.0
  %606 = vmatpush1.msra.mxu0 0.0
  %607 = vmatprep.subr.mxu0 0.0
  %608 = vmatpush1.msra.mxu0 0.0
  %609 = vmatprep.subr.mxu0 0.0
  %610 = vmatpush1.msra.mxu0 0.0
  %611 = vmatprep.subr.mxu0 0.0
  %612 = vmatpush1.msra.mxu0 0.0
  %613 = vmatprep.subr.mxu0 0.0
  %614 = vmatpush1.msra.mxu0 0.0
  %615 = vmatprep.subr.mxu0 0.0
  %616 = vmatpush1.msra.mxu0 0.0
  %617 = vmatprep.subr.mxu0 0.0
  %618 = vmatpush1.msra.mxu0 0.0
  %619 = vmatprep.subr.mxu0 0.0
  %620 = vmatpush1.msra.mxu0 0.0
  %621 = vmatprep.subr.mxu0 0.0
  %622 = vmatpush1.msra.mxu0 0.0
  %623 = vmatprep.subr.mxu0 0.0
  %624 = vmatpush1.msra.mxu0 0.0
  %625 = vmatprep.subr.mxu0 0.0
  %626 = vmatpush1.msra.mxu0 0.0
  %627 = vmatprep.subr.mxu0 0.0
  %628 = vmatpush1.msra.mxu0 0.0
  %629 = vmatprep.subr.mxu0 0.0
  %630 = vmatpush1.msra.mxu0 0.0
  %631 = vmatprep.subr.mxu0 0.0
  %632 = vmatpush1.msra.mxu0 0.0
  %633 = vmatprep.subr.mxu0 0.0
  %634 = vmatpush1.msra.mxu0 0.0
  %635 = vmatprep.subr.mxu0 0.0
  %636 = vmatpush1.msra.mxu0 0.0
  %637 = vmatprep.subr.mxu0 0.0
  %638 = vmatpush1.msra.mxu0 0.0
  %639 = vmatprep.mubr.f32.mxu0 0.0
  %640 = vmatmul.mubr.f32.gmra.mrb[0].mxu0 %v570
  %v641 = vpop.f32.mrb[0].mxu0
  %v642 = vadd.f32 0.0, %v641
  %v643 = vpop.f32.mrb[0].mxu0
  %644 = vmatprep.mubr.f32.mxu0 0.0
  %645 = vmatmul.mubr.f32.gmra.mrb[0].mxu0 %v573
  %v646 = vpop.f32.mrb[0].mxu0
  %v647 = vadd.f32 0.0, %v646
  %v648 = vpop.f32.mrb[0].mxu0
  %649 = vdwg.mxu0
  %v650 = vadd.f32 %v558, %v642
  %v651 = vadd.f32 %v559, %v647
  %s652 = scalar_lea.vmem %s1, 112
  %v653 = vld [vmem:[%s652] sm:$0xff]
  %v654 = vld [vmem:[%s652 + $0x8] sm:$0xff]
  %655 = vrot.lane.b32.xlu0 %v14, 115
  %v656 = vpop.permute.xlu0 %655
  %657 = vrot.lane.b32.xlu0 %v15, 115
  %v658 = vpop.permute.xlu0 %657
  %v662 = vsel %vm29, %v653, 0
  %v665 = vsel %vm29, %v654, 0
  %667 = vmatprep.subr.mxu0 0.0
  %668 = vmatpush1.msra.mxu0 %v656
  %669 = vmatprep.subr.mxu0 0.0
  %670 = vmatpush1.msra.mxu0 %v658
  %671 = vmatprep.subr.mxu0 0.0
  %672 = vmatpush1.msra.mxu0 0.0
  %673 = vmatprep.subr.mxu0 0.0
  %674 = vmatpush1.msra.mxu0 0.0
  %675 = vmatprep.subr.mxu0 0.0
  %676 = vmatpush1.msra.mxu0 0.0
  %677 = vmatprep.subr.mxu0 0.0
  %678 = vmatpush1.msra.mxu0 0.0
  %679 = vmatprep.subr.mxu0 0.0
  %680 = vmatpush1.msra.mxu0 0.0
  %681 = vmatprep.subr.mxu0 0.0
  %682 = vmatpush1.msra.mxu0 0.0
  %683 = vmatprep.subr.mxu0 0.0
  %684 = vmatpush1.msra.mxu0 0.0
  %685 = vmatprep.subr.mxu0 0.0
  %686 = vmatpush1.msra.mxu0 0.0
  %687 = vmatprep.subr.mxu0 0.0
  %688 = vmatpush1.msra.mxu0 0.0
  %689 = vmatprep.subr.mxu0 0.0
  %690 = vmatpush1.msra.mxu0 0.0
  %691 = vmatprep.subr.mxu0 0.0
  %692 = vmatpush1.msra.mxu0 0.0
  %693 = vmatprep.subr.mxu0 0.0
  %694 = vmatpush1.msra.mxu0 0.0
  %695 = vmatprep.subr.mxu0 0.0
  %696 = vmatpush1.msra.mxu0 0.0
  %697 = vmatprep.subr.mxu0 0.0
  %698 = vmatpush1.msra.mxu0 0.0
  %699 = vmatprep.subr.mxu0 0.0
  %700 = vmatpush1.msra.mxu0 0.0
  %701 = vmatprep.subr.mxu0 0.0
  %702 = vmatpush1.msra.mxu0 0.0
  %703 = vmatprep.subr.mxu0 0.0
  %704 = vmatpush1.msra.mxu0 0.0
  %705 = vmatprep.subr.mxu0 0.0
  %706 = vmatpush1.msra.mxu0 0.0
  %707 = vmatprep.subr.mxu0 0.0
  %708 = vmatpush1.msra.mxu0 0.0
  %709 = vmatprep.subr.mxu0 0.0
  %710 = vmatpush1.msra.mxu0 0.0
  %711 = vmatprep.subr.mxu0 0.0
  %712 = vmatpush1.msra.mxu0 0.0
  %713 = vmatprep.subr.mxu0 0.0
  %714 = vmatpush1.msra.mxu0 0.0
  %715 = vmatprep.subr.mxu0 0.0
  %716 = vmatpush1.msra.mxu0 0.0
  %717 = vmatprep.subr.mxu0 0.0
  %718 = vmatpush1.msra.mxu0 0.0
  %719 = vmatprep.subr.mxu0 0.0
  %720 = vmatpush1.msra.mxu0 0.0
  %721 = vmatprep.subr.mxu0 0.0
  %722 = vmatpush1.msra.mxu0 0.0
  %723 = vmatprep.subr.mxu0 0.0
  %724 = vmatpush1.msra.mxu0 0.0
  %725 = vmatprep.subr.mxu0 0.0
  %726 = vmatpush1.msra.mxu0 0.0
  %727 = vmatprep.subr.mxu0 0.0
  %728 = vmatpush1.msra.mxu0 0.0
  %729 = vmatprep.subr.mxu0 0.0
  %730 = vmatpush1.msra.mxu0 0.0
  %731 = vmatprep.mubr.f32.mxu0 0.0
  %732 = vmatmul.mubr.f32.gmra.mrb[0].mxu0 %v662
  %v733 = vpop.f32.mrb[0].mxu0
  %v734 = vadd.f32 0.0, %v733
  %v735 = vpop.f32.mrb[0].mxu0
  %736 = vmatprep.mubr.f32.mxu0 0.0
  %737 = vmatmul.mubr.f32.gmra.mrb[0].mxu0 %v665
  %v738 = vpop.f32.mrb[0].mxu0
  %v739 = vadd.f32 0.0, %v738
  %v740 = vpop.f32.mrb[0].mxu0
  %741 = vdwg.mxu0
  %v742 = vadd.f32 %v650, %v734
  %v743 = vadd.f32 %v651, %v739
  %s744 = scalar_lea.vmem %s1, 128
  %v745 = vld [vmem:[%s744] sm:$0xff]
  %v746 = vld [vmem:[%s744 + $0x8] sm:$0xff]
  %747 = vrot.lane.b32.xlu0 %v14, 114
  %v748 = vpop.permute.xlu0 %747
  %749 = vrot.lane.b32.xlu0 %v15, 114
  %v750 = vpop.permute.xlu0 %749
  %v754 = vsel %vm29, %v745, 0
  %v757 = vsel %vm29, %v746, 0
  %759 = vmatprep.subr.mxu0 0.0
  %760 = vmatpush1.msra.mxu0 %v748
  %761 = vmatprep.subr.mxu0 0.0
  %762 = vmatpush1.msra.mxu0 %v750
  %763 = vmatprep.subr.mxu0 0.0
  %764 = vmatpush1.msra.mxu0 0.0
  %765 = vmatprep.subr.mxu0 0.0
  %766 = vmatpush1.msra.mxu0 0.0
  %767 = vmatprep.subr.mxu0 0.0
  %768 = vmatpush1.msra.mxu0 0.0
  %769 = vmatprep.subr.mxu0 0.0
  %770 = vmatpush1.msra.mxu0 0.0
  %771 = vmatprep.subr.mxu0 0.0
  %772 = vmatpush1.msra.mxu0 0.0
  %773 = vmatprep.subr.mxu0 0.0
  %774 = vmatpush1.msra.mxu0 0.0
  %775 = vmatprep.subr.mxu0 0.0
  %776 = vmatpush1.msra.mxu0 0.0
  %777 = vmatprep.subr.mxu0 0.0
  %778 = vmatpush1.msra.mxu0 0.0
  %779 = vmatprep.subr.mxu0 0.0
  %780 = vmatpush1.msra.mxu0 0.0
  %781 = vmatprep.subr.mxu0 0.0
  %782 = vmatpush1.msra.mxu0 0.0
  %783 = vmatprep.subr.mxu0 0.0
  %784 = vmatpush1.msra.mxu0 0.0
  %785 = vmatprep.subr.mxu0 0.0
  %786 = vmatpush1.msra.mxu0 0.0
  %787 = vmatprep.subr.mxu0 0.0
  %788 = vmatpush1.msra.mxu0 0.0
  %789 = vmatprep.subr.mxu0 0.0
  %790 = vmatpush1.msra.mxu0 0.0
  %791 = vmatprep.subr.mxu0 0.0
  %792 = vmatpush1.msra.mxu0 0.0
  %793 = vmatprep.subr.mxu0 0.0
  %794 = vmatpush1.msra.mxu0 0.0
  %795 = vmatprep.subr.mxu0 0.0
  %796 = vmatpush1.msra.mxu0 0.0
  %797 = vmatprep.subr.mxu0 0.0
  %798 = vmatpush1.msra.mxu0 0.0
  %799 = vmatprep.subr.mxu0 0.0
  %800 = vmatpush1.msra.mxu0 0.0
  %801 = vmatprep.subr.mxu0 0.0
  %802 = vmatpush1.msra.mxu0 0.0
  %803 = vmatprep.subr.mxu0 0.0
  %804 = vmatpush1.msra.mxu0 0.0
  %805 = vmatprep.subr.mxu0 0.0
  %806 = vmatpush1.msra.mxu0 0.0
  %807 = vmatprep.subr.mxu0 0.0
  %808 = vmatpush1.msra.mxu0 0.0
  %809 = vmatprep.subr.mxu0 0.0
  %810 = vmatpush1.msra.mxu0 0.0
  %811 = vmatprep.subr.mxu0 0.0
  %812 = vmatpush1.msra.mxu0 0.0
  %813 = vmatprep.subr.mxu0 0.0
  %814 = vmatpush1.msra.mxu0 0.0
  %815 = vmatprep.subr.mxu0 0.0
  %816 = vmatpush1.msra.mxu0 0.0
  %817 = vmatprep.subr.mxu0 0.0
  %818 = vmatpush1.msra.mxu0 0.0
  %819 = vmatprep.subr.mxu0 0.0
  %820 = vmatpush1.msra.mxu0 0.0
  %821 = vmatprep.subr.mxu0 0.0
  %822 = vmatpush1.msra.mxu0 0.0
  %823 = vmatprep.mubr.f32.mxu0 0.0
  %824 = vmatmul.mubr.f32.gmra.mrb[0].mxu0 %v754
  %v825 = vpop.f32.mrb[0].mxu0
  %v826 = vadd.f32 0.0, %v825
  %v827 = vpop.f32.mrb[0].mxu0
  %828 = vmatprep.mubr.f32.mxu0 0.0
  %829 = vmatmul.mubr.f32.gmra.mrb[0].mxu0 %v757
  %v830 = vpop.f32.mrb[0].mxu0
  %v831 = vadd.f32 0.0, %v830
  %v832 = vpop.f32.mrb[0].mxu0
  %833 = vdwg.mxu0
  %v834 = vadd.f32 %v742, %v826
  %v835 = vadd.f32 %v743, %v831
  %v836 = vld [vmem:[%s2] sm:$0xff]
  %v837 = vld [vmem:[%s2 + $0x8] sm:$0xff]
  %839 = vset.pattern.permute.xlu0 0
  %840 = vperm.xlu0 %839, %v836
  %v841 = vpop.permute.xlu0 %840
  %844 = vset.pattern.permute.xlu0 0
  %845 = vperm.xlu0 %844, %v837
  %v846 = vpop.permute.xlu0 %845
  %v848 = vadd.f32 %v834, %v841
  %v849 = vadd.f32 %v835, %v846
  %vm850 = vcmask 588800
  %851 = vst.msk [vmem:[%s3] sm:$0xff] %vm850, %v848
  %852 = vst.msk [vmem:[%s3 + $0x8] sm:$0xff] %vm850, %v849
  // Predicated region
  $region14: #{uperhead_forward.23} parent=0 // pred_check
    _
  $region15: #{uperhead_forward.23} parent=0 // pred_check_branch
    %854 = sbr.rel (0) target = $region17
  $region16: #{uperhead_forward.23} parent=0 // pred_region
    _
  $region17: #{uperhead_forward.23} parent=0 // pred_fallthru
    _
  // Predicated region
  $region18: #{uperhead_forward.23} parent=0 // pred_check
    _
  $region19: #{uperhead_forward.23} parent=0 // pred_check_branch
    %856 = sbr.rel (0) target = $region21
  $region20: #{uperhead_forward.23} parent=0 // pred_region
    _
  $region21: #{uperhead_forward.23} parent=0 // pred_fallthru
    _

// kernel: uperhead_forward.25
$region0: #{uperhead_forward.25}
  #allocation0 [shape = 'u32[]', space=smem, size = 0x4, offset = 0x4, fixed_abs, tag = 'smem constant byte address 0x4 - core index']
  #allocation1 [shape = 'u32[144,128]{1,0:T(1,128)}', space=vmem, size = 0x12000, scoped, tag = 'internal scratch']
  %s0 = inlined_call_operand.vmem [shape: f32[32,32], index: 0, kind: input, shape index: {}]
  %s1 = inlined_call_operand.vmem [shape: f32[32,512], index: 1, kind: input, shape index: {}]
  %s2 = inlined_call_operand.vmem [shape: f32[32,512], index: 2, kind: output, shape index: {}]
  %s3 = sld [smem:[#allocation0]]
  $region18: #{uperhead_forward.25} parent=0
    _
  %s5 = ssub.s32 1, %s3
  %s6 = scalar_select 0, %s5, %s3
  // Predicated region
  $region2: #{uperhead_forward.25} parent=0 // pred_check
    _
  $region3: #{uperhead_forward.25} parent=0 // pred_check_branch
    %8 = sbr.rel (0) target = $region5
  $region4: #{uperhead_forward.25} parent=0 // pred_region
    _
  $region5: #{uperhead_forward.25} parent=0 // pred_fallthru
    _
  // Predicated region
  $region6: #{uperhead_forward.25} parent=0 // pred_check
    _
  $region7: #{uperhead_forward.25} parent=0 // pred_check_branch
    %10 = sbr.rel (0) target = $region9
  $region8: #{uperhead_forward.25} parent=0 // pred_region
    _
  $region9: #{uperhead_forward.25} parent=0 // pred_fallthru
    _
  %v11 = vld [vmem:[%s0] sm:$0xff]
  %v12 = vld [vmem:[%s0 + $0x8] sm:$0xff]
  %v13 = vld [vmem:[%s0 + $0x10] sm:$0xff]
  %v14 = vld [vmem:[%s0 + $0x18] sm:$0xff]
  %v15 = vld [vmem:[%s1] sm:$0xff]
  %v16 = vld [vmem:[%s1 + $0x8] sm:$0xff]
  %v17 = vld [vmem:[%s1 + $0x10] sm:$0xff]
  %v18 = vld [vmem:[%s1 + $0x18] sm:$0xff]
  %v19 = vld [vmem:[%s1 + $0x20] sm:$0xff]
  %v20 = vld [vmem:[%s1 + $0x28] sm:$0xff]
  %v21 = vld [vmem:[%s1 + $0x30] sm:$0xff]
  %v22 = vld [vmem:[%s1 + $0x38] sm:$0xff]
  %v23 = vld [vmem:[%s1 + $0x40] sm:$0xff]
  %v24 = vld [vmem:[%s1 + $0x48] sm:$0xff]
  %v25 = vld [vmem:[%s1 + $0x50] sm:$0xff]
  %v26 = vld [vmem:[%s1 + $0x58] sm:$0xff]
  %v27 = vld [vmem:[%s1 + $0x60] sm:$0xff]
  %v28 = vld [vmem:[%s1 + $0x68] sm:$0xff]
  %v29 = vld [vmem:[%s1 + $0x70] sm:$0xff]
  %v30 = vld [vmem:[%s1 + $0x78] sm:$0xff]
  %vm31 = vcmask 261120
  %v33 = vsel %vm31, %v11, 0
  %v36 = vsel %vm31, %v12, 0
  %v39 = vsel %vm31, %v13, 0
  %v42 = vsel %vm31, %v14, 0
  %44 = vmatprep.subr.mxu0 %v16
  %45 = vmatpush1.msra.mxu0 %v15
  %46 = vmatprep.subr.mxu0 %v20
  %47 = vmatpush1.msra.mxu0 %v19
  %48 = vmatprep.subr.mxu0 %v24
  %49 = vmatpush1.msra.mxu0 %v23
  %50 = vmatprep.subr.mxu0 %v28
  %51 = vmatpush1.msra.mxu0 %v27
  %52 = vmatprep.subr.mxu0 0.0
  %53 = vmatpush1.msra.mxu0 0.0
  %54 = vmatprep.subr.mxu0 0.0
  %55 = vmatpush1.msra.mxu0 0.0
  %56 = vmatprep.subr.mxu0 0.0
  %57 = vmatpush1.msra.mxu0 0.0
  %58 = vmatprep.subr.mxu0 0.0
  %59 = vmatpush1.msra.mxu0 0.0
  %60 = vmatprep.subr.mxu0 0.0
  %61 = vmatpush1.msra.mxu0 0.0
  %62 = vmatprep.subr.mxu0 0.0
  %63 = vmatpush1.msra.mxu0 0.0
  %64 = vmatprep.subr.mxu0 0.0
  %65 = vmatpush1.msra.mxu0 0.0
  %66 = vmatprep.subr.mxu0 0.0
  %67 = vmatpush1.msra.mxu0 0.0
  %68 = vmatprep.subr.mxu0 0.0
  %69 = vmatpush1.msra.mxu0 0.0
  %70 = vmatprep.subr.mxu0 0.0
  %71 = vmatpush1.msra.mxu0 0.0
  %72 = vmatprep.subr.mxu0 0.0
  %73 = vmatpush1.msra.mxu0 0.0
  %74 = vmatprep.subr.mxu0 0.0
  %75 = vmatpush1.msra.mxu0 0.0
  %76 = vmatprep.subr.mxu0 0.0
  %77 = vmatpush1.msra.mxu0 0.0
  %78 = vmatprep.subr.mxu0 0.0
  %79 = vmatpush1.msra.mxu0 0.0
  %80 = vmatprep.subr.mxu0 0.0
  %81 = vmatpush1.msra.mxu0 0.0
  %82 = vmatprep.subr.mxu0 0.0
  %83 = vmatpush1.msra.mxu0 0.0
  %84 = vmatprep.subr.mxu0 0.0
  %85 = vmatpush1.msra.mxu0 0.0
  %86 = vmatprep.subr.mxu0 0.0
  %87 = vmatpush1.msra.mxu0 0.0
  %88 = vmatprep.subr.mxu0 0.0
  %89 = vmatpush1.msra.mxu0 0.0
  %90 = vmatprep.subr.mxu0 0.0
  %91 = vmatpush1.msra.mxu0 0.0
  %92 = vmatprep.subr.mxu0 0.0
  %93 = vmatpush1.msra.mxu0 0.0
  %94 = vmatprep.subr.mxu0 0.0
  %95 = vmatpush1.msra.mxu0 0.0
  %96 = vmatprep.subr.mxu0 0.0
  %97 = vmatpush1.msra.mxu0 0.0
  %98 = vmatprep.subr.mxu0 0.0
  %99 = vmatpush1.msra.mxu0 0.0
  %100 = vmatprep.subr.mxu0 0.0
  %101 = vmatpush1.msra.mxu0 0.0
  %102 = vmatprep.subr.mxu0 0.0
  %103 = vmatpush1.msra.mxu0 0.0
  %104 = vmatprep.subr.mxu0 0.0
  %105 = vmatpush1.msra.mxu0 0.0
  %106 = vmatprep.subr.mxu0 0.0
  %107 = vmatpush1.msra.mxu0 0.0
  %108 = vmatprep.mubr.f32.mxu0 0.0
  %109 = vmatmul.mubr.f32.gmra.mrb[0].mxu0 %v33
  %v110 = vpop.f32.mrb[0].mxu0
  %v111 = vadd.f32 0.0, %v110
  %v112 = vpop.f32.mrb[0].mxu0
  %v113 = vadd.f32 0.0, %v112
  %114 = vmatprep.mubr.f32.mxu0 0.0
  %115 = vmatmul.mubr.f32.gmra.mrb[0].mxu0 %v36
  %v116 = vpop.f32.mrb[0].mxu0
  %v117 = vadd.f32 0.0, %v116
  %v118 = vpop.f32.mrb[0].mxu0
  %v119 = vadd.f32 0.0, %v118
  %120 = vmatprep.mubr.f32.mxu0 0.0
  %121 = vmatmul.mubr.f32.gmra.mrb[0].mxu0 %v39
  %v122 = vpop.f32.mrb[0].mxu0
  %v123 = vadd.f32 0.0, %v122
  %v124 = vpop.f32.mrb[0].mxu0
  %v125 = vadd.f32 0.0, %v124
  %126 = vmatprep.mubr.f32.mxu0 0.0
  %127 = vmatmul.mubr.f32.gmra.mrb[0].mxu0 %v42
  %v128 = vpop.f32.mrb[0].mxu0
  %v129 = vadd.f32 0.0, %v128
  %v130 = vpop.f32.mrb[0].mxu0
  %v131 = vadd.f32 0.0, %v130
  %132 = vdwg.mxu0
  %133 = vmatprep.subr.mxu0 %v18
  %134 = vmatpush1.msra.mxu0 %v17
  %135 = vmatprep.subr.mxu0 %v22
  %136 = vmatpush1.msra.mxu0 %v21
  %137 = vmatprep.subr.mxu0 %v26
  %138 = vmatpush1.msra.mxu0 %v25
  %139 = vmatprep.subr.mxu0 %v30
  %140 = vmatpush1.msra.mxu0 %v29
  %141 = vmatprep.subr.mxu0 0.0
  %142 = vmatpush1.msra.mxu0 0.0
  %143 = vmatprep.subr.mxu0 0.0
  %144 = vmatpush1.msra.mxu0 0.0
  %145 = vmatprep.subr.mxu0 0.0
  %146 = vmatpush1.msra.mxu0 0.0
  %147 = vmatprep.subr.mxu0 0.0
  %148 = vmatpush1.msra.mxu0 0.0
  %149 = vmatprep.subr.mxu0 0.0
  %150 = vmatpush1.msra.mxu0 0.0
  %151 = vmatprep.subr.mxu0 0.0
  %152 = vmatpush1.msra.mxu0 0.0
  %153 = vmatprep.subr.mxu0 0.0
  %154 = vmatpush1.msra.mxu0 0.0
  %155 = vmatprep.subr.mxu0 0.0
  %156 = vmatpush1.msra.mxu0 0.0
  %157 = vmatprep.subr.mxu0 0.0
  %158 = vmatpush1.msra.mxu0 0.0
  %159 = vmatprep.subr.mxu0 0.0
  %160 = vmatpush1.msra.mxu0 0.0
  %161 = vmatprep.subr.mxu0 0.0
  %162 = vmatpush1.msra.mxu0 0.0
  %163 = vmatprep.subr.mxu0 0.0
  %164 = vmatpush1.msra.mxu0 0.0
  %165 = vmatprep.subr.mxu0 0.0
  %166 = vmatpush1.msra.mxu0 0.0
  %167 = vmatprep.subr.mxu0 0.0
  %168 = vmatpush1.msra.mxu0 0.0
  %169 = vmatprep.subr.mxu0 0.0
  %170 = vmatpush1.msra.mxu0 0.0
  %171 = vmatprep.subr.mxu0 0.0
  %172 = vmatpush1.msra.mxu0 0.0
  %173 = vmatprep.subr.mxu0 0.0
  %174 = vmatpush1.msra.mxu0 0.0
  %175 = vmatprep.subr.mxu0 0.0
  %176 = vmatpush1.msra.mxu0 0.0
  %177 = vmatprep.subr.mxu0 0.0
  %178 = vmatpush1.msra.mxu0 0.0
  %179 = vmatprep.subr.mxu0 0.0
  %180 = vmatpush1.msra.mxu0 0.0
  %181 = vmatprep.subr.mxu0 0.0
  %182 = vmatpush1.msra.mxu0 0.0
  %183 = vmatprep.subr.mxu0 0.0
  %184 = vmatpush1.msra.mxu0 0.0
  %185 = vmatprep.subr.mxu0 0.0
  %186 = vmatpush1.msra.mxu0 0.0
  %187 = vmatprep.subr.mxu0 0.0
  %188 = vmatpush1.msra.mxu0 0.0
  %189 = vmatprep.subr.mxu0 0.0
  %190 = vmatpush1.msra.mxu0 0.0
  %191 = vmatprep.subr.mxu0 0.0
  %192 = vmatpush1.msra.mxu0 0.0
  %193 = vmatprep.subr.mxu0 0.0
  %194 = vmatpush1.msra.mxu0 0.0
  %195 = vmatprep.subr.mxu0 0.0
  %196 = vmatpush1.msra.mxu0 0.0
  %197 = vmatprep.mubr.f32.mxu0 0.0
  %198 = vmatmul.mubr.f32.gmra.mrb[0].mxu0 %v33
  %v199 = vpop.f32.mrb[0].mxu0
  %v200 = vadd.f32 0.0, %v199
  %v201 = vpop.f32.mrb[0].mxu0
  %v202 = vadd.f32 0.0, %v201
  %203 = vmatprep.mubr.f32.mxu0 0.0
  %204 = vmatmul.mubr.f32.gmra.mrb[0].mxu0 %v36
  %v205 = vpop.f32.mrb[0].mxu0
  %v206 = vadd.f32 0.0, %v205
  %v207 = vpop.f32.mrb[0].mxu0
  %v208 = vadd.f32 0.0, %v207
  %209 = vmatprep.mubr.f32.mxu0 0.0
  %210 = vmatmul.mubr.f32.gmra.mrb[0].mxu0 %v39
  %v211 = vpop.f32.mrb[0].mxu0
  %v212 = vadd.f32 0.0, %v211
  %v213 = vpop.f32.mrb[0].mxu0
  %v214 = vadd.f32 0.0, %v213
  %215 = vmatprep.mubr.f32.mxu0 0.0
  %216 = vmatmul.mubr.f32.gmra.mrb[0].mxu0 %v42
  %v217 = vpop.f32.mrb[0].mxu0
  %v218 = vadd.f32 0.0, %v217
  %v219 = vpop.f32.mrb[0].mxu0
  %v220 = vadd.f32 0.0, %v219
  %221 = vdwg.mxu0
  %222 = vst [vmem:[%s2] sm:$0xff] %v111
  %223 = vst [vmem:[%s2 + $0x8] sm:$0xff] %v113
  %224 = vst [vmem:[%s2 + $0x10] sm:$0xff] %v200
  %225 = vst [vmem:[%s2 + $0x18] sm:$0xff] %v202
  %226 = vst [vmem:[%s2 + $0x20] sm:$0xff] %v117
  %227 = vst [vmem:[%s2 + $0x28] sm:$0xff] %v119
  %228 = vst [vmem:[%s2 + $0x30] sm:$0xff] %v206
  %229 = vst [vmem:[%s2 + $0x38] sm:$0xff] %v208
  %230 = vst [vmem:[%s2 + $0x40] sm:$0xff] %v123
  %231 = vst [vmem:[%s2 + $0x48] sm:$0xff] %v125
  %232 = vst [vmem:[%s2 + $0x50] sm:$0xff] %v212
  %233 = vst [vmem:[%s2 + $0x58] sm:$0xff] %v214
  %234 = vst [vmem:[%s2 + $0x60] sm:$0xff] %v129
  %235 = vst [vmem:[%s2 + $0x68] sm:$0xff] %v131
  %236 = vst [vmem:[%s2 + $0x70] sm:$0xff] %v218
  %237 = vst [vmem:[%s2 + $0x78] sm:$0xff] %v220
  // Predicated region
  $region10: #{uperhead_forward.25} parent=0 // pred_check
    _
  $region11: #{uperhead_forward.25} parent=0 // pred_check_branch
    %239 = sbr.rel (0) target = $region13
  $region12: #{uperhead_forward.25} parent=0 // pred_region
    _
  $region13: #{uperhead_forward.25} parent=0 // pred_fallthru
    _
  // Predicated region
  $region14: #{uperhead_forward.25} parent=0 // pred_check
    _
  $region15: #{uperhead_forward.25} parent=0 // pred_check_branch
    %241 = sbr.rel (0) target = $region17
  $region16: #{uperhead_forward.25} parent=0 // pred_region
    _
  $region17: #{uperhead_forward.25} parent=0 // pred_fallthru
    _

// kernel: uperhead_forward.24
$region0: #{uperhead_forward.24}
  #allocation0 [shape = 'u32[]', space=smem, size = 0x4, offset = 0x4, fixed_abs, tag = 'smem constant byte address 0x4 - core index']
  #allocation1 [shape = 'u32[144,128]{1,0:T(1,128)}', space=vmem, size = 0x12000, scoped, tag = 'internal scratch']
  %s0 = inlined_call_operand.vmem [shape: f32[16,128], index: 0, kind: input, shape index: {}]
  %s1 = inlined_call_operand.vmem [shape: f32[128,512], index: 1, kind: input, shape index: {}]
  %s2 = inlined_call_operand.vmem [shape: f32[16,512], index: 2, kind: output, shape index: {}]
  %s3 = sld [smem:[#allocation0]]
  $region18: #{uperhead_forward.24} parent=0
    _
  %s5 = ssub.s32 1, %s3
  %s6 = scalar_select 0, %s5, %s3
  // Predicated region
  $region2: #{uperhead_forward.24} parent=0 // pred_check
    _
  $region3: #{uperhead_forward.24} parent=0 // pred_check_branch
    %8 = sbr.rel (0) target = $region5
  $region4: #{uperhead_forward.24} parent=0 // pred_region
    _
  $region5: #{uperhead_forward.24} parent=0 // pred_fallthru
    _
  // Predicated region
  $region6: #{uperhead_forward.24} parent=0 // pred_check
    _
  $region7: #{uperhead_forward.24} parent=0 // pred_check_branch
    %10 = sbr.rel (0) target = $region9
  $region8: #{uperhead_forward.24} parent=0 // pred_region
    _
  $region9: #{uperhead_forward.24} parent=0 // pred_fallthru
    _
  %v11 = vld [vmem:[%s0] sm:$0xff]
  %v12 = vld [vmem:[%s0 + $0x8] sm:$0xff]
  %v13 = vld [vmem:[%s1] sm:$0xff]
  %v14 = vld [vmem:[%s1 + $0x8] sm:$0xff]
  %v15 = vld [vmem:[%s1 + $0x10] sm:$0xff]
  %v16 = vld [vmem:[%s1 + $0x18] sm:$0xff]
  %v17 = vld [vmem:[%s1 + $0x20] sm:$0xff]
  %v18 = vld [vmem:[%s1 + $0x28] sm:$0xff]
  %v19 = vld [vmem:[%s1 + $0x30] sm:$0xff]
  %v20 = vld [vmem:[%s1 + $0x38] sm:$0xff]
  %v21 = vld [vmem:[%s1 + $0x40] sm:$0xff]
  %v22 = vld [vmem:[%s1 + $0x48] sm:$0xff]
  %v23 = vld [vmem:[%s1 + $0x50] sm:$0xff]
  %v24 = vld [vmem:[%s1 + $0x58] sm:$0xff]
  %v25 = vld [vmem:[%s1 + $0x60] sm:$0xff]
  %v26 = vld [vmem:[%s1 + $0x68] sm:$0xff]
  %v27 = vld [vmem:[%s1 + $0x70] sm:$0xff]
  %v28 = vld [vmem:[%s1 + $0x78] sm:$0xff]
  %v29 = vld [vmem:[%s1 + $0x80] sm:$0xff]
  %v30 = vld [vmem:[%s1 + $0x88] sm:$0xff]
  %v31 = vld [vmem:[%s1 + $0x90] sm:$0xff]
  %v32 = vld [vmem:[%s1 + $0x98] sm:$0xff]
  %v33 = vld [vmem:[%s1 + $0xa0] sm:$0xff]
  %v34 = vld [vmem:[%s1 + $0xa8] sm:$0xff]
  %v35 = vld [vmem:[%s1 + $0xb0] sm:$0xff]
  %v36 = vld [vmem:[%s1 + $0xb8] sm:$0xff]
  %v37 = vld [vmem:[%s1 + $0xc0] sm:$0xff]
  %v38 = vld [vmem:[%s1 + $0xc8] sm:$0xff]
  %v39 = vld [vmem:[%s1 + $0xd0] sm:$0xff]
  %v40 = vld [vmem:[%s1 + $0xd8] sm:$0xff]
  %v41 = vld [vmem:[%s1 + $0xe0] sm:$0xff]
  %v42 = vld [vmem:[%s1 + $0xe8] sm:$0xff]
  %v43 = vld [vmem:[%s1 + $0xf0] sm:$0xff]
  %v44 = vld [vmem:[%s1 + $0xf8] sm:$0xff]
  %v45 = vld [vmem:[%s1 + $0x100] sm:$0xff]
  %v46 = vld [vmem:[%s1 + $0x108] sm:$0xff]
  %v47 = vld [vmem:[%s1 + $0x110] sm:$0xff]
  %v48 = vld [vmem:[%s1 + $0x118] sm:$0xff]
  %v49 = vld [vmem:[%s1 + $0x120] sm:$0xff]
  %v50 = vld [vmem:[%s1 + $0x128] sm:$0xff]
  %v51 = vld [vmem:[%s1 + $0x130] sm:$0xff]
  %v52 = vld [vmem:[%s1 + $0x138] sm:$0xff]
  %v53 = vld [vmem:[%s1 + $0x140] sm:$0xff]
  %v54 = vld [vmem:[%s1 + $0x148] sm:$0xff]
  %v55 = vld [vmem:[%s1 + $0x150] sm:$0xff]
  %v56 = vld [vmem:[%s1 + $0x158] sm:$0xff]
  %v57 = vld [vmem:[%s1 + $0x160] sm:$0xff]
  %v58 = vld [vmem:[%s1 + $0x168] sm:$0xff]
  %v59 = vld [vmem:[%s1 + $0x170] sm:$0xff]
  %v60 = vld [vmem:[%s1 + $0x178] sm:$0xff]
  %v61 = vld [vmem:[%s1 + $0x180] sm:$0xff]
  %v62 = vld [vmem:[%s1 + $0x188] sm:$0xff]
  %v63 = vld [vmem:[%s1 + $0x190] sm:$0xff]
  %v64 = vld [vmem:[%s1 + $0x198] sm:$0xff]
  %v65 = vld [vmem:[%s1 + $0x1a0] sm:$0xff]
  %v66 = vld [vmem:[%s1 + $0x1a8] sm:$0xff]
  %v67 = vld [vmem:[%s1 + $0x1b0] sm:$0xff]
  %v68 = vld [vmem:[%s1 + $0x1b8] sm:$0xff]
  %v69 = vld [vmem:[%s1 + $0x1c0] sm:$0xff]
  %v70 = vld [vmem:[%s1 + $0x1c8] sm:$0xff]
  %v71 = vld [vmem:[%s1 + $0x1d0] sm:$0xff]
  %v72 = vld [vmem:[%s1 + $0x1d8] sm:$0xff]
  %v73 = vld [vmem:[%s1 + $0x1e0] sm:$0xff]
  %v74 = vld [vmem:[%s1 + $0x1e8] sm:$0xff]
  %v75 = vld [vmem:[%s1 + $0x1f0] sm:$0xff]
  %v76 = vld [vmem:[%s1 + $0x1f8] sm:$0xff]
  %77 = vmatprep.subr.mxu0 %v14
  %78 = vmatpush1.msra.mxu0 %v13
  %79 = vmatprep.subr.mxu0 %v18
  %80 = vmatpush1.msra.mxu0 %v17
  %81 = vmatprep.subr.mxu0 %v22
  %82 = vmatpush1.msra.mxu0 %v21
  %83 = vmatprep.subr.mxu0 %v26
  %84 = vmatpush1.msra.mxu0 %v25
  %85 = vmatprep.subr.mxu0 %v30
  %86 = vmatpush1.msra.mxu0 %v29
  %87 = vmatprep.subr.mxu0 %v34
  %88 = vmatpush1.msra.mxu0 %v33
  %89 = vmatprep.subr.mxu0 %v38
  %90 = vmatpush1.msra.mxu0 %v37
  %91 = vmatprep.subr.mxu0 %v42
  %92 = vmatpush1.msra.mxu0 %v41
  %93 = vmatprep.subr.mxu0 %v46
  %94 = vmatpush1.msra.mxu0 %v45
  %95 = vmatprep.subr.mxu0 %v50
  %96 = vmatpush1.msra.mxu0 %v49
  %97 = vmatprep.subr.mxu0 %v54
  %98 = vmatpush1.msra.mxu0 %v53
  %99 = vmatprep.subr.mxu0 %v58
  %100 = vmatpush1.msra.mxu0 %v57
  %101 = vmatprep.subr.mxu0 %v62
  %102 = vmatpush1.msra.mxu0 %v61
  %103 = vmatprep.subr.mxu0 %v66
  %104 = vmatpush1.msra.mxu0 %v65
  %105 = vmatprep.subr.mxu0 %v70
  %106 = vmatpush1.msra.mxu0 %v69
  %107 = vmatprep.subr.mxu0 %v74
  %108 = vmatpush1.msra.mxu0 %v73
  %109 = vmatprep.subr.mxu0 0.0
  %110 = vmatpush1.msra.mxu0 0.0
  %111 = vmatprep.subr.mxu0 0.0
  %112 = vmatpush1.msra.mxu0 0.0
  %113 = vmatprep.subr.mxu0 0.0
  %114 = vmatpush1.msra.mxu0 0.0
  %115 = vmatprep.subr.mxu0 0.0
  %116 = vmatpush1.msra.mxu0 0.0
  %117 = vmatprep.subr.mxu0 0.0
  %118 = vmatpush1.msra.mxu0 0.0
  %119 = vmatprep.subr.mxu0 0.0
  %120 = vmatpush1.msra.mxu0 0.0
  %121 = vmatprep.subr.mxu0 0.0
  %122 = vmatpush1.msra.mxu0 0.0
  %123 = vmatprep.subr.mxu0 0.0
  %124 = vmatpush1.msra.mxu0 0.0
  %125 = vmatprep.subr.mxu0 0.0
  %126 = vmatpush1.msra.mxu0 0.0
  %127 = vmatprep.subr.mxu0 0.0
  %128 = vmatpush1.msra.mxu0 0.0
  %129 = vmatprep.subr.mxu0 0.0
  %130 = vmatpush1.msra.mxu0 0.0
  %131 = vmatprep.subr.mxu0 0.0
  %132 = vmatpush1.msra.mxu0 0.0
  %133 = vmatprep.subr.mxu0 0.0
  %134 = vmatpush1.msra.mxu0 0.0
  %135 = vmatprep.subr.mxu0 0.0
  %136 = vmatpush1.msra.mxu0 0.0
  %137 = vmatprep.subr.mxu0 0.0
  %138 = vmatpush1.msra.mxu0 0.0
  %139 = vmatprep.subr.mxu0 0.0
  %140 = vmatpush1.msra.mxu0 0.0
  %141 = vmatprep.mubr.f32.mxu0 0.0
  %142 = vmatmul.mubr.f32.gmra.mrb[0].mxu0 %v11
  %v143 = vpop.f32.mrb[0].mxu0
  %v144 = vadd.f32 0.0, %v143
  %v145 = vpop.f32.mrb[0].mxu0
  %v146 = vadd.f32 0.0, %v145
  %147 = vmatprep.mubr.f32.mxu0 0.0
  %148 = vmatmul.mubr.f32.gmra.mrb[0].mxu0 %v12
  %v149 = vpop.f32.mrb[0].mxu0
  %v150 = vadd.f32 0.0, %v149
  %v151 = vpop.f32.mrb[0].mxu0
  %v152 = vadd.f32 0.0, %v151
  %153 = vdwg.mxu0
  %154 = vmatprep.subr.mxu0 %v16
  %155 = vmatpush1.msra.mxu0 %v15
  %156 = vmatprep.subr.mxu0 %v20
  %157 = vmatpush1.msra.mxu0 %v19
  %158 = vmatprep.subr.mxu0 %v24
  %159 = vmatpush1.msra.mxu0 %v23
  %160 = vmatprep.subr.mxu0 %v28
  %161 = vmatpush1.msra.mxu0 %v27
  %162 = vmatprep.subr.mxu0 %v32
  %163 = vmatpush1.msra.mxu0 %v31
  %164 = vmatprep.subr.mxu0 %v36
  %165 = vmatpush1.msra.mxu0 %v35
  %166 = vmatprep.subr.mxu0 %v40
  %167 = vmatpush1.msra.mxu0 %v39
  %168 = vmatprep.subr.mxu0 %v44
  %169 = vmatpush1.msra.mxu0 %v43
  %170 = vmatprep.subr.mxu0 %v48
  %171 = vmatpush1.msra.mxu0 %v47
  %172 = vmatprep.subr.mxu0 %v52
  %173 = vmatpush1.msra.mxu0 %v51
  %174 = vmatprep.subr.mxu0 %v56
  %175 = vmatpush1.msra.mxu0 %v55
  %176 = vmatprep.subr.mxu0 %v60
  %177 = vmatpush1.msra.mxu0 %v59
  %178 = vmatprep.subr.mxu0 %v64
  %179 = vmatpush1.msra.mxu0 %v63
  %180 = vmatprep.subr.mxu0 %v68
  %181 = vmatpush1.msra.mxu0 %v67
  %182 = vmatprep.subr.mxu0 %v72
  %183 = vmatpush1.msra.mxu0 %v71
  %184 = vmatprep.subr.mxu0 %v76
  %185 = vmatpush1.msra.mxu0 %v75
  %186 = vmatprep.subr.mxu0 0.0
  %187 = vmatpush1.msra.mxu0 0.0
  %188 = vmatprep.subr.mxu0 0.0
  %189 = vmatpush1.msra.mxu0 0.0
  %190 = vmatprep.subr.mxu0 0.0
  %191 = vmatpush1.msra.mxu0 0.0
  %192 = vmatprep.subr.mxu0 0.0
  %193 = vmatpush1.msra.mxu0 0.0
  %194 = vmatprep.subr.mxu0 0.0
  %195 = vmatpush1.msra.mxu0 0.0
  %196 = vmatprep.subr.mxu0 0.0
  %197 = vmatpush1.msra.mxu0 0.0
  %198 = vmatprep.subr.mxu0 0.0
  %199 = vmatpush1.msra.mxu0 0.0
  %200 = vmatprep.subr.mxu0 0.0
  %201 = vmatpush1.msra.mxu0 0.0
  %202 = vmatprep.subr.mxu0 0.0
  %203 = vmatpush1.msra.mxu0 0.0
  %204 = vmatprep.subr.mxu0 0.0
  %205 = vmatpush1.msra.mxu0 0.0
  %206 = vmatprep.subr.mxu0 0.0
  %207 = vmatpush1.msra.mxu0 0.0
  %208 = vmatprep.subr.mxu0 0.0
  %209 = vmatpush1.msra.mxu0 0.0
  %210 = vmatprep.subr.mxu0 0.0
  %211 = vmatpush1.msra.mxu0 0.0
  %212 = vmatprep.subr.mxu0 0.0
  %213 = vmatpush1.msra.mxu0 0.0
  %214 = vmatprep.subr.mxu0 0.0
  %215 = vmatpush1.msra.mxu0 0.0
  %216 = vmatprep.subr.mxu0 0.0
  %217 = vmatpush1.msra.mxu0 0.0
  %218 = vmatprep.mubr.f32.mxu0 0.0
  %219 = vmatmul.mubr.f32.gmra.mrb[0].mxu0 %v11
  %v220 = vpop.f32.mrb[0].mxu0
  %v221 = vadd.f32 0.0, %v220
  %v222 = vpop.f32.mrb[0].mxu0
  %v223 = vadd.f32 0.0, %v222
  %224 = vmatprep.mubr.f32.mxu0 0.0
  %225 = vmatmul.mubr.f32.gmra.mrb[0].mxu0 %v12
  %v226 = vpop.f32.mrb[0].mxu0
  %v227 = vadd.f32 0.0, %v226
  %v228 = vpop.f32.mrb[0].mxu0
  %v229 = vadd.f32 0.0, %v228
  %230 = vdwg.mxu0
  %231 = vst [vmem:[%s2] sm:$0xff] %v144
  %232 = vst [vmem:[%s2 + $0x8] sm:$0xff] %v146
  %233 = vst [vmem:[%s2 + $0x10] sm:$0xff] %v221
  %234 = vst [vmem:[%s2 + $0x18] sm:$0xff] %v223
  %235 = vst [vmem:[%s2 + $0x20] sm:$0xff] %v150
  %236 = vst [vmem:[%s2 + $0x28] sm:$0xff] %v152
  %237 = vst [vmem:[%s2 + $0x30] sm:$0xff] %v227
  %238 = vst [vmem:[%s2 + $0x38] sm:$0xff] %v229
  // Predicated region
  $region10: #{uperhead_forward.24} parent=0 // pred_check
    _
  $region11: #{uperhead_forward.24} parent=0 // pred_check_branch
    %240 = sbr.rel (0) target = $region13
  $region12: #{uperhead_forward.24} parent=0 // pred_region
    _
  $region13: #{uperhead_forward.24} parent=0 // pred_fallthru
    _
  // Predicated region
  $region14: #{uperhead_forward.24} parent=0 // pred_check
    _
  $region15: #{uperhead_forward.24} parent=0 // pred_check_branch
    %242 = sbr.rel (0) target = $region17
  $region16: #{uperhead_forward.24} parent=0 // pred_region
    _
  $region17: #{uperhead_forward.24} parent=0 // pred_fallthru
    _

// kernel: uperhead_forward.22
$region0: #{uperhead_forward.22}
  #allocation0 [shape = 'u32[]', space=smem, size = 0x4, offset = 0x4, fixed_abs, tag = 'smem constant byte address 0x4 - core index']
  #allocation1 [shape = 'u32[144,128]{1,0:T(1,128)}', space=vmem, size = 0x12000, scoped, tag = 'internal scratch']
  %s0 = inlined_call_operand.vmem [shape: f32[16,222], index: 0, kind: input, shape index: {}]
  %s1 = inlined_call_operand.vmem [shape: f32[9,16,16], index: 1, kind: input, shape index: {}]
  %s2 = inlined_call_operand.vmem [shape: f32[16,1], index: 2, kind: input, shape index: {}]
  %s3 = inlined_call_operand.vmem [shape: f32[16,200], index: 3, kind: output, shape index: {}]
  %s4 = sld [smem:[#allocation0]]
  $region22: #{uperhead_forward.22} parent=0
    _
  %s6 = ssub.s32 1, %s4
  %s7 = scalar_select 0, %s6, %s4
  // Predicated region
  $region2: #{uperhead_forward.22} parent=0 // pred_check
    _
  $region3: #{uperhead_forward.22} parent=0 // pred_check_branch
    %9 = sbr.rel (0) target = $region5
  $region4: #{uperhead_forward.22} parent=0 // pred_region
    _
  $region5: #{uperhead_forward.22} parent=0 // pred_fallthru
    _
  // Predicated region
  $region6: #{uperhead_forward.22} parent=0 // pred_check
    _
  $region7: #{uperhead_forward.22} parent=0 // pred_check_branch
    %11 = sbr.rel (0) target = $region9
  $region8: #{uperhead_forward.22} parent=0 // pred_region
    _
  $region9: #{uperhead_forward.22} parent=0 // pred_fallthru
    _
  // Predicated region
  $region10: #{uperhead_forward.22} parent=0 // pred_check
    _
  $region11: #{uperhead_forward.22} parent=0 // pred_check_branch
    %13 = sbr.rel (0) target = $region13
  $region12: #{uperhead_forward.22} parent=0 // pred_region
    _
  $region13: #{uperhead_forward.22} parent=0 // pred_fallthru
    _
  %v14 = vld [vmem:[%s0] sm:$0xff]
  %v15 = vld [vmem:[%s0 + $0x8] sm:$0xff]
  %v16 = vld [vmem:[%s0 + $0x10] sm:$0xff]
  %v17 = vld [vmem:[%s0 + $0x18] sm:$0xff]
  %v18 = vld [vmem:[%s1] sm:$0xff]
  %v19 = vld [vmem:[%s1 + $0x8] sm:$0xff]
  %s20 = scalar_lea.vmem %s1, 16
  %v21 = vld [vmem:[%s20] sm:$0xff]
  %v22 = vld [vmem:[%s20 + $0x8] sm:$0xff]
  %27 = vrot.lane.b32.xlu0 %v14, 127
  %v28 = vpop.permute.xlu0 %27
  %29 = vrot.lane.b32.xlu0 %v15, 127
  %v30 = vpop.permute.xlu0 %29
  %31 = vrot.lane.b32.xlu0 %v16, 127
  %v32 = vpop.permute.xlu0 %31
  %33 = vrot.lane.b32.xlu0 %v17, 127
  %v34 = vpop.permute.xlu0 %33
  %vm35 = vcmask 1039360
  %v36 = vsel %vm35, %v28, %v30
  %v37 = vsel %vm35, %v32, %v34
  %vm42 = vcmask 130048
  %v44 = vsel %vm42, %v21, 0
  %v47 = vsel %vm42, %v22, 0
  %49 = vmatprep.subr.mxu0 %v30
  %50 = vmatpush1.msra.mxu0 %v36
  %51 = vmatprep.subr.mxu0 %v34
  %52 = vmatpush1.msra.mxu0 %v37
  %53 = vmatprep.subr.mxu0 0.0
  %54 = vmatpush1.msra.mxu0 0.0
  %55 = vmatprep.subr.mxu0 0.0
  %56 = vmatpush1.msra.mxu0 0.0
  %57 = vmatprep.subr.mxu0 0.0
  %58 = vmatpush1.msra.mxu0 0.0
  %59 = vmatprep.subr.mxu0 0.0
  %60 = vmatpush1.msra.mxu0 0.0
  %61 = vmatprep.subr.mxu0 0.0
  %62 = vmatpush1.msra.mxu0 0.0
  %63 = vmatprep.subr.mxu0 0.0
  %64 = vmatpush1.msra.mxu0 0.0
  %65 = vmatprep.subr.mxu0 0.0
  %66 = vmatpush1.msra.mxu0 0.0
  %67 = vmatprep.subr.mxu0 0.0
  %68 = vmatpush1.msra.mxu0 0.0
  %69 = vmatprep.subr.mxu0 0.0
  %70 = vmatpush1.msra.mxu0 0.0
  %71 = vmatprep.subr.mxu0 0.0
  %72 = vmatpush1.msra.mxu0 0.0
  %73 = vmatprep.subr.mxu0 0.0
  %74 = vmatpush1.msra.mxu0 0.0
  %75 = vmatprep.subr.mxu0 0.0
  %76 = vmatpush1.msra.mxu0 0.0
  %77 = vmatprep.subr.mxu0 0.0
  %78 = vmatpush1.msra.mxu0 0.0
  %79 = vmatprep.subr.mxu0 0.0
  %80 = vmatpush1.msra.mxu0 0.0
  %81 = vmatprep.subr.mxu0 0.0
  %82 = vmatpush1.msra.mxu0 0.0
  %83 = vmatprep.subr.mxu0 0.0
  %84 = vmatpush1.msra.mxu0 0.0
  %85 = vmatprep.subr.mxu0 0.0
  %86 = vmatpush1.msra.mxu0 0.0
  %87 = vmatprep.subr.mxu0 0.0
  %88 = vmatpush1.msra.mxu0 0.0
  %89 = vmatprep.subr.mxu0 0.0
  %90 = vmatpush1.msra.mxu0 0.0
  %91 = vmatprep.subr.mxu0 0.0
  %92 = vmatpush1.msra.mxu0 0.0
  %93 = vmatprep.subr.mxu0 0.0
  %94 = vmatpush1.msra.mxu0 0.0
  %95 = vmatprep.subr.mxu0 0.0
  %96 = vmatpush1.msra.mxu0 0.0
  %97 = vmatprep.subr.mxu0 0.0
  %98 = vmatpush1.msra.mxu0 0.0
  %99 = vmatprep.subr.mxu0 0.0
  %100 = vmatpush1.msra.mxu0 0.0
  %101 = vmatprep.subr.mxu0 0.0
  %102 = vmatpush1.msra.mxu0 0.0
  %103 = vmatprep.subr.mxu0 0.0
  %104 = vmatpush1.msra.mxu0 0.0
  %105 = vmatprep.subr.mxu0 0.0
  %106 = vmatpush1.msra.mxu0 0.0
  %107 = vmatprep.subr.mxu0 0.0
  %108 = vmatpush1.msra.mxu0 0.0
  %109 = vmatprep.subr.mxu0 0.0
  %110 = vmatpush1.msra.mxu0 0.0
  %111 = vmatprep.subr.mxu0 0.0
  %112 = vmatpush1.msra.mxu0 0.0
  %113 = vmatprep.mubr.f32.mxu0 0.0
  %114 = vmatmul.mubr.f32.gmra.mrb[0].mxu0 %v44
  %v115 = vpop.f32.mrb[0].mxu0
  %v116 = vadd.f32 0.0, %v115
  %v117 = vpop.f32.mrb[0].mxu0
  %v118 = vadd.f32 0.0, %v117
  %119 = vmatprep.mubr.f32.mxu0 0.0
  %120 = vmatmul.mubr.f32.gmra.mrb[0].mxu0 %v47
  %v121 = vpop.f32.mrb[0].mxu0
  %v122 = vadd.f32 0.0, %v121
  %v123 = vpop.f32.mrb[0].mxu0
  %v124 = vadd.f32 0.0, %v123
  %125 = vdwg.mxu0
  %v127 = vsel %vm42, %v18, 0
  %v130 = vsel %vm42, %v19, 0
  %132 = vmatprep.subr.mxu0 %v15
  %133 = vmatpush1.msra.mxu0 %v14
  %134 = vmatprep.subr.mxu0 %v17
  %135 = vmatpush1.msra.mxu0 %v16
  %136 = vmatprep.subr.mxu0 0.0
  %137 = vmatpush1.msra.mxu0 0.0
  %138 = vmatprep.subr.mxu0 0.0
  %139 = vmatpush1.msra.mxu0 0.0
  %140 = vmatprep.subr.mxu0 0.0
  %141 = vmatpush1.msra.mxu0 0.0
  %142 = vmatprep.subr.mxu0 0.0
  %143 = vmatpush1.msra.mxu0 0.0
  %144 = vmatprep.subr.mxu0 0.0
  %145 = vmatpush1.msra.mxu0 0.0
  %146 = vmatprep.subr.mxu0 0.0
  %147 = vmatpush1.msra.mxu0 0.0
  %148 = vmatprep.subr.mxu0 0.0
  %149 = vmatpush1.msra.mxu0 0.0
  %150 = vmatprep.subr.mxu0 0.0
  %151 = vmatpush1.msra.mxu0 0.0
  %152 = vmatprep.subr.mxu0 0.0
  %153 = vmatpush1.msra.mxu0 0.0
  %154 = vmatprep.subr.mxu0 0.0
  %155 = vmatpush1.msra.mxu0 0.0
  %156 = vmatprep.subr.mxu0 0.0
  %157 = vmatpush1.msra.mxu0 0.0
  %158 = vmatprep.subr.mxu0 0.0
  %159 = vmatpush1.msra.mxu0 0.0
  %160 = vmatprep.subr.mxu0 0.0
  %161 = vmatpush1.msra.mxu0 0.0
  %162 = vmatprep.subr.mxu0 0.0
  %163 = vmatpush1.msra.mxu0 0.0
  %164 = vmatprep.subr.mxu0 0.0
  %165 = vmatpush1.msra.mxu0 0.0
  %166 = vmatprep.subr.mxu0 0.0
  %167 = vmatpush1.msra.mxu0 0.0
  %168 = vmatprep.subr.mxu0 0.0
  %169 = vmatpush1.msra.mxu0 0.0
  %170 = vmatprep.subr.mxu0 0.0
  %171 = vmatpush1.msra.mxu0 0.0
  %172 = vmatprep.subr.mxu0 0.0
  %173 = vmatpush1.msra.mxu0 0.0
  %174 = vmatprep.subr.mxu0 0.0
  %175 = vmatpush1.msra.mxu0 0.0
  %176 = vmatprep.subr.mxu0 0.0
  %177 = vmatpush1.msra.mxu0 0.0
  %178 = vmatprep.subr.mxu0 0.0
  %179 = vmatpush1.msra.mxu0 0.0
  %180 = vmatprep.subr.mxu0 0.0
  %181 = vmatpush1.msra.mxu0 0.0
  %182 = vmatprep.subr.mxu0 0.0
  %183 = vmatpush1.msra.mxu0 0.0
  %184 = vmatprep.subr.mxu0 0.0
  %185 = vmatpush1.msra.mxu0 0.0
  %186 = vmatprep.subr.mxu0 0.0
  %187 = vmatpush1.msra.mxu0 0.0
  %188 = vmatprep.subr.mxu0 0.0
  %189 = vmatpush1.msra.mxu0 0.0
  %190 = vmatprep.subr.mxu0 0.0
  %191 = vmatpush1.msra.mxu0 0.0
  %192 = vmatprep.subr.mxu0 0.0
  %193 = vmatpush1.msra.mxu0 0.0
  %194 = vmatprep.subr.mxu0 0.0
  %195 = vmatpush1.msra.mxu0 0.0
  %196 = vmatprep.mubr.f32.mxu0 0.0
  %197 = vmatmul.mubr.f32.gmra.mrb[0].mxu0 %v127
  %v198 = vpop.f32.mrb[0].mxu0
  %v199 = vadd.f32 %v116, %v198
  %v200 = vpop.f32.mrb[0].mxu0
  %v201 = vadd.f32 %v118, %v200
  %202 = vmatprep.mubr.f32.mxu0 0.0
  %203 = vmatmul.mubr.f32.gmra.mrb[0].mxu0 %v130
  %v204 = vpop.f32.mrb[0].mxu0
  %v205 = vadd.f32 %v122, %v204
  %v206 = vpop.f32.mrb[0].mxu0
  %v207 = vadd.f32 %v124, %v206
  %208 = vdwg.mxu0
  %s209 = scalar_lea.vmem %s1, 32
  %v210 = vld [vmem:[%s209] sm:$0xff]
  %v211 = vld [vmem:[%s209 + $0x8] sm:$0xff]
  %212 = vrot.lane.b32.xlu0 %v14, 126
  %v213 = vpop.permute.xlu0 %212
  %214 = vrot.lane.b32.xlu0 %v15, 126
  %v215 = vpop.permute.xlu0 %214
  %216 = vrot.lane.b32.xlu0 %v16, 126
  %v217 = vpop.permute.xlu0 %216
  %218 = vrot.lane.b32.xlu0 %v17, 126
  %v219 = vpop.permute.xlu0 %218
  %vm220 = vcmask 1031168
  %v221 = vsel %vm220, %v213, %v215
  %v222 = vsel %vm220, %v217, %v219
  %v228 = vsel %vm42, %v210, 0
  %v231 = vsel %vm42, %v211, 0
  %233 = vmatprep.subr.mxu0 %v215
  %234 = vmatpush1.msra.mxu0 %v221
  %235 = vmatprep.subr.mxu0 %v219
  %236 = vmatpush1.msra.mxu0 %v222
  %237 = vmatprep.subr.mxu0 0.0
  %238 = vmatpush1.msra.mxu0 0.0
  %239 = vmatprep.subr.mxu0 0.0
  %240 = vmatpush1.msra.mxu0 0.0
  %241 = vmatprep.subr.mxu0 0.0
  %242 = vmatpush1.msra.mxu0 0.0
  %243 = vmatprep.subr.mxu0 0.0
  %244 = vmatpush1.msra.mxu0 0.0
  %245 = vmatprep.subr.mxu0 0.0
  %246 = vmatpush1.msra.mxu0 0.0
  %247 = vmatprep.subr.mxu0 0.0
  %248 = vmatpush1.msra.mxu0 0.0
  %249 = vmatprep.subr.mxu0 0.0
  %250 = vmatpush1.msra.mxu0 0.0
  %251 = vmatprep.subr.mxu0 0.0
  %252 = vmatpush1.msra.mxu0 0.0
  %253 = vmatprep.subr.mxu0 0.0
  %254 = vmatpush1.msra.mxu0 0.0
  %255 = vmatprep.subr.mxu0 0.0
  %256 = vmatpush1.msra.mxu0 0.0
  %257 = vmatprep.subr.mxu0 0.0
  %258 = vmatpush1.msra.mxu0 0.0
  %259 = vmatprep.subr.mxu0 0.0
  %260 = vmatpush1.msra.mxu0 0.0
  %261 = vmatprep.subr.mxu0 0.0
  %262 = vmatpush1.msra.mxu0 0.0
  %263 = vmatprep.subr.mxu0 0.0
  %264 = vmatpush1.msra.mxu0 0.0
  %265 = vmatprep.subr.mxu0 0.0
  %266 = vmatpush1.msra.mxu0 0.0
  %267 = vmatprep.subr.mxu0 0.0
  %268 = vmatpush1.msra.mxu0 0.0
  %269 = vmatprep.subr.mxu0 0.0
  %270 = vmatpush1.msra.mxu0 0.0
  %271 = vmatprep.subr.mxu0 0.0
  %272 = vmatpush1.msra.mxu0 0.0
  %273 = vmatprep.subr.mxu0 0.0
  %274 = vmatpush1.msra.mxu0 0.0
  %275 = vmatprep.subr.mxu0 0.0
  %276 = vmatpush1.msra.mxu0 0.0
  %277 = vmatprep.subr.mxu0 0.0
  %278 = vmatpush1.msra.mxu0 0.0
  %279 = vmatprep.subr.mxu0 0.0
  %280 = vmatpush1.msra.mxu0 0.0
  %281 = vmatprep.subr.mxu0 0.0
  %282 = vmatpush1.msra.mxu0 0.0
  %283 = vmatprep.subr.mxu0 0.0
  %284 = vmatpush1.msra.mxu0 0.0
  %285 = vmatprep.subr.mxu0 0.0
  %286 = vmatpush1.msra.mxu0 0.0
  %287 = vmatprep.subr.mxu0 0.0
  %288 = vmatpush1.msra.mxu0 0.0
  %289 = vmatprep.subr.mxu0 0.0
  %290 = vmatpush1.msra.mxu0 0.0
  %291 = vmatprep.subr.mxu0 0.0
  %292 = vmatpush1.msra.mxu0 0.0
  %293 = vmatprep.subr.mxu0 0.0
  %294 = vmatpush1.msra.mxu0 0.0
  %295 = vmatprep.subr.mxu0 0.0
  %296 = vmatpush1.msra.mxu0 0.0
  %297 = vmatprep.mubr.f32.mxu0 0.0
  %298 = vmatmul.mubr.f32.gmra.mrb[0].mxu0 %v228
  %v299 = vpop.f32.mrb[0].mxu0
  %v300 = vadd.f32 0.0, %v299
  %v301 = vpop.f32.mrb[0].mxu0
  %v302 = vadd.f32 0.0, %v301
  %303 = vmatprep.mubr.f32.mxu0 0.0
  %304 = vmatmul.mubr.f32.gmra.mrb[0].mxu0 %v231
  %v305 = vpop.f32.mrb[0].mxu0
  %v306 = vadd.f32 0.0, %v305
  %v307 = vpop.f32.mrb[0].mxu0
  %v308 = vadd.f32 0.0, %v307
  %309 = vdwg.mxu0
  %v310 = vadd.f32 %v199, %v300
  %v311 = vadd.f32 %v201, %v302
  %v312 = vadd.f32 %v205, %v306
  %v313 = vadd.f32 %v207, %v308
  %s314 = scalar_lea.vmem %s1, 48
  %v315 = vld [vmem:[%s314] sm:$0xff]
  %v316 = vld [vmem:[%s314 + $0x8] sm:$0xff]
  %317 = vrot.lane.b32.xlu0 %v14, 118
  %v318 = vpop.permute.xlu0 %317
  %319 = vrot.lane.b32.xlu0 %v15, 118
  %v320 = vpop.permute.xlu0 %319
  %321 = vrot.lane.b32.xlu0 %v16, 118
  %v322 = vpop.permute.xlu0 %321
  %323 = vrot.lane.b32.xlu0 %v17, 118
  %v324 = vpop.permute.xlu0 %323
  %vm325 = vcmask 965632
  %v326 = vsel %vm325, %v318, %v320
  %v327 = vsel %vm325, %v322, %v324
  %v333 = vsel %vm42, %v315, 0
  %v336 = vsel %vm42, %v316, 0
  %338 = vmatprep.subr.mxu0 %v320
  %339 = vmatpush1.msra.mxu0 %v326
  %340 = vmatprep.subr.mxu0 %v324
  %341 = vmatpush1.msra.mxu0 %v327
  %342 = vmatprep.subr.mxu0 0.0
  %343 = vmatpush1.msra.mxu0 0.0
  %344 = vmatprep.subr.mxu0 0.0
  %345 = vmatpush1.msra.mxu0 0.0
  %346 = vmatprep.subr.mxu0 0.0
  %347 = vmatpush1.msra.mxu0 0.0
  %348 = vmatprep.subr.mxu0 0.0
  %349 = vmatpush1.msra.mxu0 0.0
  %350 = vmatprep.subr.mxu0 0.0
  %351 = vmatpush1.msra.mxu0 0.0
  %352 = vmatprep.subr.mxu0 0.0
  %353 = vmatpush1.msra.mxu0 0.0
  %354 = vmatprep.subr.mxu0 0.0
  %355 = vmatpush1.msra.mxu0 0.0
  %356 = vmatprep.subr.mxu0 0.0
  %357 = vmatpush1.msra.mxu0 0.0
  %358 = vmatprep.subr.mxu0 0.0
  %359 = vmatpush1.msra.mxu0 0.0
  %360 = vmatprep.subr.mxu0 0.0
  %361 = vmatpush1.msra.mxu0 0.0
  %362 = vmatprep.subr.mxu0 0.0
  %363 = vmatpush1.msra.mxu0 0.0
  %364 = vmatprep.subr.mxu0 0.0
  %365 = vmatpush1.msra.mxu0 0.0
  %366 = vmatprep.subr.mxu0 0.0
  %367 = vmatpush1.msra.mxu0 0.0
  %368 = vmatprep.subr.mxu0 0.0
  %369 = vmatpush1.msra.mxu0 0.0
  %370 = vmatprep.subr.mxu0 0.0
  %371 = vmatpush1.msra.mxu0 0.0
  %372 = vmatprep.subr.mxu0 0.0
  %373 = vmatpush1.msra.mxu0 0.0
  %374 = vmatprep.subr.mxu0 0.0
  %375 = vmatpush1.msra.mxu0 0.0
  %376 = vmatprep.subr.mxu0 0.0
  %377 = vmatpush1.msra.mxu0 0.0
  %378 = vmatprep.subr.mxu0 0.0
  %379 = vmatpush1.msra.mxu0 0.0
  %380 = vmatprep.subr.mxu0 0.0
  %381 = vmatpush1.msra.mxu0 0.0
  %382 = vmatprep.subr.mxu0 0.0
  %383 = vmatpush1.msra.mxu0 0.0
  %384 = vmatprep.subr.mxu0 0.0
  %385 = vmatpush1.msra.mxu0 0.0
  %386 = vmatprep.subr.mxu0 0.0
  %387 = vmatpush1.msra.mxu0 0.0
  %388 = vmatprep.subr.mxu0 0.0
  %389 = vmatpush1.msra.mxu0 0.0
  %390 = vmatprep.subr.mxu0 0.0
  %391 = vmatpush1.msra.mxu0 0.0
  %392 = vmatprep.subr.mxu0 0.0
  %393 = vmatpush1.msra.mxu0 0.0
  %394 = vmatprep.subr.mxu0 0.0
  %395 = vmatpush1.msra.mxu0 0.0
  %396 = vmatprep.subr.mxu0 0.0
  %397 = vmatpush1.msra.mxu0 0.0
  %398 = vmatprep.subr.mxu0 0.0
  %399 = vmatpush1.msra.mxu0 0.0
  %400 = vmatprep.subr.mxu0 0.0
  %401 = vmatpush1.msra.mxu0 0.0
  %402 = vmatprep.mubr.f32.mxu0 0.0
  %403 = vmatmul.mubr.f32.gmra.mrb[0].mxu0 %v333
  %v404 = vpop.f32.mrb[0].mxu0
  %v405 = vadd.f32 0.0, %v404
  %v406 = vpop.f32.mrb[0].mxu0
  %v407 = vadd.f32 0.0, %v406
  %408 = vmatprep.mubr.f32.mxu0 0.0
  %409 = vmatmul.mubr.f32.gmra.mrb[0].mxu0 %v336
  %v410 = vpop.f32.mrb[0].mxu0
  %v411 = vadd.f32 0.0, %v410
  %v412 = vpop.f32.mrb[0].mxu0
  %v413 = vadd.f32 0.0, %v412
  %414 = vdwg.mxu0
  %v415 = vadd.f32 %v310, %v405
  %v416 = vadd.f32 %v311, %v407
  %v417 = vadd.f32 %v312, %v411
  %v418 = vadd.f32 %v313, %v413
  %s419 = scalar_lea.vmem %s1, 64
  %v420 = vld [vmem:[%s419] sm:$0xff]
  %v421 = vld [vmem:[%s419 + $0x8] sm:$0xff]
  %422 = vrot.lane.b32.xlu0 %v14, 117
  %v423 = vpop.permute.xlu0 %422
  %424 = vrot.lane.b32.xlu0 %v15, 117
  %v425 = vpop.permute.xlu0 %424
  %426 = vrot.lane.b32.xlu0 %v16, 117
  %v427 = vpop.permute.xlu0 %426
  %428 = vrot.lane.b32.xlu0 %v17, 117
  %v429 = vpop.permute.xlu0 %428
  %vm430 = vcmask 957440
  %v431 = vsel %vm430, %v423, %v425
  %v432 = vsel %vm430, %v427, %v429
  %v438 = vsel %vm42, %v420, 0
  %v441 = vsel %vm42, %v421, 0
  %443 = vmatprep.subr.mxu0 %v425
  %444 = vmatpush1.msra.mxu0 %v431
  %445 = vmatprep.subr.mxu0 %v429
  %446 = vmatpush1.msra.mxu0 %v432
  %447 = vmatprep.subr.mxu0 0.0
  %448 = vmatpush1.msra.mxu0 0.0
  %449 = vmatprep.subr.mxu0 0.0
  %450 = vmatpush1.msra.mxu0 0.0
  %451 = vmatprep.subr.mxu0 0.0
  %452 = vmatpush1.msra.mxu0 0.0
  %453 = vmatprep.subr.mxu0 0.0
  %454 = vmatpush1.msra.mxu0 0.0
  %455 = vmatprep.subr.mxu0 0.0
  %456 = vmatpush1.msra.mxu0 0.0
  %457 = vmatprep.subr.mxu0 0.0
  %458 = vmatpush1.msra.mxu0 0.0
  %459 = vmatprep.subr.mxu0 0.0
  %460 = vmatpush1.msra.mxu0 0.0
  %461 = vmatprep.subr.mxu0 0.0
  %462 = vmatpush1.msra.mxu0 0.0
  %463 = vmatprep.subr.mxu0 0.0
  %464 = vmatpush1.msra.mxu0 0.0
  %465 = vmatprep.subr.mxu0 0.0
  %466 = vmatpush1.msra.mxu0 0.0
  %467 = vmatprep.subr.mxu0 0.0
  %468 = vmatpush1.msra.mxu0 0.0
  %469 = vmatprep.subr.mxu0 0.0
  %470 = vmatpush1.msra.mxu0 0.0
  %471 = vmatprep.subr.mxu0 0.0
  %472 = vmatpush1.msra.mxu0 0.0
  %473 = vmatprep.subr.mxu0 0.0
  %474 = vmatpush1.msra.mxu0 0.0
  %475 = vmatprep.subr.mxu0 0.0
  %476 = vmatpush1.msra.mxu0 0.0
  %477 = vmatprep.subr.mxu0 0.0
  %478 = vmatpush1.msra.mxu0 0.0
  %479 = vmatprep.subr.mxu0 0.0
  %480 = vmatpush1.msra.mxu0 0.0
  %481 = vmatprep.subr.mxu0 0.0
  %482 = vmatpush1.msra.mxu0 0.0
  %483 = vmatprep.subr.mxu0 0.0
  %484 = vmatpush1.msra.mxu0 0.0
  %485 = vmatprep.subr.mxu0 0.0
  %486 = vmatpush1.msra.mxu0 0.0
  %487 = vmatprep.subr.mxu0 0.0
  %488 = vmatpush1.msra.mxu0 0.0
  %489 = vmatprep.subr.mxu0 0.0
  %490 = vmatpush1.msra.mxu0 0.0
  %491 = vmatprep.subr.mxu0 0.0
  %492 = vmatpush1.msra.mxu0 0.0
  %493 = vmatprep.subr.mxu0 0.0
  %494 = vmatpush1.msra.mxu0 0.0
  %495 = vmatprep.subr.mxu0 0.0
  %496 = vmatpush1.msra.mxu0 0.0
  %497 = vmatprep.subr.mxu0 0.0
  %498 = vmatpush1.msra.mxu0 0.0
  %499 = vmatprep.subr.mxu0 0.0
  %500 = vmatpush1.msra.mxu0 0.0
  %501 = vmatprep.subr.mxu0 0.0
  %502 = vmatpush1.msra.mxu0 0.0
  %503 = vmatprep.subr.mxu0 0.0
  %504 = vmatpush1.msra.mxu0 0.0
  %505 = vmatprep.subr.mxu0 0.0
  %506 = vmatpush1.msra.mxu0 0.0
  %507 = vmatprep.mubr.f32.mxu0 0.0
  %508 = vmatmul.mubr.f32.gmra.mrb[0].mxu0 %v438
  %v509 = vpop.f32.mrb[0].mxu0
  %v510 = vadd.f32 0.0, %v509
  %v511 = vpop.f32.mrb[0].mxu0
  %v512 = vadd.f32 0.0, %v511
  %513 = vmatprep.mubr.f32.mxu0 0.0
  %514 = vmatmul.mubr.f32.gmra.mrb[0].mxu0 %v441
  %v515 = vpop.f32.mrb[0].mxu0
  %v516 = vadd.f32 0.0, %v515
  %v517 = vpop.f32.mrb[0].mxu0
  %v518 = vadd.f32 0.0, %v517
  %519 = vdwg.mxu0
  %v520 = vadd.f32 %v415, %v510
  %v521 = vadd.f32 %v416, %v512
  %v522 = vadd.f32 %v417, %v516
  %v523 = vadd.f32 %v418, %v518
  %s524 = scalar_lea.vmem %s1, 80
  %v525 = vld [vmem:[%s524] sm:$0xff]
  %v526 = vld [vmem:[%s524 + $0x8] sm:$0xff]
  %527 = vrot.lane.b32.xlu0 %v14, 116
  %v528 = vpop.permute.xlu0 %527
  %529 = vrot.lane.b32.xlu0 %v15, 116
  %v530 = vpop.permute.xlu0 %529
  %531 = vrot.lane.b32.xlu0 %v16, 116
  %v532 = vpop.permute.xlu0 %531
  %533 = vrot.lane.b32.xlu0 %v17, 116
  %v534 = vpop.permute.xlu0 %533
  %vm535 = vcmask 949248
  %v536 = vsel %vm535, %v528, %v530
  %v537 = vsel %vm535, %v532, %v534
  %v543 = vsel %vm42, %v525, 0
  %v546 = vsel %vm42, %v526, 0
  %548 = vmatprep.subr.mxu0 %v530
  %549 = vmatpush1.msra.mxu0 %v536
  %550 = vmatprep.subr.mxu0 %v534
  %551 = vmatpush1.msra.mxu0 %v537
  %552 = vmatprep.subr.mxu0 0.0
  %553 = vmatpush1.msra.mxu0 0.0
  %554 = vmatprep.subr.mxu0 0.0
  %555 = vmatpush1.msra.mxu0 0.0
  %556 = vmatprep.subr.mxu0 0.0
  %557 = vmatpush1.msra.mxu0 0.0
  %558 = vmatprep.subr.mxu0 0.0
  %559 = vmatpush1.msra.mxu0 0.0
  %560 = vmatprep.subr.mxu0 0.0
  %561 = vmatpush1.msra.mxu0 0.0
  %562 = vmatprep.subr.mxu0 0.0
  %563 = vmatpush1.msra.mxu0 0.0
  %564 = vmatprep.subr.mxu0 0.0
  %565 = vmatpush1.msra.mxu0 0.0
  %566 = vmatprep.subr.mxu0 0.0
  %567 = vmatpush1.msra.mxu0 0.0
  %568 = vmatprep.subr.mxu0 0.0
  %569 = vmatpush1.msra.mxu0 0.0
  %570 = vmatprep.subr.mxu0 0.0
  %571 = vmatpush1.msra.mxu0 0.0
  %572 = vmatprep.subr.mxu0 0.0
  %573 = vmatpush1.msra.mxu0 0.0
  %574 = vmatprep.subr.mxu0 0.0
  %575 = vmatpush1.msra.mxu0 0.0
  %576 = vmatprep.subr.mxu0 0.0
  %577 = vmatpush1.msra.mxu0 0.0
  %578 = vmatprep.subr.mxu0 0.0
  %579 = vmatpush1.msra.mxu0 0.0
  %580 = vmatprep.subr.mxu0 0.0
  %581 = vmatpush1.msra.mxu0 0.0
  %582 = vmatprep.subr.mxu0 0.0
  %583 = vmatpush1.msra.mxu0 0.0
  %584 = vmatprep.subr.mxu0 0.0
  %585 = vmatpush1.msra.mxu0 0.0
  %586 = vmatprep.subr.mxu0 0.0
  %587 = vmatpush1.msra.mxu0 0.0
  %588 = vmatprep.subr.mxu0 0.0
  %589 = vmatpush1.msra.mxu0 0.0
  %590 = vmatprep.subr.mxu0 0.0
  %591 = vmatpush1.msra.mxu0 0.0
  %592 = vmatprep.subr.mxu0 0.0
  %593 = vmatpush1.msra.mxu0 0.0
  %594 = vmatprep.subr.mxu0 0.0
  %595 = vmatpush1.msra.mxu0 0.0
  %596 = vmatprep.subr.mxu0 0.0
  %597 = vmatpush1.msra.mxu0 0.0
  %598 = vmatprep.subr.mxu0 0.0
  %599 = vmatpush1.msra.mxu0 0.0
  %600 = vmatprep.subr.mxu0 0.0
  %601 = vmatpush1.msra.mxu0 0.0
  %602 = vmatprep.subr.mxu0 0.0
  %603 = vmatpush1.msra.mxu0 0.0
  %604 = vmatprep.subr.mxu0 0.0
  %605 = vmatpush1.msra.mxu0 0.0
  %606 = vmatprep.subr.mxu0 0.0
  %607 = vmatpush1.msra.mxu0 0.0
  %608 = vmatprep.subr.mxu0 0.0
  %609 = vmatpush1.msra.mxu0 0.0
  %610 = vmatprep.subr.mxu0 0.0
  %611 = vmatpush1.msra.mxu0 0.0
  %612 = vmatprep.mubr.f32.mxu0 0.0
  %613 = vmatmul.mubr.f32.gmra.mrb[0].mxu0 %v543
  %v614 = vpop.f32.mrb[0].mxu0
  %v615 = vadd.f32 0.0, %v614
  %v616 = vpop.f32.mrb[0].mxu0
  %v617 = vadd.f32 0.0, %v616
  %618 = vmatprep.mubr.f32.mxu0 0.0
  %619 = vmatmul.mubr.f32.gmra.mrb[0].mxu0 %v546
  %v620 = vpop.f32.mrb[0].mxu0
  %v621 = vadd.f32 0.0, %v620
  %v622 = vpop.f32.mrb[0].mxu0
  %v623 = vadd.f32 0.0, %v622
  %624 = vdwg.mxu0
  %v625 = vadd.f32 %v520, %v615
  %v626 = vadd.f32 %v521, %v617
  %v627 = vadd.f32 %v522, %v621
  %v628 = vadd.f32 %v523, %v623
  %s629 = scalar_lea.vmem %s1, 96
  %v630 = vld [vmem:[%s629] sm:$0xff]
  %v631 = vld [vmem:[%s629 + $0x8] sm:$0xff]
  %632 = vrot.lane.b32.xlu0 %v14, 108
  %v633 = vpop.permute.xlu0 %632
  %634 = vrot.lane.b32.xlu0 %v15, 108
  %v635 = vpop.permute.xlu0 %634
  %636 = vrot.lane.b32.xlu0 %v16, 108
  %v637 = vpop.permute.xlu0 %636
  %638 = vrot.lane.b32.xlu0 %v17, 108
  %v639 = vpop.permute.xlu0 %638
  %vm640 = vcmask 883712
  %v641 = vsel %vm640, %v633, %v635
  %v642 = vsel %vm640, %v637, %v639
  %v648 = vsel %vm42, %v630, 0
  %v651 = vsel %vm42, %v631, 0
  %653 = vmatprep.subr.mxu0 %v635
  %654 = vmatpush1.msra.mxu0 %v641
  %655 = vmatprep.subr.mxu0 %v639
  %656 = vmatpush1.msra.mxu0 %v642
  %657 = vmatprep.subr.mxu0 0.0
  %658 = vmatpush1.msra.mxu0 0.0
  %659 = vmatprep.subr.mxu0 0.0
  %660 = vmatpush1.msra.mxu0 0.0
  %661 = vmatprep.subr.mxu0 0.0
  %662 = vmatpush1.msra.mxu0 0.0
  %663 = vmatprep.subr.mxu0 0.0
  %664 = vmatpush1.msra.mxu0 0.0
  %665 = vmatprep.subr.mxu0 0.0
  %666 = vmatpush1.msra.mxu0 0.0
  %667 = vmatprep.subr.mxu0 0.0
  %668 = vmatpush1.msra.mxu0 0.0
  %669 = vmatprep.subr.mxu0 0.0
  %670 = vmatpush1.msra.mxu0 0.0
  %671 = vmatprep.subr.mxu0 0.0
  %672 = vmatpush1.msra.mxu0 0.0
  %673 = vmatprep.subr.mxu0 0.0
  %674 = vmatpush1.msra.mxu0 0.0
  %675 = vmatprep.subr.mxu0 0.0
  %676 = vmatpush1.msra.mxu0 0.0
  %677 = vmatprep.subr.mxu0 0.0
  %678 = vmatpush1.msra.mxu0 0.0
  %679 = vmatprep.subr.mxu0 0.0
  %680 = vmatpush1.msra.mxu0 0.0
  %681 = vmatprep.subr.mxu0 0.0
  %682 = vmatpush1.msra.mxu0 0.0
  %683 = vmatprep.subr.mxu0 0.0
  %684 = vmatpush1.msra.mxu0 0.0
  %685 = vmatprep.subr.mxu0 0.0
  %686 = vmatpush1.msra.mxu0 0.0
  %687 = vmatprep.subr.mxu0 0.0
  %688 = vmatpush1.msra.mxu0 0.0
  %689 = vmatprep.subr.mxu0 0.0
  %690 = vmatpush1.msra.mxu0 0.0
  %691 = vmatprep.subr.mxu0 0.0
  %692 = vmatpush1.msra.mxu0 0.0
  %693 = vmatprep.subr.mxu0 0.0
  %694 = vmatpush1.msra.mxu0 0.0
  %695 = vmatprep.subr.mxu0 0.0
  %696 = vmatpush1.msra.mxu0 0.0
  %697 = vmatprep.subr.mxu0 0.0
  %698 = vmatpush1.msra.mxu0 0.0
  %699 = vmatprep.subr.mxu0 0.0
  %700 = vmatpush1.msra.mxu0 0.0
  %701 = vmatprep.subr.mxu0 0.0
  %702 = vmatpush1.msra.mxu0 0.0
  %703 = vmatprep.subr.mxu0 0.0
  %704 = vmatpush1.msra.mxu0 0.0
  %705 = vmatprep.subr.mxu0 0.0
  %706 = vmatpush1.msra.mxu0 0.0
  %707 = vmatprep.subr.mxu0 0.0
  %708 = vmatpush1.msra.mxu0 0.0
  %709 = vmatprep.subr.mxu0 0.0
  %710 = vmatpush1.msra.mxu0 0.0
  %711 = vmatprep.subr.mxu0 0.0
  %712 = vmatpush1.msra.mxu0 0.0
  %713 = vmatprep.subr.mxu0 0.0
  %714 = vmatpush1.msra.mxu0 0.0
  %715 = vmatprep.subr.mxu0 0.0
  %716 = vmatpush1.msra.mxu0 0.0
  %717 = vmatprep.mubr.f32.mxu0 0.0
  %718 = vmatmul.mubr.f32.gmra.mrb[0].mxu0 %v648
  %v719 = vpop.f32.mrb[0].mxu0
  %v720 = vadd.f32 0.0, %v719
  %v721 = vpop.f32.mrb[0].mxu0
  %v722 = vadd.f32 0.0, %v721
  %723 = vmatprep.mubr.f32.mxu0 0.0
  %724 = vmatmul.mubr.f32.gmra.mrb[0].mxu0 %v651
  %v725 = vpop.f32.mrb[0].mxu0
  %v726 = vadd.f32 0.0, %v725
  %v727 = vpop.f32.mrb[0].mxu0
  %v728 = vadd.f32 0.0, %v727
  %729 = vdwg.mxu0
  %v730 = vadd.f32 %v625, %v720
  %v731 = vadd.f32 %v626, %v722
  %v732 = vadd.f32 %v627, %v726
  %v733 = vadd.f32 %v628, %v728
  %s734 = scalar_lea.vmem %s1, 112
  %v735 = vld [vmem:[%s734] sm:$0xff]
  %v736 = vld [vmem:[%s734 + $0x8] sm:$0xff]
  %737 = vrot.lane.b32.xlu0 %v14, 107
  %v738 = vpop.permute.xlu0 %737
  %739 = vrot.lane.b32.xlu0 %v15, 107
  %v740 = vpop.permute.xlu0 %739
  %741 = vrot.lane.b32.xlu0 %v16, 107
  %v742 = vpop.permute.xlu0 %741
  %743 = vrot.lane.b32.xlu0 %v17, 107
  %v744 = vpop.permute.xlu0 %743
  %vm745 = vcmask 875520
  %v746 = vsel %vm745, %v738, %v740
  %v747 = vsel %vm745, %v742, %v744
  %v753 = vsel %vm42, %v735, 0
  %v756 = vsel %vm42, %v736, 0
  %758 = vmatprep.subr.mxu0 %v740
  %759 = vmatpush1.msra.mxu0 %v746
  %760 = vmatprep.subr.mxu0 %v744
  %761 = vmatpush1.msra.mxu0 %v747
  %762 = vmatprep.subr.mxu0 0.0
  %763 = vmatpush1.msra.mxu0 0.0
  %764 = vmatprep.subr.mxu0 0.0
  %765 = vmatpush1.msra.mxu0 0.0
  %766 = vmatprep.subr.mxu0 0.0
  %767 = vmatpush1.msra.mxu0 0.0
  %768 = vmatprep.subr.mxu0 0.0
  %769 = vmatpush1.msra.mxu0 0.0
  %770 = vmatprep.subr.mxu0 0.0
  %771 = vmatpush1.msra.mxu0 0.0
  %772 = vmatprep.subr.mxu0 0.0
  %773 = vmatpush1.msra.mxu0 0.0
  %774 = vmatprep.subr.mxu0 0.0
  %775 = vmatpush1.msra.mxu0 0.0
  %776 = vmatprep.subr.mxu0 0.0
  %777 = vmatpush1.msra.mxu0 0.0
  %778 = vmatprep.subr.mxu0 0.0
  %779 = vmatpush1.msra.mxu0 0.0
  %780 = vmatprep.subr.mxu0 0.0
  %781 = vmatpush1.msra.mxu0 0.0
  %782 = vmatprep.subr.mxu0 0.0
  %783 = vmatpush1.msra.mxu0 0.0
  %784 = vmatprep.subr.mxu0 0.0
  %785 = vmatpush1.msra.mxu0 0.0
  %786 = vmatprep.subr.mxu0 0.0
  %787 = vmatpush1.msra.mxu0 0.0
  %788 = vmatprep.subr.mxu0 0.0
  %789 = vmatpush1.msra.mxu0 0.0
  %790 = vmatprep.subr.mxu0 0.0
  %791 = vmatpush1.msra.mxu0 0.0
  %792 = vmatprep.subr.mxu0 0.0
  %793 = vmatpush1.msra.mxu0 0.0
  %794 = vmatprep.subr.mxu0 0.0
  %795 = vmatpush1.msra.mxu0 0.0
  %796 = vmatprep.subr.mxu0 0.0
  %797 = vmatpush1.msra.mxu0 0.0
  %798 = vmatprep.subr.mxu0 0.0
  %799 = vmatpush1.msra.mxu0 0.0
  %800 = vmatprep.subr.mxu0 0.0
  %801 = vmatpush1.msra.mxu0 0.0
  %802 = vmatprep.subr.mxu0 0.0
  %803 = vmatpush1.msra.mxu0 0.0
  %804 = vmatprep.subr.mxu0 0.0
  %805 = vmatpush1.msra.mxu0 0.0
  %806 = vmatprep.subr.mxu0 0.0
  %807 = vmatpush1.msra.mxu0 0.0
  %808 = vmatprep.subr.mxu0 0.0
  %809 = vmatpush1.msra.mxu0 0.0
  %810 = vmatprep.subr.mxu0 0.0
  %811 = vmatpush1.msra.mxu0 0.0
  %812 = vmatprep.subr.mxu0 0.0
  %813 = vmatpush1.msra.mxu0 0.0
  %814 = vmatprep.subr.mxu0 0.0
  %815 = vmatpush1.msra.mxu0 0.0
  %816 = vmatprep.subr.mxu0 0.0
  %817 = vmatpush1.msra.mxu0 0.0
  %818 = vmatprep.subr.mxu0 0.0
  %819 = vmatpush1.msra.mxu0 0.0
  %820 = vmatprep.subr.mxu0 0.0
  %821 = vmatpush1.msra.mxu0 0.0
  %822 = vmatprep.mubr.f32.mxu0 0.0
  %823 = vmatmul.mubr.f32.gmra.mrb[0].mxu0 %v753
  %v824 = vpop.f32.mrb[0].mxu0
  %v825 = vadd.f32 0.0, %v824
  %v826 = vpop.f32.mrb[0].mxu0
  %v827 = vadd.f32 0.0, %v826
  %828 = vmatprep.mubr.f32.mxu0 0.0
  %829 = vmatmul.mubr.f32.gmra.mrb[0].mxu0 %v756
  %v830 = vpop.f32.mrb[0].mxu0
  %v831 = vadd.f32 0.0, %v830
  %v832 = vpop.f32.mrb[0].mxu0
  %v833 = vadd.f32 0.0, %v832
  %834 = vdwg.mxu0
  %v835 = vadd.f32 %v730, %v825
  %v836 = vadd.f32 %v731, %v827
  %v837 = vadd.f32 %v732, %v831
  %v838 = vadd.f32 %v733, %v833
  %s839 = scalar_lea.vmem %s1, 128
  %v840 = vld [vmem:[%s839] sm:$0xff]
  %v841 = vld [vmem:[%s839 + $0x8] sm:$0xff]
  %842 = vrot.lane.b32.xlu0 %v14, 106
  %v843 = vpop.permute.xlu0 %842
  %844 = vrot.lane.b32.xlu0 %v15, 106
  %v845 = vpop.permute.xlu0 %844
  %846 = vrot.lane.b32.xlu0 %v16, 106
  %v847 = vpop.permute.xlu0 %846
  %848 = vrot.lane.b32.xlu0 %v17, 106
  %v849 = vpop.permute.xlu0 %848
  %vm850 = vcmask 867328
  %v851 = vsel %vm850, %v843, %v845
  %v852 = vsel %vm850, %v847, %v849
  %v858 = vsel %vm42, %v840, 0
  %v861 = vsel %vm42, %v841, 0
  %863 = vmatprep.subr.mxu0 %v845
  %864 = vmatpush1.msra.mxu0 %v851
  %865 = vmatprep.subr.mxu0 %v849
  %866 = vmatpush1.msra.mxu0 %v852
  %867 = vmatprep.subr.mxu0 0.0
  %868 = vmatpush1.msra.mxu0 0.0
  %869 = vmatprep.subr.mxu0 0.0
  %870 = vmatpush1.msra.mxu0 0.0
  %871 = vmatprep.subr.mxu0 0.0
  %872 = vmatpush1.msra.mxu0 0.0
  %873 = vmatprep.subr.mxu0 0.0
  %874 = vmatpush1.msra.mxu0 0.0
  %875 = vmatprep.subr.mxu0 0.0
  %876 = vmatpush1.msra.mxu0 0.0
  %877 = vmatprep.subr.mxu0 0.0
  %878 = vmatpush1.msra.mxu0 0.0
  %879 = vmatprep.subr.mxu0 0.0
  %880 = vmatpush1.msra.mxu0 0.0
  %881 = vmatprep.subr.mxu0 0.0
  %882 = vmatpush1.msra.mxu0 0.0
  %883 = vmatprep.subr.mxu0 0.0
  %884 = vmatpush1.msra.mxu0 0.0
  %885 = vmatprep.subr.mxu0 0.0
  %886 = vmatpush1.msra.mxu0 0.0
  %887 = vmatprep.subr.mxu0 0.0
  %888 = vmatpush1.msra.mxu0 0.0
  %889 = vmatprep.subr.mxu0 0.0
  %890 = vmatpush1.msra.mxu0 0.0
  %891 = vmatprep.subr.mxu0 0.0
  %892 = vmatpush1.msra.mxu0 0.0
  %893 = vmatprep.subr.mxu0 0.0
  %894 = vmatpush1.msra.mxu0 0.0
  %895 = vmatprep.subr.mxu0 0.0
  %896 = vmatpush1.msra.mxu0 0.0
  %897 = vmatprep.subr.mxu0 0.0
  %898 = vmatpush1.msra.mxu0 0.0
  %899 = vmatprep.subr.mxu0 0.0
  %900 = vmatpush1.msra.mxu0 0.0
  %901 = vmatprep.subr.mxu0 0.0
  %902 = vmatpush1.msra.mxu0 0.0
  %903 = vmatprep.subr.mxu0 0.0
  %904 = vmatpush1.msra.mxu0 0.0
  %905 = vmatprep.subr.mxu0 0.0
  %906 = vmatpush1.msra.mxu0 0.0
  %907 = vmatprep.subr.mxu0 0.0
  %908 = vmatpush1.msra.mxu0 0.0
  %909 = vmatprep.subr.mxu0 0.0
  %910 = vmatpush1.msra.mxu0 0.0
  %911 = vmatprep.subr.mxu0 0.0
  %912 = vmatpush1.msra.mxu0 0.0
  %913 = vmatprep.subr.mxu0 0.0
  %914 = vmatpush1.msra.mxu0 0.0
  %915 = vmatprep.subr.mxu0 0.0
  %916 = vmatpush1.msra.mxu0 0.0
  %917 = vmatprep.subr.mxu0 0.0
  %918 = vmatpush1.msra.mxu0 0.0
  %919 = vmatprep.subr.mxu0 0.0
  %920 = vmatpush1.msra.mxu0 0.0
  %921 = vmatprep.subr.mxu0 0.0
  %922 = vmatpush1.msra.mxu0 0.0
  %923 = vmatprep.subr.mxu0 0.0
  %924 = vmatpush1.msra.mxu0 0.0
  %925 = vmatprep.subr.mxu0 0.0
  %926 = vmatpush1.msra.mxu0 0.0
  %927 = vmatprep.mubr.f32.mxu0 0.0
  %928 = vmatmul.mubr.f32.gmra.mrb[0].mxu0 %v858
  %v929 = vpop.f32.mrb[0].mxu0
  %v930 = vadd.f32 0.0, %v929
  %v931 = vpop.f32.mrb[0].mxu0
  %v932 = vadd.f32 0.0, %v931
  %933 = vmatprep.mubr.f32.mxu0 0.0
  %934 = vmatmul.mubr.f32.gmra.mrb[0].mxu0 %v861
  %v935 = vpop.f32.mrb[0].mxu0
  %v936 = vadd.f32 0.0, %v935
  %v937 = vpop.f32.mrb[0].mxu0
  %v938 = vadd.f32 0.0, %v937
  %939 = vdwg.mxu0
  %v940 = vadd.f32 %v835, %v930
  %v941 = vadd.f32 %v836, %v932
  %v942 = vadd.f32 %v837, %v936
  %v943 = vadd.f32 %v838, %v938
  %v944 = vld [vmem:[%s2] sm:$0xff]
  %v945 = vld [vmem:[%s2 + $0x8] sm:$0xff]
  %947 = vset.pattern.permute.xlu0 0
  %948 = vperm.xlu0 %947, %v944
  %v949 = vpop.permute.xlu0 %948
  %952 = vset.pattern.permute.xlu0 0
  %953 = vperm.xlu0 %952, %v945
  %v954 = vpop.permute.xlu0 %953
  %v956 = vadd.f32 %v940, %v949
  %v957 = vadd.f32 %v941, %v949
  %v958 = vadd.f32 %v942, %v954
  %v959 = vadd.f32 %v943, %v954
  %960 = vst [vmem:[%s3] sm:$0xff] %v956
  %vm961 = vcmask 588800
  %962 = vst.msk [vmem:[%s3 + $0x8] sm:$0xff] %vm961, %v957
  %963 = vst [vmem:[%s3 + $0x10] sm:$0xff] %v958
  %964 = vst.msk [vmem:[%s3 + $0x18] sm:$0xff] %vm961, %v959
  // Predicated region
  $region14: #{uperhead_forward.22} parent=0 // pred_check
    _
  $region15: #{uperhead_forward.22} parent=0 // pred_check_branch
    %966 = sbr.rel (0) target = $region17
  $region16: #{uperhead_forward.22} parent=0 // pred_region
    _
  $region17: #{uperhead_forward.22} parent=0 // pred_fallthru
    _
  // Predicated region
  $region18: #{uperhead_forward.22} parent=0 // pred_check
    _
  $region19: #{uperhead_forward.22} parent=0 // pred_check_branch
    %968 = sbr.rel (0) target = $region21
  $region20: #{uperhead_forward.22} parent=0 // pred_region
    _
  $region21: #{uperhead_forward.22} parent=0 // pred_fallthru
    _

// kernel: uperhead_forward.14
$region0: #{uperhead_forward.14}
  #allocation0 [shape = 'u32[]', space=smem, size = 0x4, offset = 0x4, fixed_abs, tag = 'smem constant byte address 0x4 - core index']
  #allocation1 [shape = 'u32[144,128]{1,0:T(1,128)}', space=vmem, size = 0x12000, scoped, tag = 'internal scratch']
  %s0 = inlined_call_operand.vmem [shape: f32[16,8], index: 0, kind: input, shape index: {}]
  %s1 = inlined_call_operand.vmem [shape: f32[8,512], index: 1, kind: input, shape index: {}]
  %s2 = inlined_call_operand.vmem [shape: f32[16,1], index: 2, kind: input, shape index: {}]
  %s3 = inlined_call_operand.vmem [shape: f32[16,512], index: 3, kind: output, shape index: {}]
  %s4 = sld [smem:[#allocation0]]
  $region22: #{uperhead_forward.14} parent=0
    _
  %s6 = ssub.s32 1, %s4
  %s7 = scalar_select 0, %s6, %s4
  // Predicated region
  $region2: #{uperhead_forward.14} parent=0 // pred_check
    _
  $region3: #{uperhead_forward.14} parent=0 // pred_check_branch
    %9 = sbr.rel (0) target = $region5
  $region4: #{uperhead_forward.14} parent=0 // pred_region
    _
  $region5: #{uperhead_forward.14} parent=0 // pred_fallthru
    _
  // Predicated region
  $region6: #{uperhead_forward.14} parent=0 // pred_check
    _
  $region7: #{uperhead_forward.14} parent=0 // pred_check_branch
    %11 = sbr.rel (0) target = $region9
  $region8: #{uperhead_forward.14} parent=0 // pred_region
    _
  $region9: #{uperhead_forward.14} parent=0 // pred_fallthru
    _
  // Predicated region
  $region10: #{uperhead_forward.14} parent=0 // pred_check
    _
  $region11: #{uperhead_forward.14} parent=0 // pred_check_branch
    %13 = sbr.rel (0) target = $region13
  $region12: #{uperhead_forward.14} parent=0 // pred_region
    _
  $region13: #{uperhead_forward.14} parent=0 // pred_fallthru
    _
  %v14 = vld [vmem:[%s0] sm:$0xff]
  %v15 = vld [vmem:[%s0 + $0x8] sm:$0xff]
  %v16 = vld [vmem:[%s1] sm:$0xff]
  %v17 = vld [vmem:[%s1 + $0x8] sm:$0xff]
  %v18 = vld [vmem:[%s1 + $0x10] sm:$0xff]
  %v19 = vld [vmem:[%s1 + $0x18] sm:$0xff]
  %v20 = vld [vmem:[%s2] sm:$0xff]
  %v21 = vld [vmem:[%s2 + $0x8] sm:$0xff]
  %23 = vset.pattern.permute.xlu0 0
  %24 = vperm.xlu0 %23, %v20
  %v25 = vpop.permute.xlu0 %24
  %28 = vset.pattern.permute.xlu0 0
  %29 = vperm.xlu0 %28, %v21
  %v30 = vpop.permute.xlu0 %29
  %vm32 = vcmask 64512
  %v34 = vsel %vm32, %v14, 0
  %v37 = vsel %vm32, %v15, 0
  %39 = vmatprep.subr.mxu0 %v17
  %40 = vmatpush1.msra.mxu0 %v16
  %41 = vmatprep.subr.mxu0 0.0
  %42 = vmatpush1.msra.mxu0 0.0
  %43 = vmatprep.subr.mxu0 0.0
  %44 = vmatpush1.msra.mxu0 0.0
  %45 = vmatprep.subr.mxu0 0.0
  %46 = vmatpush1.msra.mxu0 0.0
  %47 = vmatprep.subr.mxu0 0.0
  %48 = vmatpush1.msra.mxu0 0.0
  %49 = vmatprep.subr.mxu0 0.0
  %50 = vmatpush1.msra.mxu0 0.0
  %51 = vmatprep.subr.mxu0 0.0
  %52 = vmatpush1.msra.mxu0 0.0
  %53 = vmatprep.subr.mxu0 0.0
  %54 = vmatpush1.msra.mxu0 0.0
  %55 = vmatprep.subr.mxu0 0.0
  %56 = vmatpush1.msra.mxu0 0.0
  %57 = vmatprep.subr.mxu0 0.0
  %58 = vmatpush1.msra.mxu0 0.0
  %59 = vmatprep.subr.mxu0 0.0
  %60 = vmatpush1.msra.mxu0 0.0
  %61 = vmatprep.subr.mxu0 0.0
  %62 = vmatpush1.msra.mxu0 0.0
  %63 = vmatprep.subr.mxu0 0.0
  %64 = vmatpush1.msra.mxu0 0.0
  %65 = vmatprep.subr.mxu0 0.0
  %66 = vmatpush1.msra.mxu0 0.0
  %67 = vmatprep.subr.mxu0 0.0
  %68 = vmatpush1.msra.mxu0 0.0
  %69 = vmatprep.subr.mxu0 0.0
  %70 = vmatpush1.msra.mxu0 0.0
  %71 = vmatprep.subr.mxu0 0.0
  %72 = vmatpush1.msra.mxu0 0.0
  %73 = vmatprep.subr.mxu0 0.0
  %74 = vmatpush1.msra.mxu0 0.0
  %75 = vmatprep.subr.mxu0 0.0
  %76 = vmatpush1.msra.mxu0 0.0
  %77 = vmatprep.subr.mxu0 0.0
  %78 = vmatpush1.msra.mxu0 0.0
  %79 = vmatprep.subr.mxu0 0.0
  %80 = vmatpush1.msra.mxu0 0.0
  %81 = vmatprep.subr.mxu0 0.0
  %82 = vmatpush1.msra.mxu0 0.0
  %83 = vmatprep.subr.mxu0 0.0
  %84 = vmatpush1.msra.mxu0 0.0
  %85 = vmatprep.subr.mxu0 0.0
  %86 = vmatpush1.msra.mxu0 0.0
  %87 = vmatprep.subr.mxu0 0.0
  %88 = vmatpush1.msra.mxu0 0.0
  %89 = vmatprep.subr.mxu0 0.0
  %90 = vmatpush1.msra.mxu0 0.0
  %91 = vmatprep.subr.mxu0 0.0
  %92 = vmatpush1.msra.mxu0 0.0
  %93 = vmatprep.subr.mxu0 0.0
  %94 = vmatpush1.msra.mxu0 0.0
  %95 = vmatprep.subr.mxu0 0.0
  %96 = vmatpush1.msra.mxu0 0.0
  %97 = vmatprep.subr.mxu0 0.0
  %98 = vmatpush1.msra.mxu0 0.0
  %99 = vmatprep.subr.mxu0 0.0
  %100 = vmatpush1.msra.mxu0 0.0
  %101 = vmatprep.subr.mxu0 0.0
  %102 = vmatpush1.msra.mxu0 0.0
  %103 = vmatprep.mubr.f32.mxu0 0.0
  %104 = vmatmul.mubr.f32.gmra.mrb[0].mxu0 %v34
  %v105 = vpop.f32.mrb[0].mxu0
  %v106 = vadd.f32 %v25, %v105
  %v107 = vpop.f32.mrb[0].mxu0
  %v108 = vadd.f32 %v25, %v107
  %109 = vmatprep.mubr.f32.mxu0 0.0
  %110 = vmatmul.mubr.f32.gmra.mrb[0].mxu0 %v37
  %v111 = vpop.f32.mrb[0].mxu0
  %v112 = vadd.f32 %v30, %v111
  %v113 = vpop.f32.mrb[0].mxu0
  %v114 = vadd.f32 %v30, %v113
  %115 = vdwg.mxu0
  %116 = vmatprep.subr.mxu0 %v19
  %117 = vmatpush1.msra.mxu0 %v18
  %118 = vmatprep.subr.mxu0 0.0
  %119 = vmatpush1.msra.mxu0 0.0
  %120 = vmatprep.subr.mxu0 0.0
  %121 = vmatpush1.msra.mxu0 0.0
  %122 = vmatprep.subr.mxu0 0.0
  %123 = vmatpush1.msra.mxu0 0.0
  %124 = vmatprep.subr.mxu0 0.0
  %125 = vmatpush1.msra.mxu0 0.0
  %126 = vmatprep.subr.mxu0 0.0
  %127 = vmatpush1.msra.mxu0 0.0
  %128 = vmatprep.subr.mxu0 0.0
  %129 = vmatpush1.msra.mxu0 0.0
  %130 = vmatprep.subr.mxu0 0.0
  %131 = vmatpush1.msra.mxu0 0.0
  %132 = vmatprep.subr.mxu0 0.0
  %133 = vmatpush1.msra.mxu0 0.0
  %134 = vmatprep.subr.mxu0 0.0
  %135 = vmatpush1.msra.mxu0 0.0
  %136 = vmatprep.subr.mxu0 0.0
  %137 = vmatpush1.msra.mxu0 0.0
  %138 = vmatprep.subr.mxu0 0.0
  %139 = vmatpush1.msra.mxu0 0.0
  %140 = vmatprep.subr.mxu0 0.0
  %141 = vmatpush1.msra.mxu0 0.0
  %142 = vmatprep.subr.mxu0 0.0
  %143 = vmatpush1.msra.mxu0 0.0
  %144 = vmatprep.subr.mxu0 0.0
  %145 = vmatpush1.msra.mxu0 0.0
  %146 = vmatprep.subr.mxu0 0.0
  %147 = vmatpush1.msra.mxu0 0.0
  %148 = vmatprep.subr.mxu0 0.0
  %149 = vmatpush1.msra.mxu0 0.0
  %150 = vmatprep.subr.mxu0 0.0
  %151 = vmatpush1.msra.mxu0 0.0
  %152 = vmatprep.subr.mxu0 0.0
  %153 = vmatpush1.msra.mxu0 0.0
  %154 = vmatprep.subr.mxu0 0.0
  %155 = vmatpush1.msra.mxu0 0.0
  %156 = vmatprep.subr.mxu0 0.0
  %157 = vmatpush1.msra.mxu0 0.0
  %158 = vmatprep.subr.mxu0 0.0
  %159 = vmatpush1.msra.mxu0 0.0
  %160 = vmatprep.subr.mxu0 0.0
  %161 = vmatpush1.msra.mxu0 0.0
  %162 = vmatprep.subr.mxu0 0.0
  %163 = vmatpush1.msra.mxu0 0.0
  %164 = vmatprep.subr.mxu0 0.0
  %165 = vmatpush1.msra.mxu0 0.0
  %166 = vmatprep.subr.mxu0 0.0
  %167 = vmatpush1.msra.mxu0 0.0
  %168 = vmatprep.subr.mxu0 0.0
  %169 = vmatpush1.msra.mxu0 0.0
  %170 = vmatprep.subr.mxu0 0.0
  %171 = vmatpush1.msra.mxu0 0.0
  %172 = vmatprep.subr.mxu0 0.0
  %173 = vmatpush1.msra.mxu0 0.0
  %174 = vmatprep.subr.mxu0 0.0
  %175 = vmatpush1.msra.mxu0 0.0
  %176 = vmatprep.subr.mxu0 0.0
  %177 = vmatpush1.msra.mxu0 0.0
  %178 = vmatprep.subr.mxu0 0.0
  %179 = vmatpush1.msra.mxu0 0.0
  %180 = vmatprep.mubr.f32.mxu0 0.0
  %181 = vmatmul.mubr.f32.gmra.mrb[0].mxu0 %v34
  %v182 = vpop.f32.mrb[0].mxu0
  %v183 = vadd.f32 %v25, %v182
  %v184 = vpop.f32.mrb[0].mxu0
  %v185 = vadd.f32 %v25, %v184
  %186 = vmatprep.mubr.f32.mxu0 0.0
  %187 = vmatmul.mubr.f32.gmra.mrb[0].mxu0 %v37
  %v188 = vpop.f32.mrb[0].mxu0
  %v189 = vadd.f32 %v30, %v188
  %v190 = vpop.f32.mrb[0].mxu0
  %v191 = vadd.f32 %v30, %v190
  %192 = vdwg.mxu0
  %193 = vst [vmem:[%s3] sm:$0xff] %v106
  %194 = vst [vmem:[%s3 + $0x8] sm:$0xff] %v108
  %195 = vst [vmem:[%s3 + $0x10] sm:$0xff] %v183
  %196 = vst [vmem:[%s3 + $0x18] sm:$0xff] %v185
  %197 = vst [vmem:[%s3 + $0x20] sm:$0xff] %v112
  %198 = vst [vmem:[%s3 + $0x28] sm:$0xff] %v114
  %199 = vst [vmem:[%s3 + $0x30] sm:$0xff] %v189
  %200 = vst [vmem:[%s3 + $0x38] sm:$0xff] %v191
  // Predicated region
  $region14: #{uperhead_forward.14} parent=0 // pred_check
    _
  $region15: #{uperhead_forward.14} parent=0 // pred_check_branch
    %202 = sbr.rel (0) target = $region17
  $region16: #{uperhead_forward.14} parent=0 // pred_region
    _
  $region17: #{uperhead_forward.14} parent=0 // pred_fallthru
    _
  // Predicated region
  $region18: #{uperhead_forward.14} parent=0 // pred_check
    _
  $region19: #{uperhead_forward.14} parent=0 // pred_check_branch
    %204 = sbr.rel (0) target = $region21
  $region20: #{uperhead_forward.14} parent=0 // pred_region
    _
  $region21: #{uperhead_forward.14} parent=0 // pred_fallthru
    _

// kernel: uperhead_forward.20
$region0: #{uperhead_forward.20}
  #allocation0 [shape = 'u32[]', space=smem, size = 0x4, offset = 0x4, fixed_abs, tag = 'smem constant byte address 0x4 - core index']
  #allocation1 [shape = 'u32[144,128]{1,0:T(1,128)}', space=vmem, size = 0x12000, scoped, tag = 'internal scratch']
  %s0 = inlined_call_operand.vmem [shape: f32[16,128], index: 0, kind: input, shape index: {}]
  %s1 = inlined_call_operand.vmem [shape: f32[128,512], index: 1, kind: input, shape index: {}]
  %s2 = inlined_call_operand.vmem [shape: f32[16,512], index: 2, kind: input, shape index: {}]
  %s3 = inlined_call_operand.vmem [shape: f32[16,512], index: 3, kind: output, shape index: {}]
  %s4 = sld [smem:[#allocation0]]
  $region22: #{uperhead_forward.20} parent=0
    _
  %s6 = ssub.s32 1, %s4
  %s7 = scalar_select 0, %s6, %s4
  // Predicated region
  $region2: #{uperhead_forward.20} parent=0 // pred_check
    _
  $region3: #{uperhead_forward.20} parent=0 // pred_check_branch
    %9 = sbr.rel (0) target = $region5
  $region4: #{uperhead_forward.20} parent=0 // pred_region
    _
  $region5: #{uperhead_forward.20} parent=0 // pred_fallthru
    _
  // Predicated region
  $region6: #{uperhead_forward.20} parent=0 // pred_check
    _
  $region7: #{uperhead_forward.20} parent=0 // pred_check_branch
    %11 = sbr.rel (0) target = $region9
  $region8: #{uperhead_forward.20} parent=0 // pred_region
    _
  $region9: #{uperhead_forward.20} parent=0 // pred_fallthru
    _
  // Predicated region
  $region10: #{uperhead_forward.20} parent=0 // pred_check
    _
  $region11: #{uperhead_forward.20} parent=0 // pred_check_branch
    %13 = sbr.rel (0) target = $region13
  $region12: #{uperhead_forward.20} parent=0 // pred_region
    _
  $region13: #{uperhead_forward.20} parent=0 // pred_fallthru
    _
  %v14 = vld [vmem:[%s2] sm:$0xff]
  %v15 = vld [vmem:[%s2 + $0x8] sm:$0xff]
  %v16 = vld [vmem:[%s2 + $0x10] sm:$0xff]
  %v17 = vld [vmem:[%s2 + $0x18] sm:$0xff]
  %v18 = vld [vmem:[%s2 + $0x20] sm:$0xff]
  %v19 = vld [vmem:[%s2 + $0x28] sm:$0xff]
  %v20 = vld [vmem:[%s2 + $0x30] sm:$0xff]
  %v21 = vld [vmem:[%s2 + $0x38] sm:$0xff]
  %v22 = vld [vmem:[%s0] sm:$0xff]
  %v23 = vld [vmem:[%s0 + $0x8] sm:$0xff]
  %v24 = vld [vmem:[%s1] sm:$0xff]
  %v25 = vld [vmem:[%s1 + $0x8] sm:$0xff]
  %v26 = vld [vmem:[%s1 + $0x10] sm:$0xff]
  %v27 = vld [vmem:[%s1 + $0x18] sm:$0xff]
  %v28 = vld [vmem:[%s1 + $0x20] sm:$0xff]
  %v29 = vld [vmem:[%s1 + $0x28] sm:$0xff]
  %v30 = vld [vmem:[%s1 + $0x30] sm:$0xff]
  %v31 = vld [vmem:[%s1 + $0x38] sm:$0xff]
  %v32 = vld [vmem:[%s1 + $0x40] sm:$0xff]
  %v33 = vld [vmem:[%s1 + $0x48] sm:$0xff]
  %v34 = vld [vmem:[%s1 + $0x50] sm:$0xff]
  %v35 = vld [vmem:[%s1 + $0x58] sm:$0xff]
  %v36 = vld [vmem:[%s1 + $0x60] sm:$0xff]
  %v37 = vld [vmem:[%s1 + $0x68] sm:$0xff]
  %v38 = vld [vmem:[%s1 + $0x70] sm:$0xff]
  %v39 = vld [vmem:[%s1 + $0x78] sm:$0xff]
  %v40 = vld [vmem:[%s1 + $0x80] sm:$0xff]
  %v41 = vld [vmem:[%s1 + $0x88] sm:$0xff]
  %v42 = vld [vmem:[%s1 + $0x90] sm:$0xff]
  %v43 = vld [vmem:[%s1 + $0x98] sm:$0xff]
  %v44 = vld [vmem:[%s1 + $0xa0] sm:$0xff]
  %v45 = vld [vmem:[%s1 + $0xa8] sm:$0xff]
  %v46 = vld [vmem:[%s1 + $0xb0] sm:$0xff]
  %v47 = vld [vmem:[%s1 + $0xb8] sm:$0xff]
  %v48 = vld [vmem:[%s1 + $0xc0] sm:$0xff]
  %v49 = vld [vmem:[%s1 + $0xc8] sm:$0xff]
  %v50 = vld [vmem:[%s1 + $0xd0] sm:$0xff]
  %v51 = vld [vmem:[%s1 + $0xd8] sm:$0xff]
  %v52 = vld [vmem:[%s1 + $0xe0] sm:$0xff]
  %v53 = vld [vmem:[%s1 + $0xe8] sm:$0xff]
  %v54 = vld [vmem:[%s1 + $0xf0] sm:$0xff]
  %v55 = vld [vmem:[%s1 + $0xf8] sm:$0xff]
  %v56 = vld [vmem:[%s1 + $0x100] sm:$0xff]
  %v57 = vld [vmem:[%s1 + $0x108] sm:$0xff]
  %v58 = vld [vmem:[%s1 + $0x110] sm:$0xff]
  %v59 = vld [vmem:[%s1 + $0x118] sm:$0xff]
  %v60 = vld [vmem:[%s1 + $0x120] sm:$0xff]
  %v61 = vld [vmem:[%s1 + $0x128] sm:$0xff]
  %v62 = vld [vmem:[%s1 + $0x130] sm:$0xff]
  %v63 = vld [vmem:[%s1 + $0x138] sm:$0xff]
  %v64 = vld [vmem:[%s1 + $0x140] sm:$0xff]
  %v65 = vld [vmem:[%s1 + $0x148] sm:$0xff]
  %v66 = vld [vmem:[%s1 + $0x150] sm:$0xff]
  %v67 = vld [vmem:[%s1 + $0x158] sm:$0xff]
  %v68 = vld [vmem:[%s1 + $0x160] sm:$0xff]
  %v69 = vld [vmem:[%s1 + $0x168] sm:$0xff]
  %v70 = vld [vmem:[%s1 + $0x170] sm:$0xff]
  %v71 = vld [vmem:[%s1 + $0x178] sm:$0xff]
  %v72 = vld [vmem:[%s1 + $0x180] sm:$0xff]
  %v73 = vld [vmem:[%s1 + $0x188] sm:$0xff]
  %v74 = vld [vmem:[%s1 + $0x190] sm:$0xff]
  %v75 = vld [vmem:[%s1 + $0x198] sm:$0xff]
  %v76 = vld [vmem:[%s1 + $0x1a0] sm:$0xff]
  %v77 = vld [vmem:[%s1 + $0x1a8] sm:$0xff]
  %v78 = vld [vmem:[%s1 + $0x1b0] sm:$0xff]
  %v79 = vld [vmem:[%s1 + $0x1b8] sm:$0xff]
  %v80 = vld [vmem:[%s1 + $0x1c0] sm:$0xff]
  %v81 = vld [vmem:[%s1 + $0x1c8] sm:$0xff]
  %v82 = vld [vmem:[%s1 + $0x1d0] sm:$0xff]
  %v83 = vld [vmem:[%s1 + $0x1d8] sm:$0xff]
  %v84 = vld [vmem:[%s1 + $0x1e0] sm:$0xff]
  %v85 = vld [vmem:[%s1 + $0x1e8] sm:$0xff]
  %v86 = vld [vmem:[%s1 + $0x1f0] sm:$0xff]
  %v87 = vld [vmem:[%s1 + $0x1f8] sm:$0xff]
  %88 = vmatprep.subr.mxu0 %v25
  %89 = vmatpush1.msra.mxu0 %v24
  %90 = vmatprep.subr.mxu0 %v29
  %91 = vmatpush1.msra.mxu0 %v28
  %92 = vmatprep.subr.mxu0 %v33
  %93 = vmatpush1.msra.mxu0 %v32
  %94 = vmatprep.subr.mxu0 %v37
  %95 = vmatpush1.msra.mxu0 %v36
  %96 = vmatprep.subr.mxu0 %v41
  %97 = vmatpush1.msra.mxu0 %v40
  %98 = vmatprep.subr.mxu0 %v45
  %99 = vmatpush1.msra.mxu0 %v44
  %100 = vmatprep.subr.mxu0 %v49
  %101 = vmatpush1.msra.mxu0 %v48
  %102 = vmatprep.subr.mxu0 %v53
  %103 = vmatpush1.msra.mxu0 %v52
  %104 = vmatprep.subr.mxu0 %v57
  %105 = vmatpush1.msra.mxu0 %v56
  %106 = vmatprep.subr.mxu0 %v61
  %107 = vmatpush1.msra.mxu0 %v60
  %108 = vmatprep.subr.mxu0 %v65
  %109 = vmatpush1.msra.mxu0 %v64
  %110 = vmatprep.subr.mxu0 %v69
  %111 = vmatpush1.msra.mxu0 %v68
  %112 = vmatprep.subr.mxu0 %v73
  %113 = vmatpush1.msra.mxu0 %v72
  %114 = vmatprep.subr.mxu0 %v77
  %115 = vmatpush1.msra.mxu0 %v76
  %116 = vmatprep.subr.mxu0 %v81
  %117 = vmatpush1.msra.mxu0 %v80
  %118 = vmatprep.subr.mxu0 %v85
  %119 = vmatpush1.msra.mxu0 %v84
  %120 = vmatprep.subr.mxu0 0.0
  %121 = vmatpush1.msra.mxu0 0.0
  %122 = vmatprep.subr.mxu0 0.0
  %123 = vmatpush1.msra.mxu0 0.0
  %124 = vmatprep.subr.mxu0 0.0
  %125 = vmatpush1.msra.mxu0 0.0
  %126 = vmatprep.subr.mxu0 0.0
  %127 = vmatpush1.msra.mxu0 0.0
  %128 = vmatprep.subr.mxu0 0.0
  %129 = vmatpush1.msra.mxu0 0.0
  %130 = vmatprep.subr.mxu0 0.0
  %131 = vmatpush1.msra.mxu0 0.0
  %132 = vmatprep.subr.mxu0 0.0
  %133 = vmatpush1.msra.mxu0 0.0
  %134 = vmatprep.subr.mxu0 0.0
  %135 = vmatpush1.msra.mxu0 0.0
  %136 = vmatprep.subr.mxu0 0.0
  %137 = vmatpush1.msra.mxu0 0.0
  %138 = vmatprep.subr.mxu0 0.0
  %139 = vmatpush1.msra.mxu0 0.0
  %140 = vmatprep.subr.mxu0 0.0
  %141 = vmatpush1.msra.mxu0 0.0
  %142 = vmatprep.subr.mxu0 0.0
  %143 = vmatpush1.msra.mxu0 0.0
  %144 = vmatprep.subr.mxu0 0.0
  %145 = vmatpush1.msra.mxu0 0.0
  %146 = vmatprep.subr.mxu0 0.0
  %147 = vmatpush1.msra.mxu0 0.0
  %148 = vmatprep.subr.mxu0 0.0
  %149 = vmatpush1.msra.mxu0 0.0
  %150 = vmatprep.subr.mxu0 0.0
  %151 = vmatpush1.msra.mxu0 0.0
  %152 = vmatprep.mubr.f32.mxu0 0.0
  %153 = vmatmul.mubr.f32.gmra.mrb[0].mxu0 %v22
  %v154 = vpop.f32.mrb[0].mxu0
  %v155 = vadd.f32 0.0, %v154
  %v156 = vpop.f32.mrb[0].mxu0
  %v157 = vadd.f32 0.0, %v156
  %158 = vmatprep.mubr.f32.mxu0 0.0
  %159 = vmatmul.mubr.f32.gmra.mrb[0].mxu0 %v23
  %v160 = vpop.f32.mrb[0].mxu0
  %v161 = vadd.f32 0.0, %v160
  %v162 = vpop.f32.mrb[0].mxu0
  %v163 = vadd.f32 0.0, %v162
  %164 = vdwg.mxu0
  %165 = vmatprep.subr.mxu0 %v27
  %166 = vmatpush1.msra.mxu0 %v26
  %167 = vmatprep.subr.mxu0 %v31
  %168 = vmatpush1.msra.mxu0 %v30
  %169 = vmatprep.subr.mxu0 %v35
  %170 = vmatpush1.msra.mxu0 %v34
  %171 = vmatprep.subr.mxu0 %v39
  %172 = vmatpush1.msra.mxu0 %v38
  %173 = vmatprep.subr.mxu0 %v43
  %174 = vmatpush1.msra.mxu0 %v42
  %175 = vmatprep.subr.mxu0 %v47
  %176 = vmatpush1.msra.mxu0 %v46
  %177 = vmatprep.subr.mxu0 %v51
  %178 = vmatpush1.msra.mxu0 %v50
  %179 = vmatprep.subr.mxu0 %v55
  %180 = vmatpush1.msra.mxu0 %v54
  %181 = vmatprep.subr.mxu0 %v59
  %182 = vmatpush1.msra.mxu0 %v58
  %183 = vmatprep.subr.mxu0 %v63
  %184 = vmatpush1.msra.mxu0 %v62
  %185 = vmatprep.subr.mxu0 %v67
  %186 = vmatpush1.msra.mxu0 %v66
  %187 = vmatprep.subr.mxu0 %v71
  %188 = vmatpush1.msra.mxu0 %v70
  %189 = vmatprep.subr.mxu0 %v75
  %190 = vmatpush1.msra.mxu0 %v74
  %191 = vmatprep.subr.mxu0 %v79
  %192 = vmatpush1.msra.mxu0 %v78
  %193 = vmatprep.subr.mxu0 %v83
  %194 = vmatpush1.msra.mxu0 %v82
  %195 = vmatprep.subr.mxu0 %v87
  %196 = vmatpush1.msra.mxu0 %v86
  %197 = vmatprep.subr.mxu0 0.0
  %198 = vmatpush1.msra.mxu0 0.0
  %199 = vmatprep.subr.mxu0 0.0
  %200 = vmatpush1.msra.mxu0 0.0
  %201 = vmatprep.subr.mxu0 0.0
  %202 = vmatpush1.msra.mxu0 0.0
  %203 = vmatprep.subr.mxu0 0.0
  %204 = vmatpush1.msra.mxu0 0.0
  %205 = vmatprep.subr.mxu0 0.0
  %206 = vmatpush1.msra.mxu0 0.0
  %207 = vmatprep.subr.mxu0 0.0
  %208 = vmatpush1.msra.mxu0 0.0
  %209 = vmatprep.subr.mxu0 0.0
  %210 = vmatpush1.msra.mxu0 0.0
  %211 = vmatprep.subr.mxu0 0.0
  %212 = vmatpush1.msra.mxu0 0.0
  %213 = vmatprep.subr.mxu0 0.0
  %214 = vmatpush1.msra.mxu0 0.0
  %215 = vmatprep.subr.mxu0 0.0
  %216 = vmatpush1.msra.mxu0 0.0
  %217 = vmatprep.subr.mxu0 0.0
  %218 = vmatpush1.msra.mxu0 0.0
  %219 = vmatprep.subr.mxu0 0.0
  %220 = vmatpush1.msra.mxu0 0.0
  %221 = vmatprep.subr.mxu0 0.0
  %222 = vmatpush1.msra.mxu0 0.0
  %223 = vmatprep.subr.mxu0 0.0
  %224 = vmatpush1.msra.mxu0 0.0
  %225 = vmatprep.subr.mxu0 0.0
  %226 = vmatpush1.msra.mxu0 0.0
  %227 = vmatprep.subr.mxu0 0.0
  %228 = vmatpush1.msra.mxu0 0.0
  %229 = vmatprep.mubr.f32.mxu0 0.0
  %230 = vmatmul.mubr.f32.gmra.mrb[0].mxu0 %v22
  %v231 = vpop.f32.mrb[0].mxu0
  %v232 = vadd.f32 0.0, %v231
  %v233 = vpop.f32.mrb[0].mxu0
  %v234 = vadd.f32 0.0, %v233
  %235 = vmatprep.mubr.f32.mxu0 0.0
  %236 = vmatmul.mubr.f32.gmra.mrb[0].mxu0 %v23
  %v237 = vpop.f32.mrb[0].mxu0
  %v238 = vadd.f32 0.0, %v237
  %v239 = vpop.f32.mrb[0].mxu0
  %v240 = vadd.f32 0.0, %v239
  %241 = vdwg.mxu0
  %v242 = vadd.f32 %v14, %v155
  %v243 = vadd.f32 %v15, %v157
  %v244 = vadd.f32 %v16, %v232
  %v245 = vadd.f32 %v17, %v234
  %v246 = vadd.f32 %v18, %v161
  %v247 = vadd.f32 %v19, %v163
  %v248 = vadd.f32 %v20, %v238
  %v249 = vadd.f32 %v21, %v240
  %250 = vst [vmem:[%s3] sm:$0xff] %v242
  %251 = vst [vmem:[%s3 + $0x8] sm:$0xff] %v243
  %252 = vst [vmem:[%s3 + $0x10] sm:$0xff] %v244
  %253 = vst [vmem:[%s3 + $0x18] sm:$0xff] %v245
  %254 = vst [vmem:[%s3 + $0x20] sm:$0xff] %v246
  %255 = vst [vmem:[%s3 + $0x28] sm:$0xff] %v247
  %256 = vst [vmem:[%s3 + $0x30] sm:$0xff] %v248
  %257 = vst [vmem:[%s3 + $0x38] sm:$0xff] %v249
  // Predicated region
  $region14: #{uperhead_forward.20} parent=0 // pred_check
    _
  $region15: #{uperhead_forward.20} parent=0 // pred_check_branch
    %259 = sbr.rel (0) target = $region17
  $region16: #{uperhead_forward.20} parent=0 // pred_region
    _
  $region17: #{uperhead_forward.20} parent=0 // pred_fallthru
    _
  // Predicated region
  $region18: #{uperhead_forward.20} parent=0 // pred_check
    _
  $region19: #{uperhead_forward.20} parent=0 // pred_check_branch
    %261 = sbr.rel (0) target = $region21
  $region20: #{uperhead_forward.20} parent=0 // pred_region
    _
  $region21: #{uperhead_forward.20} parent=0 // pred_fallthru
    _

// kernel: uperhead_forward.21
$region0: #{uperhead_forward.21}
  #allocation0 [shape = 'u32[]', space=smem, size = 0x4, offset = 0x4, fixed_abs, tag = 'smem constant byte address 0x4 - core index']
  #allocation1 [shape = 'u32[144,128]{1,0:T(1,128)}', space=vmem, size = 0x12000, scoped, tag = 'internal scratch']
  %s0 = inlined_call_operand.vmem [shape: f32[16,686], index: 0, kind: input, shape index: {}]
  %s1 = inlined_call_operand.vmem [shape: f32[9,16,16], index: 1, kind: input, shape index: {}]
  %s2 = inlined_call_operand.vmem [shape: f32[16,1], index: 2, kind: input, shape index: {}]
  %s3 = inlined_call_operand.vmem [shape: f32[16,648], index: 3, kind: output, shape index: {}]
  %s4 = sld [smem:[#allocation0]]
  $region22: #{uperhead_forward.21} parent=0
    _
  %s6 = ssub.s32 1, %s4
  %s7 = scalar_select 0, %s6, %s4
  // Predicated region
  $region2: #{uperhead_forward.21} parent=0 // pred_check
    _
  $region3: #{uperhead_forward.21} parent=0 // pred_check_branch
    %9 = sbr.rel (0) target = $region5
  $region4: #{uperhead_forward.21} parent=0 // pred_region
    _
  $region5: #{uperhead_forward.21} parent=0 // pred_fallthru
    _
  // Predicated region
  $region6: #{uperhead_forward.21} parent=0 // pred_check
    _
  $region7: #{uperhead_forward.21} parent=0 // pred_check_branch
    %11 = sbr.rel (0) target = $region9
  $region8: #{uperhead_forward.21} parent=0 // pred_region
    _
  $region9: #{uperhead_forward.21} parent=0 // pred_fallthru
    _
  // Predicated region
  $region10: #{uperhead_forward.21} parent=0 // pred_check
    _
  $region11: #{uperhead_forward.21} parent=0 // pred_check_branch
    %13 = sbr.rel (0) target = $region13
  $region12: #{uperhead_forward.21} parent=0 // pred_region
    _
  $region13: #{uperhead_forward.21} parent=0 // pred_fallthru
    _
  %v14 = vld [vmem:[%s0] sm:$0xff]
  %v15 = vld [vmem:[%s0 + $0x8] sm:$0xff]
  %v16 = vld [vmem:[%s0 + $0x10] sm:$0xff]
  %v17 = vld [vmem:[%s0 + $0x18] sm:$0xff]
  %v18 = vld [vmem:[%s0 + $0x20] sm:$0xff]
  %v19 = vld [vmem:[%s0 + $0x28] sm:$0xff]
  %v20 = vld [vmem:[%s0 + $0x30] sm:$0xff]
  %v21 = vld [vmem:[%s0 + $0x38] sm:$0xff]
  %v22 = vld [vmem:[%s0 + $0x40] sm:$0xff]
  %v23 = vld [vmem:[%s0 + $0x48] sm:$0xff]
  %v24 = vld [vmem:[%s0 + $0x50] sm:$0xff]
  %v25 = vld [vmem:[%s0 + $0x58] sm:$0xff]
  %v26 = vld [vmem:[%s1] sm:$0xff]
  %v27 = vld [vmem:[%s1 + $0x8] sm:$0xff]
  %s28 = scalar_lea.vmem %s1, 16
  %v29 = vld [vmem:[%s28] sm:$0xff]
  %v30 = vld [vmem:[%s28 + $0x8] sm:$0xff]
  %43 = vrot.lane.b32.xlu0 %v14, 127
  %v44 = vpop.permute.xlu0 %43
  %45 = vrot.lane.b32.xlu0 %v15, 127
  %v46 = vpop.permute.xlu0 %45
  %47 = vrot.lane.b32.xlu0 %v16, 127
  %v48 = vpop.permute.xlu0 %47
  %49 = vrot.lane.b32.xlu0 %v17, 127
  %v50 = vpop.permute.xlu0 %49
  %51 = vrot.lane.b32.xlu0 %v18, 127
  %v52 = vpop.permute.xlu0 %51
  %53 = vrot.lane.b32.xlu0 %v19, 127
  %v54 = vpop.permute.xlu0 %53
  %55 = vrot.lane.b32.xlu0 %v20, 127
  %v56 = vpop.permute.xlu0 %55
  %57 = vrot.lane.b32.xlu0 %v21, 127
  %v58 = vpop.permute.xlu0 %57
  %59 = vrot.lane.b32.xlu0 %v22, 127
  %v60 = vpop.permute.xlu0 %59
  %61 = vrot.lane.b32.xlu0 %v23, 127
  %v62 = vpop.permute.xlu0 %61
  %63 = vrot.lane.b32.xlu0 %v24, 127
  %v64 = vpop.permute.xlu0 %63
  %65 = vrot.lane.b32.xlu0 %v25, 127
  %v66 = vpop.permute.xlu0 %65
  %vm67 = vcmask 1039360
  %v68 = vsel %vm67, %v44, %v46
  %v69 = vsel %vm67, %v46, %v48
  %v70 = vsel %vm67, %v48, %v50
  %v71 = vsel %vm67, %v50, %v52
  %v72 = vsel %vm67, %v52, %v54
  %v73 = vsel %vm67, %v56, %v58
  %v74 = vsel %vm67, %v58, %v60
  %v75 = vsel %vm67, %v60, %v62
  %v76 = vsel %vm67, %v62, %v64
  %v77 = vsel %vm67, %v64, %v66
  %vm90 = vcmask 130048
  %v92 = vsel %vm90, %v29, 0
  %v95 = vsel %vm90, %v30, 0
  %97 = vmatprep.subr.mxu0 %v69
  %98 = vmatpush1.msra.mxu0 %v68
  %99 = vmatprep.subr.mxu0 %v74
  %100 = vmatpush1.msra.mxu0 %v73
  %101 = vmatprep.subr.mxu0 0.0
  %102 = vmatpush1.msra.mxu0 0.0
  %103 = vmatprep.subr.mxu0 0.0
  %104 = vmatpush1.msra.mxu0 0.0
  %105 = vmatprep.subr.mxu0 0.0
  %106 = vmatpush1.msra.mxu0 0.0
  %107 = vmatprep.subr.mxu0 0.0
  %108 = vmatpush1.msra.mxu0 0.0
  %109 = vmatprep.subr.mxu0 0.0
  %110 = vmatpush1.msra.mxu0 0.0
  %111 = vmatprep.subr.mxu0 0.0
  %112 = vmatpush1.msra.mxu0 0.0
  %113 = vmatprep.subr.mxu0 0.0
  %114 = vmatpush1.msra.mxu0 0.0
  %115 = vmatprep.subr.mxu0 0.0
  %116 = vmatpush1.msra.mxu0 0.0
  %117 = vmatprep.subr.mxu0 0.0
  %118 = vmatpush1.msra.mxu0 0.0
  %119 = vmatprep.subr.mxu0 0.0
  %120 = vmatpush1.msra.mxu0 0.0
  %121 = vmatprep.subr.mxu0 0.0
  %122 = vmatpush1.msra.mxu0 0.0
  %123 = vmatprep.subr.mxu0 0.0
  %124 = vmatpush1.msra.mxu0 0.0
  %125 = vmatprep.subr.mxu0 0.0
  %126 = vmatpush1.msra.mxu0 0.0
  %127 = vmatprep.subr.mxu0 0.0
  %128 = vmatpush1.msra.mxu0 0.0
  %129 = vmatprep.subr.mxu0 0.0
  %130 = vmatpush1.msra.mxu0 0.0
  %131 = vmatprep.subr.mxu0 0.0
  %132 = vmatpush1.msra.mxu0 0.0
  %133 = vmatprep.subr.mxu0 0.0
  %134 = vmatpush1.msra.mxu0 0.0
  %135 = vmatprep.subr.mxu0 0.0
  %136 = vmatpush1.msra.mxu0 0.0
  %137 = vmatprep.subr.mxu0 0.0
  %138 = vmatpush1.msra.mxu0 0.0
  %139 = vmatprep.subr.mxu0 0.0
  %140 = vmatpush1.msra.mxu0 0.0
  %141 = vmatprep.subr.mxu0 0.0
  %142 = vmatpush1.msra.mxu0 0.0
  %143 = vmatprep.subr.mxu0 0.0
  %144 = vmatpush1.msra.mxu0 0.0
  %145 = vmatprep.subr.mxu0 0.0
  %146 = vmatpush1.msra.mxu0 0.0
  %147 = vmatprep.subr.mxu0 0.0
  %148 = vmatpush1.msra.mxu0 0.0
  %149 = vmatprep.subr.mxu0 0.0
  %150 = vmatpush1.msra.mxu0 0.0
  %151 = vmatprep.subr.mxu0 0.0
  %152 = vmatpush1.msra.mxu0 0.0
  %153 = vmatprep.subr.mxu0 0.0
  %154 = vmatpush1.msra.mxu0 0.0
  %155 = vmatprep.subr.mxu0 0.0
  %156 = vmatpush1.msra.mxu0 0.0
  %157 = vmatprep.subr.mxu0 0.0
  %158 = vmatpush1.msra.mxu0 0.0
  %159 = vmatprep.subr.mxu0 0.0
  %160 = vmatpush1.msra.mxu0 0.0
  %161 = vmatprep.mubr.f32.mxu0 0.0
  %162 = vmatmul.mubr.f32.gmra.mrb[0].mxu0 %v92
  %v163 = vpop.f32.mrb[0].mxu0
  %v164 = vadd.f32 0.0, %v163
  %v165 = vpop.f32.mrb[0].mxu0
  %v166 = vadd.f32 0.0, %v165
  %167 = vmatprep.mubr.f32.mxu0 0.0
  %168 = vmatmul.mubr.f32.gmra.mrb[0].mxu0 %v95
  %v169 = vpop.f32.mrb[0].mxu0
  %v170 = vadd.f32 0.0, %v169
  %v171 = vpop.f32.mrb[0].mxu0
  %v172 = vadd.f32 0.0, %v171
  %173 = vdwg.mxu0
  %174 = vmatprep.subr.mxu0 %v71
  %175 = vmatpush1.msra.mxu0 %v70
  %176 = vmatprep.subr.mxu0 %v76
  %177 = vmatpush1.msra.mxu0 %v75
  %178 = vmatprep.subr.mxu0 0.0
  %179 = vmatpush1.msra.mxu0 0.0
  %180 = vmatprep.subr.mxu0 0.0
  %181 = vmatpush1.msra.mxu0 0.0
  %182 = vmatprep.subr.mxu0 0.0
  %183 = vmatpush1.msra.mxu0 0.0
  %184 = vmatprep.subr.mxu0 0.0
  %185 = vmatpush1.msra.mxu0 0.0
  %186 = vmatprep.subr.mxu0 0.0
  %187 = vmatpush1.msra.mxu0 0.0
  %188 = vmatprep.subr.mxu0 0.0
  %189 = vmatpush1.msra.mxu0 0.0
  %190 = vmatprep.subr.mxu0 0.0
  %191 = vmatpush1.msra.mxu0 0.0
  %192 = vmatprep.subr.mxu0 0.0
  %193 = vmatpush1.msra.mxu0 0.0
  %194 = vmatprep.subr.mxu0 0.0
  %195 = vmatpush1.msra.mxu0 0.0
  %196 = vmatprep.subr.mxu0 0.0
  %197 = vmatpush1.msra.mxu0 0.0
  %198 = vmatprep.subr.mxu0 0.0
  %199 = vmatpush1.msra.mxu0 0.0
  %200 = vmatprep.subr.mxu0 0.0
  %201 = vmatpush1.msra.mxu0 0.0
  %202 = vmatprep.subr.mxu0 0.0
  %203 = vmatpush1.msra.mxu0 0.0
  %204 = vmatprep.subr.mxu0 0.0
  %205 = vmatpush1.msra.mxu0 0.0
  %206 = vmatprep.subr.mxu0 0.0
  %207 = vmatpush1.msra.mxu0 0.0
  %208 = vmatprep.subr.mxu0 0.0
  %209 = vmatpush1.msra.mxu0 0.0
  %210 = vmatprep.subr.mxu0 0.0
  %211 = vmatpush1.msra.mxu0 0.0
  %212 = vmatprep.subr.mxu0 0.0
  %213 = vmatpush1.msra.mxu0 0.0
  %214 = vmatprep.subr.mxu0 0.0
  %215 = vmatpush1.msra.mxu0 0.0
  %216 = vmatprep.subr.mxu0 0.0
  %217 = vmatpush1.msra.mxu0 0.0
  %218 = vmatprep.subr.mxu0 0.0
  %219 = vmatpush1.msra.mxu0 0.0
  %220 = vmatprep.subr.mxu0 0.0
  %221 = vmatpush1.msra.mxu0 0.0
  %222 = vmatprep.subr.mxu0 0.0
  %223 = vmatpush1.msra.mxu0 0.0
  %224 = vmatprep.subr.mxu0 0.0
  %225 = vmatpush1.msra.mxu0 0.0
  %226 = vmatprep.subr.mxu0 0.0
  %227 = vmatpush1.msra.mxu0 0.0
  %228 = vmatprep.subr.mxu0 0.0
  %229 = vmatpush1.msra.mxu0 0.0
  %230 = vmatprep.subr.mxu0 0.0
  %231 = vmatpush1.msra.mxu0 0.0
  %232 = vmatprep.subr.mxu0 0.0
  %233 = vmatpush1.msra.mxu0 0.0
  %234 = vmatprep.subr.mxu0 0.0
  %235 = vmatpush1.msra.mxu0 0.0
  %236 = vmatprep.subr.mxu0 0.0
  %237 = vmatpush1.msra.mxu0 0.0
  %238 = vmatprep.mubr.f32.mxu0 0.0
  %239 = vmatmul.mubr.f32.gmra.mrb[0].mxu0 %v92
  %v240 = vpop.f32.mrb[0].mxu0
  %v241 = vadd.f32 0.0, %v240
  %v242 = vpop.f32.mrb[0].mxu0
  %v243 = vadd.f32 0.0, %v242
  %244 = vmatprep.mubr.f32.mxu0 0.0
  %245 = vmatmul.mubr.f32.gmra.mrb[0].mxu0 %v95
  %v246 = vpop.f32.mrb[0].mxu0
  %v247 = vadd.f32 0.0, %v246
  %v248 = vpop.f32.mrb[0].mxu0
  %v249 = vadd.f32 0.0, %v248
  %250 = vdwg.mxu0
  %251 = vmatprep.subr.mxu0 %v54
  %252 = vmatpush1.msra.mxu0 %v72
  %253 = vmatprep.subr.mxu0 %v66
  %254 = vmatpush1.msra.mxu0 %v77
  %255 = vmatprep.subr.mxu0 0.0
  %256 = vmatpush1.msra.mxu0 0.0
  %257 = vmatprep.subr.mxu0 0.0
  %258 = vmatpush1.msra.mxu0 0.0
  %259 = vmatprep.subr.mxu0 0.0
  %260 = vmatpush1.msra.mxu0 0.0
  %261 = vmatprep.subr.mxu0 0.0
  %262 = vmatpush1.msra.mxu0 0.0
  %263 = vmatprep.subr.mxu0 0.0
  %264 = vmatpush1.msra.mxu0 0.0
  %265 = vmatprep.subr.mxu0 0.0
  %266 = vmatpush1.msra.mxu0 0.0
  %267 = vmatprep.subr.mxu0 0.0
  %268 = vmatpush1.msra.mxu0 0.0
  %269 = vmatprep.subr.mxu0 0.0
  %270 = vmatpush1.msra.mxu0 0.0
  %271 = vmatprep.subr.mxu0 0.0
  %272 = vmatpush1.msra.mxu0 0.0
  %273 = vmatprep.subr.mxu0 0.0
  %274 = vmatpush1.msra.mxu0 0.0
  %275 = vmatprep.subr.mxu0 0.0
  %276 = vmatpush1.msra.mxu0 0.0
  %277 = vmatprep.subr.mxu0 0.0
  %278 = vmatpush1.msra.mxu0 0.0
  %279 = vmatprep.subr.mxu0 0.0
  %280 = vmatpush1.msra.mxu0 0.0
  %281 = vmatprep.subr.mxu0 0.0
  %282 = vmatpush1.msra.mxu0 0.0
  %283 = vmatprep.subr.mxu0 0.0
  %284 = vmatpush1.msra.mxu0 0.0
  %285 = vmatprep.subr.mxu0 0.0
  %286 = vmatpush1.msra.mxu0 0.0
  %287 = vmatprep.subr.mxu0 0.0
  %288 = vmatpush1.msra.mxu0 0.0
  %289 = vmatprep.subr.mxu0 0.0
  %290 = vmatpush1.msra.mxu0 0.0
  %291 = vmatprep.subr.mxu0 0.0
  %292 = vmatpush1.msra.mxu0 0.0
  %293 = vmatprep.subr.mxu0 0.0
  %294 = vmatpush1.msra.mxu0 0.0
  %295 = vmatprep.subr.mxu0 0.0
  %296 = vmatpush1.msra.mxu0 0.0
  %297 = vmatprep.subr.mxu0 0.0
  %298 = vmatpush1.msra.mxu0 0.0
  %299 = vmatprep.subr.mxu0 0.0
  %300 = vmatpush1.msra.mxu0 0.0
  %301 = vmatprep.subr.mxu0 0.0
  %302 = vmatpush1.msra.mxu0 0.0
  %303 = vmatprep.subr.mxu0 0.0
  %304 = vmatpush1.msra.mxu0 0.0
  %305 = vmatprep.subr.mxu0 0.0
  %306 = vmatpush1.msra.mxu0 0.0
  %307 = vmatprep.subr.mxu0 0.0
  %308 = vmatpush1.msra.mxu0 0.0
  %309 = vmatprep.subr.mxu0 0.0
  %310 = vmatpush1.msra.mxu0 0.0
  %311 = vmatprep.subr.mxu0 0.0
  %312 = vmatpush1.msra.mxu0 0.0
  %313 = vmatprep.subr.mxu0 0.0
  %314 = vmatpush1.msra.mxu0 0.0
  %315 = vmatprep.mubr.f32.mxu0 0.0
  %316 = vmatmul.mubr.f32.gmra.mrb[0].mxu0 %v92
  %v317 = vpop.f32.mrb[0].mxu0
  %v318 = vadd.f32 0.0, %v317
  %v319 = vpop.f32.mrb[0].mxu0
  %v320 = vadd.f32 0.0, %v319
  %321 = vmatprep.mubr.f32.mxu0 0.0
  %322 = vmatmul.mubr.f32.gmra.mrb[0].mxu0 %v95
  %v323 = vpop.f32.mrb[0].mxu0
  %v324 = vadd.f32 0.0, %v323
  %v325 = vpop.f32.mrb[0].mxu0
  %v326 = vadd.f32 0.0, %v325
  %327 = vdwg.mxu0
  %v329 = vsel %vm90, %v26, 0
  %v332 = vsel %vm90, %v27, 0
  %334 = vmatprep.subr.mxu0 %v15
  %335 = vmatpush1.msra.mxu0 %v14
  %336 = vmatprep.subr.mxu0 %v21
  %337 = vmatpush1.msra.mxu0 %v20
  %338 = vmatprep.subr.mxu0 0.0
  %339 = vmatpush1.msra.mxu0 0.0
  %340 = vmatprep.subr.mxu0 0.0
  %341 = vmatpush1.msra.mxu0 0.0
  %342 = vmatprep.subr.mxu0 0.0
  %343 = vmatpush1.msra.mxu0 0.0
  %344 = vmatprep.subr.mxu0 0.0
  %345 = vmatpush1.msra.mxu0 0.0
  %346 = vmatprep.subr.mxu0 0.0
  %347 = vmatpush1.msra.mxu0 0.0
  %348 = vmatprep.subr.mxu0 0.0
  %349 = vmatpush1.msra.mxu0 0.0
  %350 = vmatprep.subr.mxu0 0.0
  %351 = vmatpush1.msra.mxu0 0.0
  %352 = vmatprep.subr.mxu0 0.0
  %353 = vmatpush1.msra.mxu0 0.0
  %354 = vmatprep.subr.mxu0 0.0
  %355 = vmatpush1.msra.mxu0 0.0
  %356 = vmatprep.subr.mxu0 0.0
  %357 = vmatpush1.msra.mxu0 0.0
  %358 = vmatprep.subr.mxu0 0.0
  %359 = vmatpush1.msra.mxu0 0.0
  %360 = vmatprep.subr.mxu0 0.0
  %361 = vmatpush1.msra.mxu0 0.0
  %362 = vmatprep.subr.mxu0 0.0
  %363 = vmatpush1.msra.mxu0 0.0
  %364 = vmatprep.subr.mxu0 0.0
  %365 = vmatpush1.msra.mxu0 0.0
  %366 = vmatprep.subr.mxu0 0.0
  %367 = vmatpush1.msra.mxu0 0.0
  %368 = vmatprep.subr.mxu0 0.0
  %369 = vmatpush1.msra.mxu0 0.0
  %370 = vmatprep.subr.mxu0 0.0
  %371 = vmatpush1.msra.mxu0 0.0
  %372 = vmatprep.subr.mxu0 0.0
  %373 = vmatpush1.msra.mxu0 0.0
  %374 = vmatprep.subr.mxu0 0.0
  %375 = vmatpush1.msra.mxu0 0.0
  %376 = vmatprep.subr.mxu0 0.0
  %377 = vmatpush1.msra.mxu0 0.0
  %378 = vmatprep.subr.mxu0 0.0
  %379 = vmatpush1.msra.mxu0 0.0
  %380 = vmatprep.subr.mxu0 0.0
  %381 = vmatpush1.msra.mxu0 0.0
  %382 = vmatprep.subr.mxu0 0.0
  %383 = vmatpush1.msra.mxu0 0.0
  %384 = vmatprep.subr.mxu0 0.0
  %385 = vmatpush1.msra.mxu0 0.0
  %386 = vmatprep.subr.mxu0 0.0
  %387 = vmatpush1.msra.mxu0 0.0
  %388 = vmatprep.subr.mxu0 0.0
  %389 = vmatpush1.msra.mxu0 0.0
  %390 = vmatprep.subr.mxu0 0.0
  %391 = vmatpush1.msra.mxu0 0.0
  %392 = vmatprep.subr.mxu0 0.0
  %393 = vmatpush1.msra.mxu0 0.0
  %394 = vmatprep.subr.mxu0 0.0
  %395 = vmatpush1.msra.mxu0 0.0
  %396 = vmatprep.subr.mxu0 0.0
  %397 = vmatpush1.msra.mxu0 0.0
  %398 = vmatprep.mubr.f32.mxu0 0.0
  %399 = vmatmul.mubr.f32.gmra.mrb[0].mxu0 %v329
  %v400 = vpop.f32.mrb[0].mxu0
  %v401 = vadd.f32 %v164, %v400
  %v402 = vpop.f32.mrb[0].mxu0
  %v403 = vadd.f32 %v166, %v402
  %404 = vmatprep.mubr.f32.mxu0 0.0
  %405 = vmatmul.mubr.f32.gmra.mrb[0].mxu0 %v332
  %v406 = vpop.f32.mrb[0].mxu0
  %v407 = vadd.f32 %v170, %v406
  %v408 = vpop.f32.mrb[0].mxu0
  %v409 = vadd.f32 %v172, %v408
  %410 = vdwg.mxu0
  %411 = vmatprep.subr.mxu0 %v17
  %412 = vmatpush1.msra.mxu0 %v16
  %413 = vmatprep.subr.mxu0 %v23
  %414 = vmatpush1.msra.mxu0 %v22
  %415 = vmatprep.subr.mxu0 0.0
  %416 = vmatpush1.msra.mxu0 0.0
  %417 = vmatprep.subr.mxu0 0.0
  %418 = vmatpush1.msra.mxu0 0.0
  %419 = vmatprep.subr.mxu0 0.0
  %420 = vmatpush1.msra.mxu0 0.0
  %421 = vmatprep.subr.mxu0 0.0
  %422 = vmatpush1.msra.mxu0 0.0
  %423 = vmatprep.subr.mxu0 0.0
  %424 = vmatpush1.msra.mxu0 0.0
  %425 = vmatprep.subr.mxu0 0.0
  %426 = vmatpush1.msra.mxu0 0.0
  %427 = vmatprep.subr.mxu0 0.0
  %428 = vmatpush1.msra.mxu0 0.0
  %429 = vmatprep.subr.mxu0 0.0
  %430 = vmatpush1.msra.mxu0 0.0
  %431 = vmatprep.subr.mxu0 0.0
  %432 = vmatpush1.msra.mxu0 0.0
  %433 = vmatprep.subr.mxu0 0.0
  %434 = vmatpush1.msra.mxu0 0.0
  %435 = vmatprep.subr.mxu0 0.0
  %436 = vmatpush1.msra.mxu0 0.0
  %437 = vmatprep.subr.mxu0 0.0
  %438 = vmatpush1.msra.mxu0 0.0
  %439 = vmatprep.subr.mxu0 0.0
  %440 = vmatpush1.msra.mxu0 0.0
  %441 = vmatprep.subr.mxu0 0.0
  %442 = vmatpush1.msra.mxu0 0.0
  %443 = vmatprep.subr.mxu0 0.0
  %444 = vmatpush1.msra.mxu0 0.0
  %445 = vmatprep.subr.mxu0 0.0
  %446 = vmatpush1.msra.mxu0 0.0
  %447 = vmatprep.subr.mxu0 0.0
  %448 = vmatpush1.msra.mxu0 0.0
  %449 = vmatprep.subr.mxu0 0.0
  %450 = vmatpush1.msra.mxu0 0.0
  %451 = vmatprep.subr.mxu0 0.0
  %452 = vmatpush1.msra.mxu0 0.0
  %453 = vmatprep.subr.mxu0 0.0
  %454 = vmatpush1.msra.mxu0 0.0
  %455 = vmatprep.subr.mxu0 0.0
  %456 = vmatpush1.msra.mxu0 0.0
  %457 = vmatprep.subr.mxu0 0.0
  %458 = vmatpush1.msra.mxu0 0.0
  %459 = vmatprep.subr.mxu0 0.0
  %460 = vmatpush1.msra.mxu0 0.0
  %461 = vmatprep.subr.mxu0 0.0
  %462 = vmatpush1.msra.mxu0 0.0
  %463 = vmatprep.subr.mxu0 0.0
  %464 = vmatpush1.msra.mxu0 0.0
  %465 = vmatprep.subr.mxu0 0.0
  %466 = vmatpush1.msra.mxu0 0.0
  %467 = vmatprep.subr.mxu0 0.0
  %468 = vmatpush1.msra.mxu0 0.0
  %469 = vmatprep.subr.mxu0 0.0
  %470 = vmatpush1.msra.mxu0 0.0
  %471 = vmatprep.subr.mxu0 0.0
  %472 = vmatpush1.msra.mxu0 0.0
  %473 = vmatprep.subr.mxu0 0.0
  %474 = vmatpush1.msra.mxu0 0.0
  %475 = vmatprep.mubr.f32.mxu0 0.0
  %476 = vmatmul.mubr.f32.gmra.mrb[0].mxu0 %v329
  %v477 = vpop.f32.mrb[0].mxu0
  %v478 = vadd.f32 %v241, %v477
  %v479 = vpop.f32.mrb[0].mxu0
  %v480 = vadd.f32 %v243, %v479
  %481 = vmatprep.mubr.f32.mxu0 0.0
  %482 = vmatmul.mubr.f32.gmra.mrb[0].mxu0 %v332
  %v483 = vpop.f32.mrb[0].mxu0
  %v484 = vadd.f32 %v247, %v483
  %v485 = vpop.f32.mrb[0].mxu0
  %v486 = vadd.f32 %v249, %v485
  %487 = vdwg.mxu0
  %488 = vmatprep.subr.mxu0 %v19
  %489 = vmatpush1.msra.mxu0 %v18
  %490 = vmatprep.subr.mxu0 %v25
  %491 = vmatpush1.msra.mxu0 %v24
  %492 = vmatprep.subr.mxu0 0.0
  %493 = vmatpush1.msra.mxu0 0.0
  %494 = vmatprep.subr.mxu0 0.0
  %495 = vmatpush1.msra.mxu0 0.0
  %496 = vmatprep.subr.mxu0 0.0
  %497 = vmatpush1.msra.mxu0 0.0
  %498 = vmatprep.subr.mxu0 0.0
  %499 = vmatpush1.msra.mxu0 0.0
  %500 = vmatprep.subr.mxu0 0.0
  %501 = vmatpush1.msra.mxu0 0.0
  %502 = vmatprep.subr.mxu0 0.0
  %503 = vmatpush1.msra.mxu0 0.0
  %504 = vmatprep.subr.mxu0 0.0
  %505 = vmatpush1.msra.mxu0 0.0
  %506 = vmatprep.subr.mxu0 0.0
  %507 = vmatpush1.msra.mxu0 0.0
  %508 = vmatprep.subr.mxu0 0.0
  %509 = vmatpush1.msra.mxu0 0.0
  %510 = vmatprep.subr.mxu0 0.0
  %511 = vmatpush1.msra.mxu0 0.0
  %512 = vmatprep.subr.mxu0 0.0
  %513 = vmatpush1.msra.mxu0 0.0
  %514 = vmatprep.subr.mxu0 0.0
  %515 = vmatpush1.msra.mxu0 0.0
  %516 = vmatprep.subr.mxu0 0.0
  %517 = vmatpush1.msra.mxu0 0.0
  %518 = vmatprep.subr.mxu0 0.0
  %519 = vmatpush1.msra.mxu0 0.0
  %520 = vmatprep.subr.mxu0 0.0
  %521 = vmatpush1.msra.mxu0 0.0
  %522 = vmatprep.subr.mxu0 0.0
  %523 = vmatpush1.msra.mxu0 0.0
  %524 = vmatprep.subr.mxu0 0.0
  %525 = vmatpush1.msra.mxu0 0.0
  %526 = vmatprep.subr.mxu0 0.0
  %527 = vmatpush1.msra.mxu0 0.0
  %528 = vmatprep.subr.mxu0 0.0
  %529 = vmatpush1.msra.mxu0 0.0
  %530 = vmatprep.subr.mxu0 0.0
  %531 = vmatpush1.msra.mxu0 0.0
  %532 = vmatprep.subr.mxu0 0.0
  %533 = vmatpush1.msra.mxu0 0.0
  %534 = vmatprep.subr.mxu0 0.0
  %535 = vmatpush1.msra.mxu0 0.0
  %536 = vmatprep.subr.mxu0 0.0
  %537 = vmatpush1.msra.mxu0 0.0
  %538 = vmatprep.subr.mxu0 0.0
  %539 = vmatpush1.msra.mxu0 0.0
  %540 = vmatprep.subr.mxu0 0.0
  %541 = vmatpush1.msra.mxu0 0.0
  %542 = vmatprep.subr.mxu0 0.0
  %543 = vmatpush1.msra.mxu0 0.0
  %544 = vmatprep.subr.mxu0 0.0
  %545 = vmatpush1.msra.mxu0 0.0
  %546 = vmatprep.subr.mxu0 0.0
  %547 = vmatpush1.msra.mxu0 0.0
  %548 = vmatprep.subr.mxu0 0.0
  %549 = vmatpush1.msra.mxu0 0.0
  %550 = vmatprep.subr.mxu0 0.0
  %551 = vmatpush1.msra.mxu0 0.0
  %552 = vmatprep.mubr.f32.mxu0 0.0
  %553 = vmatmul.mubr.f32.gmra.mrb[0].mxu0 %v329
  %v554 = vpop.f32.mrb[0].mxu0
  %v555 = vadd.f32 %v318, %v554
  %v556 = vpop.f32.mrb[0].mxu0
  %v557 = vadd.f32 %v320, %v556
  %558 = vmatprep.mubr.f32.mxu0 0.0
  %559 = vmatmul.mubr.f32.gmra.mrb[0].mxu0 %v332
  %v560 = vpop.f32.mrb[0].mxu0
  %v561 = vadd.f32 %v324, %v560
  %v562 = vpop.f32.mrb[0].mxu0
  %v563 = vadd.f32 %v326, %v562
  %564 = vdwg.mxu0
  %s565 = scalar_lea.vmem %s1, 32
  %v566 = vld [vmem:[%s565] sm:$0xff]
  %v567 = vld [vmem:[%s565 + $0x8] sm:$0xff]
  %568 = vrot.lane.b32.xlu0 %v14, 126
  %v569 = vpop.permute.xlu0 %568
  %570 = vrot.lane.b32.xlu0 %v15, 126
  %v571 = vpop.permute.xlu0 %570
  %572 = vrot.lane.b32.xlu0 %v16, 126
  %v573 = vpop.permute.xlu0 %572
  %574 = vrot.lane.b32.xlu0 %v17, 126
  %v575 = vpop.permute.xlu0 %574
  %576 = vrot.lane.b32.xlu0 %v18, 126
  %v577 = vpop.permute.xlu0 %576
  %578 = vrot.lane.b32.xlu0 %v19, 126
  %v579 = vpop.permute.xlu0 %578
  %580 = vrot.lane.b32.xlu0 %v20, 126
  %v581 = vpop.permute.xlu0 %580
  %582 = vrot.lane.b32.xlu0 %v21, 126
  %v583 = vpop.permute.xlu0 %582
  %584 = vrot.lane.b32.xlu0 %v22, 126
  %v585 = vpop.permute.xlu0 %584
  %586 = vrot.lane.b32.xlu0 %v23, 126
  %v587 = vpop.permute.xlu0 %586
  %588 = vrot.lane.b32.xlu0 %v24, 126
  %v589 = vpop.permute.xlu0 %588
  %590 = vrot.lane.b32.xlu0 %v25, 126
  %v591 = vpop.permute.xlu0 %590
  %vm592 = vcmask 1031168
  %v593 = vsel %vm592, %v569, %v571
  %v594 = vsel %vm592, %v571, %v573
  %v595 = vsel %vm592, %v573, %v575
  %v596 = vsel %vm592, %v575, %v577
  %v597 = vsel %vm592, %v577, %v579
  %v598 = vsel %vm592, %v581, %v583
  %v599 = vsel %vm592, %v583, %v585
  %v600 = vsel %vm592, %v585, %v587
  %v601 = vsel %vm592, %v587, %v589
  %v602 = vsel %vm592, %v589, %v591
  %v616 = vsel %vm90, %v566, 0
  %v619 = vsel %vm90, %v567, 0
  %621 = vmatprep.subr.mxu0 %v594
  %622 = vmatpush1.msra.mxu0 %v593
  %623 = vmatprep.subr.mxu0 %v599
  %624 = vmatpush1.msra.mxu0 %v598
  %625 = vmatprep.subr.mxu0 0.0
  %626 = vmatpush1.msra.mxu0 0.0
  %627 = vmatprep.subr.mxu0 0.0
  %628 = vmatpush1.msra.mxu0 0.0
  %629 = vmatprep.subr.mxu0 0.0
  %630 = vmatpush1.msra.mxu0 0.0
  %631 = vmatprep.subr.mxu0 0.0
  %632 = vmatpush1.msra.mxu0 0.0
  %633 = vmatprep.subr.mxu0 0.0
  %634 = vmatpush1.msra.mxu0 0.0
  %635 = vmatprep.subr.mxu0 0.0
  %636 = vmatpush1.msra.mxu0 0.0
  %637 = vmatprep.subr.mxu0 0.0
  %638 = vmatpush1.msra.mxu0 0.0
  %639 = vmatprep.subr.mxu0 0.0
  %640 = vmatpush1.msra.mxu0 0.0
  %641 = vmatprep.subr.mxu0 0.0
  %642 = vmatpush1.msra.mxu0 0.0
  %643 = vmatprep.subr.mxu0 0.0
  %644 = vmatpush1.msra.mxu0 0.0
  %645 = vmatprep.subr.mxu0 0.0
  %646 = vmatpush1.msra.mxu0 0.0
  %647 = vmatprep.subr.mxu0 0.0
  %648 = vmatpush1.msra.mxu0 0.0
  %649 = vmatprep.subr.mxu0 0.0
  %650 = vmatpush1.msra.mxu0 0.0
  %651 = vmatprep.subr.mxu0 0.0
  %652 = vmatpush1.msra.mxu0 0.0
  %653 = vmatprep.subr.mxu0 0.0
  %654 = vmatpush1.msra.mxu0 0.0
  %655 = vmatprep.subr.mxu0 0.0
  %656 = vmatpush1.msra.mxu0 0.0
  %657 = vmatprep.subr.mxu0 0.0
  %658 = vmatpush1.msra.mxu0 0.0
  %659 = vmatprep.subr.mxu0 0.0
  %660 = vmatpush1.msra.mxu0 0.0
  %661 = vmatprep.subr.mxu0 0.0
  %662 = vmatpush1.msra.mxu0 0.0
  %663 = vmatprep.subr.mxu0 0.0
  %664 = vmatpush1.msra.mxu0 0.0
  %665 = vmatprep.subr.mxu0 0.0
  %666 = vmatpush1.msra.mxu0 0.0
  %667 = vmatprep.subr.mxu0 0.0
  %668 = vmatpush1.msra.mxu0 0.0
  %669 = vmatprep.subr.mxu0 0.0
  %670 = vmatpush1.msra.mxu0 0.0
  %671 = vmatprep.subr.mxu0 0.0
  %672 = vmatpush1.msra.mxu0 0.0
  %673 = vmatprep.subr.mxu0 0.0
  %674 = vmatpush1.msra.mxu0 0.0
  %675 = vmatprep.subr.mxu0 0.0
  %676 = vmatpush1.msra.mxu0 0.0
  %677 = vmatprep.subr.mxu0 0.0
  %678 = vmatpush1.msra.mxu0 0.0
  %679 = vmatprep.subr.mxu0 0.0
  %680 = vmatpush1.msra.mxu0 0.0
  %681 = vmatprep.subr.mxu0 0.0
  %682 = vmatpush1.msra.mxu0 0.0
  %683 = vmatprep.subr.mxu0 0.0
  %684 = vmatpush1.msra.mxu0 0.0
  %685 = vmatprep.mubr.f32.mxu0 0.0
  %686 = vmatmul.mubr.f32.gmra.mrb[0].mxu0 %v616
  %v687 = vpop.f32.mrb[0].mxu0
  %v688 = vadd.f32 0.0, %v687
  %v689 = vpop.f32.mrb[0].mxu0
  %v690 = vadd.f32 0.0, %v689
  %691 = vmatprep.mubr.f32.mxu0 0.0
  %692 = vmatmul.mubr.f32.gmra.mrb[0].mxu0 %v619
  %v693 = vpop.f32.mrb[0].mxu0
  %v694 = vadd.f32 0.0, %v693
  %v695 = vpop.f32.mrb[0].mxu0
  %v696 = vadd.f32 0.0, %v695
  %697 = vdwg.mxu0
  %698 = vmatprep.subr.mxu0 %v596
  %699 = vmatpush1.msra.mxu0 %v595
  %700 = vmatprep.subr.mxu0 %v601
  %701 = vmatpush1.msra.mxu0 %v600
  %702 = vmatprep.subr.mxu0 0.0
  %703 = vmatpush1.msra.mxu0 0.0
  %704 = vmatprep.subr.mxu0 0.0
  %705 = vmatpush1.msra.mxu0 0.0
  %706 = vmatprep.subr.mxu0 0.0
  %707 = vmatpush1.msra.mxu0 0.0
  %708 = vmatprep.subr.mxu0 0.0
  %709 = vmatpush1.msra.mxu0 0.0
  %710 = vmatprep.subr.mxu0 0.0
  %711 = vmatpush1.msra.mxu0 0.0
  %712 = vmatprep.subr.mxu0 0.0
  %713 = vmatpush1.msra.mxu0 0.0
  %714 = vmatprep.subr.mxu0 0.0
  %715 = vmatpush1.msra.mxu0 0.0
  %716 = vmatprep.subr.mxu0 0.0
  %717 = vmatpush1.msra.mxu0 0.0
  %718 = vmatprep.subr.mxu0 0.0
  %719 = vmatpush1.msra.mxu0 0.0
  %720 = vmatprep.subr.mxu0 0.0
  %721 = vmatpush1.msra.mxu0 0.0
  %722 = vmatprep.subr.mxu0 0.0
  %723 = vmatpush1.msra.mxu0 0.0
  %724 = vmatprep.subr.mxu0 0.0
  %725 = vmatpush1.msra.mxu0 0.0
  %726 = vmatprep.subr.mxu0 0.0
  %727 = vmatpush1.msra.mxu0 0.0
  %728 = vmatprep.subr.mxu0 0.0
  %729 = vmatpush1.msra.mxu0 0.0
  %730 = vmatprep.subr.mxu0 0.0
  %731 = vmatpush1.msra.mxu0 0.0
  %732 = vmatprep.subr.mxu0 0.0
  %733 = vmatpush1.msra.mxu0 0.0
  %734 = vmatprep.subr.mxu0 0.0
  %735 = vmatpush1.msra.mxu0 0.0
  %736 = vmatprep.subr.mxu0 0.0
  %737 = vmatpush1.msra.mxu0 0.0
  %738 = vmatprep.subr.mxu0 0.0
  %739 = vmatpush1.msra.mxu0 0.0
  %740 = vmatprep.subr.mxu0 0.0
  %741 = vmatpush1.msra.mxu0 0.0
  %742 = vmatprep.subr.mxu0 0.0
  %743 = vmatpush1.msra.mxu0 0.0
  %744 = vmatprep.subr.mxu0 0.0
  %745 = vmatpush1.msra.mxu0 0.0
  %746 = vmatprep.subr.mxu0 0.0
  %747 = vmatpush1.msra.mxu0 0.0
  %748 = vmatprep.subr.mxu0 0.0
  %749 = vmatpush1.msra.mxu0 0.0
  %750 = vmatprep.subr.mxu0 0.0
  %751 = vmatpush1.msra.mxu0 0.0
  %752 = vmatprep.subr.mxu0 0.0
  %753 = vmatpush1.msra.mxu0 0.0
  %754 = vmatprep.subr.mxu0 0.0
  %755 = vmatpush1.msra.mxu0 0.0
  %756 = vmatprep.subr.mxu0 0.0
  %757 = vmatpush1.msra.mxu0 0.0
  %758 = vmatprep.subr.mxu0 0.0
  %759 = vmatpush1.msra.mxu0 0.0
  %760 = vmatprep.subr.mxu0 0.0
  %761 = vmatpush1.msra.mxu0 0.0
  %762 = vmatprep.mubr.f32.mxu0 0.0
  %763 = vmatmul.mubr.f32.gmra.mrb[0].mxu0 %v616
  %v764 = vpop.f32.mrb[0].mxu0
  %v765 = vadd.f32 0.0, %v764
  %v766 = vpop.f32.mrb[0].mxu0
  %v767 = vadd.f32 0.0, %v766
  %768 = vmatprep.mubr.f32.mxu0 0.0
  %769 = vmatmul.mubr.f32.gmra.mrb[0].mxu0 %v619
  %v770 = vpop.f32.mrb[0].mxu0
  %v771 = vadd.f32 0.0, %v770
  %v772 = vpop.f32.mrb[0].mxu0
  %v773 = vadd.f32 0.0, %v772
  %774 = vdwg.mxu0
  %775 = vmatprep.subr.mxu0 %v579
  %776 = vmatpush1.msra.mxu0 %v597
  %777 = vmatprep.subr.mxu0 %v591
  %778 = vmatpush1.msra.mxu0 %v602
  %779 = vmatprep.subr.mxu0 0.0
  %780 = vmatpush1.msra.mxu0 0.0
  %781 = vmatprep.subr.mxu0 0.0
  %782 = vmatpush1.msra.mxu0 0.0
  %783 = vmatprep.subr.mxu0 0.0
  %784 = vmatpush1.msra.mxu0 0.0
  %785 = vmatprep.subr.mxu0 0.0
  %786 = vmatpush1.msra.mxu0 0.0
  %787 = vmatprep.subr.mxu0 0.0
  %788 = vmatpush1.msra.mxu0 0.0
  %789 = vmatprep.subr.mxu0 0.0
  %790 = vmatpush1.msra.mxu0 0.0
  %791 = vmatprep.subr.mxu0 0.0
  %792 = vmatpush1.msra.mxu0 0.0
  %793 = vmatprep.subr.mxu0 0.0
  %794 = vmatpush1.msra.mxu0 0.0
  %795 = vmatprep.subr.mxu0 0.0
  %796 = vmatpush1.msra.mxu0 0.0
  %797 = vmatprep.subr.mxu0 0.0
  %798 = vmatpush1.msra.mxu0 0.0
  %799 = vmatprep.subr.mxu0 0.0
  %800 = vmatpush1.msra.mxu0 0.0
  %801 = vmatprep.subr.mxu0 0.0
  %802 = vmatpush1.msra.mxu0 0.0
  %803 = vmatprep.subr.mxu0 0.0
  %804 = vmatpush1.msra.mxu0 0.0
  %805 = vmatprep.subr.mxu0 0.0
  %806 = vmatpush1.msra.mxu0 0.0
  %807 = vmatprep.subr.mxu0 0.0
  %808 = vmatpush1.msra.mxu0 0.0
  %809 = vmatprep.subr.mxu0 0.0
  %810 = vmatpush1.msra.mxu0 0.0
  %811 = vmatprep.subr.mxu0 0.0
  %812 = vmatpush1.msra.mxu0 0.0
  %813 = vmatprep.subr.mxu0 0.0
  %814 = vmatpush1.msra.mxu0 0.0
  %815 = vmatprep.subr.mxu0 0.0
  %816 = vmatpush1.msra.mxu0 0.0
  %817 = vmatprep.subr.mxu0 0.0
  %818 = vmatpush1.msra.mxu0 0.0
  %819 = vmatprep.subr.mxu0 0.0
  %820 = vmatpush1.msra.mxu0 0.0
  %821 = vmatprep.subr.mxu0 0.0
  %822 = vmatpush1.msra.mxu0 0.0
  %823 = vmatprep.subr.mxu0 0.0
  %824 = vmatpush1.msra.mxu0 0.0
  %825 = vmatprep.subr.mxu0 0.0
  %826 = vmatpush1.msra.mxu0 0.0
  %827 = vmatprep.subr.mxu0 0.0
  %828 = vmatpush1.msra.mxu0 0.0
  %829 = vmatprep.subr.mxu0 0.0
  %830 = vmatpush1.msra.mxu0 0.0
  %831 = vmatprep.subr.mxu0 0.0
  %832 = vmatpush1.msra.mxu0 0.0
  %833 = vmatprep.subr.mxu0 0.0
  %834 = vmatpush1.msra.mxu0 0.0
  %835 = vmatprep.subr.mxu0 0.0
  %836 = vmatpush1.msra.mxu0 0.0
  %837 = vmatprep.subr.mxu0 0.0
  %838 = vmatpush1.msra.mxu0 0.0
  %839 = vmatprep.mubr.f32.mxu0 0.0
  %840 = vmatmul.mubr.f32.gmra.mrb[0].mxu0 %v616
  %v841 = vpop.f32.mrb[0].mxu0
  %v842 = vadd.f32 0.0, %v841
  %v843 = vpop.f32.mrb[0].mxu0
  %v844 = vadd.f32 0.0, %v843
  %845 = vmatprep.mubr.f32.mxu0 0.0
  %846 = vmatmul.mubr.f32.gmra.mrb[0].mxu0 %v619
  %v847 = vpop.f32.mrb[0].mxu0
  %v848 = vadd.f32 0.0, %v847
  %v849 = vpop.f32.mrb[0].mxu0
  %v850 = vadd.f32 0.0, %v849
  %851 = vdwg.mxu0
  %v852 = vadd.f32 %v401, %v688
  %v853 = vadd.f32 %v403, %v690
  %v854 = vadd.f32 %v478, %v765
  %v855 = vadd.f32 %v480, %v767
  %v856 = vadd.f32 %v555, %v842
  %v857 = vadd.f32 %v557, %v844
  %v858 = vadd.f32 %v407, %v694
  %v859 = vadd.f32 %v409, %v696
  %v860 = vadd.f32 %v484, %v771
  %v861 = vadd.f32 %v486, %v773
  %v862 = vadd.f32 %v561, %v848
  %v863 = vadd.f32 %v563, %v850
  %s864 = scalar_lea.vmem %s1, 48
  %v865 = vld [vmem:[%s864] sm:$0xff]
  %v866 = vld [vmem:[%s864 + $0x8] sm:$0xff]
  %867 = vrot.lane.b32.xlu0 %v14, 110
  %v868 = vpop.permute.xlu0 %867
  %869 = vrot.lane.b32.xlu0 %v15, 110
  %v870 = vpop.permute.xlu0 %869
  %871 = vrot.lane.b32.xlu0 %v16, 110
  %v872 = vpop.permute.xlu0 %871
  %873 = vrot.lane.b32.xlu0 %v17, 110
  %v874 = vpop.permute.xlu0 %873
  %875 = vrot.lane.b32.xlu0 %v18, 110
  %v876 = vpop.permute.xlu0 %875
  %877 = vrot.lane.b32.xlu0 %v19, 110
  %v878 = vpop.permute.xlu0 %877
  %879 = vrot.lane.b32.xlu0 %v20, 110
  %v880 = vpop.permute.xlu0 %879
  %881 = vrot.lane.b32.xlu0 %v21, 110
  %v882 = vpop.permute.xlu0 %881
  %883 = vrot.lane.b32.xlu0 %v22, 110
  %v884 = vpop.permute.xlu0 %883
  %885 = vrot.lane.b32.xlu0 %v23, 110
  %v886 = vpop.permute.xlu0 %885
  %887 = vrot.lane.b32.xlu0 %v24, 110
  %v888 = vpop.permute.xlu0 %887
  %889 = vrot.lane.b32.xlu0 %v25, 110
  %v890 = vpop.permute.xlu0 %889
  %vm891 = vcmask 900096
  %v892 = vsel %vm891, %v868, %v870
  %v893 = vsel %vm891, %v870, %v872
  %v894 = vsel %vm891, %v872, %v874
  %v895 = vsel %vm891, %v874, %v876
  %v896 = vsel %vm891, %v876, %v878
  %v897 = vsel %vm891, %v880, %v882
  %v898 = vsel %vm891, %v882, %v884
  %v899 = vsel %vm891, %v884, %v886
  %v900 = vsel %vm891, %v886, %v888
  %v901 = vsel %vm891, %v888, %v890
  %v915 = vsel %vm90, %v865, 0
  %v918 = vsel %vm90, %v866, 0
  %920 = vmatprep.subr.mxu0 %v893
  %921 = vmatpush1.msra.mxu0 %v892
  %922 = vmatprep.subr.mxu0 %v898
  %923 = vmatpush1.msra.mxu0 %v897
  %924 = vmatprep.subr.mxu0 0.0
  %925 = vmatpush1.msra.mxu0 0.0
  %926 = vmatprep.subr.mxu0 0.0
  %927 = vmatpush1.msra.mxu0 0.0
  %928 = vmatprep.subr.mxu0 0.0
  %929 = vmatpush1.msra.mxu0 0.0
  %930 = vmatprep.subr.mxu0 0.0
  %931 = vmatpush1.msra.mxu0 0.0
  %932 = vmatprep.subr.mxu0 0.0
  %933 = vmatpush1.msra.mxu0 0.0
  %934 = vmatprep.subr.mxu0 0.0
  %935 = vmatpush1.msra.mxu0 0.0
  %936 = vmatprep.subr.mxu0 0.0
  %937 = vmatpush1.msra.mxu0 0.0
  %938 = vmatprep.subr.mxu0 0.0
  %939 = vmatpush1.msra.mxu0 0.0
  %940 = vmatprep.subr.mxu0 0.0
  %941 = vmatpush1.msra.mxu0 0.0
  %942 = vmatprep.subr.mxu0 0.0
  %943 = vmatpush1.msra.mxu0 0.0
  %944 = vmatprep.subr.mxu0 0.0
  %945 = vmatpush1.msra.mxu0 0.0
  %946 = vmatprep.subr.mxu0 0.0
  %947 = vmatpush1.msra.mxu0 0.0
  %948 = vmatprep.subr.mxu0 0.0
  %949 = vmatpush1.msra.mxu0 0.0
  %950 = vmatprep.subr.mxu0 0.0
  %951 = vmatpush1.msra.mxu0 0.0
  %952 = vmatprep.subr.mxu0 0.0
  %953 = vmatpush1.msra.mxu0 0.0
  %954 = vmatprep.subr.mxu0 0.0
  %955 = vmatpush1.msra.mxu0 0.0
  %956 = vmatprep.subr.mxu0 0.0
  %957 = vmatpush1.msra.mxu0 0.0
  %958 = vmatprep.subr.mxu0 0.0
  %959 = vmatpush1.msra.mxu0 0.0
  %960 = vmatprep.subr.mxu0 0.0
  %961 = vmatpush1.msra.mxu0 0.0
  %962 = vmatprep.subr.mxu0 0.0
  %963 = vmatpush1.msra.mxu0 0.0
  %964 = vmatprep.subr.mxu0 0.0
  %965 = vmatpush1.msra.mxu0 0.0
  %966 = vmatprep.subr.mxu0 0.0
  %967 = vmatpush1.msra.mxu0 0.0
  %968 = vmatprep.subr.mxu0 0.0
  %969 = vmatpush1.msra.mxu0 0.0
  %970 = vmatprep.subr.mxu0 0.0
  %971 = vmatpush1.msra.mxu0 0.0
  %972 = vmatprep.subr.mxu0 0.0
  %973 = vmatpush1.msra.mxu0 0.0
  %974 = vmatprep.subr.mxu0 0.0
  %975 = vmatpush1.msra.mxu0 0.0
  %976 = vmatprep.subr.mxu0 0.0
  %977 = vmatpush1.msra.mxu0 0.0
  %978 = vmatprep.subr.mxu0 0.0
  %979 = vmatpush1.msra.mxu0 0.0
  %980 = vmatprep.subr.mxu0 0.0
  %981 = vmatpush1.msra.mxu0 0.0
  %982 = vmatprep.subr.mxu0 0.0
  %983 = vmatpush1.msra.mxu0 0.0
  %984 = vmatprep.mubr.f32.mxu0 0.0
  %985 = vmatmul.mubr.f32.gmra.mrb[0].mxu0 %v915
  %v986 = vpop.f32.mrb[0].mxu0
  %v987 = vadd.f32 0.0, %v986
  %v988 = vpop.f32.mrb[0].mxu0
  %v989 = vadd.f32 0.0, %v988
  %990 = vmatprep.mubr.f32.mxu0 0.0
  %991 = vmatmul.mubr.f32.gmra.mrb[0].mxu0 %v918
  %v992 = vpop.f32.mrb[0].mxu0
  %v993 = vadd.f32 0.0, %v992
  %v994 = vpop.f32.mrb[0].mxu0
  %v995 = vadd.f32 0.0, %v994
  %996 = vdwg.mxu0
  %997 = vmatprep.subr.mxu0 %v895
  %998 = vmatpush1.msra.mxu0 %v894
  %999 = vmatprep.subr.mxu0 %v900
  %1000 = vmatpush1.msra.mxu0 %v899
  %1001 = vmatprep.subr.mxu0 0.0
  %1002 = vmatpush1.msra.mxu0 0.0
  %1003 = vmatprep.subr.mxu0 0.0
  %1004 = vmatpush1.msra.mxu0 0.0
  %1005 = vmatprep.subr.mxu0 0.0
  %1006 = vmatpush1.msra.mxu0 0.0
  %1007 = vmatprep.subr.mxu0 0.0
  %1008 = vmatpush1.msra.mxu0 0.0
  %1009 = vmatprep.subr.mxu0 0.0
  %1010 = vmatpush1.msra.mxu0 0.0
  %1011 = vmatprep.subr.mxu0 0.0
  %1012 = vmatpush1.msra.mxu0 0.0
  %1013 = vmatprep.subr.mxu0 0.0
  %1014 = vmatpush1.msra.mxu0 0.0
  %1015 = vmatprep.subr.mxu0 0.0
  %1016 = vmatpush1.msra.mxu0 0.0
  %1017 = vmatprep.subr.mxu0 0.0
  %1018 = vmatpush1.msra.mxu0 0.0
  %1019 = vmatprep.subr.mxu0 0.0
  %1020 = vmatpush1.msra.mxu0 0.0
  %1021 = vmatprep.subr.mxu0 0.0
  %1022 = vmatpush1.msra.mxu0 0.0
  %1023 = vmatprep.subr.mxu0 0.0
  %1024 = vmatpush1.msra.mxu0 0.0
  %1025 = vmatprep.subr.mxu0 0.0
  %1026 = vmatpush1.msra.mxu0 0.0
  %1027 = vmatprep.subr.mxu0 0.0
  %1028 = vmatpush1.msra.mxu0 0.0
  %1029 = vmatprep.subr.mxu0 0.0
  %1030 = vmatpush1.msra.mxu0 0.0
  %1031 = vmatprep.subr.mxu0 0.0
  %1032 = vmatpush1.msra.mxu0 0.0
  %1033 = vmatprep.subr.mxu0 0.0
  %1034 = vmatpush1.msra.mxu0 0.0
  %1035 = vmatprep.subr.mxu0 0.0
  %1036 = vmatpush1.msra.mxu0 0.0
  %1037 = vmatprep.subr.mxu0 0.0
  %1038 = vmatpush1.msra.mxu0 0.0
  %1039 = vmatprep.subr.mxu0 0.0
  %1040 = vmatpush1.msra.mxu0 0.0
  %1041 = vmatprep.subr.mxu0 0.0
  %1042 = vmatpush1.msra.mxu0 0.0
  %1043 = vmatprep.subr.mxu0 0.0
  %1044 = vmatpush1.msra.mxu0 0.0
  %1045 = vmatprep.subr.mxu0 0.0
  %1046 = vmatpush1.msra.mxu0 0.0
  %1047 = vmatprep.subr.mxu0 0.0
  %1048 = vmatpush1.msra.mxu0 0.0
  %1049 = vmatprep.subr.mxu0 0.0
  %1050 = vmatpush1.msra.mxu0 0.0
  %1051 = vmatprep.subr.mxu0 0.0
  %1052 = vmatpush1.msra.mxu0 0.0
  %1053 = vmatprep.subr.mxu0 0.0
  %1054 = vmatpush1.msra.mxu0 0.0
  %1055 = vmatprep.subr.mxu0 0.0
  %1056 = vmatpush1.msra.mxu0 0.0
  %1057 = vmatprep.subr.mxu0 0.0
  %1058 = vmatpush1.msra.mxu0 0.0
  %1059 = vmatprep.subr.mxu0 0.0
  %1060 = vmatpush1.msra.mxu0 0.0
  %1061 = vmatprep.mubr.f32.mxu0 0.0
  %1062 = vmatmul.mubr.f32.gmra.mrb[0].mxu0 %v915
  %v1063 = vpop.f32.mrb[0].mxu0
  %v1064 = vadd.f32 0.0, %v1063
  %v1065 = vpop.f32.mrb[0].mxu0
  %v1066 = vadd.f32 0.0, %v1065
  %1067 = vmatprep.mubr.f32.mxu0 0.0
  %1068 = vmatmul.mubr.f32.gmra.mrb[0].mxu0 %v918
  %v1069 = vpop.f32.mrb[0].mxu0
  %v1070 = vadd.f32 0.0, %v1069
  %v1071 = vpop.f32.mrb[0].mxu0
  %v1072 = vadd.f32 0.0, %v1071
  %1073 = vdwg.mxu0
  %1074 = vmatprep.subr.mxu0 %v878
  %1075 = vmatpush1.msra.mxu0 %v896
  %1076 = vmatprep.subr.mxu0 %v890
  %1077 = vmatpush1.msra.mxu0 %v901
  %1078 = vmatprep.subr.mxu0 0.0
  %1079 = vmatpush1.msra.mxu0 0.0
  %1080 = vmatprep.subr.mxu0 0.0
  %1081 = vmatpush1.msra.mxu0 0.0
  %1082 = vmatprep.subr.mxu0 0.0
  %1083 = vmatpush1.msra.mxu0 0.0
  %1084 = vmatprep.subr.mxu0 0.0
  %1085 = vmatpush1.msra.mxu0 0.0
  %1086 = vmatprep.subr.mxu0 0.0
  %1087 = vmatpush1.msra.mxu0 0.0
  %1088 = vmatprep.subr.mxu0 0.0
  %1089 = vmatpush1.msra.mxu0 0.0
  %1090 = vmatprep.subr.mxu0 0.0
  %1091 = vmatpush1.msra.mxu0 0.0
  %1092 = vmatprep.subr.mxu0 0.0
  %1093 = vmatpush1.msra.mxu0 0.0
  %1094 = vmatprep.subr.mxu0 0.0
  %1095 = vmatpush1.msra.mxu0 0.0
  %1096 = vmatprep.subr.mxu0 0.0
  %1097 = vmatpush1.msra.mxu0 0.0
  %1098 = vmatprep.subr.mxu0 0.0
  %1099 = vmatpush1.msra.mxu0 0.0
  %1100 = vmatprep.subr.mxu0 0.0
  %1101 = vmatpush1.msra.mxu0 0.0
  %1102 = vmatprep.subr.mxu0 0.0
  %1103 = vmatpush1.msra.mxu0 0.0
  %1104 = vmatprep.subr.mxu0 0.0
  %1105 = vmatpush1.msra.mxu0 0.0
  %1106 = vmatprep.subr.mxu0 0.0
  %1107 = vmatpush1.msra.mxu0 0.0
  %1108 = vmatprep.subr.mxu0 0.0
  %1109 = vmatpush1.msra.mxu0 0.0
  %1110 = vmatprep.subr.mxu0 0.0
  %1111 = vmatpush1.msra.mxu0 0.0
  %1112 = vmatprep.subr.mxu0 0.0
  %1113 = vmatpush1.msra.mxu0 0.0
  %1114 = vmatprep.subr.mxu0 0.0
  %1115 = vmatpush1.msra.mxu0 0.0
  %1116 = vmatprep.subr.mxu0 0.0
  %1117 = vmatpush1.msra.mxu0 0.0
  %1118 = vmatprep.subr.mxu0 0.0
  %1119 = vmatpush1.msra.mxu0 0.0
  %1120 = vmatprep.subr.mxu0 0.0
  %1121 = vmatpush1.msra.mxu0 0.0
  %1122 = vmatprep.subr.mxu0 0.0
  %1123 = vmatpush1.msra.mxu0 0.0
  %1124 = vmatprep.subr.mxu0 0.0
  %1125 = vmatpush1.msra.mxu0 0.0
  %1126 = vmatprep.subr.mxu0 0.0
  %1127 = vmatpush1.msra.mxu0 0.0
  %1128 = vmatprep.subr.mxu0 0.0
  %1129 = vmatpush1.msra.mxu0 0.0
  %1130 = vmatprep.subr.mxu0 0.0
  %1131 = vmatpush1.msra.mxu0 0.0
  %1132 = vmatprep.subr.mxu0 0.0
  %1133 = vmatpush1.msra.mxu0 0.0
  %1134 = vmatprep.subr.mxu0 0.0
  %1135 = vmatpush1.msra.mxu0 0.0
  %1136 = vmatprep.subr.mxu0 0.0
  %1137 = vmatpush1.msra.mxu0 0.0
  %1138 = vmatprep.mubr.f32.mxu0 0.0
  %1139 = vmatmul.mubr.f32.gmra.mrb[0].mxu0 %v915
  %v1140 = vpop.f32.mrb[0].mxu0
  %v1141 = vadd.f32 0.0, %v1140
  %v1142 = vpop.f32.mrb[0].mxu0
  %v1143 = vadd.f32 0.0, %v1142
  %1144 = vmatprep.mubr.f32.mxu0 0.0
  %1145 = vmatmul.mubr.f32.gmra.mrb[0].mxu0 %v918
  %v1146 = vpop.f32.mrb[0].mxu0
  %v1147 = vadd.f32 0.0, %v1146
  %v1148 = vpop.f32.mrb[0].mxu0
  %v1149 = vadd.f32 0.0, %v1148
  %1150 = vdwg.mxu0
  %v1151 = vadd.f32 %v852, %v987
  %v1152 = vadd.f32 %v853, %v989
  %v1153 = vadd.f32 %v854, %v1064
  %v1154 = vadd.f32 %v855, %v1066
  %v1155 = vadd.f32 %v856, %v1141
  %v1156 = vadd.f32 %v857, %v1143
  %v1157 = vadd.f32 %v858, %v993
  %v1158 = vadd.f32 %v859, %v995
  %v1159 = vadd.f32 %v860, %v1070
  %v1160 = vadd.f32 %v861, %v1072
  %v1161 = vadd.f32 %v862, %v1147
  %v1162 = vadd.f32 %v863, %v1149
  %s1163 = scalar_lea.vmem %s1, 64
  %v1164 = vld [vmem:[%s1163] sm:$0xff]
  %v1165 = vld [vmem:[%s1163 + $0x8] sm:$0xff]
  %1166 = vrot.lane.b32.xlu0 %v14, 109
  %v1167 = vpop.permute.xlu0 %1166
  %1168 = vrot.lane.b32.xlu0 %v15, 109
  %v1169 = vpop.permute.xlu0 %1168
  %1170 = vrot.lane.b32.xlu0 %v16, 109
  %v1171 = vpop.permute.xlu0 %1170
  %1172 = vrot.lane.b32.xlu0 %v17, 109
  %v1173 = vpop.permute.xlu0 %1172
  %1174 = vrot.lane.b32.xlu0 %v18, 109
  %v1175 = vpop.permute.xlu0 %1174
  %1176 = vrot.lane.b32.xlu0 %v19, 109
  %v1177 = vpop.permute.xlu0 %1176
  %1178 = vrot.lane.b32.xlu0 %v20, 109
  %v1179 = vpop.permute.xlu0 %1178
  %1180 = vrot.lane.b32.xlu0 %v21, 109
  %v1181 = vpop.permute.xlu0 %1180
  %1182 = vrot.lane.b32.xlu0 %v22, 109
  %v1183 = vpop.permute.xlu0 %1182
  %1184 = vrot.lane.b32.xlu0 %v23, 109
  %v1185 = vpop.permute.xlu0 %1184
  %1186 = vrot.lane.b32.xlu0 %v24, 109
  %v1187 = vpop.permute.xlu0 %1186
  %1188 = vrot.lane.b32.xlu0 %v25, 109
  %v1189 = vpop.permute.xlu0 %1188
  %vm1190 = vcmask 891904
  %v1191 = vsel %vm1190, %v1167, %v1169
  %v1192 = vsel %vm1190, %v1169, %v1171
  %v1193 = vsel %vm1190, %v1171, %v1173
  %v1194 = vsel %vm1190, %v1173, %v1175
  %v1195 = vsel %vm1190, %v1175, %v1177
  %v1196 = vsel %vm1190, %v1179, %v1181
  %v1197 = vsel %vm1190, %v1181, %v1183
  %v1198 = vsel %vm1190, %v1183, %v1185
  %v1199 = vsel %vm1190, %v1185, %v1187
  %v1200 = vsel %vm1190, %v1187, %v1189
  %v1214 = vsel %vm90, %v1164, 0
  %v1217 = vsel %vm90, %v1165, 0
  %1219 = vmatprep.subr.mxu0 %v1192
  %1220 = vmatpush1.msra.mxu0 %v1191
  %1221 = vmatprep.subr.mxu0 %v1197
  %1222 = vmatpush1.msra.mxu0 %v1196
  %1223 = vmatprep.subr.mxu0 0.0
  %1224 = vmatpush1.msra.mxu0 0.0
  %1225 = vmatprep.subr.mxu0 0.0
  %1226 = vmatpush1.msra.mxu0 0.0
  %1227 = vmatprep.subr.mxu0 0.0
  %1228 = vmatpush1.msra.mxu0 0.0
  %1229 = vmatprep.subr.mxu0 0.0
  %1230 = vmatpush1.msra.mxu0 0.0
  %1231 = vmatprep.subr.mxu0 0.0
  %1232 = vmatpush1.msra.mxu0 0.0
  %1233 = vmatprep.subr.mxu0 0.0
  %1234 = vmatpush1.msra.mxu0 0.0
  %1235 = vmatprep.subr.mxu0 0.0
  %1236 = vmatpush1.msra.mxu0 0.0
  %1237 = vmatprep.subr.mxu0 0.0
  %1238 = vmatpush1.msra.mxu0 0.0
  %1239 = vmatprep.subr.mxu0 0.0
  %1240 = vmatpush1.msra.mxu0 0.0
  %1241 = vmatprep.subr.mxu0 0.0
  %1242 = vmatpush1.msra.mxu0 0.0
  %1243 = vmatprep.subr.mxu0 0.0
  %1244 = vmatpush1.msra.mxu0 0.0
  %1245 = vmatprep.subr.mxu0 0.0
  %1246 = vmatpush1.msra.mxu0 0.0
  %1247 = vmatprep.subr.mxu0 0.0
  %1248 = vmatpush1.msra.mxu0 0.0
  %1249 = vmatprep.subr.mxu0 0.0
  %1250 = vmatpush1.msra.mxu0 0.0
  %1251 = vmatprep.subr.mxu0 0.0
  %1252 = vmatpush1.msra.mxu0 0.0
  %1253 = vmatprep.subr.mxu0 0.0
  %1254 = vmatpush1.msra.mxu0 0.0
  %1255 = vmatprep.subr.mxu0 0.0
  %1256 = vmatpush1.msra.mxu0 0.0
  %1257 = vmatprep.subr.mxu0 0.0
  %1258 = vmatpush1.msra.mxu0 0.0
  %1259 = vmatprep.subr.mxu0 0.0
  %1260 = vmatpush1.msra.mxu0 0.0
  %1261 = vmatprep.subr.mxu0 0.0
  %1262 = vmatpush1.msra.mxu0 0.0
  %1263 = vmatprep.subr.mxu0 0.0
  %1264 = vmatpush1.msra.mxu0 0.0
  %1265 = vmatprep.subr.mxu0 0.0
  %1266 = vmatpush1.msra.mxu0 0.0
  %1267 = vmatprep.subr.mxu0 0.0
  %1268 = vmatpush1.msra.mxu0 0.0
  %1269 = vmatprep.subr.mxu0 0.0
  %1270 = vmatpush1.msra.mxu0 0.0
  %1271 = vmatprep.subr.mxu0 0.0
  %1272 = vmatpush1.msra.mxu0 0.0
  %1273 = vmatprep.subr.mxu0 0.0
  %1274 = vmatpush1.msra.mxu0 0.0
  %1275 = vmatprep.subr.mxu0 0.0
  %1276 = vmatpush1.msra.mxu0 0.0
  %1277 = vmatprep.subr.mxu0 0.0
  %1278 = vmatpush1.msra.mxu0 0.0
  %1279 = vmatprep.subr.mxu0 0.0
  %1280 = vmatpush1.msra.mxu0 0.0
  %1281 = vmatprep.subr.mxu0 0.0
  %1282 = vmatpush1.msra.mxu0 0.0
  %1283 = vmatprep.mubr.f32.mxu0 0.0
  %1284 = vmatmul.mubr.f32.gmra.mrb[0].mxu0 %v1214
  %v1285 = vpop.f32.mrb[0].mxu0
  %v1286 = vadd.f32 0.0, %v1285
  %v1287 = vpop.f32.mrb[0].mxu0
  %v1288 = vadd.f32 0.0, %v1287
  %1289 = vmatprep.mubr.f32.mxu0 0.0
  %1290 = vmatmul.mubr.f32.gmra.mrb[0].mxu0 %v1217
  %v1291 = vpop.f32.mrb[0].mxu0
  %v1292 = vadd.f32 0.0, %v1291
  %v1293 = vpop.f32.mrb[0].mxu0
  %v1294 = vadd.f32 0.0, %v1293
  %1295 = vdwg.mxu0
  %1296 = vmatprep.subr.mxu0 %v1194
  %1297 = vmatpush1.msra.mxu0 %v1193
  %1298 = vmatprep.subr.mxu0 %v1199
  %1299 = vmatpush1.msra.mxu0 %v1198
  %1300 = vmatprep.subr.mxu0 0.0
  %1301 = vmatpush1.msra.mxu0 0.0
  %1302 = vmatprep.subr.mxu0 0.0
  %1303 = vmatpush1.msra.mxu0 0.0
  %1304 = vmatprep.subr.mxu0 0.0
  %1305 = vmatpush1.msra.mxu0 0.0
  %1306 = vmatprep.subr.mxu0 0.0
  %1307 = vmatpush1.msra.mxu0 0.0
  %1308 = vmatprep.subr.mxu0 0.0
  %1309 = vmatpush1.msra.mxu0 0.0
  %1310 = vmatprep.subr.mxu0 0.0
  %1311 = vmatpush1.msra.mxu0 0.0
  %1312 = vmatprep.subr.mxu0 0.0
  %1313 = vmatpush1.msra.mxu0 0.0
  %1314 = vmatprep.subr.mxu0 0.0
  %1315 = vmatpush1.msra.mxu0 0.0
  %1316 = vmatprep.subr.mxu0 0.0
  %1317 = vmatpush1.msra.mxu0 0.0
  %1318 = vmatprep.subr.mxu0 0.0
  %1319 = vmatpush1.msra.mxu0 0.0
  %1320 = vmatprep.subr.mxu0 0.0
  %1321 = vmatpush1.msra.mxu0 0.0
  %1322 = vmatprep.subr.mxu0 0.0
  %1323 = vmatpush1.msra.mxu0 0.0
  %1324 = vmatprep.subr.mxu0 0.0
  %1325 = vmatpush1.msra.mxu0 0.0
  %1326 = vmatprep.subr.mxu0 0.0
  %1327 = vmatpush1.msra.mxu0 0.0
  %1328 = vmatprep.subr.mxu0 0.0
  %1329 = vmatpush1.msra.mxu0 0.0
  %1330 = vmatprep.subr.mxu0 0.0
  %1331 = vmatpush1.msra.mxu0 0.0
  %1332 = vmatprep.subr.mxu0 0.0
  %1333 = vmatpush1.msra.mxu0 0.0
  %1334 = vmatprep.subr.mxu0 0.0
  %1335 = vmatpush1.msra.mxu0 0.0
  %1336 = vmatprep.subr.mxu0 0.0
  %1337 = vmatpush1.msra.mxu0 0.0
  %1338 = vmatprep.subr.mxu0 0.0
  %1339 = vmatpush1.msra.mxu0 0.0
  %1340 = vmatprep.subr.mxu0 0.0
  %1341 = vmatpush1.msra.mxu0 0.0
  %1342 = vmatprep.subr.mxu0 0.0
  %1343 = vmatpush1.msra.mxu0 0.0
  %1344 = vmatprep.subr.mxu0 0.0
  %1345 = vmatpush1.msra.mxu0 0.0
  %1346 = vmatprep.subr.mxu0 0.0
  %1347 = vmatpush1.msra.mxu0 0.0
  %1348 = vmatprep.subr.mxu0 0.0
  %1349 = vmatpush1.msra.mxu0 0.0
  %1350 = vmatprep.subr.mxu0 0.0
  %1351 = vmatpush1.msra.mxu0 0.0
  %1352 = vmatprep.subr.mxu0 0.0
  %1353 = vmatpush1.msra.mxu0 0.0
  %1354 = vmatprep.subr.mxu0 0.0
  %1355 = vmatpush1.msra.mxu0 0.0
  %1356 = vmatprep.subr.mxu0 0.0
  %1357 = vmatpush1.msra.mxu0 0.0
  %1358 = vmatprep.subr.mxu0 0.0
  %1359 = vmatpush1.msra.mxu0 0.0
  %1360 = vmatprep.mubr.f32.mxu0 0.0
  %1361 = vmatmul.mubr.f32.gmra.mrb[0].mxu0 %v1214
  %v1362 = vpop.f32.mrb[0].mxu0
  %v1363 = vadd.f32 0.0, %v1362
  %v1364 = vpop.f32.mrb[0].mxu0
  %v1365 = vadd.f32 0.0, %v1364
  %1366 = vmatprep.mubr.f32.mxu0 0.0
  %1367 = vmatmul.mubr.f32.gmra.mrb[0].mxu0 %v1217
  %v1368 = vpop.f32.mrb[0].mxu0
  %v1369 = vadd.f32 0.0, %v1368
  %v1370 = vpop.f32.mrb[0].mxu0
  %v1371 = vadd.f32 0.0, %v1370
  %1372 = vdwg.mxu0
  %1373 = vmatprep.subr.mxu0 %v1177
  %1374 = vmatpush1.msra.mxu0 %v1195
  %1375 = vmatprep.subr.mxu0 %v1189
  %1376 = vmatpush1.msra.mxu0 %v1200
  %1377 = vmatprep.subr.mxu0 0.0
  %1378 = vmatpush1.msra.mxu0 0.0
  %1379 = vmatprep.subr.mxu0 0.0
  %1380 = vmatpush1.msra.mxu0 0.0
  %1381 = vmatprep.subr.mxu0 0.0
  %1382 = vmatpush1.msra.mxu0 0.0
  %1383 = vmatprep.subr.mxu0 0.0
  %1384 = vmatpush1.msra.mxu0 0.0
  %1385 = vmatprep.subr.mxu0 0.0
  %1386 = vmatpush1.msra.mxu0 0.0
  %1387 = vmatprep.subr.mxu0 0.0
  %1388 = vmatpush1.msra.mxu0 0.0
  %1389 = vmatprep.subr.mxu0 0.0
  %1390 = vmatpush1.msra.mxu0 0.0
  %1391 = vmatprep.subr.mxu0 0.0
  %1392 = vmatpush1.msra.mxu0 0.0
  %1393 = vmatprep.subr.mxu0 0.0
  %1394 = vmatpush1.msra.mxu0 0.0
  %1395 = vmatprep.subr.mxu0 0.0
  %1396 = vmatpush1.msra.mxu0 0.0
  %1397 = vmatprep.subr.mxu0 0.0
  %1398 = vmatpush1.msra.mxu0 0.0
  %1399 = vmatprep.subr.mxu0 0.0
  %1400 = vmatpush1.msra.mxu0 0.0
  %1401 = vmatprep.subr.mxu0 0.0
  %1402 = vmatpush1.msra.mxu0 0.0
  %1403 = vmatprep.subr.mxu0 0.0
  %1404 = vmatpush1.msra.mxu0 0.0
  %1405 = vmatprep.subr.mxu0 0.0
  %1406 = vmatpush1.msra.mxu0 0.0
  %1407 = vmatprep.subr.mxu0 0.0
  %1408 = vmatpush1.msra.mxu0 0.0
  %1409 = vmatprep.subr.mxu0 0.0
  %1410 = vmatpush1.msra.mxu0 0.0
  %1411 = vmatprep.subr.mxu0 0.0
  %1412 = vmatpush1.msra.mxu0 0.0
  %1413 = vmatprep.subr.mxu0 0.0
  %1414 = vmatpush1.msra.mxu0 0.0
  %1415 = vmatprep.subr.mxu0 0.0
  %1416 = vmatpush1.msra.mxu0 0.0
  %1417 = vmatprep.subr.mxu0 0.0
  %1418 = vmatpush1.msra.mxu0 0.0
  %1419 = vmatprep.subr.mxu0 0.0
  %1420 = vmatpush1.msra.mxu0 0.0
  %1421 = vmatprep.subr.mxu0 0.0
  %1422 = vmatpush1.msra.mxu0 0.0
  %1423 = vmatprep.subr.mxu0 0.0
  %1424 = vmatpush1.msra.mxu0 0.0
  %1425 = vmatprep.subr.mxu0 0.0
  %1426 = vmatpush1.msra.mxu0 0.0
  %1427 = vmatprep.subr.mxu0 0.0
  %1428 = vmatpush1.msra.mxu0 0.0
  %1429 = vmatprep.subr.mxu0 0.0
  %1430 = vmatpush1.msra.mxu0 0.0
  %1431 = vmatprep.subr.mxu0 0.0
  %1432 = vmatpush1.msra.mxu0 0.0
  %1433 = vmatprep.subr.mxu0 0.0
  %1434 = vmatpush1.msra.mxu0 0.0
  %1435 = vmatprep.subr.mxu0 0.0
  %1436 = vmatpush1.msra.mxu0 0.0
  %1437 = vmatprep.mubr.f32.mxu0 0.0
  %1438 = vmatmul.mubr.f32.gmra.mrb[0].mxu0 %v1214
  %v1439 = vpop.f32.mrb[0].mxu0
  %v1440 = vadd.f32 0.0, %v1439
  %v1441 = vpop.f32.mrb[0].mxu0
  %v1442 = vadd.f32 0.0, %v1441
  %1443 = vmatprep.mubr.f32.mxu0 0.0
  %1444 = vmatmul.mubr.f32.gmra.mrb[0].mxu0 %v1217
  %v1445 = vpop.f32.mrb[0].mxu0
  %v1446 = vadd.f32 0.0, %v1445
  %v1447 = vpop.f32.mrb[0].mxu0
  %v1448 = vadd.f32 0.0, %v1447
  %1449 = vdwg.mxu0
  %v1450 = vadd.f32 %v1151, %v1286
  %v1451 = vadd.f32 %v1152, %v1288
  %v1452 = vadd.f32 %v1153, %v1363
  %v1453 = vadd.f32 %v1154, %v1365
  %v1454 = vadd.f32 %v1155, %v1440
  %v1455 = vadd.f32 %v1156, %v1442
  %v1456 = vadd.f32 %v1157, %v1292
  %v1457 = vadd.f32 %v1158, %v1294
  %v1458 = vadd.f32 %v1159, %v1369
  %v1459 = vadd.f32 %v1160, %v1371
  %v1460 = vadd.f32 %v1161, %v1446
  %v1461 = vadd.f32 %v1162, %v1448
  %s1462 = scalar_lea.vmem %s1, 80
  %v1463 = vld [vmem:[%s1462] sm:$0xff]
  %v1464 = vld [vmem:[%s1462 + $0x8] sm:$0xff]
  %1465 = vrot.lane.b32.xlu0 %v14, 108
  %v1466 = vpop.permute.xlu0 %1465
  %1467 = vrot.lane.b32.xlu0 %v15, 108
  %v1468 = vpop.permute.xlu0 %1467
  %1469 = vrot.lane.b32.xlu0 %v16, 108
  %v1470 = vpop.permute.xlu0 %1469
  %1471 = vrot.lane.b32.xlu0 %v17, 108
  %v1472 = vpop.permute.xlu0 %1471
  %1473 = vrot.lane.b32.xlu0 %v18, 108
  %v1474 = vpop.permute.xlu0 %1473
  %1475 = vrot.lane.b32.xlu0 %v19, 108
  %v1476 = vpop.permute.xlu0 %1475
  %1477 = vrot.lane.b32.xlu0 %v20, 108
  %v1478 = vpop.permute.xlu0 %1477
  %1479 = vrot.lane.b32.xlu0 %v21, 108
  %v1480 = vpop.permute.xlu0 %1479
  %1481 = vrot.lane.b32.xlu0 %v22, 108
  %v1482 = vpop.permute.xlu0 %1481
  %1483 = vrot.lane.b32.xlu0 %v23, 108
  %v1484 = vpop.permute.xlu0 %1483
  %1485 = vrot.lane.b32.xlu0 %v24, 108
  %v1486 = vpop.permute.xlu0 %1485
  %1487 = vrot.lane.b32.xlu0 %v25, 108
  %v1488 = vpop.permute.xlu0 %1487
  %vm1489 = vcmask 883712
  %v1490 = vsel %vm1489, %v1466, %v1468
  %v1491 = vsel %vm1489, %v1468, %v1470
  %v1492 = vsel %vm1489, %v1470, %v1472
  %v1493 = vsel %vm1489, %v1472, %v1474
  %v1494 = vsel %vm1489, %v1474, %v1476
  %v1495 = vsel %vm1489, %v1478, %v1480
  %v1496 = vsel %vm1489, %v1480, %v1482
  %v1497 = vsel %vm1489, %v1482, %v1484
  %v1498 = vsel %vm1489, %v1484, %v1486
  %v1499 = vsel %vm1489, %v1486, %v1488
  %v1513 = vsel %vm90, %v1463, 0
  %v1516 = vsel %vm90, %v1464, 0
  %1518 = vmatprep.subr.mxu0 %v1491
  %1519 = vmatpush1.msra.mxu0 %v1490
  %1520 = vmatprep.subr.mxu0 %v1496
  %1521 = vmatpush1.msra.mxu0 %v1495
  %1522 = vmatprep.subr.mxu0 0.0
  %1523 = vmatpush1.msra.mxu0 0.0
  %1524 = vmatprep.subr.mxu0 0.0
  %1525 = vmatpush1.msra.mxu0 0.0
  %1526 = vmatprep.subr.mxu0 0.0
  %1527 = vmatpush1.msra.mxu0 0.0
  %1528 = vmatprep.subr.mxu0 0.0
  %1529 = vmatpush1.msra.mxu0 0.0
  %1530 = vmatprep.subr.mxu0 0.0
  %1531 = vmatpush1.msra.mxu0 0.0
  %1532 = vmatprep.subr.mxu0 0.0
  %1533 = vmatpush1.msra.mxu0 0.0
  %1534 = vmatprep.subr.mxu0 0.0
  %1535 = vmatpush1.msra.mxu0 0.0
  %1536 = vmatprep.subr.mxu0 0.0
  %1537 = vmatpush1.msra.mxu0 0.0
  %1538 = vmatprep.subr.mxu0 0.0
  %1539 = vmatpush1.msra.mxu0 0.0
  %1540 = vmatprep.subr.mxu0 0.0
  %1541 = vmatpush1.msra.mxu0 0.0
  %1542 = vmatprep.subr.mxu0 0.0
  %1543 = vmatpush1.msra.mxu0 0.0
  %1544 = vmatprep.subr.mxu0 0.0
  %1545 = vmatpush1.msra.mxu0 0.0
  %1546 = vmatprep.subr.mxu0 0.0
  %1547 = vmatpush1.msra.mxu0 0.0
  %1548 = vmatprep.subr.mxu0 0.0
  %1549 = vmatpush1.msra.mxu0 0.0
  %1550 = vmatprep.subr.mxu0 0.0
  %1551 = vmatpush1.msra.mxu0 0.0
  %1552 = vmatprep.subr.mxu0 0.0
  %1553 = vmatpush1.msra.mxu0 0.0
  %1554 = vmatprep.subr.mxu0 0.0
  %1555 = vmatpush1.msra.mxu0 0.0
  %1556 = vmatprep.subr.mxu0 0.0
  %1557 = vmatpush1.msra.mxu0 0.0
  %1558 = vmatprep.subr.mxu0 0.0
  %1559 = vmatpush1.msra.mxu0 0.0
  %1560 = vmatprep.subr.mxu0 0.0
  %1561 = vmatpush1.msra.mxu0 0.0
  %1562 = vmatprep.subr.mxu0 0.0
  %1563 = vmatpush1.msra.mxu0 0.0
  %1564 = vmatprep.subr.mxu0 0.0
  %1565 = vmatpush1.msra.mxu0 0.0
  %1566 = vmatprep.subr.mxu0 0.0
  %1567 = vmatpush1.msra.mxu0 0.0
  %1568 = vmatprep.subr.mxu0 0.0
  %1569 = vmatpush1.msra.mxu0 0.0
  %1570 = vmatprep.subr.mxu0 0.0
  %1571 = vmatpush1.msra.mxu0 0.0
  %1572 = vmatprep.subr.mxu0 0.0
  %1573 = vmatpush1.msra.mxu0 0.0
  %1574 = vmatprep.subr.mxu0 0.0
  %1575 = vmatpush1.msra.mxu0 0.0
  %1576 = vmatprep.subr.mxu0 0.0
  %1577 = vmatpush1.msra.mxu0 0.0
  %1578 = vmatprep.subr.mxu0 0.0
  %1579 = vmatpush1.msra.mxu0 0.0
  %1580 = vmatprep.subr.mxu0 0.0
  %1581 = vmatpush1.msra.mxu0 0.0
  %1582 = vmatprep.mubr.f32.mxu0 0.0
  %1583 = vmatmul.mubr.f32.gmra.mrb[0].mxu0 %v1513
  %v1584 = vpop.f32.mrb[0].mxu0
  %v1585 = vadd.f32 0.0, %v1584
  %v1586 = vpop.f32.mrb[0].mxu0
  %v1587 = vadd.f32 0.0, %v1586
  %1588 = vmatprep.mubr.f32.mxu0 0.0
  %1589 = vmatmul.mubr.f32.gmra.mrb[0].mxu0 %v1516
  %v1590 = vpop.f32.mrb[0].mxu0
  %v1591 = vadd.f32 0.0, %v1590
  %v1592 = vpop.f32.mrb[0].mxu0
  %v1593 = vadd.f32 0.0, %v1592
  %1594 = vdwg.mxu0
  %1595 = vmatprep.subr.mxu0 %v1493
  %1596 = vmatpush1.msra.mxu0 %v1492
  %1597 = vmatprep.subr.mxu0 %v1498
  %1598 = vmatpush1.msra.mxu0 %v1497
  %1599 = vmatprep.subr.mxu0 0.0
  %1600 = vmatpush1.msra.mxu0 0.0
  %1601 = vmatprep.subr.mxu0 0.0
  %1602 = vmatpush1.msra.mxu0 0.0
  %1603 = vmatprep.subr.mxu0 0.0
  %1604 = vmatpush1.msra.mxu0 0.0
  %1605 = vmatprep.subr.mxu0 0.0
  %1606 = vmatpush1.msra.mxu0 0.0
  %1607 = vmatprep.subr.mxu0 0.0
  %1608 = vmatpush1.msra.mxu0 0.0
  %1609 = vmatprep.subr.mxu0 0.0
  %1610 = vmatpush1.msra.mxu0 0.0
  %1611 = vmatprep.subr.mxu0 0.0
  %1612 = vmatpush1.msra.mxu0 0.0
  %1613 = vmatprep.subr.mxu0 0.0
  %1614 = vmatpush1.msra.mxu0 0.0
  %1615 = vmatprep.subr.mxu0 0.0
  %1616 = vmatpush1.msra.mxu0 0.0
  %1617 = vmatprep.subr.mxu0 0.0
  %1618 = vmatpush1.msra.mxu0 0.0
  %1619 = vmatprep.subr.mxu0 0.0
  %1620 = vmatpush1.msra.mxu0 0.0
  %1621 = vmatprep.subr.mxu0 0.0
  %1622 = vmatpush1.msra.mxu0 0.0
  %1623 = vmatprep.subr.mxu0 0.0
  %1624 = vmatpush1.msra.mxu0 0.0
  %1625 = vmatprep.subr.mxu0 0.0
  %1626 = vmatpush1.msra.mxu0 0.0
  %1627 = vmatprep.subr.mxu0 0.0
  %1628 = vmatpush1.msra.mxu0 0.0
  %1629 = vmatprep.subr.mxu0 0.0
  %1630 = vmatpush1.msra.mxu0 0.0
  %1631 = vmatprep.subr.mxu0 0.0
  %1632 = vmatpush1.msra.mxu0 0.0
  %1633 = vmatprep.subr.mxu0 0.0
  %1634 = vmatpush1.msra.mxu0 0.0
  %1635 = vmatprep.subr.mxu0 0.0
  %1636 = vmatpush1.msra.mxu0 0.0
  %1637 = vmatprep.subr.mxu0 0.0
  %1638 = vmatpush1.msra.mxu0 0.0
  %1639 = vmatprep.subr.mxu0 0.0
  %1640 = vmatpush1.msra.mxu0 0.0
  %1641 = vmatprep.subr.mxu0 0.0
  %1642 = vmatpush1.msra.mxu0 0.0
  %1643 = vmatprep.subr.mxu0 0.0
  %1644 = vmatpush1.msra.mxu0 0.0
  %1645 = vmatprep.subr.mxu0 0.0
  %1646 = vmatpush1.msra.mxu0 0.0
  %1647 = vmatprep.subr.mxu0 0.0
  %1648 = vmatpush1.msra.mxu0 0.0
  %1649 = vmatprep.subr.mxu0 0.0
  %1650 = vmatpush1.msra.mxu0 0.0
  %1651 = vmatprep.subr.mxu0 0.0
  %1652 = vmatpush1.msra.mxu0 0.0
  %1653 = vmatprep.subr.mxu0 0.0
  %1654 = vmatpush1.msra.mxu0 0.0
  %1655 = vmatprep.subr.mxu0 0.0
  %1656 = vmatpush1.msra.mxu0 0.0
  %1657 = vmatprep.subr.mxu0 0.0
  %1658 = vmatpush1.msra.mxu0 0.0
  %1659 = vmatprep.mubr.f32.mxu0 0.0
  %1660 = vmatmul.mubr.f32.gmra.mrb[0].mxu0 %v1513
  %v1661 = vpop.f32.mrb[0].mxu0
  %v1662 = vadd.f32 0.0, %v1661
  %v1663 = vpop.f32.mrb[0].mxu0
  %v1664 = vadd.f32 0.0, %v1663
  %1665 = vmatprep.mubr.f32.mxu0 0.0
  %1666 = vmatmul.mubr.f32.gmra.mrb[0].mxu0 %v1516
  %v1667 = vpop.f32.mrb[0].mxu0
  %v1668 = vadd.f32 0.0, %v1667
  %v1669 = vpop.f32.mrb[0].mxu0
  %v1670 = vadd.f32 0.0, %v1669
  %1671 = vdwg.mxu0
  %1672 = vmatprep.subr.mxu0 %v1476
  %1673 = vmatpush1.msra.mxu0 %v1494
  %1674 = vmatprep.subr.mxu0 %v1488
  %1675 = vmatpush1.msra.mxu0 %v1499
  %1676 = vmatprep.subr.mxu0 0.0
  %1677 = vmatpush1.msra.mxu0 0.0
  %1678 = vmatprep.subr.mxu0 0.0
  %1679 = vmatpush1.msra.mxu0 0.0
  %1680 = vmatprep.subr.mxu0 0.0
  %1681 = vmatpush1.msra.mxu0 0.0
  %1682 = vmatprep.subr.mxu0 0.0
  %1683 = vmatpush1.msra.mxu0 0.0
  %1684 = vmatprep.subr.mxu0 0.0
  %1685 = vmatpush1.msra.mxu0 0.0
  %1686 = vmatprep.subr.mxu0 0.0
  %1687 = vmatpush1.msra.mxu0 0.0
  %1688 = vmatprep.subr.mxu0 0.0
  %1689 = vmatpush1.msra.mxu0 0.0
  %1690 = vmatprep.subr.mxu0 0.0
  %1691 = vmatpush1.msra.mxu0 0.0
  %1692 = vmatprep.subr.mxu0 0.0
  %1693 = vmatpush1.msra.mxu0 0.0
  %1694 = vmatprep.subr.mxu0 0.0
  %1695 = vmatpush1.msra.mxu0 0.0
  %1696 = vmatprep.subr.mxu0 0.0
  %1697 = vmatpush1.msra.mxu0 0.0
  %1698 = vmatprep.subr.mxu0 0.0
  %1699 = vmatpush1.msra.mxu0 0.0
  %1700 = vmatprep.subr.mxu0 0.0
  %1701 = vmatpush1.msra.mxu0 0.0
  %1702 = vmatprep.subr.mxu0 0.0
  %1703 = vmatpush1.msra.mxu0 0.0
  %1704 = vmatprep.subr.mxu0 0.0
  %1705 = vmatpush1.msra.mxu0 0.0
  %1706 = vmatprep.subr.mxu0 0.0
  %1707 = vmatpush1.msra.mxu0 0.0
  %1708 = vmatprep.subr.mxu0 0.0
  %1709 = vmatpush1.msra.mxu0 0.0
  %1710 = vmatprep.subr.mxu0 0.0
  %1711 = vmatpush1.msra.mxu0 0.0
  %1712 = vmatprep.subr.mxu0 0.0
  %1713 = vmatpush1.msra.mxu0 0.0
  %1714 = vmatprep.subr.mxu0 0.0
  %1715 = vmatpush1.msra.mxu0 0.0
  %1716 = vmatprep.subr.mxu0 0.0
  %1717 = vmatpush1.msra.mxu0 0.0
  %1718 = vmatprep.subr.mxu0 0.0
  %1719 = vmatpush1.msra.mxu0 0.0
  %1720 = vmatprep.subr.mxu0 0.0
  %1721 = vmatpush1.msra.mxu0 0.0
  %1722 = vmatprep.subr.mxu0 0.0
  %1723 = vmatpush1.msra.mxu0 0.0
  %1724 = vmatprep.subr.mxu0 0.0
  %1725 = vmatpush1.msra.mxu0 0.0
  %1726 = vmatprep.subr.mxu0 0.0
  %1727 = vmatpush1.msra.mxu0 0.0
  %1728 = vmatprep.subr.mxu0 0.0
  %1729 = vmatpush1.msra.mxu0 0.0
  %1730 = vmatprep.subr.mxu0 0.0
  %1731 = vmatpush1.msra.mxu0 0.0
  %1732 = vmatprep.subr.mxu0 0.0
  %1733 = vmatpush1.msra.mxu0 0.0
  %1734 = vmatprep.subr.mxu0 0.0
  %1735 = vmatpush1.msra.mxu0 0.0
  %1736 = vmatprep.mubr.f32.mxu0 0.0
  %1737 = vmatmul.mubr.f32.gmra.mrb[0].mxu0 %v1513
  %v1738 = vpop.f32.mrb[0].mxu0
  %v1739 = vadd.f32 0.0, %v1738
  %v1740 = vpop.f32.mrb[0].mxu0
  %v1741 = vadd.f32 0.0, %v1740
  %1742 = vmatprep.mubr.f32.mxu0 0.0
  %1743 = vmatmul.mubr.f32.gmra.mrb[0].mxu0 %v1516
  %v1744 = vpop.f32.mrb[0].mxu0
  %v1745 = vadd.f32 0.0, %v1744
  %v1746 = vpop.f32.mrb[0].mxu0
  %v1747 = vadd.f32 0.0, %v1746
  %1748 = vdwg.mxu0
  %v1749 = vadd.f32 %v1450, %v1585
  %v1750 = vadd.f32 %v1451, %v1587
  %v1751 = vadd.f32 %v1452, %v1662
  %v1752 = vadd.f32 %v1453, %v1664
  %v1753 = vadd.f32 %v1454, %v1739
  %v1754 = vadd.f32 %v1455, %v1741
  %v1755 = vadd.f32 %v1456, %v1591
  %v1756 = vadd.f32 %v1457, %v1593
  %v1757 = vadd.f32 %v1458, %v1668
  %v1758 = vadd.f32 %v1459, %v1670
  %v1759 = vadd.f32 %v1460, %v1745
  %v1760 = vadd.f32 %v1461, %v1747
  %s1761 = scalar_lea.vmem %s1, 96
  %v1762 = vld [vmem:[%s1761] sm:$0xff]
  %v1763 = vld [vmem:[%s1761 + $0x8] sm:$0xff]
  %1764 = vrot.lane.b32.xlu0 %v14, 92
  %v1765 = vpop.permute.xlu0 %1764
  %1766 = vrot.lane.b32.xlu0 %v15, 92
  %v1767 = vpop.permute.xlu0 %1766
  %1768 = vrot.lane.b32.xlu0 %v16, 92
  %v1769 = vpop.permute.xlu0 %1768
  %1770 = vrot.lane.b32.xlu0 %v17, 92
  %v1771 = vpop.permute.xlu0 %1770
  %1772 = vrot.lane.b32.xlu0 %v18, 92
  %v1773 = vpop.permute.xlu0 %1772
  %1774 = vrot.lane.b32.xlu0 %v19, 92
  %v1775 = vpop.permute.xlu0 %1774
  %1776 = vrot.lane.b32.xlu0 %v20, 92
  %v1777 = vpop.permute.xlu0 %1776
  %1778 = vrot.lane.b32.xlu0 %v21, 92
  %v1779 = vpop.permute.xlu0 %1778
  %1780 = vrot.lane.b32.xlu0 %v22, 92
  %v1781 = vpop.permute.xlu0 %1780
  %1782 = vrot.lane.b32.xlu0 %v23, 92
  %v1783 = vpop.permute.xlu0 %1782
  %1784 = vrot.lane.b32.xlu0 %v24, 92
  %v1785 = vpop.permute.xlu0 %1784
  %1786 = vrot.lane.b32.xlu0 %v25, 92
  %v1787 = vpop.permute.xlu0 %1786
  %vm1788 = vcmask 752640
  %v1789 = vsel %vm1788, %v1765, %v1767
  %v1790 = vsel %vm1788, %v1767, %v1769
  %v1791 = vsel %vm1788, %v1769, %v1771
  %v1792 = vsel %vm1788, %v1771, %v1773
  %v1793 = vsel %vm1788, %v1773, %v1775
  %v1794 = vsel %vm1788, %v1777, %v1779
  %v1795 = vsel %vm1788, %v1779, %v1781
  %v1796 = vsel %vm1788, %v1781, %v1783
  %v1797 = vsel %vm1788, %v1783, %v1785
  %v1798 = vsel %vm1788, %v1785, %v1787
  %v1812 = vsel %vm90, %v1762, 0
  %v1815 = vsel %vm90, %v1763, 0
  %1817 = vmatprep.subr.mxu0 %v1790
  %1818 = vmatpush1.msra.mxu0 %v1789
  %1819 = vmatprep.subr.mxu0 %v1795
  %1820 = vmatpush1.msra.mxu0 %v1794
  %1821 = vmatprep.subr.mxu0 0.0
  %1822 = vmatpush1.msra.mxu0 0.0
  %1823 = vmatprep.subr.mxu0 0.0
  %1824 = vmatpush1.msra.mxu0 0.0
  %1825 = vmatprep.subr.mxu0 0.0
  %1826 = vmatpush1.msra.mxu0 0.0
  %1827 = vmatprep.subr.mxu0 0.0
  %1828 = vmatpush1.msra.mxu0 0.0
  %1829 = vmatprep.subr.mxu0 0.0
  %1830 = vmatpush1.msra.mxu0 0.0
  %1831 = vmatprep.subr.mxu0 0.0
  %1832 = vmatpush1.msra.mxu0 0.0
  %1833 = vmatprep.subr.mxu0 0.0
  %1834 = vmatpush1.msra.mxu0 0.0
  %1835 = vmatprep.subr.mxu0 0.0
  %1836 = vmatpush1.msra.mxu0 0.0
  %1837 = vmatprep.subr.mxu0 0.0
  %1838 = vmatpush1.msra.mxu0 0.0
  %1839 = vmatprep.subr.mxu0 0.0
  %1840 = vmatpush1.msra.mxu0 0.0
  %1841 = vmatprep.subr.mxu0 0.0
  %1842 = vmatpush1.msra.mxu0 0.0
  %1843 = vmatprep.subr.mxu0 0.0
  %1844 = vmatpush1.msra.mxu0 0.0
  %1845 = vmatprep.subr.mxu0 0.0
  %1846 = vmatpush1.msra.mxu0 0.0
  %1847 = vmatprep.subr.mxu0 0.0
  %1848 = vmatpush1.msra.mxu0 0.0
  %1849 = vmatprep.subr.mxu0 0.0
  %1850 = vmatpush1.msra.mxu0 0.0
  %1851 = vmatprep.subr.mxu0 0.0
  %1852 = vmatpush1.msra.mxu0 0.0
  %1853 = vmatprep.subr.mxu0 0.0
  %1854 = vmatpush1.msra.mxu0 0.0
  %1855 = vmatprep.subr.mxu0 0.0
  %1856 = vmatpush1.msra.mxu0 0.0
  %1857 = vmatprep.subr.mxu0 0.0
  %1858 = vmatpush1.msra.mxu0 0.0
  %1859 = vmatprep.subr.mxu0 0.0
  %1860 = vmatpush1.msra.mxu0 0.0
  %1861 = vmatprep.subr.mxu0 0.0
  %1862 = vmatpush1.msra.mxu0 0.0
  %1863 = vmatprep.subr.mxu0 0.0
  %1864 = vmatpush1.msra.mxu0 0.0
  %1865 = vmatprep.subr.mxu0 0.0
  %1866 = vmatpush1.msra.mxu0 0.0
  %1867 = vmatprep.subr.mxu0 0.0
  %1868 = vmatpush1.msra.mxu0 0.0
  %1869 = vmatprep.subr.mxu0 0.0
  %1870 = vmatpush1.msra.mxu0 0.0
  %1871 = vmatprep.subr.mxu0 0.0
  %1872 = vmatpush1.msra.mxu0 0.0
  %1873 = vmatprep.subr.mxu0 0.0
  %1874 = vmatpush1.msra.mxu0 0.0
  %1875 = vmatprep.subr.mxu0 0.0
  %1876 = vmatpush1.msra.mxu0 0.0
  %1877 = vmatprep.subr.mxu0 0.0
  %1878 = vmatpush1.msra.mxu0 0.0
  %1879 = vmatprep.subr.mxu0 0.0
  %1880 = vmatpush1.msra.mxu0 0.0
  %1881 = vmatprep.mubr.f32.mxu0 0.0
  %1882 = vmatmul.mubr.f32.gmra.mrb[0].mxu0 %v1812
  %v1883 = vpop.f32.mrb[0].mxu0
  %v1884 = vadd.f32 0.0, %v1883
  %v1885 = vpop.f32.mrb[0].mxu0
  %v1886 = vadd.f32 0.0, %v1885
  %1887 = vmatprep.mubr.f32.mxu0 0.0
  %1888 = vmatmul.mubr.f32.gmra.mrb[0].mxu0 %v1815
  %v1889 = vpop.f32.mrb[0].mxu0
  %v1890 = vadd.f32 0.0, %v1889
  %v1891 = vpop.f32.mrb[0].mxu0
  %v1892 = vadd.f32 0.0, %v1891
  %1893 = vdwg.mxu0
  %1894 = vmatprep.subr.mxu0 %v1792
  %1895 = vmatpush1.msra.mxu0 %v1791
  %1896 = vmatprep.subr.mxu0 %v1797
  %1897 = vmatpush1.msra.mxu0 %v1796
  %1898 = vmatprep.subr.mxu0 0.0
  %1899 = vmatpush1.msra.mxu0 0.0
  %1900 = vmatprep.subr.mxu0 0.0
  %1901 = vmatpush1.msra.mxu0 0.0
  %1902 = vmatprep.subr.mxu0 0.0
  %1903 = vmatpush1.msra.mxu0 0.0
  %1904 = vmatprep.subr.mxu0 0.0
  %1905 = vmatpush1.msra.mxu0 0.0
  %1906 = vmatprep.subr.mxu0 0.0
  %1907 = vmatpush1.msra.mxu0 0.0
  %1908 = vmatprep.subr.mxu0 0.0
  %1909 = vmatpush1.msra.mxu0 0.0
  %1910 = vmatprep.subr.mxu0 0.0
  %1911 = vmatpush1.msra.mxu0 0.0
  %1912 = vmatprep.subr.mxu0 0.0
  %1913 = vmatpush1.msra.mxu0 0.0
  %1914 = vmatprep.subr.mxu0 0.0
  %1915 = vmatpush1.msra.mxu0 0.0
  %1916 = vmatprep.subr.mxu0 0.0
  %1917 = vmatpush1.msra.mxu0 0.0
  %1918 = vmatprep.subr.mxu0 0.0
  %1919 = vmatpush1.msra.mxu0 0.0
  %1920 = vmatprep.subr.mxu0 0.0
  %1921 = vmatpush1.msra.mxu0 0.0
  %1922 = vmatprep.subr.mxu0 0.0
  %1923 = vmatpush1.msra.mxu0 0.0
  %1924 = vmatprep.subr.mxu0 0.0
  %1925 = vmatpush1.msra.mxu0 0.0
  %1926 = vmatprep.subr.mxu0 0.0
  %1927 = vmatpush1.msra.mxu0 0.0
  %1928 = vmatprep.subr.mxu0 0.0
  %1929 = vmatpush1.msra.mxu0 0.0
  %1930 = vmatprep.subr.mxu0 0.0
  %1931 = vmatpush1.msra.mxu0 0.0
  %1932 = vmatprep.subr.mxu0 0.0
  %1933 = vmatpush1.msra.mxu0 0.0
  %1934 = vmatprep.subr.mxu0 0.0
  %1935 = vmatpush1.msra.mxu0 0.0
  %1936 = vmatprep.subr.mxu0 0.0
  %1937 = vmatpush1.msra.mxu0 0.0
  %1938 = vmatprep.subr.mxu0 0.0
  %1939 = vmatpush1.msra.mxu0 0.0
  %1940 = vmatprep.subr.mxu0 0.0
  %1941 = vmatpush1.msra.mxu0 0.0
  %1942 = vmatprep.subr.mxu0 0.0
  %1943 = vmatpush1.msra.mxu0 0.0
  %1944 = vmatprep.subr.mxu0 0.0
  %1945 = vmatpush1.msra.mxu0 0.0
  %1946 = vmatprep.subr.mxu0 0.0
  %1947 = vmatpush1.msra.mxu0 0.0
  %1948 = vmatprep.subr.mxu0 0.0
  %1949 = vmatpush1.msra.mxu0 0.0
  %1950 = vmatprep.subr.mxu0 0.0
  %1951 = vmatpush1.msra.mxu0 0.0
  %1952 = vmatprep.subr.mxu0 0.0
  %1953 = vmatpush1.msra.mxu0 0.0
  %1954 = vmatprep.subr.mxu0 0.0
  %1955 = vmatpush1.msra.mxu0 0.0
  %1956 = vmatprep.subr.mxu0 0.0
  %1957 = vmatpush1.msra.mxu0 0.0
  %1958 = vmatprep.mubr.f32.mxu0 0.0
  %1959 = vmatmul.mubr.f32.gmra.mrb[0].mxu0 %v1812
  %v1960 = vpop.f32.mrb[0].mxu0
  %v1961 = vadd.f32 0.0, %v1960
  %v1962 = vpop.f32.mrb[0].mxu0
  %v1963 = vadd.f32 0.0, %v1962
  %1964 = vmatprep.mubr.f32.mxu0 0.0
  %1965 = vmatmul.mubr.f32.gmra.mrb[0].mxu0 %v1815
  %v1966 = vpop.f32.mrb[0].mxu0
  %v1967 = vadd.f32 0.0, %v1966
  %v1968 = vpop.f32.mrb[0].mxu0
  %v1969 = vadd.f32 0.0, %v1968
  %1970 = vdwg.mxu0
  %1971 = vmatprep.subr.mxu0 %v1775
  %1972 = vmatpush1.msra.mxu0 %v1793
  %1973 = vmatprep.subr.mxu0 %v1787
  %1974 = vmatpush1.msra.mxu0 %v1798
  %1975 = vmatprep.subr.mxu0 0.0
  %1976 = vmatpush1.msra.mxu0 0.0
  %1977 = vmatprep.subr.mxu0 0.0
  %1978 = vmatpush1.msra.mxu0 0.0
  %1979 = vmatprep.subr.mxu0 0.0
  %1980 = vmatpush1.msra.mxu0 0.0
  %1981 = vmatprep.subr.mxu0 0.0
  %1982 = vmatpush1.msra.mxu0 0.0
  %1983 = vmatprep.subr.mxu0 0.0
  %1984 = vmatpush1.msra.mxu0 0.0
  %1985 = vmatprep.subr.mxu0 0.0
  %1986 = vmatpush1.msra.mxu0 0.0
  %1987 = vmatprep.subr.mxu0 0.0
  %1988 = vmatpush1.msra.mxu0 0.0
  %1989 = vmatprep.subr.mxu0 0.0
  %1990 = vmatpush1.msra.mxu0 0.0
  %1991 = vmatprep.subr.mxu0 0.0
  %1992 = vmatpush1.msra.mxu0 0.0
  %1993 = vmatprep.subr.mxu0 0.0
  %1994 = vmatpush1.msra.mxu0 0.0
  %1995 = vmatprep.subr.mxu0 0.0
  %1996 = vmatpush1.msra.mxu0 0.0
  %1997 = vmatprep.subr.mxu0 0.0
  %1998 = vmatpush1.msra.mxu0 0.0
  %1999 = vmatprep.subr.mxu0 0.0
  %2000 = vmatpush1.msra.mxu0 0.0
  %2001 = vmatprep.subr.mxu0 0.0
  %2002 = vmatpush1.msra.mxu0 0.0
  %2003 = vmatprep.subr.mxu0 0.0
  %2004 = vmatpush1.msra.mxu0 0.0
  %2005 = vmatprep.subr.mxu0 0.0
  %2006 = vmatpush1.msra.mxu0 0.0
  %2007 = vmatprep.subr.mxu0 0.0
  %2008 = vmatpush1.msra.mxu0 0.0
  %2009 = vmatprep.subr.mxu0 0.0
  %2010 = vmatpush1.msra.mxu0 0.0
  %2011 = vmatprep.subr.mxu0 0.0
  %2012 = vmatpush1.msra.mxu0 0.0
  %2013 = vmatprep.subr.mxu0 0.0
  %2014 = vmatpush1.msra.mxu0 0.0
  %2015 = vmatprep.subr.mxu0 0.0
  %2016 = vmatpush1.msra.mxu0 0.0
  %2017 = vmatprep.subr.mxu0 0.0
  %2018 = vmatpush1.msra.mxu0 0.0
  %2019 = vmatprep.subr.mxu0 0.0
  %2020 = vmatpush1.msra.mxu0 0.0
  %2021 = vmatprep.subr.mxu0 0.0
  %2022 = vmatpush1.msra.mxu0 0.0
  %2023 = vmatprep.subr.mxu0 0.0
  %2024 = vmatpush1.msra.mxu0 0.0
  %2025 = vmatprep.subr.mxu0 0.0
  %2026 = vmatpush1.msra.mxu0 0.0
  %2027 = vmatprep.subr.mxu0 0.0
  %2028 = vmatpush1.msra.mxu0 0.0
  %2029 = vmatprep.subr.mxu0 0.0
  %2030 = vmatpush1.msra.mxu0 0.0
  %2031 = vmatprep.subr.mxu0 0.0
  %2032 = vmatpush1.msra.mxu0 0.0
  %2033 = vmatprep.subr.mxu0 0.0
  %2034 = vmatpush1.msra.mxu0 0.0
  %2035 = vmatprep.mubr.f32.mxu0 0.0
  %2036 = vmatmul.mubr.f32.gmra.mrb[0].mxu0 %v1812
  %v2037 = vpop.f32.mrb[0].mxu0
  %v2038 = vadd.f32 0.0, %v2037
  %v2039 = vpop.f32.mrb[0].mxu0
  %v2040 = vadd.f32 0.0, %v2039
  %2041 = vmatprep.mubr.f32.mxu0 0.0
  %2042 = vmatmul.mubr.f32.gmra.mrb[0].mxu0 %v1815
  %v2043 = vpop.f32.mrb[0].mxu0
  %v2044 = vadd.f32 0.0, %v2043
  %v2045 = vpop.f32.mrb[0].mxu0
  %v2046 = vadd.f32 0.0, %v2045
  %2047 = vdwg.mxu0
  %v2048 = vadd.f32 %v1749, %v1884
  %v2049 = vadd.f32 %v1750, %v1886
  %v2050 = vadd.f32 %v1751, %v1961
  %v2051 = vadd.f32 %v1752, %v1963
  %v2052 = vadd.f32 %v1753, %v2038
  %v2053 = vadd.f32 %v1754, %v2040
  %v2054 = vadd.f32 %v1755, %v1890
  %v2055 = vadd.f32 %v1756, %v1892
  %v2056 = vadd.f32 %v1757, %v1967
  %v2057 = vadd.f32 %v1758, %v1969
  %v2058 = vadd.f32 %v1759, %v2044
  %v2059 = vadd.f32 %v1760, %v2046
  %s2060 = scalar_lea.vmem %s1, 112
  %v2061 = vld [vmem:[%s2060] sm:$0xff]
  %v2062 = vld [vmem:[%s2060 + $0x8] sm:$0xff]
  %2063 = vrot.lane.b32.xlu0 %v14, 91
  %v2064 = vpop.permute.xlu0 %2063
  %2065 = vrot.lane.b32.xlu0 %v15, 91
  %v2066 = vpop.permute.xlu0 %2065
  %2067 = vrot.lane.b32.xlu0 %v16, 91
  %v2068 = vpop.permute.xlu0 %2067
  %2069 = vrot.lane.b32.xlu0 %v17, 91
  %v2070 = vpop.permute.xlu0 %2069
  %2071 = vrot.lane.b32.xlu0 %v18, 91
  %v2072 = vpop.permute.xlu0 %2071
  %2073 = vrot.lane.b32.xlu0 %v19, 91
  %v2074 = vpop.permute.xlu0 %2073
  %2075 = vrot.lane.b32.xlu0 %v20, 91
  %v2076 = vpop.permute.xlu0 %2075
  %2077 = vrot.lane.b32.xlu0 %v21, 91
  %v2078 = vpop.permute.xlu0 %2077
  %2079 = vrot.lane.b32.xlu0 %v22, 91
  %v2080 = vpop.permute.xlu0 %2079
  %2081 = vrot.lane.b32.xlu0 %v23, 91
  %v2082 = vpop.permute.xlu0 %2081
  %2083 = vrot.lane.b32.xlu0 %v24, 91
  %v2084 = vpop.permute.xlu0 %2083
  %2085 = vrot.lane.b32.xlu0 %v25, 91
  %v2086 = vpop.permute.xlu0 %2085
  %vm2087 = vcmask 744448
  %v2088 = vsel %vm2087, %v2064, %v2066
  %v2089 = vsel %vm2087, %v2066, %v2068
  %v2090 = vsel %vm2087, %v2068, %v2070
  %v2091 = vsel %vm2087, %v2070, %v2072
  %v2092 = vsel %vm2087, %v2072, %v2074
  %v2093 = vsel %vm2087, %v2076, %v2078
  %v2094 = vsel %vm2087, %v2078, %v2080
  %v2095 = vsel %vm2087, %v2080, %v2082
  %v2096 = vsel %vm2087, %v2082, %v2084
  %v2097 = vsel %vm2087, %v2084, %v2086
  %v2111 = vsel %vm90, %v2061, 0
  %v2114 = vsel %vm90, %v2062, 0
  %2116 = vmatprep.subr.mxu0 %v2089
  %2117 = vmatpush1.msra.mxu0 %v2088
  %2118 = vmatprep.subr.mxu0 %v2094
  %2119 = vmatpush1.msra.mxu0 %v2093
  %2120 = vmatprep.subr.mxu0 0.0
  %2121 = vmatpush1.msra.mxu0 0.0
  %2122 = vmatprep.subr.mxu0 0.0
  %2123 = vmatpush1.msra.mxu0 0.0
  %2124 = vmatprep.subr.mxu0 0.0
  %2125 = vmatpush1.msra.mxu0 0.0
  %2126 = vmatprep.subr.mxu0 0.0
  %2127 = vmatpush1.msra.mxu0 0.0
  %2128 = vmatprep.subr.mxu0 0.0
  %2129 = vmatpush1.msra.mxu0 0.0
  %2130 = vmatprep.subr.mxu0 0.0
  %2131 = vmatpush1.msra.mxu0 0.0
  %2132 = vmatprep.subr.mxu0 0.0
  %2133 = vmatpush1.msra.mxu0 0.0
  %2134 = vmatprep.subr.mxu0 0.0
  %2135 = vmatpush1.msra.mxu0 0.0
  %2136 = vmatprep.subr.mxu0 0.0
  %2137 = vmatpush1.msra.mxu0 0.0
  %2138 = vmatprep.subr.mxu0 0.0
  %2139 = vmatpush1.msra.mxu0 0.0
  %2140 = vmatprep.subr.mxu0 0.0
  %2141 = vmatpush1.msra.mxu0 0.0
  %2142 = vmatprep.subr.mxu0 0.0
  %2143 = vmatpush1.msra.mxu0 0.0
  %2144 = vmatprep.subr.mxu0 0.0
  %2145 = vmatpush1.msra.mxu0 0.0
  %2146 = vmatprep.subr.mxu0 0.0
  %2147 = vmatpush1.msra.mxu0 0.0
  %2148 = vmatprep.subr.mxu0 0.0
  %2149 = vmatpush1.msra.mxu0 0.0
  %2150 = vmatprep.subr.mxu0 0.0
  %2151 = vmatpush1.msra.mxu0 0.0
  %2152 = vmatprep.subr.mxu0 0.0
  %2153 = vmatpush1.msra.mxu0 0.0
  %2154 = vmatprep.subr.mxu0 0.0
  %2155 = vmatpush1.msra.mxu0 0.0
  %2156 = vmatprep.subr.mxu0 0.0
  %2157 = vmatpush1.msra.mxu0 0.0
  %2158 = vmatprep.subr.mxu0 0.0
  %2159 = vmatpush1.msra.mxu0 0.0
  %2160 = vmatprep.subr.mxu0 0.0
  %2161 = vmatpush1.msra.mxu0 0.0
  %2162 = vmatprep.subr.mxu0 0.0
  %2163 = vmatpush1.msra.mxu0 0.0
  %2164 = vmatprep.subr.mxu0 0.0
  %2165 = vmatpush1.msra.mxu0 0.0
  %2166 = vmatprep.subr.mxu0 0.0
  %2167 = vmatpush1.msra.mxu0 0.0
  %2168 = vmatprep.subr.mxu0 0.0
  %2169 = vmatpush1.msra.mxu0 0.0
  %2170 = vmatprep.subr.mxu0 0.0
  %2171 = vmatpush1.msra.mxu0 0.0
  %2172 = vmatprep.subr.mxu0 0.0
  %2173 = vmatpush1.msra.mxu0 0.0
  %2174 = vmatprep.subr.mxu0 0.0
  %2175 = vmatpush1.msra.mxu0 0.0
  %2176 = vmatprep.subr.mxu0 0.0
  %2177 = vmatpush1.msra.mxu0 0.0
  %2178 = vmatprep.subr.mxu0 0.0
  %2179 = vmatpush1.msra.mxu0 0.0
  %2180 = vmatprep.mubr.f32.mxu0 0.0
  %2181 = vmatmul.mubr.f32.gmra.mrb[0].mxu0 %v2111
  %v2182 = vpop.f32.mrb[0].mxu0
  %v2183 = vadd.f32 0.0, %v2182
  %v2184 = vpop.f32.mrb[0].mxu0
  %v2185 = vadd.f32 0.0, %v2184
  %2186 = vmatprep.mubr.f32.mxu0 0.0
  %2187 = vmatmul.mubr.f32.gmra.mrb[0].mxu0 %v2114
  %v2188 = vpop.f32.mrb[0].mxu0
  %v2189 = vadd.f32 0.0, %v2188
  %v2190 = vpop.f32.mrb[0].mxu0
  %v2191 = vadd.f32 0.0, %v2190
  %2192 = vdwg.mxu0
  %2193 = vmatprep.subr.mxu0 %v2091
  %2194 = vmatpush1.msra.mxu0 %v2090
  %2195 = vmatprep.subr.mxu0 %v2096
  %2196 = vmatpush1.msra.mxu0 %v2095
  %2197 = vmatprep.subr.mxu0 0.0
  %2198 = vmatpush1.msra.mxu0 0.0
  %2199 = vmatprep.subr.mxu0 0.0
  %2200 = vmatpush1.msra.mxu0 0.0
  %2201 = vmatprep.subr.mxu0 0.0
  %2202 = vmatpush1.msra.mxu0 0.0
  %2203 = vmatprep.subr.mxu0 0.0
  %2204 = vmatpush1.msra.mxu0 0.0
  %2205 = vmatprep.subr.mxu0 0.0
  %2206 = vmatpush1.msra.mxu0 0.0
  %2207 = vmatprep.subr.mxu0 0.0
  %2208 = vmatpush1.msra.mxu0 0.0
  %2209 = vmatprep.subr.mxu0 0.0
  %2210 = vmatpush1.msra.mxu0 0.0
  %2211 = vmatprep.subr.mxu0 0.0
  %2212 = vmatpush1.msra.mxu0 0.0
  %2213 = vmatprep.subr.mxu0 0.0
  %2214 = vmatpush1.msra.mxu0 0.0
  %2215 = vmatprep.subr.mxu0 0.0
  %2216 = vmatpush1.msra.mxu0 0.0
  %2217 = vmatprep.subr.mxu0 0.0
  %2218 = vmatpush1.msra.mxu0 0.0
  %2219 = vmatprep.subr.mxu0 0.0
  %2220 = vmatpush1.msra.mxu0 0.0
  %2221 = vmatprep.subr.mxu0 0.0
  %2222 = vmatpush1.msra.mxu0 0.0
  %2223 = vmatprep.subr.mxu0 0.0
  %2224 = vmatpush1.msra.mxu0 0.0
  %2225 = vmatprep.subr.mxu0 0.0
  %2226 = vmatpush1.msra.mxu0 0.0
  %2227 = vmatprep.subr.mxu0 0.0
  %2228 = vmatpush1.msra.mxu0 0.0
  %2229 = vmatprep.subr.mxu0 0.0
  %2230 = vmatpush1.msra.mxu0 0.0
  %2231 = vmatprep.subr.mxu0 0.0
  %2232 = vmatpush1.msra.mxu0 0.0
  %2233 = vmatprep.subr.mxu0 0.0
  %2234 = vmatpush1.msra.mxu0 0.0
  %2235 = vmatprep.subr.mxu0 0.0
  %2236 = vmatpush1.msra.mxu0 0.0
  %2237 = vmatprep.subr.mxu0 0.0
  %2238 = vmatpush1.msra.mxu0 0.0
  %2239 = vmatprep.subr.mxu0 0.0
  %2240 = vmatpush1.msra.mxu0 0.0
  %2241 = vmatprep.subr.mxu0 0.0
  %2242 = vmatpush1.msra.mxu0 0.0
  %2243 = vmatprep.subr.mxu0 0.0
  %2244 = vmatpush1.msra.mxu0 0.0
  %2245 = vmatprep.subr.mxu0 0.0
  %2246 = vmatpush1.msra.mxu0 0.0
  %2247 = vmatprep.subr.mxu0 0.0
  %2248 = vmatpush1.msra.mxu0 0.0
  %2249 = vmatprep.subr.mxu0 0.0
  %2250 = vmatpush1.msra.mxu0 0.0
  %2251 = vmatprep.subr.mxu0 0.0
  %2252 = vmatpush1.msra.mxu0 0.0
  %2253 = vmatprep.subr.mxu0 0.0
  %2254 = vmatpush1.msra.mxu0 0.0
  %2255 = vmatprep.subr.mxu0 0.0
  %2256 = vmatpush1.msra.mxu0 0.0
  %2257 = vmatprep.mubr.f32.mxu0 0.0
  %2258 = vmatmul.mubr.f32.gmra.mrb[0].mxu0 %v2111
  %v2259 = vpop.f32.mrb[0].mxu0
  %v2260 = vadd.f32 0.0, %v2259
  %v2261 = vpop.f32.mrb[0].mxu0
  %v2262 = vadd.f32 0.0, %v2261
  %2263 = vmatprep.mubr.f32.mxu0 0.0
  %2264 = vmatmul.mubr.f32.gmra.mrb[0].mxu0 %v2114
  %v2265 = vpop.f32.mrb[0].mxu0
  %v2266 = vadd.f32 0.0, %v2265
  %v2267 = vpop.f32.mrb[0].mxu0
  %v2268 = vadd.f32 0.0, %v2267
  %2269 = vdwg.mxu0
  %2270 = vmatprep.subr.mxu0 %v2074
  %2271 = vmatpush1.msra.mxu0 %v2092
  %2272 = vmatprep.subr.mxu0 %v2086
  %2273 = vmatpush1.msra.mxu0 %v2097
  %2274 = vmatprep.subr.mxu0 0.0
  %2275 = vmatpush1.msra.mxu0 0.0
  %2276 = vmatprep.subr.mxu0 0.0
  %2277 = vmatpush1.msra.mxu0 0.0
  %2278 = vmatprep.subr.mxu0 0.0
  %2279 = vmatpush1.msra.mxu0 0.0
  %2280 = vmatprep.subr.mxu0 0.0
  %2281 = vmatpush1.msra.mxu0 0.0
  %2282 = vmatprep.subr.mxu0 0.0
  %2283 = vmatpush1.msra.mxu0 0.0
  %2284 = vmatprep.subr.mxu0 0.0
  %2285 = vmatpush1.msra.mxu0 0.0
  %2286 = vmatprep.subr.mxu0 0.0
  %2287 = vmatpush1.msra.mxu0 0.0
  %2288 = vmatprep.subr.mxu0 0.0
  %2289 = vmatpush1.msra.mxu0 0.0
  %2290 = vmatprep.subr.mxu0 0.0
  %2291 = vmatpush1.msra.mxu0 0.0
  %2292 = vmatprep.subr.mxu0 0.0
  %2293 = vmatpush1.msra.mxu0 0.0
  %2294 = vmatprep.subr.mxu0 0.0
  %2295 = vmatpush1.msra.mxu0 0.0
  %2296 = vmatprep.subr.mxu0 0.0
  %2297 = vmatpush1.msra.mxu0 0.0
  %2298 = vmatprep.subr.mxu0 0.0
  %2299 = vmatpush1.msra.mxu0 0.0
  %2300 = vmatprep.subr.mxu0 0.0
  %2301 = vmatpush1.msra.mxu0 0.0
  %2302 = vmatprep.subr.mxu0 0.0
  %2303 = vmatpush1.msra.mxu0 0.0
  %2304 = vmatprep.subr.mxu0 0.0
  %2305 = vmatpush1.msra.mxu0 0.0
  %2306 = vmatprep.subr.mxu0 0.0
  %2307 = vmatpush1.msra.mxu0 0.0
  %2308 = vmatprep.subr.mxu0 0.0
  %2309 = vmatpush1.msra.mxu0 0.0
  %2310 = vmatprep.subr.mxu0 0.0
  %2311 = vmatpush1.msra.mxu0 0.0
  %2312 = vmatprep.subr.mxu0 0.0
  %2313 = vmatpush1.msra.mxu0 0.0
  %2314 = vmatprep.subr.mxu0 0.0
  %2315 = vmatpush1.msra.mxu0 0.0
  %2316 = vmatprep.subr.mxu0 0.0
  %2317 = vmatpush1.msra.mxu0 0.0
  %2318 = vmatprep.subr.mxu0 0.0
  %2319 = vmatpush1.msra.mxu0 0.0
  %2320 = vmatprep.subr.mxu0 0.0
  %2321 = vmatpush1.msra.mxu0 0.0
  %2322 = vmatprep.subr.mxu0 0.0
  %2323 = vmatpush1.msra.mxu0 0.0
  %2324 = vmatprep.subr.mxu0 0.0
  %2325 = vmatpush1.msra.mxu0 0.0
  %2326 = vmatprep.subr.mxu0 0.0
  %2327 = vmatpush1.msra.mxu0 0.0
  %2328 = vmatprep.subr.mxu0 0.0
  %2329 = vmatpush1.msra.mxu0 0.0
  %2330 = vmatprep.subr.mxu0 0.0
  %2331 = vmatpush1.msra.mxu0 0.0
  %2332 = vmatprep.subr.mxu0 0.0
  %2333 = vmatpush1.msra.mxu0 0.0
  %2334 = vmatprep.mubr.f32.mxu0 0.0
  %2335 = vmatmul.mubr.f32.gmra.mrb[0].mxu0 %v2111
  %v2336 = vpop.f32.mrb[0].mxu0
  %v2337 = vadd.f32 0.0, %v2336
  %v2338 = vpop.f32.mrb[0].mxu0
  %v2339 = vadd.f32 0.0, %v2338
  %2340 = vmatprep.mubr.f32.mxu0 0.0
  %2341 = vmatmul.mubr.f32.gmra.mrb[0].mxu0 %v2114
  %v2342 = vpop.f32.mrb[0].mxu0
  %v2343 = vadd.f32 0.0, %v2342
  %v2344 = vpop.f32.mrb[0].mxu0
  %v2345 = vadd.f32 0.0, %v2344
  %2346 = vdwg.mxu0
  %v2347 = vadd.f32 %v2048, %v2183
  %v2348 = vadd.f32 %v2049, %v2185
  %v2349 = vadd.f32 %v2050, %v2260
  %v2350 = vadd.f32 %v2051, %v2262
  %v2351 = vadd.f32 %v2052, %v2337
  %v2352 = vadd.f32 %v2053, %v2339
  %v2353 = vadd.f32 %v2054, %v2189
  %v2354 = vadd.f32 %v2055, %v2191
  %v2355 = vadd.f32 %v2056, %v2266
  %v2356 = vadd.f32 %v2057, %v2268
  %v2357 = vadd.f32 %v2058, %v2343
  %v2358 = vadd.f32 %v2059, %v2345
  %s2359 = scalar_lea.vmem %s1, 128
  %v2360 = vld [vmem:[%s2359] sm:$0xff]
  %v2361 = vld [vmem:[%s2359 + $0x8] sm:$0xff]
  %2362 = vrot.lane.b32.xlu0 %v14, 90
  %v2363 = vpop.permute.xlu0 %2362
  %2364 = vrot.lane.b32.xlu0 %v15, 90
  %v2365 = vpop.permute.xlu0 %2364
  %2366 = vrot.lane.b32.xlu0 %v16, 90
  %v2367 = vpop.permute.xlu0 %2366
  %2368 = vrot.lane.b32.xlu0 %v17, 90
  %v2369 = vpop.permute.xlu0 %2368
  %2370 = vrot.lane.b32.xlu0 %v18, 90
  %v2371 = vpop.permute.xlu0 %2370
  %2372 = vrot.lane.b32.xlu0 %v19, 90
  %v2373 = vpop.permute.xlu0 %2372
  %2374 = vrot.lane.b32.xlu0 %v20, 90
  %v2375 = vpop.permute.xlu0 %2374
  %2376 = vrot.lane.b32.xlu0 %v21, 90
  %v2377 = vpop.permute.xlu0 %2376
  %2378 = vrot.lane.b32.xlu0 %v22, 90
  %v2379 = vpop.permute.xlu0 %2378
  %2380 = vrot.lane.b32.xlu0 %v23, 90
  %v2381 = vpop.permute.xlu0 %2380
  %2382 = vrot.lane.b32.xlu0 %v24, 90
  %v2383 = vpop.permute.xlu0 %2382
  %2384 = vrot.lane.b32.xlu0 %v25, 90
  %v2385 = vpop.permute.xlu0 %2384
  %vm2386 = vcmask 736256
  %v2387 = vsel %vm2386, %v2363, %v2365
  %v2388 = vsel %vm2386, %v2365, %v2367
  %v2389 = vsel %vm2386, %v2367, %v2369
  %v2390 = vsel %vm2386, %v2369, %v2371
  %v2391 = vsel %vm2386, %v2371, %v2373
  %v2392 = vsel %vm2386, %v2375, %v2377
  %v2393 = vsel %vm2386, %v2377, %v2379
  %v2394 = vsel %vm2386, %v2379, %v2381
  %v2395 = vsel %vm2386, %v2381, %v2383
  %v2396 = vsel %vm2386, %v2383, %v2385
  %v2410 = vsel %vm90, %v2360, 0
  %v2413 = vsel %vm90, %v2361, 0
  %2415 = vmatprep.subr.mxu0 %v2388
  %2416 = vmatpush1.msra.mxu0 %v2387
  %2417 = vmatprep.subr.mxu0 %v2393
  %2418 = vmatpush1.msra.mxu0 %v2392
  %2419 = vmatprep.subr.mxu0 0.0
  %2420 = vmatpush1.msra.mxu0 0.0
  %2421 = vmatprep.subr.mxu0 0.0
  %2422 = vmatpush1.msra.mxu0 0.0
  %2423 = vmatprep.subr.mxu0 0.0
  %2424 = vmatpush1.msra.mxu0 0.0
  %2425 = vmatprep.subr.mxu0 0.0
  %2426 = vmatpush1.msra.mxu0 0.0
  %2427 = vmatprep.subr.mxu0 0.0
  %2428 = vmatpush1.msra.mxu0 0.0
  %2429 = vmatprep.subr.mxu0 0.0
  %2430 = vmatpush1.msra.mxu0 0.0
  %2431 = vmatprep.subr.mxu0 0.0
  %2432 = vmatpush1.msra.mxu0 0.0
  %2433 = vmatprep.subr.mxu0 0.0
  %2434 = vmatpush1.msra.mxu0 0.0
  %2435 = vmatprep.subr.mxu0 0.0
  %2436 = vmatpush1.msra.mxu0 0.0
  %2437 = vmatprep.subr.mxu0 0.0
  %2438 = vmatpush1.msra.mxu0 0.0
  %2439 = vmatprep.subr.mxu0 0.0
  %2440 = vmatpush1.msra.mxu0 0.0
  %2441 = vmatprep.subr.mxu0 0.0
  %2442 = vmatpush1.msra.mxu0 0.0
  %2443 = vmatprep.subr.mxu0 0.0
  %2444 = vmatpush1.msra.mxu0 0.0
  %2445 = vmatprep.subr.mxu0 0.0
  %2446 = vmatpush1.msra.mxu0 0.0
  %2447 = vmatprep.subr.mxu0 0.0
  %2448 = vmatpush1.msra.mxu0 0.0
  %2449 = vmatprep.subr.mxu0 0.0
  %2450 = vmatpush1.msra.mxu0 0.0
  %2451 = vmatprep.subr.mxu0 0.0
  %2452 = vmatpush1.msra.mxu0 0.0
  %2453 = vmatprep.subr.mxu0 0.0
  %2454 = vmatpush1.msra.mxu0 0.0
  %2455 = vmatprep.subr.mxu0 0.0
  %2456 = vmatpush1.msra.mxu0 0.0
  %2457 = vmatprep.subr.mxu0 0.0
  %2458 = vmatpush1.msra.mxu0 0.0
  %2459 = vmatprep.subr.mxu0 0.0
  %2460 = vmatpush1.msra.mxu0 0.0
  %2461 = vmatprep.subr.mxu0 0.0
  %2462 = vmatpush1.msra.mxu0 0.0
  %2463 = vmatprep.subr.mxu0 0.0
  %2464 = vmatpush1.msra.mxu0 0.0
  %2465 = vmatprep.subr.mxu0 0.0
  %2466 = vmatpush1.msra.mxu0 0.0
  %2467 = vmatprep.subr.mxu0 0.0
  %2468 = vmatpush1.msra.mxu0 0.0
  %2469 = vmatprep.subr.mxu0 0.0
  %2470 = vmatpush1.msra.mxu0 0.0
  %2471 = vmatprep.subr.mxu0 0.0
  %2472 = vmatpush1.msra.mxu0 0.0
  %2473 = vmatprep.subr.mxu0 0.0
  %2474 = vmatpush1.msra.mxu0 0.0
  %2475 = vmatprep.subr.mxu0 0.0
  %2476 = vmatpush1.msra.mxu0 0.0
  %2477 = vmatprep.subr.mxu0 0.0
  %2478 = vmatpush1.msra.mxu0 0.0
  %2479 = vmatprep.mubr.f32.mxu0 0.0
  %2480 = vmatmul.mubr.f32.gmra.mrb[0].mxu0 %v2410
  %v2481 = vpop.f32.mrb[0].mxu0
  %v2482 = vadd.f32 0.0, %v2481
  %v2483 = vpop.f32.mrb[0].mxu0
  %v2484 = vadd.f32 0.0, %v2483
  %2485 = vmatprep.mubr.f32.mxu0 0.0
  %2486 = vmatmul.mubr.f32.gmra.mrb[0].mxu0 %v2413
  %v2487 = vpop.f32.mrb[0].mxu0
  %v2488 = vadd.f32 0.0, %v2487
  %v2489 = vpop.f32.mrb[0].mxu0
  %v2490 = vadd.f32 0.0, %v2489
  %2491 = vdwg.mxu0
  %2492 = vmatprep.subr.mxu0 %v2390
  %2493 = vmatpush1.msra.mxu0 %v2389
  %2494 = vmatprep.subr.mxu0 %v2395
  %2495 = vmatpush1.msra.mxu0 %v2394
  %2496 = vmatprep.subr.mxu0 0.0
  %2497 = vmatpush1.msra.mxu0 0.0
  %2498 = vmatprep.subr.mxu0 0.0
  %2499 = vmatpush1.msra.mxu0 0.0
  %2500 = vmatprep.subr.mxu0 0.0
  %2501 = vmatpush1.msra.mxu0 0.0
  %2502 = vmatprep.subr.mxu0 0.0
  %2503 = vmatpush1.msra.mxu0 0.0
  %2504 = vmatprep.subr.mxu0 0.0
  %2505 = vmatpush1.msra.mxu0 0.0
  %2506 = vmatprep.subr.mxu0 0.0
  %2507 = vmatpush1.msra.mxu0 0.0
  %2508 = vmatprep.subr.mxu0 0.0
  %2509 = vmatpush1.msra.mxu0 0.0
  %2510 = vmatprep.subr.mxu0 0.0
  %2511 = vmatpush1.msra.mxu0 0.0
  %2512 = vmatprep.subr.mxu0 0.0
  %2513 = vmatpush1.msra.mxu0 0.0
  %2514 = vmatprep.subr.mxu0 0.0
  %2515 = vmatpush1.msra.mxu0 0.0
  %2516 = vmatprep.subr.mxu0 0.0
  %2517 = vmatpush1.msra.mxu0 0.0
  %2518 = vmatprep.subr.mxu0 0.0
  %2519 = vmatpush1.msra.mxu0 0.0
  %2520 = vmatprep.subr.mxu0 0.0
  %2521 = vmatpush1.msra.mxu0 0.0
  %2522 = vmatprep.subr.mxu0 0.0
  %2523 = vmatpush1.msra.mxu0 0.0
  %2524 = vmatprep.subr.mxu0 0.0
  %2525 = vmatpush1.msra.mxu0 0.0
  %2526 = vmatprep.subr.mxu0 0.0
  %2527 = vmatpush1.msra.mxu0 0.0
  %2528 = vmatprep.subr.mxu0 0.0
  %2529 = vmatpush1.msra.mxu0 0.0
  %2530 = vmatprep.subr.mxu0 0.0
  %2531 = vmatpush1.msra.mxu0 0.0
  %2532 = vmatprep.subr.mxu0 0.0
  %2533 = vmatpush1.msra.mxu0 0.0
  %2534 = vmatprep.subr.mxu0 0.0
  %2535 = vmatpush1.msra.mxu0 0.0
  %2536 = vmatprep.subr.mxu0 0.0
  %2537 = vmatpush1.msra.mxu0 0.0
  %2538 = vmatprep.subr.mxu0 0.0
  %2539 = vmatpush1.msra.mxu0 0.0
  %2540 = vmatprep.subr.mxu0 0.0
  %2541 = vmatpush1.msra.mxu0 0.0
  %2542 = vmatprep.subr.mxu0 0.0
  %2543 = vmatpush1.msra.mxu0 0.0
  %2544 = vmatprep.subr.mxu0 0.0
  %2545 = vmatpush1.msra.mxu0 0.0
  %2546 = vmatprep.subr.mxu0 0.0
  %2547 = vmatpush1.msra.mxu0 0.0
  %2548 = vmatprep.subr.mxu0 0.0
  %2549 = vmatpush1.msra.mxu0 0.0
  %2550 = vmatprep.subr.mxu0 0.0
  %2551 = vmatpush1.msra.mxu0 0.0
  %2552 = vmatprep.subr.mxu0 0.0
  %2553 = vmatpush1.msra.mxu0 0.0
  %2554 = vmatprep.subr.mxu0 0.0
  %2555 = vmatpush1.msra.mxu0 0.0
  %2556 = vmatprep.mubr.f32.mxu0 0.0
  %2557 = vmatmul.mubr.f32.gmra.mrb[0].mxu0 %v2410
  %v2558 = vpop.f32.mrb[0].mxu0
  %v2559 = vadd.f32 0.0, %v2558
  %v2560 = vpop.f32.mrb[0].mxu0
  %v2561 = vadd.f32 0.0, %v2560
  %2562 = vmatprep.mubr.f32.mxu0 0.0
  %2563 = vmatmul.mubr.f32.gmra.mrb[0].mxu0 %v2413
  %v2564 = vpop.f32.mrb[0].mxu0
  %v2565 = vadd.f32 0.0, %v2564
  %v2566 = vpop.f32.mrb[0].mxu0
  %v2567 = vadd.f32 0.0, %v2566
  %2568 = vdwg.mxu0
  %2569 = vmatprep.subr.mxu0 %v2373
  %2570 = vmatpush1.msra.mxu0 %v2391
  %2571 = vmatprep.subr.mxu0 %v2385
  %2572 = vmatpush1.msra.mxu0 %v2396
  %2573 = vmatprep.subr.mxu0 0.0
  %2574 = vmatpush1.msra.mxu0 0.0
  %2575 = vmatprep.subr.mxu0 0.0
  %2576 = vmatpush1.msra.mxu0 0.0
  %2577 = vmatprep.subr.mxu0 0.0
  %2578 = vmatpush1.msra.mxu0 0.0
  %2579 = vmatprep.subr.mxu0 0.0
  %2580 = vmatpush1.msra.mxu0 0.0
  %2581 = vmatprep.subr.mxu0 0.0
  %2582 = vmatpush1.msra.mxu0 0.0
  %2583 = vmatprep.subr.mxu0 0.0
  %2584 = vmatpush1.msra.mxu0 0.0
  %2585 = vmatprep.subr.mxu0 0.0
  %2586 = vmatpush1.msra.mxu0 0.0
  %2587 = vmatprep.subr.mxu0 0.0
  %2588 = vmatpush1.msra.mxu0 0.0
  %2589 = vmatprep.subr.mxu0 0.0
  %2590 = vmatpush1.msra.mxu0 0.0
  %2591 = vmatprep.subr.mxu0 0.0
  %2592 = vmatpush1.msra.mxu0 0.0
  %2593 = vmatprep.subr.mxu0 0.0
  %2594 = vmatpush1.msra.mxu0 0.0
  %2595 = vmatprep.subr.mxu0 0.0
  %2596 = vmatpush1.msra.mxu0 0.0
  %2597 = vmatprep.subr.mxu0 0.0
  %2598 = vmatpush1.msra.mxu0 0.0
  %2599 = vmatprep.subr.mxu0 0.0
  %2600 = vmatpush1.msra.mxu0 0.0
  %2601 = vmatprep.subr.mxu0 0.0
  %2602 = vmatpush1.msra.mxu0 0.0
  %2603 = vmatprep.subr.mxu0 0.0
  %2604 = vmatpush1.msra.mxu0 0.0
  %2605 = vmatprep.subr.mxu0 0.0
  %2606 = vmatpush1.msra.mxu0 0.0
  %2607 = vmatprep.subr.mxu0 0.0
  %2608 = vmatpush1.msra.mxu0 0.0
  %2609 = vmatprep.subr.mxu0 0.0
  %2610 = vmatpush1.msra.mxu0 0.0
  %2611 = vmatprep.subr.mxu0 0.0
  %2612 = vmatpush1.msra.mxu0 0.0
  %2613 = vmatprep.subr.mxu0 0.0
  %2614 = vmatpush1.msra.mxu0 0.0
  %2615 = vmatprep.subr.mxu0 0.0
  %2616 = vmatpush1.msra.mxu0 0.0
  %2617 = vmatprep.subr.mxu0 0.0
  %2618 = vmatpush1.msra.mxu0 0.0
  %2619 = vmatprep.subr.mxu0 0.0
  %2620 = vmatpush1.msra.mxu0 0.0
  %2621 = vmatprep.subr.mxu0 0.0
  %2622 = vmatpush1.msra.mxu0 0.0
  %2623 = vmatprep.subr.mxu0 0.0
  %2624 = vmatpush1.msra.mxu0 0.0
  %2625 = vmatprep.subr.mxu0 0.0
  %2626 = vmatpush1.msra.mxu0 0.0
  %2627 = vmatprep.subr.mxu0 0.0
  %2628 = vmatpush1.msra.mxu0 0.0
  %2629 = vmatprep.subr.mxu0 0.0
  %2630 = vmatpush1.msra.mxu0 0.0
  %2631 = vmatprep.subr.mxu0 0.0
  %2632 = vmatpush1.msra.mxu0 0.0
  %2633 = vmatprep.mubr.f32.mxu0 0.0
  %2634 = vmatmul.mubr.f32.gmra.mrb[0].mxu0 %v2410
  %v2635 = vpop.f32.mrb[0].mxu0
  %v2636 = vadd.f32 0.0, %v2635
  %v2637 = vpop.f32.mrb[0].mxu0
  %v2638 = vadd.f32 0.0, %v2637
  %2639 = vmatprep.mubr.f32.mxu0 0.0
  %2640 = vmatmul.mubr.f32.gmra.mrb[0].mxu0 %v2413
  %v2641 = vpop.f32.mrb[0].mxu0
  %v2642 = vadd.f32 0.0, %v2641
  %v2643 = vpop.f32.mrb[0].mxu0
  %v2644 = vadd.f32 0.0, %v2643
  %2645 = vdwg.mxu0
  %v2646 = vadd.f32 %v2347, %v2482
  %v2647 = vadd.f32 %v2348, %v2484
  %v2648 = vadd.f32 %v2349, %v2559
  %v2649 = vadd.f32 %v2350, %v2561
  %v2650 = vadd.f32 %v2351, %v2636
  %v2651 = vadd.f32 %v2352, %v2638
  %v2652 = vadd.f32 %v2353, %v2488
  %v2653 = vadd.f32 %v2354, %v2490
  %v2654 = vadd.f32 %v2355, %v2565
  %v2655 = vadd.f32 %v2356, %v2567
  %v2656 = vadd.f32 %v2357, %v2642
  %v2657 = vadd.f32 %v2358, %v2644
  %v2658 = vld [vmem:[%s2] sm:$0xff]
  %v2659 = vld [vmem:[%s2 + $0x8] sm:$0xff]
  %2661 = vset.pattern.permute.xlu0 0
  %2662 = vperm.xlu0 %2661, %v2658
  %v2663 = vpop.permute.xlu0 %2662
  %2666 = vset.pattern.permute.xlu0 0
  %2667 = vperm.xlu0 %2666, %v2659
  %v2668 = vpop.permute.xlu0 %2667
  %v2670 = vadd.f32 %v2646, %v2663
  %v2671 = vadd.f32 %v2647, %v2663
  %v2672 = vadd.f32 %v2648, %v2663
  %v2673 = vadd.f32 %v2649, %v2663
  %v2674 = vadd.f32 %v2650, %v2663
  %v2675 = vadd.f32 %v2651, %v2663
  %v2676 = vadd.f32 %v2652, %v2668
  %v2677 = vadd.f32 %v2653, %v2668
  %v2678 = vadd.f32 %v2654, %v2668
  %v2679 = vadd.f32 %v2655, %v2668
  %v2680 = vadd.f32 %v2656, %v2668
  %v2681 = vadd.f32 %v2657, %v2668
  %2682 = vst [vmem:[%s3] sm:$0xff] %v2670
  %2683 = vst [vmem:[%s3 + $0x8] sm:$0xff] %v2671
  %2684 = vst [vmem:[%s3 + $0x10] sm:$0xff] %v2672
  %2685 = vst [vmem:[%s3 + $0x18] sm:$0xff] %v2673
  %2686 = vst [vmem:[%s3 + $0x20] sm:$0xff] %v2674
  %vm2687 = vcmask 64512
  %2688 = vst.msk [vmem:[%s3 + $0x28] sm:$0xff] %vm2687, %v2675
  %2689 = vst [vmem:[%s3 + $0x30] sm:$0xff] %v2676
  %2690 = vst [vmem:[%s3 + $0x38] sm:$0xff] %v2677
  %2691 = vst [vmem:[%s3 + $0x40] sm:$0xff] %v2678
  %2692 = vst [vmem:[%s3 + $0x48] sm:$0xff] %v2679
  %2693 = vst [vmem:[%s3 + $0x50] sm:$0xff] %v2680
  %2694 = vst.msk [vmem:[%s3 + $0x58] sm:$0xff] %vm2687, %v2681
  // Predicated region
  $region14: #{uperhead_forward.21} parent=0 // pred_check
    _
  $region15: #{uperhead_forward.21} parent=0 // pred_check_branch
    %2696 = sbr.rel (0) target = $region17
  $region16: #{uperhead_forward.21} parent=0 // pred_region
    _
  $region17: #{uperhead_forward.21} parent=0 // pred_fallthru
    _
  // Predicated region
  $region18: #{uperhead_forward.21} parent=0 // pred_check
    _
  $region19: #{uperhead_forward.21} parent=0 // pred_check_branch
    %2698 = sbr.rel (0) target = $region21
  $region20: #{uperhead_forward.21} parent=0 // pred_region
    _
  $region21: #{uperhead_forward.21} parent=0 // pred_fallthru
    _

// kernel: uperhead_forward.26
$region0: #{uperhead_forward.26}
  #allocation0 [shape = 'u32[]', space=smem, size = 0x4, offset = 0x4, fixed_abs, tag = 'smem constant byte address 0x4 - core index']
  #allocation1 [shape = 'u32[144,128]{1,0:T(1,128)}', space=vmem, size = 0x12000, scoped, tag = 'internal scratch']
  %s0 = inlined_call_operand.vmem [shape: f32[20,64], index: 0, kind: input, shape index: {}]
  %s1 = inlined_call_operand.vmem [shape: f32[64,512], index: 1, kind: input, shape index: {}]
  %s2 = inlined_call_operand.vmem [shape: f32[20,1], index: 2, kind: input, shape index: {}]
  %s3 = inlined_call_operand.vmem [shape: f32[20,512], index: 3, kind: output, shape index: {}]
  %s4 = sld [smem:[#allocation0]]
  $region22: #{uperhead_forward.26} parent=0
    _
  %s6 = ssub.s32 1, %s4
  %s7 = scalar_select 0, %s6, %s4
  // Predicated region
  $region2: #{uperhead_forward.26} parent=0 // pred_check
    _
  $region3: #{uperhead_forward.26} parent=0 // pred_check_branch
    %9 = sbr.rel (0) target = $region5
  $region4: #{uperhead_forward.26} parent=0 // pred_region
    _
  $region5: #{uperhead_forward.26} parent=0 // pred_fallthru
    _
  // Predicated region
  $region6: #{uperhead_forward.26} parent=0 // pred_check
    _
  $region7: #{uperhead_forward.26} parent=0 // pred_check_branch
    %11 = sbr.rel (0) target = $region9
  $region8: #{uperhead_forward.26} parent=0 // pred_region
    _
  $region9: #{uperhead_forward.26} parent=0 // pred_fallthru
    _
  // Predicated region
  $region10: #{uperhead_forward.26} parent=0 // pred_check
    _
  $region11: #{uperhead_forward.26} parent=0 // pred_check_branch
    %13 = sbr.rel (0) target = $region13
  $region12: #{uperhead_forward.26} parent=0 // pred_region
    _
  $region13: #{uperhead_forward.26} parent=0 // pred_fallthru
    _
  %v14 = vld [vmem:[%s0] sm:$0xff]
  %v15 = vld [vmem:[%s0 + $0x8] sm:$0xff]
  %v16 = vld [vmem:[%s0 + $0x10] sm:$0xf]
  %v17 = vld [vmem:[%s1] sm:$0xff]
  %v18 = vld [vmem:[%s1 + $0x8] sm:$0xff]
  %v19 = vld [vmem:[%s1 + $0x10] sm:$0xff]
  %v20 = vld [vmem:[%s1 + $0x18] sm:$0xff]
  %v21 = vld [vmem:[%s1 + $0x20] sm:$0xff]
  %v22 = vld [vmem:[%s1 + $0x28] sm:$0xff]
  %v23 = vld [vmem:[%s1 + $0x30] sm:$0xff]
  %v24 = vld [vmem:[%s1 + $0x38] sm:$0xff]
  %v25 = vld [vmem:[%s1 + $0x40] sm:$0xff]
  %v26 = vld [vmem:[%s1 + $0x48] sm:$0xff]
  %v27 = vld [vmem:[%s1 + $0x50] sm:$0xff]
  %v28 = vld [vmem:[%s1 + $0x58] sm:$0xff]
  %v29 = vld [vmem:[%s1 + $0x60] sm:$0xff]
  %v30 = vld [vmem:[%s1 + $0x68] sm:$0xff]
  %v31 = vld [vmem:[%s1 + $0x70] sm:$0xff]
  %v32 = vld [vmem:[%s1 + $0x78] sm:$0xff]
  %v33 = vld [vmem:[%s1 + $0x80] sm:$0xff]
  %v34 = vld [vmem:[%s1 + $0x88] sm:$0xff]
  %v35 = vld [vmem:[%s1 + $0x90] sm:$0xff]
  %v36 = vld [vmem:[%s1 + $0x98] sm:$0xff]
  %v37 = vld [vmem:[%s1 + $0xa0] sm:$0xff]
  %v38 = vld [vmem:[%s1 + $0xa8] sm:$0xff]
  %v39 = vld [vmem:[%s1 + $0xb0] sm:$0xff]
  %v40 = vld [vmem:[%s1 + $0xb8] sm:$0xff]
  %v41 = vld [vmem:[%s1 + $0xc0] sm:$0xff]
  %v42 = vld [vmem:[%s1 + $0xc8] sm:$0xff]
  %v43 = vld [vmem:[%s1 + $0xd0] sm:$0xff]
  %v44 = vld [vmem:[%s1 + $0xd8] sm:$0xff]
  %v45 = vld [vmem:[%s1 + $0xe0] sm:$0xff]
  %v46 = vld [vmem:[%s1 + $0xe8] sm:$0xff]
  %v47 = vld [vmem:[%s1 + $0xf0] sm:$0xff]
  %v48 = vld [vmem:[%s1 + $0xf8] sm:$0xff]
  %v49 = vld [vmem:[%s2] sm:$0xff]
  %v50 = vld [vmem:[%s2 + $0x8] sm:$0xff]
  %v51 = vld [vmem:[%s2 + $0x10] sm:$0xf]
  %53 = vset.pattern.permute.xlu0 0
  %54 = vperm.xlu0 %53, %v49
  %v55 = vpop.permute.xlu0 %54
  %58 = vset.pattern.permute.xlu0 0
  %59 = vperm.xlu0 %58, %v50
  %v60 = vpop.permute.xlu0 %59
  %63 = vset.pattern.permute.xlu0 0
  %64 = vperm.xlu0 %63, %v51
  %v65 = vpop.permute.xlu0 %64
  %vm67 = vcmask 523264
  %v69 = vsel %vm67, %v14, 0
  %v72 = vsel %vm67, %v15, 0
  %v75 = vsel %vm67, %v16, 0
  %77 = vmatprep.subr.mxu0 %v18
  %78 = vmatpush1.msra.mxu0 %v17
  %79 = vmatprep.subr.mxu0 %v22
  %80 = vmatpush1.msra.mxu0 %v21
  %81 = vmatprep.subr.mxu0 %v26
  %82 = vmatpush1.msra.mxu0 %v25
  %83 = vmatprep.subr.mxu0 %v30
  %84 = vmatpush1.msra.mxu0 %v29
  %85 = vmatprep.subr.mxu0 %v34
  %86 = vmatpush1.msra.mxu0 %v33
  %87 = vmatprep.subr.mxu0 %v38
  %88 = vmatpush1.msra.mxu0 %v37
  %89 = vmatprep.subr.mxu0 %v42
  %90 = vmatpush1.msra.mxu0 %v41
  %91 = vmatprep.subr.mxu0 %v46
  %92 = vmatpush1.msra.mxu0 %v45
  %93 = vmatprep.subr.mxu0 0.0
  %94 = vmatpush1.msra.mxu0 0.0
  %95 = vmatprep.subr.mxu0 0.0
  %96 = vmatpush1.msra.mxu0 0.0
  %97 = vmatprep.subr.mxu0 0.0
  %98 = vmatpush1.msra.mxu0 0.0
  %99 = vmatprep.subr.mxu0 0.0
  %100 = vmatpush1.msra.mxu0 0.0
  %101 = vmatprep.subr.mxu0 0.0
  %102 = vmatpush1.msra.mxu0 0.0
  %103 = vmatprep.subr.mxu0 0.0
  %104 = vmatpush1.msra.mxu0 0.0
  %105 = vmatprep.subr.mxu0 0.0
  %106 = vmatpush1.msra.mxu0 0.0
  %107 = vmatprep.subr.mxu0 0.0
  %108 = vmatpush1.msra.mxu0 0.0
  %109 = vmatprep.subr.mxu0 0.0
  %110 = vmatpush1.msra.mxu0 0.0
  %111 = vmatprep.subr.mxu0 0.0
  %112 = vmatpush1.msra.mxu0 0.0
  %113 = vmatprep.subr.mxu0 0.0
  %114 = vmatpush1.msra.mxu0 0.0
  %115 = vmatprep.subr.mxu0 0.0
  %116 = vmatpush1.msra.mxu0 0.0
  %117 = vmatprep.subr.mxu0 0.0
  %118 = vmatpush1.msra.mxu0 0.0
  %119 = vmatprep.subr.mxu0 0.0
  %120 = vmatpush1.msra.mxu0 0.0
  %121 = vmatprep.subr.mxu0 0.0
  %122 = vmatpush1.msra.mxu0 0.0
  %123 = vmatprep.subr.mxu0 0.0
  %124 = vmatpush1.msra.mxu0 0.0
  %125 = vmatprep.subr.mxu0 0.0
  %126 = vmatpush1.msra.mxu0 0.0
  %127 = vmatprep.subr.mxu0 0.0
  %128 = vmatpush1.msra.mxu0 0.0
  %129 = vmatprep.subr.mxu0 0.0
  %130 = vmatpush1.msra.mxu0 0.0
  %131 = vmatprep.subr.mxu0 0.0
  %132 = vmatpush1.msra.mxu0 0.0
  %133 = vmatprep.subr.mxu0 0.0
  %134 = vmatpush1.msra.mxu0 0.0
  %135 = vmatprep.subr.mxu0 0.0
  %136 = vmatpush1.msra.mxu0 0.0
  %137 = vmatprep.subr.mxu0 0.0
  %138 = vmatpush1.msra.mxu0 0.0
  %139 = vmatprep.subr.mxu0 0.0
  %140 = vmatpush1.msra.mxu0 0.0
  %141 = vmatprep.mubr.f32.mxu0 0.0
  %142 = vmatmul.mubr.f32.gmra.mrb[0].mxu0 %v69
  %v143 = vpop.f32.mrb[0].mxu0
  %v144 = vadd.f32 %v55, %v143
  %v145 = vpop.f32.mrb[0].mxu0
  %v146 = vadd.f32 %v55, %v145
  %147 = vmatprep.mubr.f32.mxu0 0.0
  %148 = vmatmul.mubr.f32.gmra.mrb[0].mxu0 %v72
  %v149 = vpop.f32.mrb[0].mxu0
  %v150 = vadd.f32 %v60, %v149
  %v151 = vpop.f32.mrb[0].mxu0
  %v152 = vadd.f32 %v60, %v151
  %153 = vmatprep.mubr.f32.mxu0 0.0
  %154 = vmatmul.mubr.f32.gmra.mrb[0].mxu0 %v75
  %v155 = vpop.f32.mrb[0].mxu0
  %v156 = vadd.f32 %v65, %v155
  %v157 = vpop.f32.mrb[0].mxu0
  %v158 = vadd.f32 %v65, %v157
  %159 = vdwg.mxu0
  %160 = vmatprep.subr.mxu0 %v20
  %161 = vmatpush1.msra.mxu0 %v19
  %162 = vmatprep.subr.mxu0 %v24
  %163 = vmatpush1.msra.mxu0 %v23
  %164 = vmatprep.subr.mxu0 %v28
  %165 = vmatpush1.msra.mxu0 %v27
  %166 = vmatprep.subr.mxu0 %v32
  %167 = vmatpush1.msra.mxu0 %v31
  %168 = vmatprep.subr.mxu0 %v36
  %169 = vmatpush1.msra.mxu0 %v35
  %170 = vmatprep.subr.mxu0 %v40
  %171 = vmatpush1.msra.mxu0 %v39
  %172 = vmatprep.subr.mxu0 %v44
  %173 = vmatpush1.msra.mxu0 %v43
  %174 = vmatprep.subr.mxu0 %v48
  %175 = vmatpush1.msra.mxu0 %v47
  %176 = vmatprep.subr.mxu0 0.0
  %177 = vmatpush1.msra.mxu0 0.0
  %178 = vmatprep.subr.mxu0 0.0
  %179 = vmatpush1.msra.mxu0 0.0
  %180 = vmatprep.subr.mxu0 0.0
  %181 = vmatpush1.msra.mxu0 0.0
  %182 = vmatprep.subr.mxu0 0.0
  %183 = vmatpush1.msra.mxu0 0.0
  %184 = vmatprep.subr.mxu0 0.0
  %185 = vmatpush1.msra.mxu0 0.0
  %186 = vmatprep.subr.mxu0 0.0
  %187 = vmatpush1.msra.mxu0 0.0
  %188 = vmatprep.subr.mxu0 0.0
  %189 = vmatpush1.msra.mxu0 0.0
  %190 = vmatprep.subr.mxu0 0.0
  %191 = vmatpush1.msra.mxu0 0.0
  %192 = vmatprep.subr.mxu0 0.0
  %193 = vmatpush1.msra.mxu0 0.0
  %194 = vmatprep.subr.mxu0 0.0
  %195 = vmatpush1.msra.mxu0 0.0
  %196 = vmatprep.subr.mxu0 0.0
  %197 = vmatpush1.msra.mxu0 0.0
  %198 = vmatprep.subr.mxu0 0.0
  %199 = vmatpush1.msra.mxu0 0.0
  %200 = vmatprep.subr.mxu0 0.0
  %201 = vmatpush1.msra.mxu0 0.0
  %202 = vmatprep.subr.mxu0 0.0
  %203 = vmatpush1.msra.mxu0 0.0
  %204 = vmatprep.subr.mxu0 0.0
  %205 = vmatpush1.msra.mxu0 0.0
  %206 = vmatprep.subr.mxu0 0.0
  %207 = vmatpush1.msra.mxu0 0.0
  %208 = vmatprep.subr.mxu0 0.0
  %209 = vmatpush1.msra.mxu0 0.0
  %210 = vmatprep.subr.mxu0 0.0
  %211 = vmatpush1.msra.mxu0 0.0
  %212 = vmatprep.subr.mxu0 0.0
  %213 = vmatpush1.msra.mxu0 0.0
  %214 = vmatprep.subr.mxu0 0.0
  %215 = vmatpush1.msra.mxu0 0.0
  %216 = vmatprep.subr.mxu0 0.0
  %217 = vmatpush1.msra.mxu0 0.0
  %218 = vmatprep.subr.mxu0 0.0
  %219 = vmatpush1.msra.mxu0 0.0
  %220 = vmatprep.subr.mxu0 0.0
  %221 = vmatpush1.msra.mxu0 0.0
  %222 = vmatprep.subr.mxu0 0.0
  %223 = vmatpush1.msra.mxu0 0.0
  %224 = vmatprep.mubr.f32.mxu0 0.0
  %225 = vmatmul.mubr.f32.gmra.mrb[0].mxu0 %v69
  %v226 = vpop.f32.mrb[0].mxu0
  %v227 = vadd.f32 %v55, %v226
  %v228 = vpop.f32.mrb[0].mxu0
  %v229 = vadd.f32 %v55, %v228
  %230 = vmatprep.mubr.f32.mxu0 0.0
  %231 = vmatmul.mubr.f32.gmra.mrb[0].mxu0 %v72
  %v232 = vpop.f32.mrb[0].mxu0
  %v233 = vadd.f32 %v60, %v232
  %v234 = vpop.f32.mrb[0].mxu0
  %v235 = vadd.f32 %v60, %v234
  %236 = vmatprep.mubr.f32.mxu0 0.0
  %237 = vmatmul.mubr.f32.gmra.mrb[0].mxu0 %v75
  %v238 = vpop.f32.mrb[0].mxu0
  %v239 = vadd.f32 %v65, %v238
  %v240 = vpop.f32.mrb[0].mxu0
  %v241 = vadd.f32 %v65, %v240
  %242 = vdwg.mxu0
  %243 = vst [vmem:[%s3] sm:$0xff] %v144
  %244 = vst [vmem:[%s3 + $0x8] sm:$0xff] %v146
  %245 = vst [vmem:[%s3 + $0x10] sm:$0xff] %v227
  %246 = vst [vmem:[%s3 + $0x18] sm:$0xff] %v229
  %247 = vst [vmem:[%s3 + $0x20] sm:$0xff] %v150
  %248 = vst [vmem:[%s3 + $0x28] sm:$0xff] %v152
  %249 = vst [vmem:[%s3 + $0x30] sm:$0xff] %v233
  %250 = vst [vmem:[%s3 + $0x38] sm:$0xff] %v235
  %251 = vst [vmem:[%s3 + $0x40] sm:$0xf] %v156
  %252 = vst [vmem:[%s3 + $0x48] sm:$0xf] %v158
  %253 = vst [vmem:[%s3 + $0x50] sm:$0xf] %v239
  %254 = vst [vmem:[%s3 + $0x58] sm:$0xf] %v241
  // Predicated region
  $region14: #{uperhead_forward.26} parent=0 // pred_check
    _
  $region15: #{uperhead_forward.26} parent=0 // pred_check_branch
    %256 = sbr.rel (0) target = $region17
  $region16: #{uperhead_forward.26} parent=0 // pred_region
    _
  $region17: #{uperhead_forward.26} parent=0 // pred_fallthru
    _
  // Predicated region
  $region18: #{uperhead_forward.26} parent=0 // pred_check
    _
  $region19: #{uperhead_forward.26} parent=0 // pred_check_branch
    %258 = sbr.rel (0) target = $region21
  $region20: #{uperhead_forward.26} parent=0 // pred_region
    _
  $region21: #{uperhead_forward.26} parent=0 // pred_fallthru
    _

// kernel: uperhead_forward.27
$region0: #{uperhead_forward.27}
  #allocation0 [shape = 'u32[]', space=smem, size = 0x4, offset = 0x4, fixed_abs, tag = 'smem constant byte address 0x4 - core index']
  #allocation1 [shape = 'u32[144,128]{1,0:T(1,128)}', space=vmem, size = 0x12000, scoped, tag = 'internal scratch']
  %s0 = inlined_call_operand.vmem [shape: f32[64,686], index: 0, kind: input, shape index: {}]
  %s1 = inlined_call_operand.vmem [shape: f32[9,5,64], index: 1, kind: input, shape index: {}]
  %s2 = inlined_call_operand.vmem [shape: f32[5,1], index: 2, kind: input, shape index: {}]
  %s3 = inlined_call_operand.vmem [shape: f32[5,648], index: 3, kind: output, shape index: {}]
  %s4 = sld [smem:[#allocation0]]
  $region22: #{uperhead_forward.27} parent=0
    _
  %s6 = ssub.s32 1, %s4
  %s7 = scalar_select 0, %s6, %s4
  // Predicated region
  $region2: #{uperhead_forward.27} parent=0 // pred_check
    _
  $region3: #{uperhead_forward.27} parent=0 // pred_check_branch
    %9 = sbr.rel (0) target = $region5
  $region4: #{uperhead_forward.27} parent=0 // pred_region
    _
  $region5: #{uperhead_forward.27} parent=0 // pred_fallthru
    _
  // Predicated region
  $region6: #{uperhead_forward.27} parent=0 // pred_check
    _
  $region7: #{uperhead_forward.27} parent=0 // pred_check_branch
    %11 = sbr.rel (0) target = $region9
  $region8: #{uperhead_forward.27} parent=0 // pred_region
    _
  $region9: #{uperhead_forward.27} parent=0 // pred_fallthru
    _
  // Predicated region
  $region10: #{uperhead_forward.27} parent=0 // pred_check
    _
  $region11: #{uperhead_forward.27} parent=0 // pred_check_branch
    %13 = sbr.rel (0) target = $region13
  $region12: #{uperhead_forward.27} parent=0 // pred_region
    _
  $region13: #{uperhead_forward.27} parent=0 // pred_fallthru
    _
  %v14 = vld [vmem:[%s0] sm:$0xff]
  %v15 = vld [vmem:[%s0 + $0x8] sm:$0xff]
  %v16 = vld [vmem:[%s0 + $0x10] sm:$0xff]
  %v17 = vld [vmem:[%s0 + $0x18] sm:$0xff]
  %v18 = vld [vmem:[%s0 + $0x20] sm:$0xff]
  %v19 = vld [vmem:[%s0 + $0x28] sm:$0xff]
  %v20 = vld [vmem:[%s0 + $0x30] sm:$0xff]
  %v21 = vld [vmem:[%s0 + $0x38] sm:$0xff]
  %v22 = vld [vmem:[%s0 + $0x40] sm:$0xff]
  %v23 = vld [vmem:[%s0 + $0x48] sm:$0xff]
  %v24 = vld [vmem:[%s0 + $0x50] sm:$0xff]
  %v25 = vld [vmem:[%s0 + $0x58] sm:$0xff]
  %v26 = vld [vmem:[%s0 + $0x60] sm:$0xff]
  %v27 = vld [vmem:[%s0 + $0x68] sm:$0xff]
  %v28 = vld [vmem:[%s0 + $0x70] sm:$0xff]
  %v29 = vld [vmem:[%s0 + $0x78] sm:$0xff]
  %v30 = vld [vmem:[%s0 + $0x80] sm:$0xff]
  %v31 = vld [vmem:[%s0 + $0x88] sm:$0xff]
  %v32 = vld [vmem:[%s0 + $0x90] sm:$0xff]
  %v33 = vld [vmem:[%s0 + $0x98] sm:$0xff]
  %v34 = vld [vmem:[%s0 + $0xa0] sm:$0xff]
  %v35 = vld [vmem:[%s0 + $0xa8] sm:$0xff]
  %v36 = vld [vmem:[%s0 + $0xb0] sm:$0xff]
  %v37 = vld [vmem:[%s0 + $0xb8] sm:$0xff]
  %v38 = vld [vmem:[%s0 + $0xc0] sm:$0xff]
  %v39 = vld [vmem:[%s0 + $0xc8] sm:$0xff]
  %v40 = vld [vmem:[%s0 + $0xd0] sm:$0xff]
  %v41 = vld [vmem:[%s0 + $0xd8] sm:$0xff]
  %v42 = vld [vmem:[%s0 + $0xe0] sm:$0xff]
  %v43 = vld [vmem:[%s0 + $0xe8] sm:$0xff]
  %v44 = vld [vmem:[%s0 + $0xf0] sm:$0xff]
  %v45 = vld [vmem:[%s0 + $0xf8] sm:$0xff]
  %v46 = vld [vmem:[%s0 + $0x100] sm:$0xff]
  %v47 = vld [vmem:[%s0 + $0x108] sm:$0xff]
  %v48 = vld [vmem:[%s0 + $0x110] sm:$0xff]
  %v49 = vld [vmem:[%s0 + $0x118] sm:$0xff]
  %v50 = vld [vmem:[%s0 + $0x120] sm:$0xff]
  %v51 = vld [vmem:[%s0 + $0x128] sm:$0xff]
  %v52 = vld [vmem:[%s0 + $0x130] sm:$0xff]
  %v53 = vld [vmem:[%s0 + $0x138] sm:$0xff]
  %v54 = vld [vmem:[%s0 + $0x140] sm:$0xff]
  %v55 = vld [vmem:[%s0 + $0x148] sm:$0xff]
  %v56 = vld [vmem:[%s0 + $0x150] sm:$0xff]
  %v57 = vld [vmem:[%s0 + $0x158] sm:$0xff]
  %v58 = vld [vmem:[%s0 + $0x160] sm:$0xff]
  %v59 = vld [vmem:[%s0 + $0x168] sm:$0xff]
  %v60 = vld [vmem:[%s0 + $0x170] sm:$0xff]
  %v61 = vld [vmem:[%s0 + $0x178] sm:$0xff]
  %v62 = vld [vmem:[%s1] sm:$0x1f]
  %s63 = scalar_lea.vmem %s1, 8
  %v64 = vld [vmem:[%s63] sm:$0x1f]
  %113 = vrot.lane.b32.xlu0 %v14, 127
  %v114 = vpop.permute.xlu0 %113
  %115 = vrot.lane.b32.xlu0 %v15, 127
  %v116 = vpop.permute.xlu0 %115
  %117 = vrot.lane.b32.xlu0 %v16, 127
  %v118 = vpop.permute.xlu0 %117
  %119 = vrot.lane.b32.xlu0 %v17, 127
  %v120 = vpop.permute.xlu0 %119
  %121 = vrot.lane.b32.xlu0 %v18, 127
  %v122 = vpop.permute.xlu0 %121
  %123 = vrot.lane.b32.xlu0 %v19, 127
  %v124 = vpop.permute.xlu0 %123
  %125 = vrot.lane.b32.xlu0 %v20, 127
  %v126 = vpop.permute.xlu0 %125
  %127 = vrot.lane.b32.xlu0 %v21, 127
  %v128 = vpop.permute.xlu0 %127
  %129 = vrot.lane.b32.xlu0 %v22, 127
  %v130 = vpop.permute.xlu0 %129
  %131 = vrot.lane.b32.xlu0 %v23, 127
  %v132 = vpop.permute.xlu0 %131
  %133 = vrot.lane.b32.xlu0 %v24, 127
  %v134 = vpop.permute.xlu0 %133
  %135 = vrot.lane.b32.xlu0 %v25, 127
  %v136 = vpop.permute.xlu0 %135
  %137 = vrot.lane.b32.xlu0 %v26, 127
  %v138 = vpop.permute.xlu0 %137
  %139 = vrot.lane.b32.xlu0 %v27, 127
  %v140 = vpop.permute.xlu0 %139
  %141 = vrot.lane.b32.xlu0 %v28, 127
  %v142 = vpop.permute.xlu0 %141
  %143 = vrot.lane.b32.xlu0 %v29, 127
  %v144 = vpop.permute.xlu0 %143
  %145 = vrot.lane.b32.xlu0 %v30, 127
  %v146 = vpop.permute.xlu0 %145
  %147 = vrot.lane.b32.xlu0 %v31, 127
  %v148 = vpop.permute.xlu0 %147
  %149 = vrot.lane.b32.xlu0 %v32, 127
  %v150 = vpop.permute.xlu0 %149
  %151 = vrot.lane.b32.xlu0 %v33, 127
  %v152 = vpop.permute.xlu0 %151
  %153 = vrot.lane.b32.xlu0 %v34, 127
  %v154 = vpop.permute.xlu0 %153
  %155 = vrot.lane.b32.xlu0 %v35, 127
  %v156 = vpop.permute.xlu0 %155
  %157 = vrot.lane.b32.xlu0 %v36, 127
  %v158 = vpop.permute.xlu0 %157
  %159 = vrot.lane.b32.xlu0 %v37, 127
  %v160 = vpop.permute.xlu0 %159
  %161 = vrot.lane.b32.xlu0 %v38, 127
  %v162 = vpop.permute.xlu0 %161
  %163 = vrot.lane.b32.xlu0 %v39, 127
  %v164 = vpop.permute.xlu0 %163
  %165 = vrot.lane.b32.xlu0 %v40, 127
  %v166 = vpop.permute.xlu0 %165
  %167 = vrot.lane.b32.xlu0 %v41, 127
  %v168 = vpop.permute.xlu0 %167
  %169 = vrot.lane.b32.xlu0 %v42, 127
  %v170 = vpop.permute.xlu0 %169
  %171 = vrot.lane.b32.xlu0 %v43, 127
  %v172 = vpop.permute.xlu0 %171
  %173 = vrot.lane.b32.xlu0 %v44, 127
  %v174 = vpop.permute.xlu0 %173
  %175 = vrot.lane.b32.xlu0 %v45, 127
  %v176 = vpop.permute.xlu0 %175
  %177 = vrot.lane.b32.xlu0 %v46, 127
  %v178 = vpop.permute.xlu0 %177
  %179 = vrot.lane.b32.xlu0 %v47, 127
  %v180 = vpop.permute.xlu0 %179
  %181 = vrot.lane.b32.xlu0 %v48, 127
  %v182 = vpop.permute.xlu0 %181
  %183 = vrot.lane.b32.xlu0 %v49, 127
  %v184 = vpop.permute.xlu0 %183
  %185 = vrot.lane.b32.xlu0 %v50, 127
  %v186 = vpop.permute.xlu0 %185
  %187 = vrot.lane.b32.xlu0 %v51, 127
  %v188 = vpop.permute.xlu0 %187
  %189 = vrot.lane.b32.xlu0 %v52, 127
  %v190 = vpop.permute.xlu0 %189
  %191 = vrot.lane.b32.xlu0 %v53, 127
  %v192 = vpop.permute.xlu0 %191
  %193 = vrot.lane.b32.xlu0 %v54, 127
  %v194 = vpop.permute.xlu0 %193
  %195 = vrot.lane.b32.xlu0 %v55, 127
  %v196 = vpop.permute.xlu0 %195
  %197 = vrot.lane.b32.xlu0 %v56, 127
  %v198 = vpop.permute.xlu0 %197
  %199 = vrot.lane.b32.xlu0 %v57, 127
  %v200 = vpop.permute.xlu0 %199
  %201 = vrot.lane.b32.xlu0 %v58, 127
  %v202 = vpop.permute.xlu0 %201
  %203 = vrot.lane.b32.xlu0 %v59, 127
  %v204 = vpop.permute.xlu0 %203
  %205 = vrot.lane.b32.xlu0 %v60, 127
  %v206 = vpop.permute.xlu0 %205
  %207 = vrot.lane.b32.xlu0 %v61, 127
  %v208 = vpop.permute.xlu0 %207
  %vm209 = vcmask 1039360
  %v210 = vsel %vm209, %v114, %v116
  %v211 = vsel %vm209, %v116, %v118
  %v212 = vsel %vm209, %v118, %v120
  %v213 = vsel %vm209, %v120, %v122
  %v214 = vsel %vm209, %v122, %v124
  %v215 = vsel %vm209, %v126, %v128
  %v216 = vsel %vm209, %v128, %v130
  %v217 = vsel %vm209, %v130, %v132
  %v218 = vsel %vm209, %v132, %v134
  %v219 = vsel %vm209, %v134, %v136
  %v220 = vsel %vm209, %v138, %v140
  %v221 = vsel %vm209, %v140, %v142
  %v222 = vsel %vm209, %v142, %v144
  %v223 = vsel %vm209, %v144, %v146
  %v224 = vsel %vm209, %v146, %v148
  %v225 = vsel %vm209, %v150, %v152
  %v226 = vsel %vm209, %v152, %v154
  %v227 = vsel %vm209, %v154, %v156
  %v228 = vsel %vm209, %v156, %v158
  %v229 = vsel %vm209, %v158, %v160
  %v230 = vsel %vm209, %v162, %v164
  %v231 = vsel %vm209, %v164, %v166
  %v232 = vsel %vm209, %v166, %v168
  %v233 = vsel %vm209, %v168, %v170
  %v234 = vsel %vm209, %v170, %v172
  %v235 = vsel %vm209, %v174, %v176
  %v236 = vsel %vm209, %v176, %v178
  %v237 = vsel %vm209, %v178, %v180
  %v238 = vsel %vm209, %v180, %v182
  %v239 = vsel %vm209, %v182, %v184
  %v240 = vsel %vm209, %v186, %v188
  %v241 = vsel %vm209, %v188, %v190
  %v242 = vsel %vm209, %v190, %v192
  %v243 = vsel %vm209, %v192, %v194
  %v244 = vsel %vm209, %v194, %v196
  %v245 = vsel %vm209, %v198, %v200
  %v246 = vsel %vm209, %v200, %v202
  %v247 = vsel %vm209, %v202, %v204
  %v248 = vsel %vm209, %v204, %v206
  %v249 = vsel %vm209, %v206, %v208
  %vm298 = vcmask 523264
  %v300 = vsel %vm298, %v64, 0
  %302 = vmatprep.subr.mxu0 %v211
  %303 = vmatpush1.msra.mxu0 %v210
  %304 = vmatprep.subr.mxu0 %v216
  %305 = vmatpush1.msra.mxu0 %v215
  %306 = vmatprep.subr.mxu0 %v221
  %307 = vmatpush1.msra.mxu0 %v220
  %308 = vmatprep.subr.mxu0 %v226
  %309 = vmatpush1.msra.mxu0 %v225
  %310 = vmatprep.subr.mxu0 %v231
  %311 = vmatpush1.msra.mxu0 %v230
  %312 = vmatprep.subr.mxu0 %v236
  %313 = vmatpush1.msra.mxu0 %v235
  %314 = vmatprep.subr.mxu0 %v241
  %315 = vmatpush1.msra.mxu0 %v240
  %316 = vmatprep.subr.mxu0 %v246
  %317 = vmatpush1.msra.mxu0 %v245
  %318 = vmatprep.subr.mxu0 0.0
  %319 = vmatpush1.msra.mxu0 0.0
  %320 = vmatprep.subr.mxu0 0.0
  %321 = vmatpush1.msra.mxu0 0.0
  %322 = vmatprep.subr.mxu0 0.0
  %323 = vmatpush1.msra.mxu0 0.0
  %324 = vmatprep.subr.mxu0 0.0
  %325 = vmatpush1.msra.mxu0 0.0
  %326 = vmatprep.subr.mxu0 0.0
  %327 = vmatpush1.msra.mxu0 0.0
  %328 = vmatprep.subr.mxu0 0.0
  %329 = vmatpush1.msra.mxu0 0.0
  %330 = vmatprep.subr.mxu0 0.0
  %331 = vmatpush1.msra.mxu0 0.0
  %332 = vmatprep.subr.mxu0 0.0
  %333 = vmatpush1.msra.mxu0 0.0
  %334 = vmatprep.subr.mxu0 0.0
  %335 = vmatpush1.msra.mxu0 0.0
  %336 = vmatprep.subr.mxu0 0.0
  %337 = vmatpush1.msra.mxu0 0.0
  %338 = vmatprep.subr.mxu0 0.0
  %339 = vmatpush1.msra.mxu0 0.0
  %340 = vmatprep.subr.mxu0 0.0
  %341 = vmatpush1.msra.mxu0 0.0
  %342 = vmatprep.subr.mxu0 0.0
  %343 = vmatpush1.msra.mxu0 0.0
  %344 = vmatprep.subr.mxu0 0.0
  %345 = vmatpush1.msra.mxu0 0.0
  %346 = vmatprep.subr.mxu0 0.0
  %347 = vmatpush1.msra.mxu0 0.0
  %348 = vmatprep.subr.mxu0 0.0
  %349 = vmatpush1.msra.mxu0 0.0
  %350 = vmatprep.subr.mxu0 0.0
  %351 = vmatpush1.msra.mxu0 0.0
  %352 = vmatprep.subr.mxu0 0.0
  %353 = vmatpush1.msra.mxu0 0.0
  %354 = vmatprep.subr.mxu0 0.0
  %355 = vmatpush1.msra.mxu0 0.0
  %356 = vmatprep.subr.mxu0 0.0
  %357 = vmatpush1.msra.mxu0 0.0
  %358 = vmatprep.subr.mxu0 0.0
  %359 = vmatpush1.msra.mxu0 0.0
  %360 = vmatprep.subr.mxu0 0.0
  %361 = vmatpush1.msra.mxu0 0.0
  %362 = vmatprep.subr.mxu0 0.0
  %363 = vmatpush1.msra.mxu0 0.0
  %364 = vmatprep.subr.mxu0 0.0
  %365 = vmatpush1.msra.mxu0 0.0
  %366 = vmatprep.mubr.f32.mxu0 0.0
  %367 = vmatmul.mubr.f32.gmra.mrb[0].mxu0 %v300
  %v368 = vpop.f32.mrb[0].mxu0
  %v369 = vadd.f32 0.0, %v368
  %v370 = vpop.f32.mrb[0].mxu0
  %v371 = vadd.f32 0.0, %v370
  %372 = vdwg.mxu0
  %373 = vmatprep.subr.mxu0 %v213
  %374 = vmatpush1.msra.mxu0 %v212
  %375 = vmatprep.subr.mxu0 %v218
  %376 = vmatpush1.msra.mxu0 %v217
  %377 = vmatprep.subr.mxu0 %v223
  %378 = vmatpush1.msra.mxu0 %v222
  %379 = vmatprep.subr.mxu0 %v228
  %380 = vmatpush1.msra.mxu0 %v227
  %381 = vmatprep.subr.mxu0 %v233
  %382 = vmatpush1.msra.mxu0 %v232
  %383 = vmatprep.subr.mxu0 %v238
  %384 = vmatpush1.msra.mxu0 %v237
  %385 = vmatprep.subr.mxu0 %v243
  %386 = vmatpush1.msra.mxu0 %v242
  %387 = vmatprep.subr.mxu0 %v248
  %388 = vmatpush1.msra.mxu0 %v247
  %389 = vmatprep.subr.mxu0 0.0
  %390 = vmatpush1.msra.mxu0 0.0
  %391 = vmatprep.subr.mxu0 0.0
  %392 = vmatpush1.msra.mxu0 0.0
  %393 = vmatprep.subr.mxu0 0.0
  %394 = vmatpush1.msra.mxu0 0.0
  %395 = vmatprep.subr.mxu0 0.0
  %396 = vmatpush1.msra.mxu0 0.0
  %397 = vmatprep.subr.mxu0 0.0
  %398 = vmatpush1.msra.mxu0 0.0
  %399 = vmatprep.subr.mxu0 0.0
  %400 = vmatpush1.msra.mxu0 0.0
  %401 = vmatprep.subr.mxu0 0.0
  %402 = vmatpush1.msra.mxu0 0.0
  %403 = vmatprep.subr.mxu0 0.0
  %404 = vmatpush1.msra.mxu0 0.0
  %405 = vmatprep.subr.mxu0 0.0
  %406 = vmatpush1.msra.mxu0 0.0
  %407 = vmatprep.subr.mxu0 0.0
  %408 = vmatpush1.msra.mxu0 0.0
  %409 = vmatprep.subr.mxu0 0.0
  %410 = vmatpush1.msra.mxu0 0.0
  %411 = vmatprep.subr.mxu0 0.0
  %412 = vmatpush1.msra.mxu0 0.0
  %413 = vmatprep.subr.mxu0 0.0
  %414 = vmatpush1.msra.mxu0 0.0
  %415 = vmatprep.subr.mxu0 0.0
  %416 = vmatpush1.msra.mxu0 0.0
  %417 = vmatprep.subr.mxu0 0.0
  %418 = vmatpush1.msra.mxu0 0.0
  %419 = vmatprep.subr.mxu0 0.0
  %420 = vmatpush1.msra.mxu0 0.0
  %421 = vmatprep.subr.mxu0 0.0
  %422 = vmatpush1.msra.mxu0 0.0
  %423 = vmatprep.subr.mxu0 0.0
  %424 = vmatpush1.msra.mxu0 0.0
  %425 = vmatprep.subr.mxu0 0.0
  %426 = vmatpush1.msra.mxu0 0.0
  %427 = vmatprep.subr.mxu0 0.0
  %428 = vmatpush1.msra.mxu0 0.0
  %429 = vmatprep.subr.mxu0 0.0
  %430 = vmatpush1.msra.mxu0 0.0
  %431 = vmatprep.subr.mxu0 0.0
  %432 = vmatpush1.msra.mxu0 0.0
  %433 = vmatprep.subr.mxu0 0.0
  %434 = vmatpush1.msra.mxu0 0.0
  %435 = vmatprep.subr.mxu0 0.0
  %436 = vmatpush1.msra.mxu0 0.0
  %437 = vmatprep.mubr.f32.mxu0 0.0
  %438 = vmatmul.mubr.f32.gmra.mrb[0].mxu0 %v300
  %v439 = vpop.f32.mrb[0].mxu0
  %v440 = vadd.f32 0.0, %v439
  %v441 = vpop.f32.mrb[0].mxu0
  %v442 = vadd.f32 0.0, %v441
  %443 = vdwg.mxu0
  %444 = vmatprep.subr.mxu0 %v124
  %445 = vmatpush1.msra.mxu0 %v214
  %446 = vmatprep.subr.mxu0 %v136
  %447 = vmatpush1.msra.mxu0 %v219
  %448 = vmatprep.subr.mxu0 %v148
  %449 = vmatpush1.msra.mxu0 %v224
  %450 = vmatprep.subr.mxu0 %v160
  %451 = vmatpush1.msra.mxu0 %v229
  %452 = vmatprep.subr.mxu0 %v172
  %453 = vmatpush1.msra.mxu0 %v234
  %454 = vmatprep.subr.mxu0 %v184
  %455 = vmatpush1.msra.mxu0 %v239
  %456 = vmatprep.subr.mxu0 %v196
  %457 = vmatpush1.msra.mxu0 %v244
  %458 = vmatprep.subr.mxu0 %v208
  %459 = vmatpush1.msra.mxu0 %v249
  %460 = vmatprep.subr.mxu0 0.0
  %461 = vmatpush1.msra.mxu0 0.0
  %462 = vmatprep.subr.mxu0 0.0
  %463 = vmatpush1.msra.mxu0 0.0
  %464 = vmatprep.subr.mxu0 0.0
  %465 = vmatpush1.msra.mxu0 0.0
  %466 = vmatprep.subr.mxu0 0.0
  %467 = vmatpush1.msra.mxu0 0.0
  %468 = vmatprep.subr.mxu0 0.0
  %469 = vmatpush1.msra.mxu0 0.0
  %470 = vmatprep.subr.mxu0 0.0
  %471 = vmatpush1.msra.mxu0 0.0
  %472 = vmatprep.subr.mxu0 0.0
  %473 = vmatpush1.msra.mxu0 0.0
  %474 = vmatprep.subr.mxu0 0.0
  %475 = vmatpush1.msra.mxu0 0.0
  %476 = vmatprep.subr.mxu0 0.0
  %477 = vmatpush1.msra.mxu0 0.0
  %478 = vmatprep.subr.mxu0 0.0
  %479 = vmatpush1.msra.mxu0 0.0
  %480 = vmatprep.subr.mxu0 0.0
  %481 = vmatpush1.msra.mxu0 0.0
  %482 = vmatprep.subr.mxu0 0.0
  %483 = vmatpush1.msra.mxu0 0.0
  %484 = vmatprep.subr.mxu0 0.0
  %485 = vmatpush1.msra.mxu0 0.0
  %486 = vmatprep.subr.mxu0 0.0
  %487 = vmatpush1.msra.mxu0 0.0
  %488 = vmatprep.subr.mxu0 0.0
  %489 = vmatpush1.msra.mxu0 0.0
  %490 = vmatprep.subr.mxu0 0.0
  %491 = vmatpush1.msra.mxu0 0.0
  %492 = vmatprep.subr.mxu0 0.0
  %493 = vmatpush1.msra.mxu0 0.0
  %494 = vmatprep.subr.mxu0 0.0
  %495 = vmatpush1.msra.mxu0 0.0
  %496 = vmatprep.subr.mxu0 0.0
  %497 = vmatpush1.msra.mxu0 0.0
  %498 = vmatprep.subr.mxu0 0.0
  %499 = vmatpush1.msra.mxu0 0.0
  %500 = vmatprep.subr.mxu0 0.0
  %501 = vmatpush1.msra.mxu0 0.0
  %502 = vmatprep.subr.mxu0 0.0
  %503 = vmatpush1.msra.mxu0 0.0
  %504 = vmatprep.subr.mxu0 0.0
  %505 = vmatpush1.msra.mxu0 0.0
  %506 = vmatprep.subr.mxu0 0.0
  %507 = vmatpush1.msra.mxu0 0.0
  %508 = vmatprep.mubr.f32.mxu0 0.0
  %509 = vmatmul.mubr.f32.gmra.mrb[0].mxu0 %v300
  %v510 = vpop.f32.mrb[0].mxu0
  %v511 = vadd.f32 0.0, %v510
  %v512 = vpop.f32.mrb[0].mxu0
  %v513 = vadd.f32 0.0, %v512
  %514 = vdwg.mxu0
  %v516 = vsel %vm298, %v62, 0
  %518 = vmatprep.subr.mxu0 %v15
  %519 = vmatpush1.msra.mxu0 %v14
  %520 = vmatprep.subr.mxu0 %v21
  %521 = vmatpush1.msra.mxu0 %v20
  %522 = vmatprep.subr.mxu0 %v27
  %523 = vmatpush1.msra.mxu0 %v26
  %524 = vmatprep.subr.mxu0 %v33
  %525 = vmatpush1.msra.mxu0 %v32
  %526 = vmatprep.subr.mxu0 %v39
  %527 = vmatpush1.msra.mxu0 %v38
  %528 = vmatprep.subr.mxu0 %v45
  %529 = vmatpush1.msra.mxu0 %v44
  %530 = vmatprep.subr.mxu0 %v51
  %531 = vmatpush1.msra.mxu0 %v50
  %532 = vmatprep.subr.mxu0 %v57
  %533 = vmatpush1.msra.mxu0 %v56
  %534 = vmatprep.subr.mxu0 0.0
  %535 = vmatpush1.msra.mxu0 0.0
  %536 = vmatprep.subr.mxu0 0.0
  %537 = vmatpush1.msra.mxu0 0.0
  %538 = vmatprep.subr.mxu0 0.0
  %539 = vmatpush1.msra.mxu0 0.0
  %540 = vmatprep.subr.mxu0 0.0
  %541 = vmatpush1.msra.mxu0 0.0
  %542 = vmatprep.subr.mxu0 0.0
  %543 = vmatpush1.msra.mxu0 0.0
  %544 = vmatprep.subr.mxu0 0.0
  %545 = vmatpush1.msra.mxu0 0.0
  %546 = vmatprep.subr.mxu0 0.0
  %547 = vmatpush1.msra.mxu0 0.0
  %548 = vmatprep.subr.mxu0 0.0
  %549 = vmatpush1.msra.mxu0 0.0
  %550 = vmatprep.subr.mxu0 0.0
  %551 = vmatpush1.msra.mxu0 0.0
  %552 = vmatprep.subr.mxu0 0.0
  %553 = vmatpush1.msra.mxu0 0.0
  %554 = vmatprep.subr.mxu0 0.0
  %555 = vmatpush1.msra.mxu0 0.0
  %556 = vmatprep.subr.mxu0 0.0
  %557 = vmatpush1.msra.mxu0 0.0
  %558 = vmatprep.subr.mxu0 0.0
  %559 = vmatpush1.msra.mxu0 0.0
  %560 = vmatprep.subr.mxu0 0.0
  %561 = vmatpush1.msra.mxu0 0.0
  %562 = vmatprep.subr.mxu0 0.0
  %563 = vmatpush1.msra.mxu0 0.0
  %564 = vmatprep.subr.mxu0 0.0
  %565 = vmatpush1.msra.mxu0 0.0
  %566 = vmatprep.subr.mxu0 0.0
  %567 = vmatpush1.msra.mxu0 0.0
  %568 = vmatprep.subr.mxu0 0.0
  %569 = vmatpush1.msra.mxu0 0.0
  %570 = vmatprep.subr.mxu0 0.0
  %571 = vmatpush1.msra.mxu0 0.0
  %572 = vmatprep.subr.mxu0 0.0
  %573 = vmatpush1.msra.mxu0 0.0
  %574 = vmatprep.subr.mxu0 0.0
  %575 = vmatpush1.msra.mxu0 0.0
  %576 = vmatprep.subr.mxu0 0.0
  %577 = vmatpush1.msra.mxu0 0.0
  %578 = vmatprep.subr.mxu0 0.0
  %579 = vmatpush1.msra.mxu0 0.0
  %580 = vmatprep.subr.mxu0 0.0
  %581 = vmatpush1.msra.mxu0 0.0
  %582 = vmatprep.mubr.f32.mxu0 0.0
  %583 = vmatmul.mubr.f32.gmra.mrb[0].mxu0 %v516
  %v584 = vpop.f32.mrb[0].mxu0
  %v585 = vadd.f32 %v369, %v584
  %v586 = vpop.f32.mrb[0].mxu0
  %v587 = vadd.f32 %v371, %v586
  %588 = vdwg.mxu0
  %589 = vmatprep.subr.mxu0 %v17
  %590 = vmatpush1.msra.mxu0 %v16
  %591 = vmatprep.subr.mxu0 %v23
  %592 = vmatpush1.msra.mxu0 %v22
  %593 = vmatprep.subr.mxu0 %v29
  %594 = vmatpush1.msra.mxu0 %v28
  %595 = vmatprep.subr.mxu0 %v35
  %596 = vmatpush1.msra.mxu0 %v34
  %597 = vmatprep.subr.mxu0 %v41
  %598 = vmatpush1.msra.mxu0 %v40
  %599 = vmatprep.subr.mxu0 %v47
  %600 = vmatpush1.msra.mxu0 %v46
  %601 = vmatprep.subr.mxu0 %v53
  %602 = vmatpush1.msra.mxu0 %v52
  %603 = vmatprep.subr.mxu0 %v59
  %604 = vmatpush1.msra.mxu0 %v58
  %605 = vmatprep.subr.mxu0 0.0
  %606 = vmatpush1.msra.mxu0 0.0
  %607 = vmatprep.subr.mxu0 0.0
  %608 = vmatpush1.msra.mxu0 0.0
  %609 = vmatprep.subr.mxu0 0.0
  %610 = vmatpush1.msra.mxu0 0.0
  %611 = vmatprep.subr.mxu0 0.0
  %612 = vmatpush1.msra.mxu0 0.0
  %613 = vmatprep.subr.mxu0 0.0
  %614 = vmatpush1.msra.mxu0 0.0
  %615 = vmatprep.subr.mxu0 0.0
  %616 = vmatpush1.msra.mxu0 0.0
  %617 = vmatprep.subr.mxu0 0.0
  %618 = vmatpush1.msra.mxu0 0.0
  %619 = vmatprep.subr.mxu0 0.0
  %620 = vmatpush1.msra.mxu0 0.0
  %621 = vmatprep.subr.mxu0 0.0
  %622 = vmatpush1.msra.mxu0 0.0
  %623 = vmatprep.subr.mxu0 0.0
  %624 = vmatpush1.msra.mxu0 0.0
  %625 = vmatprep.subr.mxu0 0.0
  %626 = vmatpush1.msra.mxu0 0.0
  %627 = vmatprep.subr.mxu0 0.0
  %628 = vmatpush1.msra.mxu0 0.0
  %629 = vmatprep.subr.mxu0 0.0
  %630 = vmatpush1.msra.mxu0 0.0
  %631 = vmatprep.subr.mxu0 0.0
  %632 = vmatpush1.msra.mxu0 0.0
  %633 = vmatprep.subr.mxu0 0.0
  %634 = vmatpush1.msra.mxu0 0.0
  %635 = vmatprep.subr.mxu0 0.0
  %636 = vmatpush1.msra.mxu0 0.0
  %637 = vmatprep.subr.mxu0 0.0
  %638 = vmatpush1.msra.mxu0 0.0
  %639 = vmatprep.subr.mxu0 0.0
  %640 = vmatpush1.msra.mxu0 0.0
  %641 = vmatprep.subr.mxu0 0.0
  %642 = vmatpush1.msra.mxu0 0.0
  %643 = vmatprep.subr.mxu0 0.0
  %644 = vmatpush1.msra.mxu0 0.0
  %645 = vmatprep.subr.mxu0 0.0
  %646 = vmatpush1.msra.mxu0 0.0
  %647 = vmatprep.subr.mxu0 0.0
  %648 = vmatpush1.msra.mxu0 0.0
  %649 = vmatprep.subr.mxu0 0.0
  %650 = vmatpush1.msra.mxu0 0.0
  %651 = vmatprep.subr.mxu0 0.0
  %652 = vmatpush1.msra.mxu0 0.0
  %653 = vmatprep.mubr.f32.mxu0 0.0
  %654 = vmatmul.mubr.f32.gmra.mrb[0].mxu0 %v516
  %v655 = vpop.f32.mrb[0].mxu0
  %v656 = vadd.f32 %v440, %v655
  %v657 = vpop.f32.mrb[0].mxu0
  %v658 = vadd.f32 %v442, %v657
  %659 = vdwg.mxu0
  %660 = vmatprep.subr.mxu0 %v19
  %661 = vmatpush1.msra.mxu0 %v18
  %662 = vmatprep.subr.mxu0 %v25
  %663 = vmatpush1.msra.mxu0 %v24
  %664 = vmatprep.subr.mxu0 %v31
  %665 = vmatpush1.msra.mxu0 %v30
  %666 = vmatprep.subr.mxu0 %v37
  %667 = vmatpush1.msra.mxu0 %v36
  %668 = vmatprep.subr.mxu0 %v43
  %669 = vmatpush1.msra.mxu0 %v42
  %670 = vmatprep.subr.mxu0 %v49
  %671 = vmatpush1.msra.mxu0 %v48
  %672 = vmatprep.subr.mxu0 %v55
  %673 = vmatpush1.msra.mxu0 %v54
  %674 = vmatprep.subr.mxu0 %v61
  %675 = vmatpush1.msra.mxu0 %v60
  %676 = vmatprep.subr.mxu0 0.0
  %677 = vmatpush1.msra.mxu0 0.0
  %678 = vmatprep.subr.mxu0 0.0
  %679 = vmatpush1.msra.mxu0 0.0
  %680 = vmatprep.subr.mxu0 0.0
  %681 = vmatpush1.msra.mxu0 0.0
  %682 = vmatprep.subr.mxu0 0.0
  %683 = vmatpush1.msra.mxu0 0.0
  %684 = vmatprep.subr.mxu0 0.0
  %685 = vmatpush1.msra.mxu0 0.0
  %686 = vmatprep.subr.mxu0 0.0
  %687 = vmatpush1.msra.mxu0 0.0
  %688 = vmatprep.subr.mxu0 0.0
  %689 = vmatpush1.msra.mxu0 0.0
  %690 = vmatprep.subr.mxu0 0.0
  %691 = vmatpush1.msra.mxu0 0.0
  %692 = vmatprep.subr.mxu0 0.0
  %693 = vmatpush1.msra.mxu0 0.0
  %694 = vmatprep.subr.mxu0 0.0
  %695 = vmatpush1.msra.mxu0 0.0
  %696 = vmatprep.subr.mxu0 0.0
  %697 = vmatpush1.msra.mxu0 0.0
  %698 = vmatprep.subr.mxu0 0.0
  %699 = vmatpush1.msra.mxu0 0.0
  %700 = vmatprep.subr.mxu0 0.0
  %701 = vmatpush1.msra.mxu0 0.0
  %702 = vmatprep.subr.mxu0 0.0
  %703 = vmatpush1.msra.mxu0 0.0
  %704 = vmatprep.subr.mxu0 0.0
  %705 = vmatpush1.msra.mxu0 0.0
  %706 = vmatprep.subr.mxu0 0.0
  %707 = vmatpush1.msra.mxu0 0.0
  %708 = vmatprep.subr.mxu0 0.0
  %709 = vmatpush1.msra.mxu0 0.0
  %710 = vmatprep.subr.mxu0 0.0
  %711 = vmatpush1.msra.mxu0 0.0
  %712 = vmatprep.subr.mxu0 0.0
  %713 = vmatpush1.msra.mxu0 0.0
  %714 = vmatprep.subr.mxu0 0.0
  %715 = vmatpush1.msra.mxu0 0.0
  %716 = vmatprep.subr.mxu0 0.0
  %717 = vmatpush1.msra.mxu0 0.0
  %718 = vmatprep.subr.mxu0 0.0
  %719 = vmatpush1.msra.mxu0 0.0
  %720 = vmatprep.subr.mxu0 0.0
  %721 = vmatpush1.msra.mxu0 0.0
  %722 = vmatprep.subr.mxu0 0.0
  %723 = vmatpush1.msra.mxu0 0.0
  %724 = vmatprep.mubr.f32.mxu0 0.0
  %725 = vmatmul.mubr.f32.gmra.mrb[0].mxu0 %v516
  %v726 = vpop.f32.mrb[0].mxu0
  %v727 = vadd.f32 %v511, %v726
  %v728 = vpop.f32.mrb[0].mxu0
  %v729 = vadd.f32 %v513, %v728
  %730 = vdwg.mxu0
  %s731 = scalar_lea.vmem %s1, 16
  %v732 = vld [vmem:[%s731] sm:$0x1f]
  %733 = vrot.lane.b32.xlu0 %v14, 126
  %v734 = vpop.permute.xlu0 %733
  %735 = vrot.lane.b32.xlu0 %v15, 126
  %v736 = vpop.permute.xlu0 %735
  %737 = vrot.lane.b32.xlu0 %v16, 126
  %v738 = vpop.permute.xlu0 %737
  %739 = vrot.lane.b32.xlu0 %v17, 126
  %v740 = vpop.permute.xlu0 %739
  %741 = vrot.lane.b32.xlu0 %v18, 126
  %v742 = vpop.permute.xlu0 %741
  %743 = vrot.lane.b32.xlu0 %v19, 126
  %v744 = vpop.permute.xlu0 %743
  %745 = vrot.lane.b32.xlu0 %v20, 126
  %v746 = vpop.permute.xlu0 %745
  %747 = vrot.lane.b32.xlu0 %v21, 126
  %v748 = vpop.permute.xlu0 %747
  %749 = vrot.lane.b32.xlu0 %v22, 126
  %v750 = vpop.permute.xlu0 %749
  %751 = vrot.lane.b32.xlu0 %v23, 126
  %v752 = vpop.permute.xlu0 %751
  %753 = vrot.lane.b32.xlu0 %v24, 126
  %v754 = vpop.permute.xlu0 %753
  %755 = vrot.lane.b32.xlu0 %v25, 126
  %v756 = vpop.permute.xlu0 %755
  %757 = vrot.lane.b32.xlu0 %v26, 126
  %v758 = vpop.permute.xlu0 %757
  %759 = vrot.lane.b32.xlu0 %v27, 126
  %v760 = vpop.permute.xlu0 %759
  %761 = vrot.lane.b32.xlu0 %v28, 126
  %v762 = vpop.permute.xlu0 %761
  %763 = vrot.lane.b32.xlu0 %v29, 126
  %v764 = vpop.permute.xlu0 %763
  %765 = vrot.lane.b32.xlu0 %v30, 126
  %v766 = vpop.permute.xlu0 %765
  %767 = vrot.lane.b32.xlu0 %v31, 126
  %v768 = vpop.permute.xlu0 %767
  %769 = vrot.lane.b32.xlu0 %v32, 126
  %v770 = vpop.permute.xlu0 %769
  %771 = vrot.lane.b32.xlu0 %v33, 126
  %v772 = vpop.permute.xlu0 %771
  %773 = vrot.lane.b32.xlu0 %v34, 126
  %v774 = vpop.permute.xlu0 %773
  %775 = vrot.lane.b32.xlu0 %v35, 126
  %v776 = vpop.permute.xlu0 %775
  %777 = vrot.lane.b32.xlu0 %v36, 126
  %v778 = vpop.permute.xlu0 %777
  %779 = vrot.lane.b32.xlu0 %v37, 126
  %v780 = vpop.permute.xlu0 %779
  %781 = vrot.lane.b32.xlu0 %v38, 126
  %v782 = vpop.permute.xlu0 %781
  %783 = vrot.lane.b32.xlu0 %v39, 126
  %v784 = vpop.permute.xlu0 %783
  %785 = vrot.lane.b32.xlu0 %v40, 126
  %v786 = vpop.permute.xlu0 %785
  %787 = vrot.lane.b32.xlu0 %v41, 126
  %v788 = vpop.permute.xlu0 %787
  %789 = vrot.lane.b32.xlu0 %v42, 126
  %v790 = vpop.permute.xlu0 %789
  %791 = vrot.lane.b32.xlu0 %v43, 126
  %v792 = vpop.permute.xlu0 %791
  %793 = vrot.lane.b32.xlu0 %v44, 126
  %v794 = vpop.permute.xlu0 %793
  %795 = vrot.lane.b32.xlu0 %v45, 126
  %v796 = vpop.permute.xlu0 %795
  %797 = vrot.lane.b32.xlu0 %v46, 126
  %v798 = vpop.permute.xlu0 %797
  %799 = vrot.lane.b32.xlu0 %v47, 126
  %v800 = vpop.permute.xlu0 %799
  %801 = vrot.lane.b32.xlu0 %v48, 126
  %v802 = vpop.permute.xlu0 %801
  %803 = vrot.lane.b32.xlu0 %v49, 126
  %v804 = vpop.permute.xlu0 %803
  %805 = vrot.lane.b32.xlu0 %v50, 126
  %v806 = vpop.permute.xlu0 %805
  %807 = vrot.lane.b32.xlu0 %v51, 126
  %v808 = vpop.permute.xlu0 %807
  %809 = vrot.lane.b32.xlu0 %v52, 126
  %v810 = vpop.permute.xlu0 %809
  %811 = vrot.lane.b32.xlu0 %v53, 126
  %v812 = vpop.permute.xlu0 %811
  %813 = vrot.lane.b32.xlu0 %v54, 126
  %v814 = vpop.permute.xlu0 %813
  %815 = vrot.lane.b32.xlu0 %v55, 126
  %v816 = vpop.permute.xlu0 %815
  %817 = vrot.lane.b32.xlu0 %v56, 126
  %v818 = vpop.permute.xlu0 %817
  %819 = vrot.lane.b32.xlu0 %v57, 126
  %v820 = vpop.permute.xlu0 %819
  %821 = vrot.lane.b32.xlu0 %v58, 126
  %v822 = vpop.permute.xlu0 %821
  %823 = vrot.lane.b32.xlu0 %v59, 126
  %v824 = vpop.permute.xlu0 %823
  %825 = vrot.lane.b32.xlu0 %v60, 126
  %v826 = vpop.permute.xlu0 %825
  %827 = vrot.lane.b32.xlu0 %v61, 126
  %v828 = vpop.permute.xlu0 %827
  %vm829 = vcmask 1031168
  %v830 = vsel %vm829, %v734, %v736
  %v831 = vsel %vm829, %v736, %v738
  %v832 = vsel %vm829, %v738, %v740
  %v833 = vsel %vm829, %v740, %v742
  %v834 = vsel %vm829, %v742, %v744
  %v835 = vsel %vm829, %v746, %v748
  %v836 = vsel %vm829, %v748, %v750
  %v837 = vsel %vm829, %v750, %v752
  %v838 = vsel %vm829, %v752, %v754
  %v839 = vsel %vm829, %v754, %v756
  %v840 = vsel %vm829, %v758, %v760
  %v841 = vsel %vm829, %v760, %v762
  %v842 = vsel %vm829, %v762, %v764
  %v843 = vsel %vm829, %v764, %v766
  %v844 = vsel %vm829, %v766, %v768
  %v845 = vsel %vm829, %v770, %v772
  %v846 = vsel %vm829, %v772, %v774
  %v847 = vsel %vm829, %v774, %v776
  %v848 = vsel %vm829, %v776, %v778
  %v849 = vsel %vm829, %v778, %v780
  %v850 = vsel %vm829, %v782, %v784
  %v851 = vsel %vm829, %v784, %v786
  %v852 = vsel %vm829, %v786, %v788
  %v853 = vsel %vm829, %v788, %v790
  %v854 = vsel %vm829, %v790, %v792
  %v855 = vsel %vm829, %v794, %v796
  %v856 = vsel %vm829, %v796, %v798
  %v857 = vsel %vm829, %v798, %v800
  %v858 = vsel %vm829, %v800, %v802
  %v859 = vsel %vm829, %v802, %v804
  %v860 = vsel %vm829, %v806, %v808
  %v861 = vsel %vm829, %v808, %v810
  %v862 = vsel %vm829, %v810, %v812
  %v863 = vsel %vm829, %v812, %v814
  %v864 = vsel %vm829, %v814, %v816
  %v865 = vsel %vm829, %v818, %v820
  %v866 = vsel %vm829, %v820, %v822
  %v867 = vsel %vm829, %v822, %v824
  %v868 = vsel %vm829, %v824, %v826
  %v869 = vsel %vm829, %v826, %v828
  %v919 = vsel %vm298, %v732, 0
  %921 = vmatprep.subr.mxu0 %v831
  %922 = vmatpush1.msra.mxu0 %v830
  %923 = vmatprep.subr.mxu0 %v836
  %924 = vmatpush1.msra.mxu0 %v835
  %925 = vmatprep.subr.mxu0 %v841
  %926 = vmatpush1.msra.mxu0 %v840
  %927 = vmatprep.subr.mxu0 %v846
  %928 = vmatpush1.msra.mxu0 %v845
  %929 = vmatprep.subr.mxu0 %v851
  %930 = vmatpush1.msra.mxu0 %v850
  %931 = vmatprep.subr.mxu0 %v856
  %932 = vmatpush1.msra.mxu0 %v855
  %933 = vmatprep.subr.mxu0 %v861
  %934 = vmatpush1.msra.mxu0 %v860
  %935 = vmatprep.subr.mxu0 %v866
  %936 = vmatpush1.msra.mxu0 %v865
  %937 = vmatprep.subr.mxu0 0.0
  %938 = vmatpush1.msra.mxu0 0.0
  %939 = vmatprep.subr.mxu0 0.0
  %940 = vmatpush1.msra.mxu0 0.0
  %941 = vmatprep.subr.mxu0 0.0
  %942 = vmatpush1.msra.mxu0 0.0
  %943 = vmatprep.subr.mxu0 0.0
  %944 = vmatpush1.msra.mxu0 0.0
  %945 = vmatprep.subr.mxu0 0.0
  %946 = vmatpush1.msra.mxu0 0.0
  %947 = vmatprep.subr.mxu0 0.0
  %948 = vmatpush1.msra.mxu0 0.0
  %949 = vmatprep.subr.mxu0 0.0
  %950 = vmatpush1.msra.mxu0 0.0
  %951 = vmatprep.subr.mxu0 0.0
  %952 = vmatpush1.msra.mxu0 0.0
  %953 = vmatprep.subr.mxu0 0.0
  %954 = vmatpush1.msra.mxu0 0.0
  %955 = vmatprep.subr.mxu0 0.0
  %956 = vmatpush1.msra.mxu0 0.0
  %957 = vmatprep.subr.mxu0 0.0
  %958 = vmatpush1.msra.mxu0 0.0
  %959 = vmatprep.subr.mxu0 0.0
  %960 = vmatpush1.msra.mxu0 0.0
  %961 = vmatprep.subr.mxu0 0.0
  %962 = vmatpush1.msra.mxu0 0.0
  %963 = vmatprep.subr.mxu0 0.0
  %964 = vmatpush1.msra.mxu0 0.0
  %965 = vmatprep.subr.mxu0 0.0
  %966 = vmatpush1.msra.mxu0 0.0
  %967 = vmatprep.subr.mxu0 0.0
  %968 = vmatpush1.msra.mxu0 0.0
  %969 = vmatprep.subr.mxu0 0.0
  %970 = vmatpush1.msra.mxu0 0.0
  %971 = vmatprep.subr.mxu0 0.0
  %972 = vmatpush1.msra.mxu0 0.0
  %973 = vmatprep.subr.mxu0 0.0
  %974 = vmatpush1.msra.mxu0 0.0
  %975 = vmatprep.subr.mxu0 0.0
  %976 = vmatpush1.msra.mxu0 0.0
  %977 = vmatprep.subr.mxu0 0.0
  %978 = vmatpush1.msra.mxu0 0.0
  %979 = vmatprep.subr.mxu0 0.0
  %980 = vmatpush1.msra.mxu0 0.0
  %981 = vmatprep.subr.mxu0 0.0
  %982 = vmatpush1.msra.mxu0 0.0
  %983 = vmatprep.subr.mxu0 0.0
  %984 = vmatpush1.msra.mxu0 0.0
  %985 = vmatprep.mubr.f32.mxu0 0.0
  %986 = vmatmul.mubr.f32.gmra.mrb[0].mxu0 %v919
  %v987 = vpop.f32.mrb[0].mxu0
  %v988 = vadd.f32 0.0, %v987
  %v989 = vpop.f32.mrb[0].mxu0
  %v990 = vadd.f32 0.0, %v989
  %991 = vdwg.mxu0
  %992 = vmatprep.subr.mxu0 %v833
  %993 = vmatpush1.msra.mxu0 %v832
  %994 = vmatprep.subr.mxu0 %v838
  %995 = vmatpush1.msra.mxu0 %v837
  %996 = vmatprep.subr.mxu0 %v843
  %997 = vmatpush1.msra.mxu0 %v842
  %998 = vmatprep.subr.mxu0 %v848
  %999 = vmatpush1.msra.mxu0 %v847
  %1000 = vmatprep.subr.mxu0 %v853
  %1001 = vmatpush1.msra.mxu0 %v852
  %1002 = vmatprep.subr.mxu0 %v858
  %1003 = vmatpush1.msra.mxu0 %v857
  %1004 = vmatprep.subr.mxu0 %v863
  %1005 = vmatpush1.msra.mxu0 %v862
  %1006 = vmatprep.subr.mxu0 %v868
  %1007 = vmatpush1.msra.mxu0 %v867
  %1008 = vmatprep.subr.mxu0 0.0
  %1009 = vmatpush1.msra.mxu0 0.0
  %1010 = vmatprep.subr.mxu0 0.0
  %1011 = vmatpush1.msra.mxu0 0.0
  %1012 = vmatprep.subr.mxu0 0.0
  %1013 = vmatpush1.msra.mxu0 0.0
  %1014 = vmatprep.subr.mxu0 0.0
  %1015 = vmatpush1.msra.mxu0 0.0
  %1016 = vmatprep.subr.mxu0 0.0
  %1017 = vmatpush1.msra.mxu0 0.0
  %1018 = vmatprep.subr.mxu0 0.0
  %1019 = vmatpush1.msra.mxu0 0.0
  %1020 = vmatprep.subr.mxu0 0.0
  %1021 = vmatpush1.msra.mxu0 0.0
  %1022 = vmatprep.subr.mxu0 0.0
  %1023 = vmatpush1.msra.mxu0 0.0
  %1024 = vmatprep.subr.mxu0 0.0
  %1025 = vmatpush1.msra.mxu0 0.0
  %1026 = vmatprep.subr.mxu0 0.0
  %1027 = vmatpush1.msra.mxu0 0.0
  %1028 = vmatprep.subr.mxu0 0.0
  %1029 = vmatpush1.msra.mxu0 0.0
  %1030 = vmatprep.subr.mxu0 0.0
  %1031 = vmatpush1.msra.mxu0 0.0
  %1032 = vmatprep.subr.mxu0 0.0
  %1033 = vmatpush1.msra.mxu0 0.0
  %1034 = vmatprep.subr.mxu0 0.0
  %1035 = vmatpush1.msra.mxu0 0.0
  %1036 = vmatprep.subr.mxu0 0.0
  %1037 = vmatpush1.msra.mxu0 0.0
  %1038 = vmatprep.subr.mxu0 0.0
  %1039 = vmatpush1.msra.mxu0 0.0
  %1040 = vmatprep.subr.mxu0 0.0
  %1041 = vmatpush1.msra.mxu0 0.0
  %1042 = vmatprep.subr.mxu0 0.0
  %1043 = vmatpush1.msra.mxu0 0.0
  %1044 = vmatprep.subr.mxu0 0.0
  %1045 = vmatpush1.msra.mxu0 0.0
  %1046 = vmatprep.subr.mxu0 0.0
  %1047 = vmatpush1.msra.mxu0 0.0
  %1048 = vmatprep.subr.mxu0 0.0
  %1049 = vmatpush1.msra.mxu0 0.0
  %1050 = vmatprep.subr.mxu0 0.0
  %1051 = vmatpush1.msra.mxu0 0.0
  %1052 = vmatprep.subr.mxu0 0.0
  %1053 = vmatpush1.msra.mxu0 0.0
  %1054 = vmatprep.subr.mxu0 0.0
  %1055 = vmatpush1.msra.mxu0 0.0
  %1056 = vmatprep.mubr.f32.mxu0 0.0
  %1057 = vmatmul.mubr.f32.gmra.mrb[0].mxu0 %v919
  %v1058 = vpop.f32.mrb[0].mxu0
  %v1059 = vadd.f32 0.0, %v1058
  %v1060 = vpop.f32.mrb[0].mxu0
  %v1061 = vadd.f32 0.0, %v1060
  %1062 = vdwg.mxu0
  %1063 = vmatprep.subr.mxu0 %v744
  %1064 = vmatpush1.msra.mxu0 %v834
  %1065 = vmatprep.subr.mxu0 %v756
  %1066 = vmatpush1.msra.mxu0 %v839
  %1067 = vmatprep.subr.mxu0 %v768
  %1068 = vmatpush1.msra.mxu0 %v844
  %1069 = vmatprep.subr.mxu0 %v780
  %1070 = vmatpush1.msra.mxu0 %v849
  %1071 = vmatprep.subr.mxu0 %v792
  %1072 = vmatpush1.msra.mxu0 %v854
  %1073 = vmatprep.subr.mxu0 %v804
  %1074 = vmatpush1.msra.mxu0 %v859
  %1075 = vmatprep.subr.mxu0 %v816
  %1076 = vmatpush1.msra.mxu0 %v864
  %1077 = vmatprep.subr.mxu0 %v828
  %1078 = vmatpush1.msra.mxu0 %v869
  %1079 = vmatprep.subr.mxu0 0.0
  %1080 = vmatpush1.msra.mxu0 0.0
  %1081 = vmatprep.subr.mxu0 0.0
  %1082 = vmatpush1.msra.mxu0 0.0
  %1083 = vmatprep.subr.mxu0 0.0
  %1084 = vmatpush1.msra.mxu0 0.0
  %1085 = vmatprep.subr.mxu0 0.0
  %1086 = vmatpush1.msra.mxu0 0.0
  %1087 = vmatprep.subr.mxu0 0.0
  %1088 = vmatpush1.msra.mxu0 0.0
  %1089 = vmatprep.subr.mxu0 0.0
  %1090 = vmatpush1.msra.mxu0 0.0
  %1091 = vmatprep.subr.mxu0 0.0
  %1092 = vmatpush1.msra.mxu0 0.0
  %1093 = vmatprep.subr.mxu0 0.0
  %1094 = vmatpush1.msra.mxu0 0.0
  %1095 = vmatprep.subr.mxu0 0.0
  %1096 = vmatpush1.msra.mxu0 0.0
  %1097 = vmatprep.subr.mxu0 0.0
  %1098 = vmatpush1.msra.mxu0 0.0
  %1099 = vmatprep.subr.mxu0 0.0
  %1100 = vmatpush1.msra.mxu0 0.0
  %1101 = vmatprep.subr.mxu0 0.0
  %1102 = vmatpush1.msra.mxu0 0.0
  %1103 = vmatprep.subr.mxu0 0.0
  %1104 = vmatpush1.msra.mxu0 0.0
  %1105 = vmatprep.subr.mxu0 0.0
  %1106 = vmatpush1.msra.mxu0 0.0
  %1107 = vmatprep.subr.mxu0 0.0
  %1108 = vmatpush1.msra.mxu0 0.0
  %1109 = vmatprep.subr.mxu0 0.0
  %1110 = vmatpush1.msra.mxu0 0.0
  %1111 = vmatprep.subr.mxu0 0.0
  %1112 = vmatpush1.msra.mxu0 0.0
  %1113 = vmatprep.subr.mxu0 0.0
  %1114 = vmatpush1.msra.mxu0 0.0
  %1115 = vmatprep.subr.mxu0 0.0
  %1116 = vmatpush1.msra.mxu0 0.0
  %1117 = vmatprep.subr.mxu0 0.0
  %1118 = vmatpush1.msra.mxu0 0.0
  %1119 = vmatprep.subr.mxu0 0.0
  %1120 = vmatpush1.msra.mxu0 0.0
  %1121 = vmatprep.subr.mxu0 0.0
  %1122 = vmatpush1.msra.mxu0 0.0
  %1123 = vmatprep.subr.mxu0 0.0
  %1124 = vmatpush1.msra.mxu0 0.0
  %1125 = vmatprep.subr.mxu0 0.0
  %1126 = vmatpush1.msra.mxu0 0.0
  %1127 = vmatprep.mubr.f32.mxu0 0.0
  %1128 = vmatmul.mubr.f32.gmra.mrb[0].mxu0 %v919
  %v1129 = vpop.f32.mrb[0].mxu0
  %v1130 = vadd.f32 0.0, %v1129
  %v1131 = vpop.f32.mrb[0].mxu0
  %v1132 = vadd.f32 0.0, %v1131
  %1133 = vdwg.mxu0
  %v1134 = vadd.f32 %v585, %v988
  %v1135 = vadd.f32 %v587, %v990
  %v1136 = vadd.f32 %v656, %v1059
  %v1137 = vadd.f32 %v658, %v1061
  %v1138 = vadd.f32 %v727, %v1130
  %v1139 = vadd.f32 %v729, %v1132
  %s1140 = scalar_lea.vmem %s1, 24
  %v1141 = vld [vmem:[%s1140] sm:$0x1f]
  %1142 = vrot.lane.b32.xlu0 %v14, 110
  %v1143 = vpop.permute.xlu0 %1142
  %1144 = vrot.lane.b32.xlu0 %v15, 110
  %v1145 = vpop.permute.xlu0 %1144
  %1146 = vrot.lane.b32.xlu0 %v16, 110
  %v1147 = vpop.permute.xlu0 %1146
  %1148 = vrot.lane.b32.xlu0 %v17, 110
  %v1149 = vpop.permute.xlu0 %1148
  %1150 = vrot.lane.b32.xlu0 %v18, 110
  %v1151 = vpop.permute.xlu0 %1150
  %1152 = vrot.lane.b32.xlu0 %v19, 110
  %v1153 = vpop.permute.xlu0 %1152
  %1154 = vrot.lane.b32.xlu0 %v20, 110
  %v1155 = vpop.permute.xlu0 %1154
  %1156 = vrot.lane.b32.xlu0 %v21, 110
  %v1157 = vpop.permute.xlu0 %1156
  %1158 = vrot.lane.b32.xlu0 %v22, 110
  %v1159 = vpop.permute.xlu0 %1158
  %1160 = vrot.lane.b32.xlu0 %v23, 110
  %v1161 = vpop.permute.xlu0 %1160
  %1162 = vrot.lane.b32.xlu0 %v24, 110
  %v1163 = vpop.permute.xlu0 %1162
  %1164 = vrot.lane.b32.xlu0 %v25, 110
  %v1165 = vpop.permute.xlu0 %1164
  %1166 = vrot.lane.b32.xlu0 %v26, 110
  %v1167 = vpop.permute.xlu0 %1166
  %1168 = vrot.lane.b32.xlu0 %v27, 110
  %v1169 = vpop.permute.xlu0 %1168
  %1170 = vrot.lane.b32.xlu0 %v28, 110
  %v1171 = vpop.permute.xlu0 %1170
  %1172 = vrot.lane.b32.xlu0 %v29, 110
  %v1173 = vpop.permute.xlu0 %1172
  %1174 = vrot.lane.b32.xlu0 %v30, 110
  %v1175 = vpop.permute.xlu0 %1174
  %1176 = vrot.lane.b32.xlu0 %v31, 110
  %v1177 = vpop.permute.xlu0 %1176
  %1178 = vrot.lane.b32.xlu0 %v32, 110
  %v1179 = vpop.permute.xlu0 %1178
  %1180 = vrot.lane.b32.xlu0 %v33, 110
  %v1181 = vpop.permute.xlu0 %1180
  %1182 = vrot.lane.b32.xlu0 %v34, 110
  %v1183 = vpop.permute.xlu0 %1182
  %1184 = vrot.lane.b32.xlu0 %v35, 110
  %v1185 = vpop.permute.xlu0 %1184
  %1186 = vrot.lane.b32.xlu0 %v36, 110
  %v1187 = vpop.permute.xlu0 %1186
  %1188 = vrot.lane.b32.xlu0 %v37, 110
  %v1189 = vpop.permute.xlu0 %1188
  %1190 = vrot.lane.b32.xlu0 %v38, 110
  %v1191 = vpop.permute.xlu0 %1190
  %1192 = vrot.lane.b32.xlu0 %v39, 110
  %v1193 = vpop.permute.xlu0 %1192
  %1194 = vrot.lane.b32.xlu0 %v40, 110
  %v1195 = vpop.permute.xlu0 %1194
  %1196 = vrot.lane.b32.xlu0 %v41, 110
  %v1197 = vpop.permute.xlu0 %1196
  %1198 = vrot.lane.b32.xlu0 %v42, 110
  %v1199 = vpop.permute.xlu0 %1198
  %1200 = vrot.lane.b32.xlu0 %v43, 110
  %v1201 = vpop.permute.xlu0 %1200
  %1202 = vrot.lane.b32.xlu0 %v44, 110
  %v1203 = vpop.permute.xlu0 %1202
  %1204 = vrot.lane.b32.xlu0 %v45, 110
  %v1205 = vpop.permute.xlu0 %1204
  %1206 = vrot.lane.b32.xlu0 %v46, 110
  %v1207 = vpop.permute.xlu0 %1206
  %1208 = vrot.lane.b32.xlu0 %v47, 110
  %v1209 = vpop.permute.xlu0 %1208
  %1210 = vrot.lane.b32.xlu0 %v48, 110
  %v1211 = vpop.permute.xlu0 %1210
  %1212 = vrot.lane.b32.xlu0 %v49, 110
  %v1213 = vpop.permute.xlu0 %1212
  %1214 = vrot.lane.b32.xlu0 %v50, 110
  %v1215 = vpop.permute.xlu0 %1214
  %1216 = vrot.lane.b32.xlu0 %v51, 110
  %v1217 = vpop.permute.xlu0 %1216
  %1218 = vrot.lane.b32.xlu0 %v52, 110
  %v1219 = vpop.permute.xlu0 %1218
  %1220 = vrot.lane.b32.xlu0 %v53, 110
  %v1221 = vpop.permute.xlu0 %1220
  %1222 = vrot.lane.b32.xlu0 %v54, 110
  %v1223 = vpop.permute.xlu0 %1222
  %1224 = vrot.lane.b32.xlu0 %v55, 110
  %v1225 = vpop.permute.xlu0 %1224
  %1226 = vrot.lane.b32.xlu0 %v56, 110
  %v1227 = vpop.permute.xlu0 %1226
  %1228 = vrot.lane.b32.xlu0 %v57, 110
  %v1229 = vpop.permute.xlu0 %1228
  %1230 = vrot.lane.b32.xlu0 %v58, 110
  %v1231 = vpop.permute.xlu0 %1230
  %1232 = vrot.lane.b32.xlu0 %v59, 110
  %v1233 = vpop.permute.xlu0 %1232
  %1234 = vrot.lane.b32.xlu0 %v60, 110
  %v1235 = vpop.permute.xlu0 %1234
  %1236 = vrot.lane.b32.xlu0 %v61, 110
  %v1237 = vpop.permute.xlu0 %1236
  %vm1238 = vcmask 900096
  %v1239 = vsel %vm1238, %v1143, %v1145
  %v1240 = vsel %vm1238, %v1145, %v1147
  %v1241 = vsel %vm1238, %v1147, %v1149
  %v1242 = vsel %vm1238, %v1149, %v1151
  %v1243 = vsel %vm1238, %v1151, %v1153
  %v1244 = vsel %vm1238, %v1155, %v1157
  %v1245 = vsel %vm1238, %v1157, %v1159
  %v1246 = vsel %vm1238, %v1159, %v1161
  %v1247 = vsel %vm1238, %v1161, %v1163
  %v1248 = vsel %vm1238, %v1163, %v1165
  %v1249 = vsel %vm1238, %v1167, %v1169
  %v1250 = vsel %vm1238, %v1169, %v1171
  %v1251 = vsel %vm1238, %v1171, %v1173
  %v1252 = vsel %vm1238, %v1173, %v1175
  %v1253 = vsel %vm1238, %v1175, %v1177
  %v1254 = vsel %vm1238, %v1179, %v1181
  %v1255 = vsel %vm1238, %v1181, %v1183
  %v1256 = vsel %vm1238, %v1183, %v1185
  %v1257 = vsel %vm1238, %v1185, %v1187
  %v1258 = vsel %vm1238, %v1187, %v1189
  %v1259 = vsel %vm1238, %v1191, %v1193
  %v1260 = vsel %vm1238, %v1193, %v1195
  %v1261 = vsel %vm1238, %v1195, %v1197
  %v1262 = vsel %vm1238, %v1197, %v1199
  %v1263 = vsel %vm1238, %v1199, %v1201
  %v1264 = vsel %vm1238, %v1203, %v1205
  %v1265 = vsel %vm1238, %v1205, %v1207
  %v1266 = vsel %vm1238, %v1207, %v1209
  %v1267 = vsel %vm1238, %v1209, %v1211
  %v1268 = vsel %vm1238, %v1211, %v1213
  %v1269 = vsel %vm1238, %v1215, %v1217
  %v1270 = vsel %vm1238, %v1217, %v1219
  %v1271 = vsel %vm1238, %v1219, %v1221
  %v1272 = vsel %vm1238, %v1221, %v1223
  %v1273 = vsel %vm1238, %v1223, %v1225
  %v1274 = vsel %vm1238, %v1227, %v1229
  %v1275 = vsel %vm1238, %v1229, %v1231
  %v1276 = vsel %vm1238, %v1231, %v1233
  %v1277 = vsel %vm1238, %v1233, %v1235
  %v1278 = vsel %vm1238, %v1235, %v1237
  %v1328 = vsel %vm298, %v1141, 0
  %1330 = vmatprep.subr.mxu0 %v1240
  %1331 = vmatpush1.msra.mxu0 %v1239
  %1332 = vmatprep.subr.mxu0 %v1245
  %1333 = vmatpush1.msra.mxu0 %v1244
  %1334 = vmatprep.subr.mxu0 %v1250
  %1335 = vmatpush1.msra.mxu0 %v1249
  %1336 = vmatprep.subr.mxu0 %v1255
  %1337 = vmatpush1.msra.mxu0 %v1254
  %1338 = vmatprep.subr.mxu0 %v1260
  %1339 = vmatpush1.msra.mxu0 %v1259
  %1340 = vmatprep.subr.mxu0 %v1265
  %1341 = vmatpush1.msra.mxu0 %v1264
  %1342 = vmatprep.subr.mxu0 %v1270
  %1343 = vmatpush1.msra.mxu0 %v1269
  %1344 = vmatprep.subr.mxu0 %v1275
  %1345 = vmatpush1.msra.mxu0 %v1274
  %1346 = vmatprep.subr.mxu0 0.0
  %1347 = vmatpush1.msra.mxu0 0.0
  %1348 = vmatprep.subr.mxu0 0.0
  %1349 = vmatpush1.msra.mxu0 0.0
  %1350 = vmatprep.subr.mxu0 0.0
  %1351 = vmatpush1.msra.mxu0 0.0
  %1352 = vmatprep.subr.mxu0 0.0
  %1353 = vmatpush1.msra.mxu0 0.0
  %1354 = vmatprep.subr.mxu0 0.0
  %1355 = vmatpush1.msra.mxu0 0.0
  %1356 = vmatprep.subr.mxu0 0.0
  %1357 = vmatpush1.msra.mxu0 0.0
  %1358 = vmatprep.subr.mxu0 0.0
  %1359 = vmatpush1.msra.mxu0 0.0
  %1360 = vmatprep.subr.mxu0 0.0
  %1361 = vmatpush1.msra.mxu0 0.0
  %1362 = vmatprep.subr.mxu0 0.0
  %1363 = vmatpush1.msra.mxu0 0.0
  %1364 = vmatprep.subr.mxu0 0.0
  %1365 = vmatpush1.msra.mxu0 0.0
  %1366 = vmatprep.subr.mxu0 0.0
  %1367 = vmatpush1.msra.mxu0 0.0
  %1368 = vmatprep.subr.mxu0 0.0
  %1369 = vmatpush1.msra.mxu0 0.0
  %1370 = vmatprep.subr.mxu0 0.0
  %1371 = vmatpush1.msra.mxu0 0.0
  %1372 = vmatprep.subr.mxu0 0.0
  %1373 = vmatpush1.msra.mxu0 0.0
  %1374 = vmatprep.subr.mxu0 0.0
  %1375 = vmatpush1.msra.mxu0 0.0
  %1376 = vmatprep.subr.mxu0 0.0
  %1377 = vmatpush1.msra.mxu0 0.0
  %1378 = vmatprep.subr.mxu0 0.0
  %1379 = vmatpush1.msra.mxu0 0.0
  %1380 = vmatprep.subr.mxu0 0.0
  %1381 = vmatpush1.msra.mxu0 0.0
  %1382 = vmatprep.subr.mxu0 0.0
  %1383 = vmatpush1.msra.mxu0 0.0
  %1384 = vmatprep.subr.mxu0 0.0
  %1385 = vmatpush1.msra.mxu0 0.0
  %1386 = vmatprep.subr.mxu0 0.0
  %1387 = vmatpush1.msra.mxu0 0.0
  %1388 = vmatprep.subr.mxu0 0.0
  %1389 = vmatpush1.msra.mxu0 0.0
  %1390 = vmatprep.subr.mxu0 0.0
  %1391 = vmatpush1.msra.mxu0 0.0
  %1392 = vmatprep.subr.mxu0 0.0
  %1393 = vmatpush1.msra.mxu0 0.0
  %1394 = vmatprep.mubr.f32.mxu0 0.0
  %1395 = vmatmul.mubr.f32.gmra.mrb[0].mxu0 %v1328
  %v1396 = vpop.f32.mrb[0].mxu0
  %v1397 = vadd.f32 0.0, %v1396
  %v1398 = vpop.f32.mrb[0].mxu0
  %v1399 = vadd.f32 0.0, %v1398
  %1400 = vdwg.mxu0
  %1401 = vmatprep.subr.mxu0 %v1242
  %1402 = vmatpush1.msra.mxu0 %v1241
  %1403 = vmatprep.subr.mxu0 %v1247
  %1404 = vmatpush1.msra.mxu0 %v1246
  %1405 = vmatprep.subr.mxu0 %v1252
  %1406 = vmatpush1.msra.mxu0 %v1251
  %1407 = vmatprep.subr.mxu0 %v1257
  %1408 = vmatpush1.msra.mxu0 %v1256
  %1409 = vmatprep.subr.mxu0 %v1262
  %1410 = vmatpush1.msra.mxu0 %v1261
  %1411 = vmatprep.subr.mxu0 %v1267
  %1412 = vmatpush1.msra.mxu0 %v1266
  %1413 = vmatprep.subr.mxu0 %v1272
  %1414 = vmatpush1.msra.mxu0 %v1271
  %1415 = vmatprep.subr.mxu0 %v1277
  %1416 = vmatpush1.msra.mxu0 %v1276
  %1417 = vmatprep.subr.mxu0 0.0
  %1418 = vmatpush1.msra.mxu0 0.0
  %1419 = vmatprep.subr.mxu0 0.0
  %1420 = vmatpush1.msra.mxu0 0.0
  %1421 = vmatprep.subr.mxu0 0.0
  %1422 = vmatpush1.msra.mxu0 0.0
  %1423 = vmatprep.subr.mxu0 0.0
  %1424 = vmatpush1.msra.mxu0 0.0
  %1425 = vmatprep.subr.mxu0 0.0
  %1426 = vmatpush1.msra.mxu0 0.0
  %1427 = vmatprep.subr.mxu0 0.0
  %1428 = vmatpush1.msra.mxu0 0.0
  %1429 = vmatprep.subr.mxu0 0.0
  %1430 = vmatpush1.msra.mxu0 0.0
  %1431 = vmatprep.subr.mxu0 0.0
  %1432 = vmatpush1.msra.mxu0 0.0
  %1433 = vmatprep.subr.mxu0 0.0
  %1434 = vmatpush1.msra.mxu0 0.0
  %1435 = vmatprep.subr.mxu0 0.0
  %1436 = vmatpush1.msra.mxu0 0.0
  %1437 = vmatprep.subr.mxu0 0.0
  %1438 = vmatpush1.msra.mxu0 0.0
  %1439 = vmatprep.subr.mxu0 0.0
  %1440 = vmatpush1.msra.mxu0 0.0
  %1441 = vmatprep.subr.mxu0 0.0
  %1442 = vmatpush1.msra.mxu0 0.0
  %1443 = vmatprep.subr.mxu0 0.0
  %1444 = vmatpush1.msra.mxu0 0.0
  %1445 = vmatprep.subr.mxu0 0.0
  %1446 = vmatpush1.msra.mxu0 0.0
  %1447 = vmatprep.subr.mxu0 0.0
  %1448 = vmatpush1.msra.mxu0 0.0
  %1449 = vmatprep.subr.mxu0 0.0
  %1450 = vmatpush1.msra.mxu0 0.0
  %1451 = vmatprep.subr.mxu0 0.0
  %1452 = vmatpush1.msra.mxu0 0.0
  %1453 = vmatprep.subr.mxu0 0.0
  %1454 = vmatpush1.msra.mxu0 0.0
  %1455 = vmatprep.subr.mxu0 0.0
  %1456 = vmatpush1.msra.mxu0 0.0
  %1457 = vmatprep.subr.mxu0 0.0
  %1458 = vmatpush1.msra.mxu0 0.0
  %1459 = vmatprep.subr.mxu0 0.0
  %1460 = vmatpush1.msra.mxu0 0.0
  %1461 = vmatprep.subr.mxu0 0.0
  %1462 = vmatpush1.msra.mxu0 0.0
  %1463 = vmatprep.subr.mxu0 0.0
  %1464 = vmatpush1.msra.mxu0 0.0
  %1465 = vmatprep.mubr.f32.mxu0 0.0
  %1466 = vmatmul.mubr.f32.gmra.mrb[0].mxu0 %v1328
  %v1467 = vpop.f32.mrb[0].mxu0
  %v1468 = vadd.f32 0.0, %v1467
  %v1469 = vpop.f32.mrb[0].mxu0
  %v1470 = vadd.f32 0.0, %v1469
  %1471 = vdwg.mxu0
  %1472 = vmatprep.subr.mxu0 %v1153
  %1473 = vmatpush1.msra.mxu0 %v1243
  %1474 = vmatprep.subr.mxu0 %v1165
  %1475 = vmatpush1.msra.mxu0 %v1248
  %1476 = vmatprep.subr.mxu0 %v1177
  %1477 = vmatpush1.msra.mxu0 %v1253
  %1478 = vmatprep.subr.mxu0 %v1189
  %1479 = vmatpush1.msra.mxu0 %v1258
  %1480 = vmatprep.subr.mxu0 %v1201
  %1481 = vmatpush1.msra.mxu0 %v1263
  %1482 = vmatprep.subr.mxu0 %v1213
  %1483 = vmatpush1.msra.mxu0 %v1268
  %1484 = vmatprep.subr.mxu0 %v1225
  %1485 = vmatpush1.msra.mxu0 %v1273
  %1486 = vmatprep.subr.mxu0 %v1237
  %1487 = vmatpush1.msra.mxu0 %v1278
  %1488 = vmatprep.subr.mxu0 0.0
  %1489 = vmatpush1.msra.mxu0 0.0
  %1490 = vmatprep.subr.mxu0 0.0
  %1491 = vmatpush1.msra.mxu0 0.0
  %1492 = vmatprep.subr.mxu0 0.0
  %1493 = vmatpush1.msra.mxu0 0.0
  %1494 = vmatprep.subr.mxu0 0.0
  %1495 = vmatpush1.msra.mxu0 0.0
  %1496 = vmatprep.subr.mxu0 0.0
  %1497 = vmatpush1.msra.mxu0 0.0
  %1498 = vmatprep.subr.mxu0 0.0
  %1499 = vmatpush1.msra.mxu0 0.0
  %1500 = vmatprep.subr.mxu0 0.0
  %1501 = vmatpush1.msra.mxu0 0.0
  %1502 = vmatprep.subr.mxu0 0.0
  %1503 = vmatpush1.msra.mxu0 0.0
  %1504 = vmatprep.subr.mxu0 0.0
  %1505 = vmatpush1.msra.mxu0 0.0
  %1506 = vmatprep.subr.mxu0 0.0
  %1507 = vmatpush1.msra.mxu0 0.0
  %1508 = vmatprep.subr.mxu0 0.0
  %1509 = vmatpush1.msra.mxu0 0.0
  %1510 = vmatprep.subr.mxu0 0.0
  %1511 = vmatpush1.msra.mxu0 0.0
  %1512 = vmatprep.subr.mxu0 0.0
  %1513 = vmatpush1.msra.mxu0 0.0
  %1514 = vmatprep.subr.mxu0 0.0
  %1515 = vmatpush1.msra.mxu0 0.0
  %1516 = vmatprep.subr.mxu0 0.0
  %1517 = vmatpush1.msra.mxu0 0.0
  %1518 = vmatprep.subr.mxu0 0.0
  %1519 = vmatpush1.msra.mxu0 0.0
  %1520 = vmatprep.subr.mxu0 0.0
  %1521 = vmatpush1.msra.mxu0 0.0
  %1522 = vmatprep.subr.mxu0 0.0
  %1523 = vmatpush1.msra.mxu0 0.0
  %1524 = vmatprep.subr.mxu0 0.0
  %1525 = vmatpush1.msra.mxu0 0.0
  %1526 = vmatprep.subr.mxu0 0.0
  %1527 = vmatpush1.msra.mxu0 0.0
  %1528 = vmatprep.subr.mxu0 0.0
  %1529 = vmatpush1.msra.mxu0 0.0
  %1530 = vmatprep.subr.mxu0 0.0
  %1531 = vmatpush1.msra.mxu0 0.0
  %1532 = vmatprep.subr.mxu0 0.0
  %1533 = vmatpush1.msra.mxu0 0.0
  %1534 = vmatprep.subr.mxu0 0.0
  %1535 = vmatpush1.msra.mxu0 0.0
  %1536 = vmatprep.mubr.f32.mxu0 0.0
  %1537 = vmatmul.mubr.f32.gmra.mrb[0].mxu0 %v1328
  %v1538 = vpop.f32.mrb[0].mxu0
  %v1539 = vadd.f32 0.0, %v1538
  %v1540 = vpop.f32.mrb[0].mxu0
  %v1541 = vadd.f32 0.0, %v1540
  %1542 = vdwg.mxu0
  %v1543 = vadd.f32 %v1134, %v1397
  %v1544 = vadd.f32 %v1135, %v1399
  %v1545 = vadd.f32 %v1136, %v1468
  %v1546 = vadd.f32 %v1137, %v1470
  %v1547 = vadd.f32 %v1138, %v1539
  %v1548 = vadd.f32 %v1139, %v1541
  %s1549 = scalar_lea.vmem %s1, 32
  %v1550 = vld [vmem:[%s1549] sm:$0x1f]
  %1551 = vrot.lane.b32.xlu0 %v14, 109
  %v1552 = vpop.permute.xlu0 %1551
  %1553 = vrot.lane.b32.xlu0 %v15, 109
  %v1554 = vpop.permute.xlu0 %1553
  %1555 = vrot.lane.b32.xlu0 %v16, 109
  %v1556 = vpop.permute.xlu0 %1555
  %1557 = vrot.lane.b32.xlu0 %v17, 109
  %v1558 = vpop.permute.xlu0 %1557
  %1559 = vrot.lane.b32.xlu0 %v18, 109
  %v1560 = vpop.permute.xlu0 %1559
  %1561 = vrot.lane.b32.xlu0 %v19, 109
  %v1562 = vpop.permute.xlu0 %1561
  %1563 = vrot.lane.b32.xlu0 %v20, 109
  %v1564 = vpop.permute.xlu0 %1563
  %1565 = vrot.lane.b32.xlu0 %v21, 109
  %v1566 = vpop.permute.xlu0 %1565
  %1567 = vrot.lane.b32.xlu0 %v22, 109
  %v1568 = vpop.permute.xlu0 %1567
  %1569 = vrot.lane.b32.xlu0 %v23, 109
  %v1570 = vpop.permute.xlu0 %1569
  %1571 = vrot.lane.b32.xlu0 %v24, 109
  %v1572 = vpop.permute.xlu0 %1571
  %1573 = vrot.lane.b32.xlu0 %v25, 109
  %v1574 = vpop.permute.xlu0 %1573
  %1575 = vrot.lane.b32.xlu0 %v26, 109
  %v1576 = vpop.permute.xlu0 %1575
  %1577 = vrot.lane.b32.xlu0 %v27, 109
  %v1578 = vpop.permute.xlu0 %1577
  %1579 = vrot.lane.b32.xlu0 %v28, 109
  %v1580 = vpop.permute.xlu0 %1579
  %1581 = vrot.lane.b32.xlu0 %v29, 109
  %v1582 = vpop.permute.xlu0 %1581
  %1583 = vrot.lane.b32.xlu0 %v30, 109
  %v1584 = vpop.permute.xlu0 %1583
  %1585 = vrot.lane.b32.xlu0 %v31, 109
  %v1586 = vpop.permute.xlu0 %1585
  %1587 = vrot.lane.b32.xlu0 %v32, 109
  %v1588 = vpop.permute.xlu0 %1587
  %1589 = vrot.lane.b32.xlu0 %v33, 109
  %v1590 = vpop.permute.xlu0 %1589
  %1591 = vrot.lane.b32.xlu0 %v34, 109
  %v1592 = vpop.permute.xlu0 %1591
  %1593 = vrot.lane.b32.xlu0 %v35, 109
  %v1594 = vpop.permute.xlu0 %1593
  %1595 = vrot.lane.b32.xlu0 %v36, 109
  %v1596 = vpop.permute.xlu0 %1595
  %1597 = vrot.lane.b32.xlu0 %v37, 109
  %v1598 = vpop.permute.xlu0 %1597
  %1599 = vrot.lane.b32.xlu0 %v38, 109
  %v1600 = vpop.permute.xlu0 %1599
  %1601 = vrot.lane.b32.xlu0 %v39, 109
  %v1602 = vpop.permute.xlu0 %1601
  %1603 = vrot.lane.b32.xlu0 %v40, 109
  %v1604 = vpop.permute.xlu0 %1603
  %1605 = vrot.lane.b32.xlu0 %v41, 109
  %v1606 = vpop.permute.xlu0 %1605
  %1607 = vrot.lane.b32.xlu0 %v42, 109
  %v1608 = vpop.permute.xlu0 %1607
  %1609 = vrot.lane.b32.xlu0 %v43, 109
  %v1610 = vpop.permute.xlu0 %1609
  %1611 = vrot.lane.b32.xlu0 %v44, 109
  %v1612 = vpop.permute.xlu0 %1611
  %1613 = vrot.lane.b32.xlu0 %v45, 109
  %v1614 = vpop.permute.xlu0 %1613
  %1615 = vrot.lane.b32.xlu0 %v46, 109
  %v1616 = vpop.permute.xlu0 %1615
  %1617 = vrot.lane.b32.xlu0 %v47, 109
  %v1618 = vpop.permute.xlu0 %1617
  %1619 = vrot.lane.b32.xlu0 %v48, 109
  %v1620 = vpop.permute.xlu0 %1619
  %1621 = vrot.lane.b32.xlu0 %v49, 109
  %v1622 = vpop.permute.xlu0 %1621
  %1623 = vrot.lane.b32.xlu0 %v50, 109
  %v1624 = vpop.permute.xlu0 %1623
  %1625 = vrot.lane.b32.xlu0 %v51, 109
  %v1626 = vpop.permute.xlu0 %1625
  %1627 = vrot.lane.b32.xlu0 %v52, 109
  %v1628 = vpop.permute.xlu0 %1627
  %1629 = vrot.lane.b32.xlu0 %v53, 109
  %v1630 = vpop.permute.xlu0 %1629
  %1631 = vrot.lane.b32.xlu0 %v54, 109
  %v1632 = vpop.permute.xlu0 %1631
  %1633 = vrot.lane.b32.xlu0 %v55, 109
  %v1634 = vpop.permute.xlu0 %1633
  %1635 = vrot.lane.b32.xlu0 %v56, 109
  %v1636 = vpop.permute.xlu0 %1635
  %1637 = vrot.lane.b32.xlu0 %v57, 109
  %v1638 = vpop.permute.xlu0 %1637
  %1639 = vrot.lane.b32.xlu0 %v58, 109
  %v1640 = vpop.permute.xlu0 %1639
  %1641 = vrot.lane.b32.xlu0 %v59, 109
  %v1642 = vpop.permute.xlu0 %1641
  %1643 = vrot.lane.b32.xlu0 %v60, 109
  %v1644 = vpop.permute.xlu0 %1643
  %1645 = vrot.lane.b32.xlu0 %v61, 109
  %v1646 = vpop.permute.xlu0 %1645
  %vm1647 = vcmask 891904
  %v1648 = vsel %vm1647, %v1552, %v1554
  %v1649 = vsel %vm1647, %v1554, %v1556
  %v1650 = vsel %vm1647, %v1556, %v1558
  %v1651 = vsel %vm1647, %v1558, %v1560
  %v1652 = vsel %vm1647, %v1560, %v1562
  %v1653 = vsel %vm1647, %v1564, %v1566
  %v1654 = vsel %vm1647, %v1566, %v1568
  %v1655 = vsel %vm1647, %v1568, %v1570
  %v1656 = vsel %vm1647, %v1570, %v1572
  %v1657 = vsel %vm1647, %v1572, %v1574
  %v1658 = vsel %vm1647, %v1576, %v1578
  %v1659 = vsel %vm1647, %v1578, %v1580
  %v1660 = vsel %vm1647, %v1580, %v1582
  %v1661 = vsel %vm1647, %v1582, %v1584
  %v1662 = vsel %vm1647, %v1584, %v1586
  %v1663 = vsel %vm1647, %v1588, %v1590
  %v1664 = vsel %vm1647, %v1590, %v1592
  %v1665 = vsel %vm1647, %v1592, %v1594
  %v1666 = vsel %vm1647, %v1594, %v1596
  %v1667 = vsel %vm1647, %v1596, %v1598
  %v1668 = vsel %vm1647, %v1600, %v1602
  %v1669 = vsel %vm1647, %v1602, %v1604
  %v1670 = vsel %vm1647, %v1604, %v1606
  %v1671 = vsel %vm1647, %v1606, %v1608
  %v1672 = vsel %vm1647, %v1608, %v1610
  %v1673 = vsel %vm1647, %v1612, %v1614
  %v1674 = vsel %vm1647, %v1614, %v1616
  %v1675 = vsel %vm1647, %v1616, %v1618
  %v1676 = vsel %vm1647, %v1618, %v1620
  %v1677 = vsel %vm1647, %v1620, %v1622
  %v1678 = vsel %vm1647, %v1624, %v1626
  %v1679 = vsel %vm1647, %v1626, %v1628
  %v1680 = vsel %vm1647, %v1628, %v1630
  %v1681 = vsel %vm1647, %v1630, %v1632
  %v1682 = vsel %vm1647, %v1632, %v1634
  %v1683 = vsel %vm1647, %v1636, %v1638
  %v1684 = vsel %vm1647, %v1638, %v1640
  %v1685 = vsel %vm1647, %v1640, %v1642
  %v1686 = vsel %vm1647, %v1642, %v1644
  %v1687 = vsel %vm1647, %v1644, %v1646
  %v1737 = vsel %vm298, %v1550, 0
  %1739 = vmatprep.subr.mxu0 %v1649
  %1740 = vmatpush1.msra.mxu0 %v1648
  %1741 = vmatprep.subr.mxu0 %v1654
  %1742 = vmatpush1.msra.mxu0 %v1653
  %1743 = vmatprep.subr.mxu0 %v1659
  %1744 = vmatpush1.msra.mxu0 %v1658
  %1745 = vmatprep.subr.mxu0 %v1664
  %1746 = vmatpush1.msra.mxu0 %v1663
  %1747 = vmatprep.subr.mxu0 %v1669
  %1748 = vmatpush1.msra.mxu0 %v1668
  %1749 = vmatprep.subr.mxu0 %v1674
  %1750 = vmatpush1.msra.mxu0 %v1673
  %1751 = vmatprep.subr.mxu0 %v1679
  %1752 = vmatpush1.msra.mxu0 %v1678
  %1753 = vmatprep.subr.mxu0 %v1684
  %1754 = vmatpush1.msra.mxu0 %v1683
  %1755 = vmatprep.subr.mxu0 0.0
  %1756 = vmatpush1.msra.mxu0 0.0
  %1757 = vmatprep.subr.mxu0 0.0
  %1758 = vmatpush1.msra.mxu0 0.0
  %1759 = vmatprep.subr.mxu0 0.0
  %1760 = vmatpush1.msra.mxu0 0.0
  %1761 = vmatprep.subr.mxu0 0.0
  %1762 = vmatpush1.msra.mxu0 0.0
  %1763 = vmatprep.subr.mxu0 0.0
  %1764 = vmatpush1.msra.mxu0 0.0
  %1765 = vmatprep.subr.mxu0 0.0
  %1766 = vmatpush1.msra.mxu0 0.0
  %1767 = vmatprep.subr.mxu0 0.0
  %1768 = vmatpush1.msra.mxu0 0.0
  %1769 = vmatprep.subr.mxu0 0.0
  %1770 = vmatpush1.msra.mxu0 0.0
  %1771 = vmatprep.subr.mxu0 0.0
  %1772 = vmatpush1.msra.mxu0 0.0
  %1773 = vmatprep.subr.mxu0 0.0
  %1774 = vmatpush1.msra.mxu0 0.0
  %1775 = vmatprep.subr.mxu0 0.0
  %1776 = vmatpush1.msra.mxu0 0.0
  %1777 = vmatprep.subr.mxu0 0.0
  %1778 = vmatpush1.msra.mxu0 0.0
  %1779 = vmatprep.subr.mxu0 0.0
  %1780 = vmatpush1.msra.mxu0 0.0
  %1781 = vmatprep.subr.mxu0 0.0
  %1782 = vmatpush1.msra.mxu0 0.0
  %1783 = vmatprep.subr.mxu0 0.0
  %1784 = vmatpush1.msra.mxu0 0.0
  %1785 = vmatprep.subr.mxu0 0.0
  %1786 = vmatpush1.msra.mxu0 0.0
  %1787 = vmatprep.subr.mxu0 0.0
  %1788 = vmatpush1.msra.mxu0 0.0
  %1789 = vmatprep.subr.mxu0 0.0
  %1790 = vmatpush1.msra.mxu0 0.0
  %1791 = vmatprep.subr.mxu0 0.0
  %1792 = vmatpush1.msra.mxu0 0.0
  %1793 = vmatprep.subr.mxu0 0.0
  %1794 = vmatpush1.msra.mxu0 0.0
  %1795 = vmatprep.subr.mxu0 0.0
  %1796 = vmatpush1.msra.mxu0 0.0
  %1797 = vmatprep.subr.mxu0 0.0
  %1798 = vmatpush1.msra.mxu0 0.0
  %1799 = vmatprep.subr.mxu0 0.0
  %1800 = vmatpush1.msra.mxu0 0.0
  %1801 = vmatprep.subr.mxu0 0.0
  %1802 = vmatpush1.msra.mxu0 0.0
  %1803 = vmatprep.mubr.f32.mxu0 0.0
  %1804 = vmatmul.mubr.f32.gmra.mrb[0].mxu0 %v1737
  %v1805 = vpop.f32.mrb[0].mxu0
  %v1806 = vadd.f32 0.0, %v1805
  %v1807 = vpop.f32.mrb[0].mxu0
  %v1808 = vadd.f32 0.0, %v1807
  %1809 = vdwg.mxu0
  %1810 = vmatprep.subr.mxu0 %v1651
  %1811 = vmatpush1.msra.mxu0 %v1650
  %1812 = vmatprep.subr.mxu0 %v1656
  %1813 = vmatpush1.msra.mxu0 %v1655
  %1814 = vmatprep.subr.mxu0 %v1661
  %1815 = vmatpush1.msra.mxu0 %v1660
  %1816 = vmatprep.subr.mxu0 %v1666
  %1817 = vmatpush1.msra.mxu0 %v1665
  %1818 = vmatprep.subr.mxu0 %v1671
  %1819 = vmatpush1.msra.mxu0 %v1670
  %1820 = vmatprep.subr.mxu0 %v1676
  %1821 = vmatpush1.msra.mxu0 %v1675
  %1822 = vmatprep.subr.mxu0 %v1681
  %1823 = vmatpush1.msra.mxu0 %v1680
  %1824 = vmatprep.subr.mxu0 %v1686
  %1825 = vmatpush1.msra.mxu0 %v1685
  %1826 = vmatprep.subr.mxu0 0.0
  %1827 = vmatpush1.msra.mxu0 0.0
  %1828 = vmatprep.subr.mxu0 0.0
  %1829 = vmatpush1.msra.mxu0 0.0
  %1830 = vmatprep.subr.mxu0 0.0
  %1831 = vmatpush1.msra.mxu0 0.0
  %1832 = vmatprep.subr.mxu0 0.0
  %1833 = vmatpush1.msra.mxu0 0.0
  %1834 = vmatprep.subr.mxu0 0.0
  %1835 = vmatpush1.msra.mxu0 0.0
  %1836 = vmatprep.subr.mxu0 0.0
  %1837 = vmatpush1.msra.mxu0 0.0
  %1838 = vmatprep.subr.mxu0 0.0
  %1839 = vmatpush1.msra.mxu0 0.0
  %1840 = vmatprep.subr.mxu0 0.0
  %1841 = vmatpush1.msra.mxu0 0.0
  %1842 = vmatprep.subr.mxu0 0.0
  %1843 = vmatpush1.msra.mxu0 0.0
  %1844 = vmatprep.subr.mxu0 0.0
  %1845 = vmatpush1.msra.mxu0 0.0
  %1846 = vmatprep.subr.mxu0 0.0
  %1847 = vmatpush1.msra.mxu0 0.0
  %1848 = vmatprep.subr.mxu0 0.0
  %1849 = vmatpush1.msra.mxu0 0.0
  %1850 = vmatprep.subr.mxu0 0.0
  %1851 = vmatpush1.msra.mxu0 0.0
  %1852 = vmatprep.subr.mxu0 0.0
  %1853 = vmatpush1.msra.mxu0 0.0
  %1854 = vmatprep.subr.mxu0 0.0
  %1855 = vmatpush1.msra.mxu0 0.0
  %1856 = vmatprep.subr.mxu0 0.0
  %1857 = vmatpush1.msra.mxu0 0.0
  %1858 = vmatprep.subr.mxu0 0.0
  %1859 = vmatpush1.msra.mxu0 0.0
  %1860 = vmatprep.subr.mxu0 0.0
  %1861 = vmatpush1.msra.mxu0 0.0
  %1862 = vmatprep.subr.mxu0 0.0
  %1863 = vmatpush1.msra.mxu0 0.0
  %1864 = vmatprep.subr.mxu0 0.0
  %1865 = vmatpush1.msra.mxu0 0.0
  %1866 = vmatprep.subr.mxu0 0.0
  %1867 = vmatpush1.msra.mxu0 0.0
  %1868 = vmatprep.subr.mxu0 0.0
  %1869 = vmatpush1.msra.mxu0 0.0
  %1870 = vmatprep.subr.mxu0 0.0
  %1871 = vmatpush1.msra.mxu0 0.0
  %1872 = vmatprep.subr.mxu0 0.0
  %1873 = vmatpush1.msra.mxu0 0.0
  %1874 = vmatprep.mubr.f32.mxu0 0.0
  %1875 = vmatmul.mubr.f32.gmra.mrb[0].mxu0 %v1737
  %v1876 = vpop.f32.mrb[0].mxu0
  %v1877 = vadd.f32 0.0, %v1876
  %v1878 = vpop.f32.mrb[0].mxu0
  %v1879 = vadd.f32 0.0, %v1878
  %1880 = vdwg.mxu0
  %1881 = vmatprep.subr.mxu0 %v1562
  %1882 = vmatpush1.msra.mxu0 %v1652
  %1883 = vmatprep.subr.mxu0 %v1574
  %1884 = vmatpush1.msra.mxu0 %v1657
  %1885 = vmatprep.subr.mxu0 %v1586
  %1886 = vmatpush1.msra.mxu0 %v1662
  %1887 = vmatprep.subr.mxu0 %v1598
  %1888 = vmatpush1.msra.mxu0 %v1667
  %1889 = vmatprep.subr.mxu0 %v1610
  %1890 = vmatpush1.msra.mxu0 %v1672
  %1891 = vmatprep.subr.mxu0 %v1622
  %1892 = vmatpush1.msra.mxu0 %v1677
  %1893 = vmatprep.subr.mxu0 %v1634
  %1894 = vmatpush1.msra.mxu0 %v1682
  %1895 = vmatprep.subr.mxu0 %v1646
  %1896 = vmatpush1.msra.mxu0 %v1687
  %1897 = vmatprep.subr.mxu0 0.0
  %1898 = vmatpush1.msra.mxu0 0.0
  %1899 = vmatprep.subr.mxu0 0.0
  %1900 = vmatpush1.msra.mxu0 0.0
  %1901 = vmatprep.subr.mxu0 0.0
  %1902 = vmatpush1.msra.mxu0 0.0
  %1903 = vmatprep.subr.mxu0 0.0
  %1904 = vmatpush1.msra.mxu0 0.0
  %1905 = vmatprep.subr.mxu0 0.0
  %1906 = vmatpush1.msra.mxu0 0.0
  %1907 = vmatprep.subr.mxu0 0.0
  %1908 = vmatpush1.msra.mxu0 0.0
  %1909 = vmatprep.subr.mxu0 0.0
  %1910 = vmatpush1.msra.mxu0 0.0
  %1911 = vmatprep.subr.mxu0 0.0
  %1912 = vmatpush1.msra.mxu0 0.0
  %1913 = vmatprep.subr.mxu0 0.0
  %1914 = vmatpush1.msra.mxu0 0.0
  %1915 = vmatprep.subr.mxu0 0.0
  %1916 = vmatpush1.msra.mxu0 0.0
  %1917 = vmatprep.subr.mxu0 0.0
  %1918 = vmatpush1.msra.mxu0 0.0
  %1919 = vmatprep.subr.mxu0 0.0
  %1920 = vmatpush1.msra.mxu0 0.0
  %1921 = vmatprep.subr.mxu0 0.0
  %1922 = vmatpush1.msra.mxu0 0.0
  %1923 = vmatprep.subr.mxu0 0.0
  %1924 = vmatpush1.msra.mxu0 0.0
  %1925 = vmatprep.subr.mxu0 0.0
  %1926 = vmatpush1.msra.mxu0 0.0
  %1927 = vmatprep.subr.mxu0 0.0
  %1928 = vmatpush1.msra.mxu0 0.0
  %1929 = vmatprep.subr.mxu0 0.0
  %1930 = vmatpush1.msra.mxu0 0.0
  %1931 = vmatprep.subr.mxu0 0.0
  %1932 = vmatpush1.msra.mxu0 0.0
  %1933 = vmatprep.subr.mxu0 0.0
  %1934 = vmatpush1.msra.mxu0 0.0
  %1935 = vmatprep.subr.mxu0 0.0
  %1936 = vmatpush1.msra.mxu0 0.0
  %1937 = vmatprep.subr.mxu0 0.0
  %1938 = vmatpush1.msra.mxu0 0.0
  %1939 = vmatprep.subr.mxu0 0.0
  %1940 = vmatpush1.msra.mxu0 0.0
  %1941 = vmatprep.subr.mxu0 0.0
  %1942 = vmatpush1.msra.mxu0 0.0
  %1943 = vmatprep.subr.mxu0 0.0
  %1944 = vmatpush1.msra.mxu0 0.0
  %1945 = vmatprep.mubr.f32.mxu0 0.0
  %1946 = vmatmul.mubr.f32.gmra.mrb[0].mxu0 %v1737
  %v1947 = vpop.f32.mrb[0].mxu0
  %v1948 = vadd.f32 0.0, %v1947
  %v1949 = vpop.f32.mrb[0].mxu0
  %v1950 = vadd.f32 0.0, %v1949
  %1951 = vdwg.mxu0
  %v1952 = vadd.f32 %v1543, %v1806
  %v1953 = vadd.f32 %v1544, %v1808
  %v1954 = vadd.f32 %v1545, %v1877
  %v1955 = vadd.f32 %v1546, %v1879
  %v1956 = vadd.f32 %v1547, %v1948
  %v1957 = vadd.f32 %v1548, %v1950
  %s1958 = scalar_lea.vmem %s1, 40
  %v1959 = vld [vmem:[%s1958] sm:$0x1f]
  %1960 = vrot.lane.b32.xlu0 %v14, 108
  %v1961 = vpop.permute.xlu0 %1960
  %1962 = vrot.lane.b32.xlu0 %v15, 108
  %v1963 = vpop.permute.xlu0 %1962
  %1964 = vrot.lane.b32.xlu0 %v16, 108
  %v1965 = vpop.permute.xlu0 %1964
  %1966 = vrot.lane.b32.xlu0 %v17, 108
  %v1967 = vpop.permute.xlu0 %1966
  %1968 = vrot.lane.b32.xlu0 %v18, 108
  %v1969 = vpop.permute.xlu0 %1968
  %1970 = vrot.lane.b32.xlu0 %v19, 108
  %v1971 = vpop.permute.xlu0 %1970
  %1972 = vrot.lane.b32.xlu0 %v20, 108
  %v1973 = vpop.permute.xlu0 %1972
  %1974 = vrot.lane.b32.xlu0 %v21, 108
  %v1975 = vpop.permute.xlu0 %1974
  %1976 = vrot.lane.b32.xlu0 %v22, 108
  %v1977 = vpop.permute.xlu0 %1976
  %1978 = vrot.lane.b32.xlu0 %v23, 108
  %v1979 = vpop.permute.xlu0 %1978
  %1980 = vrot.lane.b32.xlu0 %v24, 108
  %v1981 = vpop.permute.xlu0 %1980
  %1982 = vrot.lane.b32.xlu0 %v25, 108
  %v1983 = vpop.permute.xlu0 %1982
  %1984 = vrot.lane.b32.xlu0 %v26, 108
  %v1985 = vpop.permute.xlu0 %1984
  %1986 = vrot.lane.b32.xlu0 %v27, 108
  %v1987 = vpop.permute.xlu0 %1986
  %1988 = vrot.lane.b32.xlu0 %v28, 108
  %v1989 = vpop.permute.xlu0 %1988
  %1990 = vrot.lane.b32.xlu0 %v29, 108
  %v1991 = vpop.permute.xlu0 %1990
  %1992 = vrot.lane.b32.xlu0 %v30, 108
  %v1993 = vpop.permute.xlu0 %1992
  %1994 = vrot.lane.b32.xlu0 %v31, 108
  %v1995 = vpop.permute.xlu0 %1994
  %1996 = vrot.lane.b32.xlu0 %v32, 108
  %v1997 = vpop.permute.xlu0 %1996
  %1998 = vrot.lane.b32.xlu0 %v33, 108
  %v1999 = vpop.permute.xlu0 %1998
  %2000 = vrot.lane.b32.xlu0 %v34, 108
  %v2001 = vpop.permute.xlu0 %2000
  %2002 = vrot.lane.b32.xlu0 %v35, 108
  %v2003 = vpop.permute.xlu0 %2002
  %2004 = vrot.lane.b32.xlu0 %v36, 108
  %v2005 = vpop.permute.xlu0 %2004
  %2006 = vrot.lane.b32.xlu0 %v37, 108
  %v2007 = vpop.permute.xlu0 %2006
  %2008 = vrot.lane.b32.xlu0 %v38, 108
  %v2009 = vpop.permute.xlu0 %2008
  %2010 = vrot.lane.b32.xlu0 %v39, 108
  %v2011 = vpop.permute.xlu0 %2010
  %2012 = vrot.lane.b32.xlu0 %v40, 108
  %v2013 = vpop.permute.xlu0 %2012
  %2014 = vrot.lane.b32.xlu0 %v41, 108
  %v2015 = vpop.permute.xlu0 %2014
  %2016 = vrot.lane.b32.xlu0 %v42, 108
  %v2017 = vpop.permute.xlu0 %2016
  %2018 = vrot.lane.b32.xlu0 %v43, 108
  %v2019 = vpop.permute.xlu0 %2018
  %2020 = vrot.lane.b32.xlu0 %v44, 108
  %v2021 = vpop.permute.xlu0 %2020
  %2022 = vrot.lane.b32.xlu0 %v45, 108
  %v2023 = vpop.permute.xlu0 %2022
  %2024 = vrot.lane.b32.xlu0 %v46, 108
  %v2025 = vpop.permute.xlu0 %2024
  %2026 = vrot.lane.b32.xlu0 %v47, 108
  %v2027 = vpop.permute.xlu0 %2026
  %2028 = vrot.lane.b32.xlu0 %v48, 108
  %v2029 = vpop.permute.xlu0 %2028
  %2030 = vrot.lane.b32.xlu0 %v49, 108
  %v2031 = vpop.permute.xlu0 %2030
  %2032 = vrot.lane.b32.xlu0 %v50, 108
  %v2033 = vpop.permute.xlu0 %2032
  %2034 = vrot.lane.b32.xlu0 %v51, 108
  %v2035 = vpop.permute.xlu0 %2034
  %2036 = vrot.lane.b32.xlu0 %v52, 108
  %v2037 = vpop.permute.xlu0 %2036
  %2038 = vrot.lane.b32.xlu0 %v53, 108
  %v2039 = vpop.permute.xlu0 %2038
  %2040 = vrot.lane.b32.xlu0 %v54, 108
  %v2041 = vpop.permute.xlu0 %2040
  %2042 = vrot.lane.b32.xlu0 %v55, 108
  %v2043 = vpop.permute.xlu0 %2042
  %2044 = vrot.lane.b32.xlu0 %v56, 108
  %v2045 = vpop.permute.xlu0 %2044
  %2046 = vrot.lane.b32.xlu0 %v57, 108
  %v2047 = vpop.permute.xlu0 %2046
  %2048 = vrot.lane.b32.xlu0 %v58, 108
  %v2049 = vpop.permute.xlu0 %2048
  %2050 = vrot.lane.b32.xlu0 %v59, 108
  %v2051 = vpop.permute.xlu0 %2050
  %2052 = vrot.lane.b32.xlu0 %v60, 108
  %v2053 = vpop.permute.xlu0 %2052
  %2054 = vrot.lane.b32.xlu0 %v61, 108
  %v2055 = vpop.permute.xlu0 %2054
  %vm2056 = vcmask 883712
  %v2057 = vsel %vm2056, %v1961, %v1963
  %v2058 = vsel %vm2056, %v1963, %v1965
  %v2059 = vsel %vm2056, %v1965, %v1967
  %v2060 = vsel %vm2056, %v1967, %v1969
  %v2061 = vsel %vm2056, %v1969, %v1971
  %v2062 = vsel %vm2056, %v1973, %v1975
  %v2063 = vsel %vm2056, %v1975, %v1977
  %v2064 = vsel %vm2056, %v1977, %v1979
  %v2065 = vsel %vm2056, %v1979, %v1981
  %v2066 = vsel %vm2056, %v1981, %v1983
  %v2067 = vsel %vm2056, %v1985, %v1987
  %v2068 = vsel %vm2056, %v1987, %v1989
  %v2069 = vsel %vm2056, %v1989, %v1991
  %v2070 = vsel %vm2056, %v1991, %v1993
  %v2071 = vsel %vm2056, %v1993, %v1995
  %v2072 = vsel %vm2056, %v1997, %v1999
  %v2073 = vsel %vm2056, %v1999, %v2001
  %v2074 = vsel %vm2056, %v2001, %v2003
  %v2075 = vsel %vm2056, %v2003, %v2005
  %v2076 = vsel %vm2056, %v2005, %v2007
  %v2077 = vsel %vm2056, %v2009, %v2011
  %v2078 = vsel %vm2056, %v2011, %v2013
  %v2079 = vsel %vm2056, %v2013, %v2015
  %v2080 = vsel %vm2056, %v2015, %v2017
  %v2081 = vsel %vm2056, %v2017, %v2019
  %v2082 = vsel %vm2056, %v2021, %v2023
  %v2083 = vsel %vm2056, %v2023, %v2025
  %v2084 = vsel %vm2056, %v2025, %v2027
  %v2085 = vsel %vm2056, %v2027, %v2029
  %v2086 = vsel %vm2056, %v2029, %v2031
  %v2087 = vsel %vm2056, %v2033, %v2035
  %v2088 = vsel %vm2056, %v2035, %v2037
  %v2089 = vsel %vm2056, %v2037, %v2039
  %v2090 = vsel %vm2056, %v2039, %v2041
  %v2091 = vsel %vm2056, %v2041, %v2043
  %v2092 = vsel %vm2056, %v2045, %v2047
  %v2093 = vsel %vm2056, %v2047, %v2049
  %v2094 = vsel %vm2056, %v2049, %v2051
  %v2095 = vsel %vm2056, %v2051, %v2053
  %v2096 = vsel %vm2056, %v2053, %v2055
  %v2146 = vsel %vm298, %v1959, 0
  %2148 = vmatprep.subr.mxu0 %v2058
  %2149 = vmatpush1.msra.mxu0 %v2057
  %2150 = vmatprep.subr.mxu0 %v2063
  %2151 = vmatpush1.msra.mxu0 %v2062
  %2152 = vmatprep.subr.mxu0 %v2068
  %2153 = vmatpush1.msra.mxu0 %v2067
  %2154 = vmatprep.subr.mxu0 %v2073
  %2155 = vmatpush1.msra.mxu0 %v2072
  %2156 = vmatprep.subr.mxu0 %v2078
  %2157 = vmatpush1.msra.mxu0 %v2077
  %2158 = vmatprep.subr.mxu0 %v2083
  %2159 = vmatpush1.msra.mxu0 %v2082
  %2160 = vmatprep.subr.mxu0 %v2088
  %2161 = vmatpush1.msra.mxu0 %v2087
  %2162 = vmatprep.subr.mxu0 %v2093
  %2163 = vmatpush1.msra.mxu0 %v2092
  %2164 = vmatprep.subr.mxu0 0.0
  %2165 = vmatpush1.msra.mxu0 0.0
  %2166 = vmatprep.subr.mxu0 0.0
  %2167 = vmatpush1.msra.mxu0 0.0
  %2168 = vmatprep.subr.mxu0 0.0
  %2169 = vmatpush1.msra.mxu0 0.0
  %2170 = vmatprep.subr.mxu0 0.0
  %2171 = vmatpush1.msra.mxu0 0.0
  %2172 = vmatprep.subr.mxu0 0.0
  %2173 = vmatpush1.msra.mxu0 0.0
  %2174 = vmatprep.subr.mxu0 0.0
  %2175 = vmatpush1.msra.mxu0 0.0
  %2176 = vmatprep.subr.mxu0 0.0
  %2177 = vmatpush1.msra.mxu0 0.0
  %2178 = vmatprep.subr.mxu0 0.0
  %2179 = vmatpush1.msra.mxu0 0.0
  %2180 = vmatprep.subr.mxu0 0.0
  %2181 = vmatpush1.msra.mxu0 0.0
  %2182 = vmatprep.subr.mxu0 0.0
  %2183 = vmatpush1.msra.mxu0 0.0
  %2184 = vmatprep.subr.mxu0 0.0
  %2185 = vmatpush1.msra.mxu0 0.0
  %2186 = vmatprep.subr.mxu0 0.0
  %2187 = vmatpush1.msra.mxu0 0.0
  %2188 = vmatprep.subr.mxu0 0.0
  %2189 = vmatpush1.msra.mxu0 0.0
  %2190 = vmatprep.subr.mxu0 0.0
  %2191 = vmatpush1.msra.mxu0 0.0
  %2192 = vmatprep.subr.mxu0 0.0
  %2193 = vmatpush1.msra.mxu0 0.0
  %2194 = vmatprep.subr.mxu0 0.0
  %2195 = vmatpush1.msra.mxu0 0.0
  %2196 = vmatprep.subr.mxu0 0.0
  %2197 = vmatpush1.msra.mxu0 0.0
  %2198 = vmatprep.subr.mxu0 0.0
  %2199 = vmatpush1.msra.mxu0 0.0
  %2200 = vmatprep.subr.mxu0 0.0
  %2201 = vmatpush1.msra.mxu0 0.0
  %2202 = vmatprep.subr.mxu0 0.0
  %2203 = vmatpush1.msra.mxu0 0.0
  %2204 = vmatprep.subr.mxu0 0.0
  %2205 = vmatpush1.msra.mxu0 0.0
  %2206 = vmatprep.subr.mxu0 0.0
  %2207 = vmatpush1.msra.mxu0 0.0
  %2208 = vmatprep.subr.mxu0 0.0
  %2209 = vmatpush1.msra.mxu0 0.0
  %2210 = vmatprep.subr.mxu0 0.0
  %2211 = vmatpush1.msra.mxu0 0.0
  %2212 = vmatprep.mubr.f32.mxu0 0.0
  %2213 = vmatmul.mubr.f32.gmra.mrb[0].mxu0 %v2146
  %v2214 = vpop.f32.mrb[0].mxu0
  %v2215 = vadd.f32 0.0, %v2214
  %v2216 = vpop.f32.mrb[0].mxu0
  %v2217 = vadd.f32 0.0, %v2216
  %2218 = vdwg.mxu0
  %2219 = vmatprep.subr.mxu0 %v2060
  %2220 = vmatpush1.msra.mxu0 %v2059
  %2221 = vmatprep.subr.mxu0 %v2065
  %2222 = vmatpush1.msra.mxu0 %v2064
  %2223 = vmatprep.subr.mxu0 %v2070
  %2224 = vmatpush1.msra.mxu0 %v2069
  %2225 = vmatprep.subr.mxu0 %v2075
  %2226 = vmatpush1.msra.mxu0 %v2074
  %2227 = vmatprep.subr.mxu0 %v2080
  %2228 = vmatpush1.msra.mxu0 %v2079
  %2229 = vmatprep.subr.mxu0 %v2085
  %2230 = vmatpush1.msra.mxu0 %v2084
  %2231 = vmatprep.subr.mxu0 %v2090
  %2232 = vmatpush1.msra.mxu0 %v2089
  %2233 = vmatprep.subr.mxu0 %v2095
  %2234 = vmatpush1.msra.mxu0 %v2094
  %2235 = vmatprep.subr.mxu0 0.0
  %2236 = vmatpush1.msra.mxu0 0.0
  %2237 = vmatprep.subr.mxu0 0.0
  %2238 = vmatpush1.msra.mxu0 0.0
  %2239 = vmatprep.subr.mxu0 0.0
  %2240 = vmatpush1.msra.mxu0 0.0
  %2241 = vmatprep.subr.mxu0 0.0
  %2242 = vmatpush1.msra.mxu0 0.0
  %2243 = vmatprep.subr.mxu0 0.0
  %2244 = vmatpush1.msra.mxu0 0.0
  %2245 = vmatprep.subr.mxu0 0.0
  %2246 = vmatpush1.msra.mxu0 0.0
  %2247 = vmatprep.subr.mxu0 0.0
  %2248 = vmatpush1.msra.mxu0 0.0
  %2249 = vmatprep.subr.mxu0 0.0
  %2250 = vmatpush1.msra.mxu0 0.0
  %2251 = vmatprep.subr.mxu0 0.0
  %2252 = vmatpush1.msra.mxu0 0.0
  %2253 = vmatprep.subr.mxu0 0.0
  %2254 = vmatpush1.msra.mxu0 0.0
  %2255 = vmatprep.subr.mxu0 0.0
  %2256 = vmatpush1.msra.mxu0 0.0
  %2257 = vmatprep.subr.mxu0 0.0
  %2258 = vmatpush1.msra.mxu0 0.0
  %2259 = vmatprep.subr.mxu0 0.0
  %2260 = vmatpush1.msra.mxu0 0.0
  %2261 = vmatprep.subr.mxu0 0.0
  %2262 = vmatpush1.msra.mxu0 0.0
  %2263 = vmatprep.subr.mxu0 0.0
  %2264 = vmatpush1.msra.mxu0 0.0
  %2265 = vmatprep.subr.mxu0 0.0
  %2266 = vmatpush1.msra.mxu0 0.0
  %2267 = vmatprep.subr.mxu0 0.0
  %2268 = vmatpush1.msra.mxu0 0.0
  %2269 = vmatprep.subr.mxu0 0.0
  %2270 = vmatpush1.msra.mxu0 0.0
  %2271 = vmatprep.subr.mxu0 0.0
  %2272 = vmatpush1.msra.mxu0 0.0
  %2273 = vmatprep.subr.mxu0 0.0
  %2274 = vmatpush1.msra.mxu0 0.0
  %2275 = vmatprep.subr.mxu0 0.0
  %2276 = vmatpush1.msra.mxu0 0.0
  %2277 = vmatprep.subr.mxu0 0.0
  %2278 = vmatpush1.msra.mxu0 0.0
  %2279 = vmatprep.subr.mxu0 0.0
  %2280 = vmatpush1.msra.mxu0 0.0
  %2281 = vmatprep.subr.mxu0 0.0
  %2282 = vmatpush1.msra.mxu0 0.0
  %2283 = vmatprep.mubr.f32.mxu0 0.0
  %2284 = vmatmul.mubr.f32.gmra.mrb[0].mxu0 %v2146
  %v2285 = vpop.f32.mrb[0].mxu0
  %v2286 = vadd.f32 0.0, %v2285
  %v2287 = vpop.f32.mrb[0].mxu0
  %v2288 = vadd.f32 0.0, %v2287
  %2289 = vdwg.mxu0
  %2290 = vmatprep.subr.mxu0 %v1971
  %2291 = vmatpush1.msra.mxu0 %v2061
  %2292 = vmatprep.subr.mxu0 %v1983
  %2293 = vmatpush1.msra.mxu0 %v2066
  %2294 = vmatprep.subr.mxu0 %v1995
  %2295 = vmatpush1.msra.mxu0 %v2071
  %2296 = vmatprep.subr.mxu0 %v2007
  %2297 = vmatpush1.msra.mxu0 %v2076
  %2298 = vmatprep.subr.mxu0 %v2019
  %2299 = vmatpush1.msra.mxu0 %v2081
  %2300 = vmatprep.subr.mxu0 %v2031
  %2301 = vmatpush1.msra.mxu0 %v2086
  %2302 = vmatprep.subr.mxu0 %v2043
  %2303 = vmatpush1.msra.mxu0 %v2091
  %2304 = vmatprep.subr.mxu0 %v2055
  %2305 = vmatpush1.msra.mxu0 %v2096
  %2306 = vmatprep.subr.mxu0 0.0
  %2307 = vmatpush1.msra.mxu0 0.0
  %2308 = vmatprep.subr.mxu0 0.0
  %2309 = vmatpush1.msra.mxu0 0.0
  %2310 = vmatprep.subr.mxu0 0.0
  %2311 = vmatpush1.msra.mxu0 0.0
  %2312 = vmatprep.subr.mxu0 0.0
  %2313 = vmatpush1.msra.mxu0 0.0
  %2314 = vmatprep.subr.mxu0 0.0
  %2315 = vmatpush1.msra.mxu0 0.0
  %2316 = vmatprep.subr.mxu0 0.0
  %2317 = vmatpush1.msra.mxu0 0.0
  %2318 = vmatprep.subr.mxu0 0.0
  %2319 = vmatpush1.msra.mxu0 0.0
  %2320 = vmatprep.subr.mxu0 0.0
  %2321 = vmatpush1.msra.mxu0 0.0
  %2322 = vmatprep.subr.mxu0 0.0
  %2323 = vmatpush1.msra.mxu0 0.0
  %2324 = vmatprep.subr.mxu0 0.0
  %2325 = vmatpush1.msra.mxu0 0.0
  %2326 = vmatprep.subr.mxu0 0.0
  %2327 = vmatpush1.msra.mxu0 0.0
  %2328 = vmatprep.subr.mxu0 0.0
  %2329 = vmatpush1.msra.mxu0 0.0
  %2330 = vmatprep.subr.mxu0 0.0
  %2331 = vmatpush1.msra.mxu0 0.0
  %2332 = vmatprep.subr.mxu0 0.0
  %2333 = vmatpush1.msra.mxu0 0.0
  %2334 = vmatprep.subr.mxu0 0.0
  %2335 = vmatpush1.msra.mxu0 0.0
  %2336 = vmatprep.subr.mxu0 0.0
  %2337 = vmatpush1.msra.mxu0 0.0
  %2338 = vmatprep.subr.mxu0 0.0
  %2339 = vmatpush1.msra.mxu0 0.0
  %2340 = vmatprep.subr.mxu0 0.0
  %2341 = vmatpush1.msra.mxu0 0.0
  %2342 = vmatprep.subr.mxu0 0.0
  %2343 = vmatpush1.msra.mxu0 0.0
  %2344 = vmatprep.subr.mxu0 0.0
  %2345 = vmatpush1.msra.mxu0 0.0
  %2346 = vmatprep.subr.mxu0 0.0
  %2347 = vmatpush1.msra.mxu0 0.0
  %2348 = vmatprep.subr.mxu0 0.0
  %2349 = vmatpush1.msra.mxu0 0.0
  %2350 = vmatprep.subr.mxu0 0.0
  %2351 = vmatpush1.msra.mxu0 0.0
  %2352 = vmatprep.subr.mxu0 0.0
  %2353 = vmatpush1.msra.mxu0 0.0
  %2354 = vmatprep.mubr.f32.mxu0 0.0
  %2355 = vmatmul.mubr.f32.gmra.mrb[0].mxu0 %v2146
  %v2356 = vpop.f32.mrb[0].mxu0
  %v2357 = vadd.f32 0.0, %v2356
  %v2358 = vpop.f32.mrb[0].mxu0
  %v2359 = vadd.f32 0.0, %v2358
  %2360 = vdwg.mxu0
  %v2361 = vadd.f32 %v1952, %v2215
  %v2362 = vadd.f32 %v1953, %v2217
  %v2363 = vadd.f32 %v1954, %v2286
  %v2364 = vadd.f32 %v1955, %v2288
  %v2365 = vadd.f32 %v1956, %v2357
  %v2366 = vadd.f32 %v1957, %v2359
  %s2367 = scalar_lea.vmem %s1, 48
  %v2368 = vld [vmem:[%s2367] sm:$0x1f]
  %2369 = vrot.lane.b32.xlu0 %v14, 92
  %v2370 = vpop.permute.xlu0 %2369
  %2371 = vrot.lane.b32.xlu0 %v15, 92
  %v2372 = vpop.permute.xlu0 %2371
  %2373 = vrot.lane.b32.xlu0 %v16, 92
  %v2374 = vpop.permute.xlu0 %2373
  %2375 = vrot.lane.b32.xlu0 %v17, 92
  %v2376 = vpop.permute.xlu0 %2375
  %2377 = vrot.lane.b32.xlu0 %v18, 92
  %v2378 = vpop.permute.xlu0 %2377
  %2379 = vrot.lane.b32.xlu0 %v19, 92
  %v2380 = vpop.permute.xlu0 %2379
  %2381 = vrot.lane.b32.xlu0 %v20, 92
  %v2382 = vpop.permute.xlu0 %2381
  %2383 = vrot.lane.b32.xlu0 %v21, 92
  %v2384 = vpop.permute.xlu0 %2383
  %2385 = vrot.lane.b32.xlu0 %v22, 92
  %v2386 = vpop.permute.xlu0 %2385
  %2387 = vrot.lane.b32.xlu0 %v23, 92
  %v2388 = vpop.permute.xlu0 %2387
  %2389 = vrot.lane.b32.xlu0 %v24, 92
  %v2390 = vpop.permute.xlu0 %2389
  %2391 = vrot.lane.b32.xlu0 %v25, 92
  %v2392 = vpop.permute.xlu0 %2391
  %2393 = vrot.lane.b32.xlu0 %v26, 92
  %v2394 = vpop.permute.xlu0 %2393
  %2395 = vrot.lane.b32.xlu0 %v27, 92
  %v2396 = vpop.permute.xlu0 %2395
  %2397 = vrot.lane.b32.xlu0 %v28, 92
  %v2398 = vpop.permute.xlu0 %2397
  %2399 = vrot.lane.b32.xlu0 %v29, 92
  %v2400 = vpop.permute.xlu0 %2399
  %2401 = vrot.lane.b32.xlu0 %v30, 92
  %v2402 = vpop.permute.xlu0 %2401
  %2403 = vrot.lane.b32.xlu0 %v31, 92
  %v2404 = vpop.permute.xlu0 %2403
  %2405 = vrot.lane.b32.xlu0 %v32, 92
  %v2406 = vpop.permute.xlu0 %2405
  %2407 = vrot.lane.b32.xlu0 %v33, 92
  %v2408 = vpop.permute.xlu0 %2407
  %2409 = vrot.lane.b32.xlu0 %v34, 92
  %v2410 = vpop.permute.xlu0 %2409
  %2411 = vrot.lane.b32.xlu0 %v35, 92
  %v2412 = vpop.permute.xlu0 %2411
  %2413 = vrot.lane.b32.xlu0 %v36, 92
  %v2414 = vpop.permute.xlu0 %2413
  %2415 = vrot.lane.b32.xlu0 %v37, 92
  %v2416 = vpop.permute.xlu0 %2415
  %2417 = vrot.lane.b32.xlu0 %v38, 92
  %v2418 = vpop.permute.xlu0 %2417
  %2419 = vrot.lane.b32.xlu0 %v39, 92
  %v2420 = vpop.permute.xlu0 %2419
  %2421 = vrot.lane.b32.xlu0 %v40, 92
  %v2422 = vpop.permute.xlu0 %2421
  %2423 = vrot.lane.b32.xlu0 %v41, 92
  %v2424 = vpop.permute.xlu0 %2423
  %2425 = vrot.lane.b32.xlu0 %v42, 92
  %v2426 = vpop.permute.xlu0 %2425
  %2427 = vrot.lane.b32.xlu0 %v43, 92
  %v2428 = vpop.permute.xlu0 %2427
  %2429 = vrot.lane.b32.xlu0 %v44, 92
  %v2430 = vpop.permute.xlu0 %2429
  %2431 = vrot.lane.b32.xlu0 %v45, 92
  %v2432 = vpop.permute.xlu0 %2431
  %2433 = vrot.lane.b32.xlu0 %v46, 92
  %v2434 = vpop.permute.xlu0 %2433
  %2435 = vrot.lane.b32.xlu0 %v47, 92
  %v2436 = vpop.permute.xlu0 %2435
  %2437 = vrot.lane.b32.xlu0 %v48, 92
  %v2438 = vpop.permute.xlu0 %2437
  %2439 = vrot.lane.b32.xlu0 %v49, 92
  %v2440 = vpop.permute.xlu0 %2439
  %2441 = vrot.lane.b32.xlu0 %v50, 92
  %v2442 = vpop.permute.xlu0 %2441
  %2443 = vrot.lane.b32.xlu0 %v51, 92
  %v2444 = vpop.permute.xlu0 %2443
  %2445 = vrot.lane.b32.xlu0 %v52, 92
  %v2446 = vpop.permute.xlu0 %2445
  %2447 = vrot.lane.b32.xlu0 %v53, 92
  %v2448 = vpop.permute.xlu0 %2447
  %2449 = vrot.lane.b32.xlu0 %v54, 92
  %v2450 = vpop.permute.xlu0 %2449
  %2451 = vrot.lane.b32.xlu0 %v55, 92
  %v2452 = vpop.permute.xlu0 %2451
  %2453 = vrot.lane.b32.xlu0 %v56, 92
  %v2454 = vpop.permute.xlu0 %2453
  %2455 = vrot.lane.b32.xlu0 %v57, 92
  %v2456 = vpop.permute.xlu0 %2455
  %2457 = vrot.lane.b32.xlu0 %v58, 92
  %v2458 = vpop.permute.xlu0 %2457
  %2459 = vrot.lane.b32.xlu0 %v59, 92
  %v2460 = vpop.permute.xlu0 %2459
  %2461 = vrot.lane.b32.xlu0 %v60, 92
  %v2462 = vpop.permute.xlu0 %2461
  %2463 = vrot.lane.b32.xlu0 %v61, 92
  %v2464 = vpop.permute.xlu0 %2463
  %vm2465 = vcmask 752640
  %v2466 = vsel %vm2465, %v2370, %v2372
  %v2467 = vsel %vm2465, %v2372, %v2374
  %v2468 = vsel %vm2465, %v2374, %v2376
  %v2469 = vsel %vm2465, %v2376, %v2378
  %v2470 = vsel %vm2465, %v2378, %v2380
  %v2471 = vsel %vm2465, %v2382, %v2384
  %v2472 = vsel %vm2465, %v2384, %v2386
  %v2473 = vsel %vm2465, %v2386, %v2388
  %v2474 = vsel %vm2465, %v2388, %v2390
  %v2475 = vsel %vm2465, %v2390, %v2392
  %v2476 = vsel %vm2465, %v2394, %v2396
  %v2477 = vsel %vm2465, %v2396, %v2398
  %v2478 = vsel %vm2465, %v2398, %v2400
  %v2479 = vsel %vm2465, %v2400, %v2402
  %v2480 = vsel %vm2465, %v2402, %v2404
  %v2481 = vsel %vm2465, %v2406, %v2408
  %v2482 = vsel %vm2465, %v2408, %v2410
  %v2483 = vsel %vm2465, %v2410, %v2412
  %v2484 = vsel %vm2465, %v2412, %v2414
  %v2485 = vsel %vm2465, %v2414, %v2416
  %v2486 = vsel %vm2465, %v2418, %v2420
  %v2487 = vsel %vm2465, %v2420, %v2422
  %v2488 = vsel %vm2465, %v2422, %v2424
  %v2489 = vsel %vm2465, %v2424, %v2426
  %v2490 = vsel %vm2465, %v2426, %v2428
  %v2491 = vsel %vm2465, %v2430, %v2432
  %v2492 = vsel %vm2465, %v2432, %v2434
  %v2493 = vsel %vm2465, %v2434, %v2436
  %v2494 = vsel %vm2465, %v2436, %v2438
  %v2495 = vsel %vm2465, %v2438, %v2440
  %v2496 = vsel %vm2465, %v2442, %v2444
  %v2497 = vsel %vm2465, %v2444, %v2446
  %v2498 = vsel %vm2465, %v2446, %v2448
  %v2499 = vsel %vm2465, %v2448, %v2450
  %v2500 = vsel %vm2465, %v2450, %v2452
  %v2501 = vsel %vm2465, %v2454, %v2456
  %v2502 = vsel %vm2465, %v2456, %v2458
  %v2503 = vsel %vm2465, %v2458, %v2460
  %v2504 = vsel %vm2465, %v2460, %v2462
  %v2505 = vsel %vm2465, %v2462, %v2464
  %v2555 = vsel %vm298, %v2368, 0
  %2557 = vmatprep.subr.mxu0 %v2467
  %2558 = vmatpush1.msra.mxu0 %v2466
  %2559 = vmatprep.subr.mxu0 %v2472
  %2560 = vmatpush1.msra.mxu0 %v2471
  %2561 = vmatprep.subr.mxu0 %v2477
  %2562 = vmatpush1.msra.mxu0 %v2476
  %2563 = vmatprep.subr.mxu0 %v2482
  %2564 = vmatpush1.msra.mxu0 %v2481
  %2565 = vmatprep.subr.mxu0 %v2487
  %2566 = vmatpush1.msra.mxu0 %v2486
  %2567 = vmatprep.subr.mxu0 %v2492
  %2568 = vmatpush1.msra.mxu0 %v2491
  %2569 = vmatprep.subr.mxu0 %v2497
  %2570 = vmatpush1.msra.mxu0 %v2496
  %2571 = vmatprep.subr.mxu0 %v2502
  %2572 = vmatpush1.msra.mxu0 %v2501
  %2573 = vmatprep.subr.mxu0 0.0
  %2574 = vmatpush1.msra.mxu0 0.0
  %2575 = vmatprep.subr.mxu0 0.0
  %2576 = vmatpush1.msra.mxu0 0.0
  %2577 = vmatprep.subr.mxu0 0.0
  %2578 = vmatpush1.msra.mxu0 0.0
  %2579 = vmatprep.subr.mxu0 0.0
  %2580 = vmatpush1.msra.mxu0 0.0
  %2581 = vmatprep.subr.mxu0 0.0
  %2582 = vmatpush1.msra.mxu0 0.0
  %2583 = vmatprep.subr.mxu0 0.0
  %2584 = vmatpush1.msra.mxu0 0.0
  %2585 = vmatprep.subr.mxu0 0.0
  %2586 = vmatpush1.msra.mxu0 0.0
  %2587 = vmatprep.subr.mxu0 0.0
  %2588 = vmatpush1.msra.mxu0 0.0
  %2589 = vmatprep.subr.mxu0 0.0
  %2590 = vmatpush1.msra.mxu0 0.0
  %2591 = vmatprep.subr.mxu0 0.0
  %2592 = vmatpush1.msra.mxu0 0.0
  %2593 = vmatprep.subr.mxu0 0.0
  %2594 = vmatpush1.msra.mxu0 0.0
  %2595 = vmatprep.subr.mxu0 0.0
  %2596 = vmatpush1.msra.mxu0 0.0
  %2597 = vmatprep.subr.mxu0 0.0
  %2598 = vmatpush1.msra.mxu0 0.0
  %2599 = vmatprep.subr.mxu0 0.0
  %2600 = vmatpush1.msra.mxu0 0.0
  %2601 = vmatprep.subr.mxu0 0.0
  %2602 = vmatpush1.msra.mxu0 0.0
  %2603 = vmatprep.subr.mxu0 0.0
  %2604 = vmatpush1.msra.mxu0 0.0
  %2605 = vmatprep.subr.mxu0 0.0
  %2606 = vmatpush1.msra.mxu0 0.0
  %2607 = vmatprep.subr.mxu0 0.0
  %2608 = vmatpush1.msra.mxu0 0.0
  %2609 = vmatprep.subr.mxu0 0.0
  %2610 = vmatpush1.msra.mxu0 0.0
  %2611 = vmatprep.subr.mxu0 0.0
  %2612 = vmatpush1.msra.mxu0 0.0
  %2613 = vmatprep.subr.mxu0 0.0
  %2614 = vmatpush1.msra.mxu0 0.0
  %2615 = vmatprep.subr.mxu0 0.0
  %2616 = vmatpush1.msra.mxu0 0.0
  %2617 = vmatprep.subr.mxu0 0.0
  %2618 = vmatpush1.msra.mxu0 0.0
  %2619 = vmatprep.subr.mxu0 0.0
  %2620 = vmatpush1.msra.mxu0 0.0
  %2621 = vmatprep.mubr.f32.mxu0 0.0
  %2622 = vmatmul.mubr.f32.gmra.mrb[0].mxu0 %v2555
  %v2623 = vpop.f32.mrb[0].mxu0
  %v2624 = vadd.f32 0.0, %v2623
  %v2625 = vpop.f32.mrb[0].mxu0
  %v2626 = vadd.f32 0.0, %v2625
  %2627 = vdwg.mxu0
  %2628 = vmatprep.subr.mxu0 %v2469
  %2629 = vmatpush1.msra.mxu0 %v2468
  %2630 = vmatprep.subr.mxu0 %v2474
  %2631 = vmatpush1.msra.mxu0 %v2473
  %2632 = vmatprep.subr.mxu0 %v2479
  %2633 = vmatpush1.msra.mxu0 %v2478
  %2634 = vmatprep.subr.mxu0 %v2484
  %2635 = vmatpush1.msra.mxu0 %v2483
  %2636 = vmatprep.subr.mxu0 %v2489
  %2637 = vmatpush1.msra.mxu0 %v2488
  %2638 = vmatprep.subr.mxu0 %v2494
  %2639 = vmatpush1.msra.mxu0 %v2493
  %2640 = vmatprep.subr.mxu0 %v2499
  %2641 = vmatpush1.msra.mxu0 %v2498
  %2642 = vmatprep.subr.mxu0 %v2504
  %2643 = vmatpush1.msra.mxu0 %v2503
  %2644 = vmatprep.subr.mxu0 0.0
  %2645 = vmatpush1.msra.mxu0 0.0
  %2646 = vmatprep.subr.mxu0 0.0
  %2647 = vmatpush1.msra.mxu0 0.0
  %2648 = vmatprep.subr.mxu0 0.0
  %2649 = vmatpush1.msra.mxu0 0.0
  %2650 = vmatprep.subr.mxu0 0.0
  %2651 = vmatpush1.msra.mxu0 0.0
  %2652 = vmatprep.subr.mxu0 0.0
  %2653 = vmatpush1.msra.mxu0 0.0
  %2654 = vmatprep.subr.mxu0 0.0
  %2655 = vmatpush1.msra.mxu0 0.0
  %2656 = vmatprep.subr.mxu0 0.0
  %2657 = vmatpush1.msra.mxu0 0.0
  %2658 = vmatprep.subr.mxu0 0.0
  %2659 = vmatpush1.msra.mxu0 0.0
  %2660 = vmatprep.subr.mxu0 0.0
  %2661 = vmatpush1.msra.mxu0 0.0
  %2662 = vmatprep.subr.mxu0 0.0
  %2663 = vmatpush1.msra.mxu0 0.0
  %2664 = vmatprep.subr.mxu0 0.0
  %2665 = vmatpush1.msra.mxu0 0.0
  %2666 = vmatprep.subr.mxu0 0.0
  %2667 = vmatpush1.msra.mxu0 0.0
  %2668 = vmatprep.subr.mxu0 0.0
  %2669 = vmatpush1.msra.mxu0 0.0
  %2670 = vmatprep.subr.mxu0 0.0
  %2671 = vmatpush1.msra.mxu0 0.0
  %2672 = vmatprep.subr.mxu0 0.0
  %2673 = vmatpush1.msra.mxu0 0.0
  %2674 = vmatprep.subr.mxu0 0.0
  %2675 = vmatpush1.msra.mxu0 0.0
  %2676 = vmatprep.subr.mxu0 0.0
  %2677 = vmatpush1.msra.mxu0 0.0
  %2678 = vmatprep.subr.mxu0 0.0
  %2679 = vmatpush1.msra.mxu0 0.0
  %2680 = vmatprep.subr.mxu0 0.0
  %2681 = vmatpush1.msra.mxu0 0.0
  %2682 = vmatprep.subr.mxu0 0.0
  %2683 = vmatpush1.msra.mxu0 0.0
  %2684 = vmatprep.subr.mxu0 0.0
  %2685 = vmatpush1.msra.mxu0 0.0
  %2686 = vmatprep.subr.mxu0 0.0
  %2687 = vmatpush1.msra.mxu0 0.0
  %2688 = vmatprep.subr.mxu0 0.0
  %2689 = vmatpush1.msra.mxu0 0.0
  %2690 = vmatprep.subr.mxu0 0.0
  %2691 = vmatpush1.msra.mxu0 0.0
  %2692 = vmatprep.mubr.f32.mxu0 0.0
  %2693 = vmatmul.mubr.f32.gmra.mrb[0].mxu0 %v2555
  %v2694 = vpop.f32.mrb[0].mxu0
  %v2695 = vadd.f32 0.0, %v2694
  %v2696 = vpop.f32.mrb[0].mxu0
  %v2697 = vadd.f32 0.0, %v2696
  %2698 = vdwg.mxu0
  %2699 = vmatprep.subr.mxu0 %v2380
  %2700 = vmatpush1.msra.mxu0 %v2470
  %2701 = vmatprep.subr.mxu0 %v2392
  %2702 = vmatpush1.msra.mxu0 %v2475
  %2703 = vmatprep.subr.mxu0 %v2404
  %2704 = vmatpush1.msra.mxu0 %v2480
  %2705 = vmatprep.subr.mxu0 %v2416
  %2706 = vmatpush1.msra.mxu0 %v2485
  %2707 = vmatprep.subr.mxu0 %v2428
  %2708 = vmatpush1.msra.mxu0 %v2490
  %2709 = vmatprep.subr.mxu0 %v2440
  %2710 = vmatpush1.msra.mxu0 %v2495
  %2711 = vmatprep.subr.mxu0 %v2452
  %2712 = vmatpush1.msra.mxu0 %v2500
  %2713 = vmatprep.subr.mxu0 %v2464
  %2714 = vmatpush1.msra.mxu0 %v2505
  %2715 = vmatprep.subr.mxu0 0.0
  %2716 = vmatpush1.msra.mxu0 0.0
  %2717 = vmatprep.subr.mxu0 0.0
  %2718 = vmatpush1.msra.mxu0 0.0
  %2719 = vmatprep.subr.mxu0 0.0
  %2720 = vmatpush1.msra.mxu0 0.0
  %2721 = vmatprep.subr.mxu0 0.0
  %2722 = vmatpush1.msra.mxu0 0.0
  %2723 = vmatprep.subr.mxu0 0.0
  %2724 = vmatpush1.msra.mxu0 0.0
  %2725 = vmatprep.subr.mxu0 0.0
  %2726 = vmatpush1.msra.mxu0 0.0
  %2727 = vmatprep.subr.mxu0 0.0
  %2728 = vmatpush1.msra.mxu0 0.0
  %2729 = vmatprep.subr.mxu0 0.0
  %2730 = vmatpush1.msra.mxu0 0.0
  %2731 = vmatprep.subr.mxu0 0.0
  %2732 = vmatpush1.msra.mxu0 0.0
  %2733 = vmatprep.subr.mxu0 0.0
  %2734 = vmatpush1.msra.mxu0 0.0
  %2735 = vmatprep.subr.mxu0 0.0
  %2736 = vmatpush1.msra.mxu0 0.0
  %2737 = vmatprep.subr.mxu0 0.0
  %2738 = vmatpush1.msra.mxu0 0.0
  %2739 = vmatprep.subr.mxu0 0.0
  %2740 = vmatpush1.msra.mxu0 0.0
  %2741 = vmatprep.subr.mxu0 0.0
  %2742 = vmatpush1.msra.mxu0 0.0
  %2743 = vmatprep.subr.mxu0 0.0
  %2744 = vmatpush1.msra.mxu0 0.0
  %2745 = vmatprep.subr.mxu0 0.0
  %2746 = vmatpush1.msra.mxu0 0.0
  %2747 = vmatprep.subr.mxu0 0.0
  %2748 = vmatpush1.msra.mxu0 0.0
  %2749 = vmatprep.subr.mxu0 0.0
  %2750 = vmatpush1.msra.mxu0 0.0
  %2751 = vmatprep.subr.mxu0 0.0
  %2752 = vmatpush1.msra.mxu0 0.0
  %2753 = vmatprep.subr.mxu0 0.0
  %2754 = vmatpush1.msra.mxu0 0.0
  %2755 = vmatprep.subr.mxu0 0.0
  %2756 = vmatpush1.msra.mxu0 0.0
  %2757 = vmatprep.subr.mxu0 0.0
  %2758 = vmatpush1.msra.mxu0 0.0
  %2759 = vmatprep.subr.mxu0 0.0
  %2760 = vmatpush1.msra.mxu0 0.0
  %2761 = vmatprep.subr.mxu0 0.0
  %2762 = vmatpush1.msra.mxu0 0.0
  %2763 = vmatprep.mubr.f32.mxu0 0.0
  %2764 = vmatmul.mubr.f32.gmra.mrb[0].mxu0 %v2555
  %v2765 = vpop.f32.mrb[0].mxu0
  %v2766 = vadd.f32 0.0, %v2765
  %v2767 = vpop.f32.mrb[0].mxu0
  %v2768 = vadd.f32 0.0, %v2767
  %2769 = vdwg.mxu0
  %v2770 = vadd.f32 %v2361, %v2624
  %v2771 = vadd.f32 %v2362, %v2626
  %v2772 = vadd.f32 %v2363, %v2695
  %v2773 = vadd.f32 %v2364, %v2697
  %v2774 = vadd.f32 %v2365, %v2766
  %v2775 = vadd.f32 %v2366, %v2768
  %s2776 = scalar_lea.vmem %s1, 56
  %v2777 = vld [vmem:[%s2776] sm:$0x1f]
  %2778 = vrot.lane.b32.xlu0 %v14, 91
  %v2779 = vpop.permute.xlu0 %2778
  %2780 = vrot.lane.b32.xlu0 %v15, 91
  %v2781 = vpop.permute.xlu0 %2780
  %2782 = vrot.lane.b32.xlu0 %v16, 91
  %v2783 = vpop.permute.xlu0 %2782
  %2784 = vrot.lane.b32.xlu0 %v17, 91
  %v2785 = vpop.permute.xlu0 %2784
  %2786 = vrot.lane.b32.xlu0 %v18, 91
  %v2787 = vpop.permute.xlu0 %2786
  %2788 = vrot.lane.b32.xlu0 %v19, 91
  %v2789 = vpop.permute.xlu0 %2788
  %2790 = vrot.lane.b32.xlu0 %v20, 91
  %v2791 = vpop.permute.xlu0 %2790
  %2792 = vrot.lane.b32.xlu0 %v21, 91
  %v2793 = vpop.permute.xlu0 %2792
  %2794 = vrot.lane.b32.xlu0 %v22, 91
  %v2795 = vpop.permute.xlu0 %2794
  %2796 = vrot.lane.b32.xlu0 %v23, 91
  %v2797 = vpop.permute.xlu0 %2796
  %2798 = vrot.lane.b32.xlu0 %v24, 91
  %v2799 = vpop.permute.xlu0 %2798
  %2800 = vrot.lane.b32.xlu0 %v25, 91
  %v2801 = vpop.permute.xlu0 %2800
  %2802 = vrot.lane.b32.xlu0 %v26, 91
  %v2803 = vpop.permute.xlu0 %2802
  %2804 = vrot.lane.b32.xlu0 %v27, 91
  %v2805 = vpop.permute.xlu0 %2804
  %2806 = vrot.lane.b32.xlu0 %v28, 91
  %v2807 = vpop.permute.xlu0 %2806
  %2808 = vrot.lane.b32.xlu0 %v29, 91
  %v2809 = vpop.permute.xlu0 %2808
  %2810 = vrot.lane.b32.xlu0 %v30, 91
  %v2811 = vpop.permute.xlu0 %2810
  %2812 = vrot.lane.b32.xlu0 %v31, 91
  %v2813 = vpop.permute.xlu0 %2812
  %2814 = vrot.lane.b32.xlu0 %v32, 91
  %v2815 = vpop.permute.xlu0 %2814
  %2816 = vrot.lane.b32.xlu0 %v33, 91
  %v2817 = vpop.permute.xlu0 %2816
  %2818 = vrot.lane.b32.xlu0 %v34, 91
  %v2819 = vpop.permute.xlu0 %2818
  %2820 = vrot.lane.b32.xlu0 %v35, 91
  %v2821 = vpop.permute.xlu0 %2820
  %2822 = vrot.lane.b32.xlu0 %v36, 91
  %v2823 = vpop.permute.xlu0 %2822
  %2824 = vrot.lane.b32.xlu0 %v37, 91
  %v2825 = vpop.permute.xlu0 %2824
  %2826 = vrot.lane.b32.xlu0 %v38, 91
  %v2827 = vpop.permute.xlu0 %2826
  %2828 = vrot.lane.b32.xlu0 %v39, 91
  %v2829 = vpop.permute.xlu0 %2828
  %2830 = vrot.lane.b32.xlu0 %v40, 91
  %v2831 = vpop.permute.xlu0 %2830
  %2832 = vrot.lane.b32.xlu0 %v41, 91
  %v2833 = vpop.permute.xlu0 %2832
  %2834 = vrot.lane.b32.xlu0 %v42, 91
  %v2835 = vpop.permute.xlu0 %2834
  %2836 = vrot.lane.b32.xlu0 %v43, 91
  %v2837 = vpop.permute.xlu0 %2836
  %2838 = vrot.lane.b32.xlu0 %v44, 91
  %v2839 = vpop.permute.xlu0 %2838
  %2840 = vrot.lane.b32.xlu0 %v45, 91
  %v2841 = vpop.permute.xlu0 %2840
  %2842 = vrot.lane.b32.xlu0 %v46, 91
  %v2843 = vpop.permute.xlu0 %2842
  %2844 = vrot.lane.b32.xlu0 %v47, 91
  %v2845 = vpop.permute.xlu0 %2844
  %2846 = vrot.lane.b32.xlu0 %v48, 91
  %v2847 = vpop.permute.xlu0 %2846
  %2848 = vrot.lane.b32.xlu0 %v49, 91
  %v2849 = vpop.permute.xlu0 %2848
  %2850 = vrot.lane.b32.xlu0 %v50, 91
  %v2851 = vpop.permute.xlu0 %2850
  %2852 = vrot.lane.b32.xlu0 %v51, 91
  %v2853 = vpop.permute.xlu0 %2852
  %2854 = vrot.lane.b32.xlu0 %v52, 91
  %v2855 = vpop.permute.xlu0 %2854
  %2856 = vrot.lane.b32.xlu0 %v53, 91
  %v2857 = vpop.permute.xlu0 %2856
  %2858 = vrot.lane.b32.xlu0 %v54, 91
  %v2859 = vpop.permute.xlu0 %2858
  %2860 = vrot.lane.b32.xlu0 %v55, 91
  %v2861 = vpop.permute.xlu0 %2860
  %2862 = vrot.lane.b32.xlu0 %v56, 91
  %v2863 = vpop.permute.xlu0 %2862
  %2864 = vrot.lane.b32.xlu0 %v57, 91
  %v2865 = vpop.permute.xlu0 %2864
  %2866 = vrot.lane.b32.xlu0 %v58, 91
  %v2867 = vpop.permute.xlu0 %2866
  %2868 = vrot.lane.b32.xlu0 %v59, 91
  %v2869 = vpop.permute.xlu0 %2868
  %2870 = vrot.lane.b32.xlu0 %v60, 91
  %v2871 = vpop.permute.xlu0 %2870
  %2872 = vrot.lane.b32.xlu0 %v61, 91
  %v2873 = vpop.permute.xlu0 %2872
  %vm2874 = vcmask 744448
  %v2875 = vsel %vm2874, %v2779, %v2781
  %v2876 = vsel %vm2874, %v2781, %v2783
  %v2877 = vsel %vm2874, %v2783, %v2785
  %v2878 = vsel %vm2874, %v2785, %v2787
  %v2879 = vsel %vm2874, %v2787, %v2789
  %v2880 = vsel %vm2874, %v2791, %v2793
  %v2881 = vsel %vm2874, %v2793, %v2795
  %v2882 = vsel %vm2874, %v2795, %v2797
  %v2883 = vsel %vm2874, %v2797, %v2799
  %v2884 = vsel %vm2874, %v2799, %v2801
  %v2885 = vsel %vm2874, %v2803, %v2805
  %v2886 = vsel %vm2874, %v2805, %v2807
  %v2887 = vsel %vm2874, %v2807, %v2809
  %v2888 = vsel %vm2874, %v2809, %v2811
  %v2889 = vsel %vm2874, %v2811, %v2813
  %v2890 = vsel %vm2874, %v2815, %v2817
  %v2891 = vsel %vm2874, %v2817, %v2819
  %v2892 = vsel %vm2874, %v2819, %v2821
  %v2893 = vsel %vm2874, %v2821, %v2823
  %v2894 = vsel %vm2874, %v2823, %v2825
  %v2895 = vsel %vm2874, %v2827, %v2829
  %v2896 = vsel %vm2874, %v2829, %v2831
  %v2897 = vsel %vm2874, %v2831, %v2833
  %v2898 = vsel %vm2874, %v2833, %v2835
  %v2899 = vsel %vm2874, %v2835, %v2837
  %v2900 = vsel %vm2874, %v2839, %v2841
  %v2901 = vsel %vm2874, %v2841, %v2843
  %v2902 = vsel %vm2874, %v2843, %v2845
  %v2903 = vsel %vm2874, %v2845, %v2847
  %v2904 = vsel %vm2874, %v2847, %v2849
  %v2905 = vsel %vm2874, %v2851, %v2853
  %v2906 = vsel %vm2874, %v2853, %v2855
  %v2907 = vsel %vm2874, %v2855, %v2857
  %v2908 = vsel %vm2874, %v2857, %v2859
  %v2909 = vsel %vm2874, %v2859, %v2861
  %v2910 = vsel %vm2874, %v2863, %v2865
  %v2911 = vsel %vm2874, %v2865, %v2867
  %v2912 = vsel %vm2874, %v2867, %v2869
  %v2913 = vsel %vm2874, %v2869, %v2871
  %v2914 = vsel %vm2874, %v2871, %v2873
  %v2964 = vsel %vm298, %v2777, 0
  %2966 = vmatprep.subr.mxu0 %v2876
  %2967 = vmatpush1.msra.mxu0 %v2875
  %2968 = vmatprep.subr.mxu0 %v2881
  %2969 = vmatpush1.msra.mxu0 %v2880
  %2970 = vmatprep.subr.mxu0 %v2886
  %2971 = vmatpush1.msra.mxu0 %v2885
  %2972 = vmatprep.subr.mxu0 %v2891
  %2973 = vmatpush1.msra.mxu0 %v2890
  %2974 = vmatprep.subr.mxu0 %v2896
  %2975 = vmatpush1.msra.mxu0 %v2895
  %2976 = vmatprep.subr.mxu0 %v2901
  %2977 = vmatpush1.msra.mxu0 %v2900
  %2978 = vmatprep.subr.mxu0 %v2906
  %2979 = vmatpush1.msra.mxu0 %v2905
  %2980 = vmatprep.subr.mxu0 %v2911
  %2981 = vmatpush1.msra.mxu0 %v2910
  %2982 = vmatprep.subr.mxu0 0.0
  %2983 = vmatpush1.msra.mxu0 0.0
  %2984 = vmatprep.subr.mxu0 0.0
  %2985 = vmatpush1.msra.mxu0 0.0
  %2986 = vmatprep.subr.mxu0 0.0
  %2987 = vmatpush1.msra.mxu0 0.0
  %2988 = vmatprep.subr.mxu0 0.0
  %2989 = vmatpush1.msra.mxu0 0.0
  %2990 = vmatprep.subr.mxu0 0.0
  %2991 = vmatpush1.msra.mxu0 0.0
  %2992 = vmatprep.subr.mxu0 0.0
  %2993 = vmatpush1.msra.mxu0 0.0
  %2994 = vmatprep.subr.mxu0 0.0
  %2995 = vmatpush1.msra.mxu0 0.0
  %2996 = vmatprep.subr.mxu0 0.0
  %2997 = vmatpush1.msra.mxu0 0.0
  %2998 = vmatprep.subr.mxu0 0.0
  %2999 = vmatpush1.msra.mxu0 0.0
  %3000 = vmatprep.subr.mxu0 0.0
  %3001 = vmatpush1.msra.mxu0 0.0
  %3002 = vmatprep.subr.mxu0 0.0
  %3003 = vmatpush1.msra.mxu0 0.0
  %3004 = vmatprep.subr.mxu0 0.0
  %3005 = vmatpush1.msra.mxu0 0.0
  %3006 = vmatprep.subr.mxu0 0.0
  %3007 = vmatpush1.msra.mxu0 0.0
  %3008 = vmatprep.subr.mxu0 0.0
  %3009 = vmatpush1.msra.mxu0 0.0
  %3010 = vmatprep.subr.mxu0 0.0
  %3011 = vmatpush1.msra.mxu0 0.0
  %3012 = vmatprep.subr.mxu0 0.0
  %3013 = vmatpush1.msra.mxu0 0.0
  %3014 = vmatprep.subr.mxu0 0.0
  %3015 = vmatpush1.msra.mxu0 0.0
  %3016 = vmatprep.subr.mxu0 0.0
  %3017 = vmatpush1.msra.mxu0 0.0
  %3018 = vmatprep.subr.mxu0 0.0
  %3019 = vmatpush1.msra.mxu0 0.0
  %3020 = vmatprep.subr.mxu0 0.0
  %3021 = vmatpush1.msra.mxu0 0.0
  %3022 = vmatprep.subr.mxu0 0.0
  %3023 = vmatpush1.msra.mxu0 0.0
  %3024 = vmatprep.subr.mxu0 0.0
  %3025 = vmatpush1.msra.mxu0 0.0
  %3026 = vmatprep.subr.mxu0 0.0
  %3027 = vmatpush1.msra.mxu0 0.0
  %3028 = vmatprep.subr.mxu0 0.0
  %3029 = vmatpush1.msra.mxu0 0.0
  %3030 = vmatprep.mubr.f32.mxu0 0.0
  %3031 = vmatmul.mubr.f32.gmra.mrb[0].mxu0 %v2964
  %v3032 = vpop.f32.mrb[0].mxu0
  %v3033 = vadd.f32 0.0, %v3032
  %v3034 = vpop.f32.mrb[0].mxu0
  %v3035 = vadd.f32 0.0, %v3034
  %3036 = vdwg.mxu0
  %3037 = vmatprep.subr.mxu0 %v2878
  %3038 = vmatpush1.msra.mxu0 %v2877
  %3039 = vmatprep.subr.mxu0 %v2883
  %3040 = vmatpush1.msra.mxu0 %v2882
  %3041 = vmatprep.subr.mxu0 %v2888
  %3042 = vmatpush1.msra.mxu0 %v2887
  %3043 = vmatprep.subr.mxu0 %v2893
  %3044 = vmatpush1.msra.mxu0 %v2892
  %3045 = vmatprep.subr.mxu0 %v2898
  %3046 = vmatpush1.msra.mxu0 %v2897
  %3047 = vmatprep.subr.mxu0 %v2903
  %3048 = vmatpush1.msra.mxu0 %v2902
  %3049 = vmatprep.subr.mxu0 %v2908
  %3050 = vmatpush1.msra.mxu0 %v2907
  %3051 = vmatprep.subr.mxu0 %v2913
  %3052 = vmatpush1.msra.mxu0 %v2912
  %3053 = vmatprep.subr.mxu0 0.0
  %3054 = vmatpush1.msra.mxu0 0.0
  %3055 = vmatprep.subr.mxu0 0.0
  %3056 = vmatpush1.msra.mxu0 0.0
  %3057 = vmatprep.subr.mxu0 0.0
  %3058 = vmatpush1.msra.mxu0 0.0
  %3059 = vmatprep.subr.mxu0 0.0
  %3060 = vmatpush1.msra.mxu0 0.0
  %3061 = vmatprep.subr.mxu0 0.0
  %3062 = vmatpush1.msra.mxu0 0.0
  %3063 = vmatprep.subr.mxu0 0.0
  %3064 = vmatpush1.msra.mxu0 0.0
  %3065 = vmatprep.subr.mxu0 0.0
  %3066 = vmatpush1.msra.mxu0 0.0
  %3067 = vmatprep.subr.mxu0 0.0
  %3068 = vmatpush1.msra.mxu0 0.0
  %3069 = vmatprep.subr.mxu0 0.0
  %3070 = vmatpush1.msra.mxu0 0.0
  %3071 = vmatprep.subr.mxu0 0.0
  %3072 = vmatpush1.msra.mxu0 0.0
  %3073 = vmatprep.subr.mxu0 0.0
  %3074 = vmatpush1.msra.mxu0 0.0
  %3075 = vmatprep.subr.mxu0 0.0
  %3076 = vmatpush1.msra.mxu0 0.0
  %3077 = vmatprep.subr.mxu0 0.0
  %3078 = vmatpush1.msra.mxu0 0.0
  %3079 = vmatprep.subr.mxu0 0.0
  %3080 = vmatpush1.msra.mxu0 0.0
  %3081 = vmatprep.subr.mxu0 0.0
  %3082 = vmatpush1.msra.mxu0 0.0
  %3083 = vmatprep.subr.mxu0 0.0
  %3084 = vmatpush1.msra.mxu0 0.0
  %3085 = vmatprep.subr.mxu0 0.0
  %3086 = vmatpush1.msra.mxu0 0.0
  %3087 = vmatprep.subr.mxu0 0.0
  %3088 = vmatpush1.msra.mxu0 0.0
  %3089 = vmatprep.subr.mxu0 0.0
  %3090 = vmatpush1.msra.mxu0 0.0
  %3091 = vmatprep.subr.mxu0 0.0
  %3092 = vmatpush1.msra.mxu0 0.0
  %3093 = vmatprep.subr.mxu0 0.0
  %3094 = vmatpush1.msra.mxu0 0.0
  %3095 = vmatprep.subr.mxu0 0.0
  %3096 = vmatpush1.msra.mxu0 0.0
  %3097 = vmatprep.subr.mxu0 0.0
  %3098 = vmatpush1.msra.mxu0 0.0
  %3099 = vmatprep.subr.mxu0 0.0
  %3100 = vmatpush1.msra.mxu0 0.0
  %3101 = vmatprep.mubr.f32.mxu0 0.0
  %3102 = vmatmul.mubr.f32.gmra.mrb[0].mxu0 %v2964
  %v3103 = vpop.f32.mrb[0].mxu0
  %v3104 = vadd.f32 0.0, %v3103
  %v3105 = vpop.f32.mrb[0].mxu0
  %v3106 = vadd.f32 0.0, %v3105
  %3107 = vdwg.mxu0
  %3108 = vmatprep.subr.mxu0 %v2789
  %3109 = vmatpush1.msra.mxu0 %v2879
  %3110 = vmatprep.subr.mxu0 %v2801
  %3111 = vmatpush1.msra.mxu0 %v2884
  %3112 = vmatprep.subr.mxu0 %v2813
  %3113 = vmatpush1.msra.mxu0 %v2889
  %3114 = vmatprep.subr.mxu0 %v2825
  %3115 = vmatpush1.msra.mxu0 %v2894
  %3116 = vmatprep.subr.mxu0 %v2837
  %3117 = vmatpush1.msra.mxu0 %v2899
  %3118 = vmatprep.subr.mxu0 %v2849
  %3119 = vmatpush1.msra.mxu0 %v2904
  %3120 = vmatprep.subr.mxu0 %v2861
  %3121 = vmatpush1.msra.mxu0 %v2909
  %3122 = vmatprep.subr.mxu0 %v2873
  %3123 = vmatpush1.msra.mxu0 %v2914
  %3124 = vmatprep.subr.mxu0 0.0
  %3125 = vmatpush1.msra.mxu0 0.0
  %3126 = vmatprep.subr.mxu0 0.0
  %3127 = vmatpush1.msra.mxu0 0.0
  %3128 = vmatprep.subr.mxu0 0.0
  %3129 = vmatpush1.msra.mxu0 0.0
  %3130 = vmatprep.subr.mxu0 0.0
  %3131 = vmatpush1.msra.mxu0 0.0
  %3132 = vmatprep.subr.mxu0 0.0
  %3133 = vmatpush1.msra.mxu0 0.0
  %3134 = vmatprep.subr.mxu0 0.0
  %3135 = vmatpush1.msra.mxu0 0.0
  %3136 = vmatprep.subr.mxu0 0.0
  %3137 = vmatpush1.msra.mxu0 0.0
  %3138 = vmatprep.subr.mxu0 0.0
  %3139 = vmatpush1.msra.mxu0 0.0
  %3140 = vmatprep.subr.mxu0 0.0
  %3141 = vmatpush1.msra.mxu0 0.0
  %3142 = vmatprep.subr.mxu0 0.0
  %3143 = vmatpush1.msra.mxu0 0.0
  %3144 = vmatprep.subr.mxu0 0.0
  %3145 = vmatpush1.msra.mxu0 0.0
  %3146 = vmatprep.subr.mxu0 0.0
  %3147 = vmatpush1.msra.mxu0 0.0
  %3148 = vmatprep.subr.mxu0 0.0
  %3149 = vmatpush1.msra.mxu0 0.0
  %3150 = vmatprep.subr.mxu0 0.0
  %3151 = vmatpush1.msra.mxu0 0.0
  %3152 = vmatprep.subr.mxu0 0.0
  %3153 = vmatpush1.msra.mxu0 0.0
  %3154 = vmatprep.subr.mxu0 0.0
  %3155 = vmatpush1.msra.mxu0 0.0
  %3156 = vmatprep.subr.mxu0 0.0
  %3157 = vmatpush1.msra.mxu0 0.0
  %3158 = vmatprep.subr.mxu0 0.0
  %3159 = vmatpush1.msra.mxu0 0.0
  %3160 = vmatprep.subr.mxu0 0.0
  %3161 = vmatpush1.msra.mxu0 0.0
  %3162 = vmatprep.subr.mxu0 0.0
  %3163 = vmatpush1.msra.mxu0 0.0
  %3164 = vmatprep.subr.mxu0 0.0
  %3165 = vmatpush1.msra.mxu0 0.0
  %3166 = vmatprep.subr.mxu0 0.0
  %3167 = vmatpush1.msra.mxu0 0.0
  %3168 = vmatprep.subr.mxu0 0.0
  %3169 = vmatpush1.msra.mxu0 0.0
  %3170 = vmatprep.subr.mxu0 0.0
  %3171 = vmatpush1.msra.mxu0 0.0
  %3172 = vmatprep.mubr.f32.mxu0 0.0
  %3173 = vmatmul.mubr.f32.gmra.mrb[0].mxu0 %v2964
  %v3174 = vpop.f32.mrb[0].mxu0
  %v3175 = vadd.f32 0.0, %v3174
  %v3176 = vpop.f32.mrb[0].mxu0
  %v3177 = vadd.f32 0.0, %v3176
  %3178 = vdwg.mxu0
  %v3179 = vadd.f32 %v2770, %v3033
  %v3180 = vadd.f32 %v2771, %v3035
  %v3181 = vadd.f32 %v2772, %v3104
  %v3182 = vadd.f32 %v2773, %v3106
  %v3183 = vadd.f32 %v2774, %v3175
  %v3184 = vadd.f32 %v2775, %v3177
  %s3185 = scalar_lea.vmem %s1, 64
  %v3186 = vld [vmem:[%s3185] sm:$0x1f]
  %3187 = vrot.lane.b32.xlu0 %v14, 90
  %v3188 = vpop.permute.xlu0 %3187
  %3189 = vrot.lane.b32.xlu0 %v15, 90
  %v3190 = vpop.permute.xlu0 %3189
  %3191 = vrot.lane.b32.xlu0 %v16, 90
  %v3192 = vpop.permute.xlu0 %3191
  %3193 = vrot.lane.b32.xlu0 %v17, 90
  %v3194 = vpop.permute.xlu0 %3193
  %3195 = vrot.lane.b32.xlu0 %v18, 90
  %v3196 = vpop.permute.xlu0 %3195
  %3197 = vrot.lane.b32.xlu0 %v19, 90
  %v3198 = vpop.permute.xlu0 %3197
  %3199 = vrot.lane.b32.xlu0 %v20, 90
  %v3200 = vpop.permute.xlu0 %3199
  %3201 = vrot.lane.b32.xlu0 %v21, 90
  %v3202 = vpop.permute.xlu0 %3201
  %3203 = vrot.lane.b32.xlu0 %v22, 90
  %v3204 = vpop.permute.xlu0 %3203
  %3205 = vrot.lane.b32.xlu0 %v23, 90
  %v3206 = vpop.permute.xlu0 %3205
  %3207 = vrot.lane.b32.xlu0 %v24, 90
  %v3208 = vpop.permute.xlu0 %3207
  %3209 = vrot.lane.b32.xlu0 %v25, 90
  %v3210 = vpop.permute.xlu0 %3209
  %3211 = vrot.lane.b32.xlu0 %v26, 90
  %v3212 = vpop.permute.xlu0 %3211
  %3213 = vrot.lane.b32.xlu0 %v27, 90
  %v3214 = vpop.permute.xlu0 %3213
  %3215 = vrot.lane.b32.xlu0 %v28, 90
  %v3216 = vpop.permute.xlu0 %3215
  %3217 = vrot.lane.b32.xlu0 %v29, 90
  %v3218 = vpop.permute.xlu0 %3217
  %3219 = vrot.lane.b32.xlu0 %v30, 90
  %v3220 = vpop.permute.xlu0 %3219
  %3221 = vrot.lane.b32.xlu0 %v31, 90
  %v3222 = vpop.permute.xlu0 %3221
  %3223 = vrot.lane.b32.xlu0 %v32, 90
  %v3224 = vpop.permute.xlu0 %3223
  %3225 = vrot.lane.b32.xlu0 %v33, 90
  %v3226 = vpop.permute.xlu0 %3225
  %3227 = vrot.lane.b32.xlu0 %v34, 90
  %v3228 = vpop.permute.xlu0 %3227
  %3229 = vrot.lane.b32.xlu0 %v35, 90
  %v3230 = vpop.permute.xlu0 %3229
  %3231 = vrot.lane.b32.xlu0 %v36, 90
  %v3232 = vpop.permute.xlu0 %3231
  %3233 = vrot.lane.b32.xlu0 %v37, 90
  %v3234 = vpop.permute.xlu0 %3233
  %3235 = vrot.lane.b32.xlu0 %v38, 90
  %v3236 = vpop.permute.xlu0 %3235
  %3237 = vrot.lane.b32.xlu0 %v39, 90
  %v3238 = vpop.permute.xlu0 %3237
  %3239 = vrot.lane.b32.xlu0 %v40, 90
  %v3240 = vpop.permute.xlu0 %3239
  %3241 = vrot.lane.b32.xlu0 %v41, 90
  %v3242 = vpop.permute.xlu0 %3241
  %3243 = vrot.lane.b32.xlu0 %v42, 90
  %v3244 = vpop.permute.xlu0 %3243
  %3245 = vrot.lane.b32.xlu0 %v43, 90
  %v3246 = vpop.permute.xlu0 %3245
  %3247 = vrot.lane.b32.xlu0 %v44, 90
  %v3248 = vpop.permute.xlu0 %3247
  %3249 = vrot.lane.b32.xlu0 %v45, 90
  %v3250 = vpop.permute.xlu0 %3249
  %3251 = vrot.lane.b32.xlu0 %v46, 90
  %v3252 = vpop.permute.xlu0 %3251
  %3253 = vrot.lane.b32.xlu0 %v47, 90
  %v3254 = vpop.permute.xlu0 %3253
  %3255 = vrot.lane.b32.xlu0 %v48, 90
  %v3256 = vpop.permute.xlu0 %3255
  %3257 = vrot.lane.b32.xlu0 %v49, 90
  %v3258 = vpop.permute.xlu0 %3257
  %3259 = vrot.lane.b32.xlu0 %v50, 90
  %v3260 = vpop.permute.xlu0 %3259
  %3261 = vrot.lane.b32.xlu0 %v51, 90
  %v3262 = vpop.permute.xlu0 %3261
  %3263 = vrot.lane.b32.xlu0 %v52, 90
  %v3264 = vpop.permute.xlu0 %3263
  %3265 = vrot.lane.b32.xlu0 %v53, 90
  %v3266 = vpop.permute.xlu0 %3265
  %3267 = vrot.lane.b32.xlu0 %v54, 90
  %v3268 = vpop.permute.xlu0 %3267
  %3269 = vrot.lane.b32.xlu0 %v55, 90
  %v3270 = vpop.permute.xlu0 %3269
  %3271 = vrot.lane.b32.xlu0 %v56, 90
  %v3272 = vpop.permute.xlu0 %3271
  %3273 = vrot.lane.b32.xlu0 %v57, 90
  %v3274 = vpop.permute.xlu0 %3273
  %3275 = vrot.lane.b32.xlu0 %v58, 90
  %v3276 = vpop.permute.xlu0 %3275
  %3277 = vrot.lane.b32.xlu0 %v59, 90
  %v3278 = vpop.permute.xlu0 %3277
  %3279 = vrot.lane.b32.xlu0 %v60, 90
  %v3280 = vpop.permute.xlu0 %3279
  %3281 = vrot.lane.b32.xlu0 %v61, 90
  %v3282 = vpop.permute.xlu0 %3281
  %vm3283 = vcmask 736256
  %v3284 = vsel %vm3283, %v3188, %v3190
  %v3285 = vsel %vm3283, %v3190, %v3192
  %v3286 = vsel %vm3283, %v3192, %v3194
  %v3287 = vsel %vm3283, %v3194, %v3196
  %v3288 = vsel %vm3283, %v3196, %v3198
  %v3289 = vsel %vm3283, %v3200, %v3202
  %v3290 = vsel %vm3283, %v3202, %v3204
  %v3291 = vsel %vm3283, %v3204, %v3206
  %v3292 = vsel %vm3283, %v3206, %v3208
  %v3293 = vsel %vm3283, %v3208, %v3210
  %v3294 = vsel %vm3283, %v3212, %v3214
  %v3295 = vsel %vm3283, %v3214, %v3216
  %v3296 = vsel %vm3283, %v3216, %v3218
  %v3297 = vsel %vm3283, %v3218, %v3220
  %v3298 = vsel %vm3283, %v3220, %v3222
  %v3299 = vsel %vm3283, %v3224, %v3226
  %v3300 = vsel %vm3283, %v3226, %v3228
  %v3301 = vsel %vm3283, %v3228, %v3230
  %v3302 = vsel %vm3283, %v3230, %v3232
  %v3303 = vsel %vm3283, %v3232, %v3234
  %v3304 = vsel %vm3283, %v3236, %v3238
  %v3305 = vsel %vm3283, %v3238, %v3240
  %v3306 = vsel %vm3283, %v3240, %v3242
  %v3307 = vsel %vm3283, %v3242, %v3244
  %v3308 = vsel %vm3283, %v3244, %v3246
  %v3309 = vsel %vm3283, %v3248, %v3250
  %v3310 = vsel %vm3283, %v3250, %v3252
  %v3311 = vsel %vm3283, %v3252, %v3254
  %v3312 = vsel %vm3283, %v3254, %v3256
  %v3313 = vsel %vm3283, %v3256, %v3258
  %v3314 = vsel %vm3283, %v3260, %v3262
  %v3315 = vsel %vm3283, %v3262, %v3264
  %v3316 = vsel %vm3283, %v3264, %v3266
  %v3317 = vsel %vm3283, %v3266, %v3268
  %v3318 = vsel %vm3283, %v3268, %v3270
  %v3319 = vsel %vm3283, %v3272, %v3274
  %v3320 = vsel %vm3283, %v3274, %v3276
  %v3321 = vsel %vm3283, %v3276, %v3278
  %v3322 = vsel %vm3283, %v3278, %v3280
  %v3323 = vsel %vm3283, %v3280, %v3282
  %v3373 = vsel %vm298, %v3186, 0
  %3375 = vmatprep.subr.mxu0 %v3285
  %3376 = vmatpush1.msra.mxu0 %v3284
  %3377 = vmatprep.subr.mxu0 %v3290
  %3378 = vmatpush1.msra.mxu0 %v3289
  %3379 = vmatprep.subr.mxu0 %v3295
  %3380 = vmatpush1.msra.mxu0 %v3294
  %3381 = vmatprep.subr.mxu0 %v3300
  %3382 = vmatpush1.msra.mxu0 %v3299
  %3383 = vmatprep.subr.mxu0 %v3305
  %3384 = vmatpush1.msra.mxu0 %v3304
  %3385 = vmatprep.subr.mxu0 %v3310
  %3386 = vmatpush1.msra.mxu0 %v3309
  %3387 = vmatprep.subr.mxu0 %v3315
  %3388 = vmatpush1.msra.mxu0 %v3314
  %3389 = vmatprep.subr.mxu0 %v3320
  %3390 = vmatpush1.msra.mxu0 %v3319
  %3391 = vmatprep.subr.mxu0 0.0
  %3392 = vmatpush1.msra.mxu0 0.0
  %3393 = vmatprep.subr.mxu0 0.0
  %3394 = vmatpush1.msra.mxu0 0.0
  %3395 = vmatprep.subr.mxu0 0.0
  %3396 = vmatpush1.msra.mxu0 0.0
  %3397 = vmatprep.subr.mxu0 0.0
  %3398 = vmatpush1.msra.mxu0 0.0
  %3399 = vmatprep.subr.mxu0 0.0
  %3400 = vmatpush1.msra.mxu0 0.0
  %3401 = vmatprep.subr.mxu0 0.0
  %3402 = vmatpush1.msra.mxu0 0.0
  %3403 = vmatprep.subr.mxu0 0.0
  %3404 = vmatpush1.msra.mxu0 0.0
  %3405 = vmatprep.subr.mxu0 0.0
  %3406 = vmatpush1.msra.mxu0 0.0
  %3407 = vmatprep.subr.mxu0 0.0
  %3408 = vmatpush1.msra.mxu0 0.0
  %3409 = vmatprep.subr.mxu0 0.0
  %3410 = vmatpush1.msra.mxu0 0.0
  %3411 = vmatprep.subr.mxu0 0.0
  %3412 = vmatpush1.msra.mxu0 0.0
  %3413 = vmatprep.subr.mxu0 0.0
  %3414 = vmatpush1.msra.mxu0 0.0
  %3415 = vmatprep.subr.mxu0 0.0
  %3416 = vmatpush1.msra.mxu0 0.0
  %3417 = vmatprep.subr.mxu0 0.0
  %3418 = vmatpush1.msra.mxu0 0.0
  %3419 = vmatprep.subr.mxu0 0.0
  %3420 = vmatpush1.msra.mxu0 0.0
  %3421 = vmatprep.subr.mxu0 0.0
  %3422 = vmatpush1.msra.mxu0 0.0
  %3423 = vmatprep.subr.mxu0 0.0
  %3424 = vmatpush1.msra.mxu0 0.0
  %3425 = vmatprep.subr.mxu0 0.0
  %3426 = vmatpush1.msra.mxu0 0.0
  %3427 = vmatprep.subr.mxu0 0.0
  %3428 = vmatpush1.msra.mxu0 0.0
  %3429 = vmatprep.subr.mxu0 0.0
  %3430 = vmatpush1.msra.mxu0 0.0
  %3431 = vmatprep.subr.mxu0 0.0
  %3432 = vmatpush1.msra.mxu0 0.0
  %3433 = vmatprep.subr.mxu0 0.0
  %3434 = vmatpush1.msra.mxu0 0.0
  %3435 = vmatprep.subr.mxu0 0.0
  %3436 = vmatpush1.msra.mxu0 0.0
  %3437 = vmatprep.subr.mxu0 0.0
  %3438 = vmatpush1.msra.mxu0 0.0
  %3439 = vmatprep.mubr.f32.mxu0 0.0
  %3440 = vmatmul.mubr.f32.gmra.mrb[0].mxu0 %v3373
  %v3441 = vpop.f32.mrb[0].mxu0
  %v3442 = vadd.f32 0.0, %v3441
  %v3443 = vpop.f32.mrb[0].mxu0
  %v3444 = vadd.f32 0.0, %v3443
  %3445 = vdwg.mxu0
  %3446 = vmatprep.subr.mxu0 %v3287
  %3447 = vmatpush1.msra.mxu0 %v3286
  %3448 = vmatprep.subr.mxu0 %v3292
  %3449 = vmatpush1.msra.mxu0 %v3291
  %3450 = vmatprep.subr.mxu0 %v3297
  %3451 = vmatpush1.msra.mxu0 %v3296
  %3452 = vmatprep.subr.mxu0 %v3302
  %3453 = vmatpush1.msra.mxu0 %v3301
  %3454 = vmatprep.subr.mxu0 %v3307
  %3455 = vmatpush1.msra.mxu0 %v3306
  %3456 = vmatprep.subr.mxu0 %v3312
  %3457 = vmatpush1.msra.mxu0 %v3311
  %3458 = vmatprep.subr.mxu0 %v3317
  %3459 = vmatpush1.msra.mxu0 %v3316
  %3460 = vmatprep.subr.mxu0 %v3322
  %3461 = vmatpush1.msra.mxu0 %v3321
  %3462 = vmatprep.subr.mxu0 0.0
  %3463 = vmatpush1.msra.mxu0 0.0
  %3464 = vmatprep.subr.mxu0 0.0
  %3465 = vmatpush1.msra.mxu0 0.0
  %3466 = vmatprep.subr.mxu0 0.0
  %3467 = vmatpush1.msra.mxu0 0.0
  %3468 = vmatprep.subr.mxu0 0.0
  %3469 = vmatpush1.msra.mxu0 0.0
  %3470 = vmatprep.subr.mxu0 0.0
  %3471 = vmatpush1.msra.mxu0 0.0
  %3472 = vmatprep.subr.mxu0 0.0
  %3473 = vmatpush1.msra.mxu0 0.0
  %3474 = vmatprep.subr.mxu0 0.0
  %3475 = vmatpush1.msra.mxu0 0.0
  %3476 = vmatprep.subr.mxu0 0.0
  %3477 = vmatpush1.msra.mxu0 0.0
  %3478 = vmatprep.subr.mxu0 0.0
  %3479 = vmatpush1.msra.mxu0 0.0
  %3480 = vmatprep.subr.mxu0 0.0
  %3481 = vmatpush1.msra.mxu0 0.0
  %3482 = vmatprep.subr.mxu0 0.0
  %3483 = vmatpush1.msra.mxu0 0.0
  %3484 = vmatprep.subr.mxu0 0.0
  %3485 = vmatpush1.msra.mxu0 0.0
  %3486 = vmatprep.subr.mxu0 0.0
  %3487 = vmatpush1.msra.mxu0 0.0
  %3488 = vmatprep.subr.mxu0 0.0
  %3489 = vmatpush1.msra.mxu0 0.0
  %3490 = vmatprep.subr.mxu0 0.0
  %3491 = vmatpush1.msra.mxu0 0.0
  %3492 = vmatprep.subr.mxu0 0.0
  %3493 = vmatpush1.msra.mxu0 0.0
  %3494 = vmatprep.subr.mxu0 0.0
  %3495 = vmatpush1.msra.mxu0 0.0
  %3496 = vmatprep.subr.mxu0 0.0
  %3497 = vmatpush1.msra.mxu0 0.0
  %3498 = vmatprep.subr.mxu0 0.0
  %3499 = vmatpush1.msra.mxu0 0.0
  %3500 = vmatprep.subr.mxu0 0.0
  %3501 = vmatpush1.msra.mxu0 0.0
  %3502 = vmatprep.subr.mxu0 0.0
  %3503 = vmatpush1.msra.mxu0 0.0
  %3504 = vmatprep.subr.mxu0 0.0
  %3505 = vmatpush1.msra.mxu0 0.0
  %3506 = vmatprep.subr.mxu0 0.0
  %3507 = vmatpush1.msra.mxu0 0.0
  %3508 = vmatprep.subr.mxu0 0.0
  %3509 = vmatpush1.msra.mxu0 0.0
  %3510 = vmatprep.mubr.f32.mxu0 0.0
  %3511 = vmatmul.mubr.f32.gmra.mrb[0].mxu0 %v3373
  %v3512 = vpop.f32.mrb[0].mxu0
  %v3513 = vadd.f32 0.0, %v3512
  %v3514 = vpop.f32.mrb[0].mxu0
  %v3515 = vadd.f32 0.0, %v3514
  %3516 = vdwg.mxu0
  %3517 = vmatprep.subr.mxu0 %v3198
  %3518 = vmatpush1.msra.mxu0 %v3288
  %3519 = vmatprep.subr.mxu0 %v3210
  %3520 = vmatpush1.msra.mxu0 %v3293
  %3521 = vmatprep.subr.mxu0 %v3222
  %3522 = vmatpush1.msra.mxu0 %v3298
  %3523 = vmatprep.subr.mxu0 %v3234
  %3524 = vmatpush1.msra.mxu0 %v3303
  %3525 = vmatprep.subr.mxu0 %v3246
  %3526 = vmatpush1.msra.mxu0 %v3308
  %3527 = vmatprep.subr.mxu0 %v3258
  %3528 = vmatpush1.msra.mxu0 %v3313
  %3529 = vmatprep.subr.mxu0 %v3270
  %3530 = vmatpush1.msra.mxu0 %v3318
  %3531 = vmatprep.subr.mxu0 %v3282
  %3532 = vmatpush1.msra.mxu0 %v3323
  %3533 = vmatprep.subr.mxu0 0.0
  %3534 = vmatpush1.msra.mxu0 0.0
  %3535 = vmatprep.subr.mxu0 0.0
  %3536 = vmatpush1.msra.mxu0 0.0
  %3537 = vmatprep.subr.mxu0 0.0
  %3538 = vmatpush1.msra.mxu0 0.0
  %3539 = vmatprep.subr.mxu0 0.0
  %3540 = vmatpush1.msra.mxu0 0.0
  %3541 = vmatprep.subr.mxu0 0.0
  %3542 = vmatpush1.msra.mxu0 0.0
  %3543 = vmatprep.subr.mxu0 0.0
  %3544 = vmatpush1.msra.mxu0 0.0
  %3545 = vmatprep.subr.mxu0 0.0
  %3546 = vmatpush1.msra.mxu0 0.0
  %3547 = vmatprep.subr.mxu0 0.0
  %3548 = vmatpush1.msra.mxu0 0.0
  %3549 = vmatprep.subr.mxu0 0.0
  %3550 = vmatpush1.msra.mxu0 0.0
  %3551 = vmatprep.subr.mxu0 0.0
  %3552 = vmatpush1.msra.mxu0 0.0
  %3553 = vmatprep.subr.mxu0 0.0
  %3554 = vmatpush1.msra.mxu0 0.0
  %3555 = vmatprep.subr.mxu0 0.0
  %3556 = vmatpush1.msra.mxu0 0.0
  %3557 = vmatprep.subr.mxu0 0.0
  %3558 = vmatpush1.msra.mxu0 0.0
  %3559 = vmatprep.subr.mxu0 0.0
  %3560 = vmatpush1.msra.mxu0 0.0
  %3561 = vmatprep.subr.mxu0 0.0
  %3562 = vmatpush1.msra.mxu0 0.0
  %3563 = vmatprep.subr.mxu0 0.0
  %3564 = vmatpush1.msra.mxu0 0.0
  %3565 = vmatprep.subr.mxu0 0.0
  %3566 = vmatpush1.msra.mxu0 0.0
  %3567 = vmatprep.subr.mxu0 0.0
  %3568 = vmatpush1.msra.mxu0 0.0
  %3569 = vmatprep.subr.mxu0 0.0
  %3570 = vmatpush1.msra.mxu0 0.0
  %3571 = vmatprep.subr.mxu0 0.0
  %3572 = vmatpush1.msra.mxu0 0.0
  %3573 = vmatprep.subr.mxu0 0.0
  %3574 = vmatpush1.msra.mxu0 0.0
  %3575 = vmatprep.subr.mxu0 0.0
  %3576 = vmatpush1.msra.mxu0 0.0
  %3577 = vmatprep.subr.mxu0 0.0
  %3578 = vmatpush1.msra.mxu0 0.0
  %3579 = vmatprep.subr.mxu0 0.0
  %3580 = vmatpush1.msra.mxu0 0.0
  %3581 = vmatprep.mubr.f32.mxu0 0.0
  %3582 = vmatmul.mubr.f32.gmra.mrb[0].mxu0 %v3373
  %v3583 = vpop.f32.mrb[0].mxu0
  %v3584 = vadd.f32 0.0, %v3583
  %v3585 = vpop.f32.mrb[0].mxu0
  %v3586 = vadd.f32 0.0, %v3585
  %3587 = vdwg.mxu0
  %v3588 = vadd.f32 %v3179, %v3442
  %v3589 = vadd.f32 %v3180, %v3444
  %v3590 = vadd.f32 %v3181, %v3513
  %v3591 = vadd.f32 %v3182, %v3515
  %v3592 = vadd.f32 %v3183, %v3584
  %v3593 = vadd.f32 %v3184, %v3586
  %v3594 = vld [vmem:[%s2] sm:$0x1f]
  %3596 = vset.pattern.permute.xlu0 0
  %3597 = vperm.xlu0 %3596, %v3594
  %v3598 = vpop.permute.xlu0 %3597
  %v3600 = vadd.f32 %v3588, %v3598
  %v3601 = vadd.f32 %v3589, %v3598
  %v3602 = vadd.f32 %v3590, %v3598
  %v3603 = vadd.f32 %v3591, %v3598
  %v3604 = vadd.f32 %v3592, %v3598
  %v3605 = vadd.f32 %v3593, %v3598
  %3606 = vst [vmem:[%s3] sm:$0x1f] %v3600
  %3607 = vst [vmem:[%s3 + $0x8] sm:$0x1f] %v3601
  %3608 = vst [vmem:[%s3 + $0x10] sm:$0x1f] %v3602
  %3609 = vst [vmem:[%s3 + $0x18] sm:$0x1f] %v3603
  %3610 = vst [vmem:[%s3 + $0x20] sm:$0x1f] %v3604
  %vm3611 = vcmask 61440
  %3612 = vst.msk [vmem:[%s3 + $0x28] sm:$0x1f] %vm3611, %v3605
  // Predicated region
  $region14: #{uperhead_forward.27} parent=0 // pred_check
    _
  $region15: #{uperhead_forward.27} parent=0 // pred_check_branch
    %3614 = sbr.rel (0) target = $region17
  $region16: #{uperhead_forward.27} parent=0 // pred_region
    _
  $region17: #{uperhead_forward.27} parent=0 // pred_fallthru
    _
  // Predicated region
  $region18: #{uperhead_forward.27} parent=0 // pred_check
    _
  $region19: #{uperhead_forward.27} parent=0 // pred_check_branch
    %3616 = sbr.rel (0) target = $region21
  $region20: #{uperhead_forward.27} parent=0 // pred_region
    _
  $region21: #{uperhead_forward.27} parent=0 // pred_fallthru
    _

</llo_original>
